<compile_context>
chip_gen: v7x
topology: tpu7x:2x2x1
jax: 0.10.0
libtpu: 0.0.40
codegen_flags: <defaults>
</compile_context>

<pallas_src>
import math

import jax
import jax.numpy as jnp
import numpy as np
from jax.experimental import pallas as pl
from jax.experimental.pallas import tpu as pltpu

LOG_2PI = math.log(2.0 * math.pi)
MIXTURE_WEIGHTS = (3.0 / 20.0, 3.0 / 4.0, 1.0 / 10.0)
LN_EPS = 0.1  # Encoder uses LayerNorm(eps=0.1)


def _round_up(n, m=128):
    return ((n + m - 1) // m) * m


def _pad_cols(a, cols):
    return jnp.pad(a, ((0, 0), (0, cols - a.shape[1])))


def _pad2(a, rows, cols):
    return jnp.pad(a, ((0, rows - a.shape[0]), (0, cols - a.shape[1])))


def _make_kernel(hidden_dim, latent_pad, use_bf16):
    log_w0 = math.log(MIXTURE_WEIGHTS[0])
    log_w1 = math.log(MIXTURE_WEIGHTS[1])
    log_w2 = math.log(MIXTURE_WEIGHTS[2])
    inv_h = 1.0 / float(hidden_dim)  # TRUE hidden dim (not the lane-padded one)

    def kernel(x_ref, z_ref, w1_ref, w2_ref, w3_ref, w4_ref, w5_ref,
               whead_ref, hvec_ref, lvec_ref, out_ref):
        # Static Ref slices: zero-cost views into the packed parameter blocks
        # (no full (15, hidden) load + value slicing).
        b = [hvec_ref[i:i + 1, :] for i in range(5)]
        g = [hvec_ref[5 + i:6 + i, :] for i in range(5)]
        be = [hvec_ref[10 + i:11 + i, :] for i in range(5)]

        bmu = lvec_ref[0:1, :]
        blv = lvec_ref[1:2, :]
        mu_prior = lvec_ref[2:3, :]
        logvar_prior = lvec_ref[3:4, :]
        inv_var_prior = lvec_ref[4:5, :]
        logvar_unif = lvec_ref[5:6, :]
        inv_var_unif = lvec_ref[6:7, :]

        def lin(h, w_ref, bias=None):
            if use_bf16:
                # Weights are already bf16 (host-side pack); only the small
                # activation tile is cast here.
                h = h.astype(jnp.bfloat16)
            y = jnp.dot(h, w_ref[...], preferred_element_type=jnp.float32)
            return y if bias is None else y + bias

        def swish(v):
            return v * jax.nn.sigmoid(v)

        def layernorm(v, gamma, beta):
            # E[v^2]-E[v]^2 form (both cross-lane reductions issue from v);
            # divide by the TRUE hidden_dim so zero-padded lanes (which carry
            # gamma=beta=0) do not perturb the statistics.
            mean = jnp.sum(v, axis=-1, keepdims=True) * inv_h
            mean_sq = jnp.sum(v * v, axis=-1, keepdims=True) * inv_h
            var = mean_sq - mean * mean
            return (v - mean) * jax.lax.rsqrt(var + LN_EPS) * gamma + beta

        x = x_ref[...]
        z = z_ref[...]

        # ---- encoder_old.forward(x, dropout_rate=0): dropout is identity.
        # NOTE: all-zero rows of x produce inf/NaN, matching PyTorch behavior.
        x = x * jax.lax.rsqrt(jnp.sum(x * x, axis=-1, keepdims=True))

        h1 = layernorm(swish(lin(x, w1_ref, b[0])), g[0], be[0])
        h2 = layernorm(swish(lin(h1, w2_ref, b[1]) + h1), g[1], be[1])
        s2 = h1 + h2
        h3 = layernorm(swish(lin(h2, w3_ref, b[2]) + s2), g[2], be[2])
        s3 = s2 + h3
        h4 = layernorm(swish(lin(h3, w4_ref, b[3]) + s3), g[3], be[3])
        s4 = s3 + h4
        h5 = layernorm(swish(lin(h4, w5_ref, b[4]) + s4), g[4], be[4])

        # ---- fused (fc_mu | fc_logvar) head: one matmul, split on a 128-lane
        # tile boundary (latent is padded to a multiple of 128).
        head = lin(h5, whead_ref)
        post_mu = head[:, :latent_pad] + bmu
        post_logvar = head[:, latent_pad:] + blv

        def log_norm_pdf(zz, mu, logvar, inv_var):
            d = zz - mu
            return -0.5 * (logvar + LOG_2PI + d * d * inv_var)

        stnd = log_norm_pdf(z, mu_prior, logvar_prior, inv_var_prior) + log_w0
        post = log_norm_pdf(z, post_mu, post_logvar, jnp.exp(-post_logvar)) + log_w1
        unif = log_norm_pdf(z, mu_prior, logvar_unif, inv_var_unif) + log_w2

        # logsumexp over the 3 mixture components
        m = jnp.maximum(jnp.maximum(stnd, post), unif)
        out_ref[...] = m + jnp.log(
            jnp.exp(stnd - m) + jnp.exp(post - m) + jnp.exp(unif - m))

    return kernel


def pack_params(params, *, use_bf16=False):
    """Pack + lane-pad the 27-entry raw parameter list into the 8 kernel inputs."""
    (W1, b1, g1, be1, W2, b2, g2, be2, W3, b3, g3, be3,
     W4, b4, g4, be4, W5, b5, g5, be5,
     Wmu, bmu, Wlv, blv, mu_prior, logvar_prior, logvar_unif) = params
    hidden = W1.shape[1]
    latent = Wmu.shape[1]
    hp = _round_up(hidden)   # lane-padded hidden
    lp = _round_up(latent)   # lane-padded latent

    W1 = _pad_cols(W1, hp)                                               # (input, hp)
    W2, W3, W4, W5 = (_pad2(W, hp, hp) for W in (W2, W3, W4, W5))        # (hp, hp)
    whead = jnp.concatenate([_pad2(Wmu, hp, lp), _pad2(Wlv, hp, lp)],
                            axis=1)                                      # (hp, 2*lp)

    # Padded lanes get bias=0 and gamma=beta=0 -> LayerNorm output is exactly
    # 0 there, so the padding stays inert through every layer.
    hvecs = jnp.concatenate(
        [_pad_cols(v, hp) for v in (b1, b2, b3, b4, b5,
                                    g1, g2, g3, g4, g5,
                                    be1, be2, be3, be4, be5)], axis=0)   # (15, hp)

    bmu, blv, mu_prior, logvar_prior, logvar_unif = (
        _pad_cols(v, lp) for v in (bmu, blv, mu_prior, logvar_prior, logvar_unif))
    lvecs = jnp.concatenate(
        [bmu, blv, mu_prior,
         logvar_prior, jnp.exp(-logvar_prior),
         logvar_unif, jnp.exp(-logvar_unif)], axis=0)                    # (7, lp)

    if use_bf16:
        # Host-side cast: no per-grid-step full-matrix casts inside the kernel
        # and half the resident weight VMEM / HBM traffic.
        W1, W2, W3, W4, W5, whead = (w.astype(jnp.bfloat16)
                                     for w in (W1, W2, W3, W4, W5, whead))
    return (W1, W2, W3, W4, W5, whead, hvecs, lvecs), hp, lp


def _vmem_limit_bytes(input_dim, hp, lp, block_b, weight_bytes, single_buffer_weights):
    wbuf = 1 if single_buffer_weights else 2
    weights = (input_dim * hp + 4 * hp * hp + hp * 2 * lp) * weight_bytes
    packed = (15 * hp + 7 * lp) * 4
    streamed = 2 * block_b * (input_dim + 2 * lp) * 4       # x, z, out double-buffered
    acts = (10 * block_b * hp + 2 * block_b * 2 * lp) * 4   # h1..h5, running sums, head
    total = wbuf * (weights + packed) + streamed + acts
    # 25% headroom, floor at 16 MiB, clamp at v7x's 64 MiB physical VMEM.
    return int(min(max(int(total * 1.25), 16 * 2**20), 64 * 2**20))


def composite_prior(x, z, params, *, block_b=None, use_bf16=False):
    B, input_dim = x.shape
    latent_dim = z.shape[1]
    hidden_dim = params[0].shape[1]
    (W1, W2, W3, W4, W5, whead, hvecs, lvecs), hp, lp = pack_params(
        params, use_bf16=use_bf16)

    if block_b is None:
        # Big batch tile to amortize ~0.35us/step overhead, but keep >=2 grid
        # steps so the "parallel" axis can feed both v7x TensorCores.
        block_b = min(B, 512)
        if block_b == B and B % 2 == 0 and B >= 16:
            block_b = B // 2
    assert B % block_b == 0, "batch must be divisible by the batch tile"

    z_pad = jnp.pad(z, ((0, 0), (0, lp - latent_dim)))
    kernel = _make_kernel(hidden_dim, lp, use_bf16)
    weight_bytes = 2 if use_bf16 else 4

    def make_grid_spec(single_buffer_weights):
        def resident(shape):
            # Constant index_map: block never changes across grid steps.
            # Buffered(1) keeps a single VMEM copy instead of two.
            if single_buffer_weights:
                return pl.BlockSpec(shape, lambda i: (0, 0),
                                    pipeline_mode=pl.Buffered(buffer_count=1))
            return pl.BlockSpec(shape, lambda i: (0, 0))

        return pltpu.PrefetchScalarGridSpec(
            num_scalar_prefetch=0,
            grid=(B // block_b,),
            in_specs=[
                pl.BlockSpec((block_b, input_dim), lambda i: (i, 0)),   # x (batch-tiled)
                pl.BlockSpec((block_b, lp), lambda i: (i, 0)),          # z (lane-padded)
                resident((input_dim, hp)),                              # W1
                resident((hp, hp)),                                     # W2
                resident((hp, hp)),                                     # W3
                resident((hp, hp)),                                     # W4
                resident((hp, hp)),                                     # W5
                resident((hp, 2 * lp)),                                 # fused Wmu|Wlv
                resident((15, hp)),                                     # biases + LN gamma/beta
                resident((7, lp)),                                      # head biases + priors
            ],
            out_specs=pl.BlockSpec((block_b, lp), lambda i: (i, 0)),    # lane-dense out
        )

    def run(single_buffer_weights):
        fn = pl.pallas_call(
            kernel,
            out_shape=jax.ShapeDtypeStruct((B, lp), jnp.float32),
            grid_spec=make_grid_spec(single_buffer_weights),
            compiler_params=pltpu.CompilerParams(
                dimension_semantics=("parallel",),
                vmem_limit_bytes=_vmem_limit_bytes(
                    input_dim, hp, lp, block_b, weight_bytes, single_buffer_weights)),
        )
        return jax.block_until_ready(
            fn(x, z_pad, W1, W2, W3, W4, W5, whead, hvecs, lvecs))

    # TODO(synk): for production RecVAE shapes (input_dim ~ n_items) a resident
    # W1 exceeds v7x's 64 MiB VMEM; stream it over an extra "arbitrary" K grid
    # axis with a pl.when-initialized f32 accumulator (or at minimum bf16 W1).
    try:
        out_pad = run(single_buffer_weights=True)
    except Exception:  # jaxlib without single-buffered pipeline support
        out_pad = run(single_buffer_weights=False)
    return out_pad[:, :latent_dim]


def init_params(key, input_dim, hidden_dim, latent_dim):
    """Deterministic synthetic init matching module shapes (weights as (in,out))."""
    params = []
    dims = [
        (input_dim, hidden_dim),   # fc1
        (hidden_dim, hidden_dim),  # fc2
        (hidden_dim, hidden_dim),  # fc3
        (hidden_dim, hidden_dim),  # fc4
        (hidden_dim, hidden_dim),  # fc5
    ]
    keys = jax.random.split(key, 2 * len(dims) + 4)
    ki = 0
    for (din, dout) in dims:
        bound = 1.0 / math.sqrt(din)
        W = jax.random.uniform(keys[ki], (din, dout), jnp.float32, -bound, bound); ki += 1
        b = jax.random.uniform(keys[ki], (1, dout), jnp.float32, -bound, bound); ki += 1
        gamma = jnp.ones((1, dout), jnp.float32)
        beta = jnp.zeros((1, dout), jnp.float32)
        params += [W, b, gamma, beta]
    # fc_mu, fc_logvar
    for _ in range(2):
        bound = 1.0 / math.sqrt(hidden_dim)
        W = jax.random.uniform(keys[ki], (hidden_dim, latent_dim), jnp.float32, -bound, bound); ki += 1
        b = jax.random.uniform(keys[ki], (1, latent_dim), jnp.float32, -bound, bound); ki += 1
        params += [W, b]
    # prior parameters (non-trainable, filled constants)
    mu_prior = jnp.zeros((1, latent_dim), jnp.float32)
    logvar_prior = jnp.zeros((1, latent_dim), jnp.float32)
    logvar_uniform_prior = jnp.full((1, latent_dim), 10.0, jnp.float32)
    params += [mu_prior, logvar_prior, logvar_uniform_prior]
    return params


def composite_prior_reference(x, z, params):
    """Pure-JAX reference mirroring the PyTorch forward (for correctness check)."""
    p = params
    x = x / jnp.sqrt(jnp.sum(x * x, axis=-1, keepdims=True))

    def lin(h, W, b):
        return h @ W + b

    def ln(v, g, b):
        mean = jnp.mean(v, -1, keepdims=True)
        var = jnp.mean((v - mean) ** 2, -1, keepdims=True)
        return (v - mean) / jnp.sqrt(var + LN_EPS) * g + b

    def sw(v):
        return v * jax.nn.sigmoid(v)

    def log_norm_pdf(zz, mu, logvar):
        return -0.5 * (logvar + LOG_2PI + (zz - mu) ** 2 / jnp.exp(logvar))

    h1 = ln(sw(lin(x, p[0], p[1])), p[2], p[3])
    h2 = ln(sw(lin(h1, p[4], p[5]) + h1), p[6], p[7])
    h3 = ln(sw(lin(h2, p[8], p[9]) + h1 + h2), p[10], p[11])
    h4 = ln(sw(lin(h3, p[12], p[13]) + h1 + h2 + h3), p[14], p[15])
    h5 = ln(sw(lin(h4, p[16], p[17]) + h1 + h2 + h3 + h4), p[18], p[19])
    post_mu = lin(h5, p[20], p[21])
    post_logvar = lin(h5, p[22], p[23])
    mu_prior, logvar_prior, logvar_unif = p[24], p[25], p[26]

    gs = [
        log_norm_pdf(z, mu_prior, logvar_prior) + math.log(MIXTURE_WEIGHTS[0]),
        log_norm_pdf(z, post_mu, post_logvar) + math.log(MIXTURE_WEIGHTS[1]),
        log_norm_pdf(z, mu_prior, logvar_unif) + math.log(MIXTURE_WEIGHTS[2]),
    ]
    return jax.scipy.special.logsumexp(jnp.stack(gs, axis=-1), axis=-1)


if __name__ == "__main__":
    B, INPUT_DIM, HIDDEN_DIM, LATENT_DIM = 256, 64, 32, 16

    key = jax.random.PRNGKey(0)
    kx, kz, kp = jax.random.split(key, 3)
    # x is an implicit-feedback interaction vector (non-negative counts)
    x = jax.random.uniform(kx, (B, INPUT_DIM), jnp.float32, 0.0, 1.0) + 0.01
    z = jax.random.normal(kz, (B, LATENT_DIM), jnp.float32)
    params = init_params(kp, INPUT_DIM, HIDDEN_DIM, LATENT_DIM)

    # use_bf16=False keeps exact f32 module semantics (enable for v6e/v7x
    # production throughput together with a loosened tolerance).
    out = composite_prior(x, z, params, use_bf16=False)
    out = jax.block_until_ready(out)

    ref = composite_prior_reference(x, z, params)
    np.testing.assert_allclose(np.asarray(out), np.asarray(ref), rtol=1e-4, atol=1e-4)

    print("KERNEL_OK")
</pallas_src>

<mosaic_0001>
module attributes {stable_mosaic.version = 11 : i64} {
  func.func @kernel(%arg0: i32, %arg1: memref<128x64xf32, #tpu.memory_space<vmem>>, %arg2: memref<128x128xf32, #tpu.memory_space<vmem>>, %arg3: memref<64x128xf32, #tpu.memory_space<vmem>>, %arg4: memref<128x128xf32, #tpu.memory_space<vmem>>, %arg5: memref<128x128xf32, #tpu.memory_space<vmem>>, %arg6: memref<128x128xf32, #tpu.memory_space<vmem>>, %arg7: memref<128x128xf32, #tpu.memory_space<vmem>>, %arg8: memref<128x256xf32, #tpu.memory_space<vmem>>, %arg9: memref<15x128xf32, #tpu.memory_space<vmem>>, %arg10: memref<7x128xf32, #tpu.memory_space<vmem>>, %arg11: memref<128x128xf32, #tpu.memory_space<vmem>>) attributes {dimension_semantics = [#tpu.dimension_semantics<parallel>], iteration_bounds = array<i64: 2>, scalar_prefetch = 0 : i64, scratch_operands = 0 : i64, tpu.core_type = #tpu.core_type<tc>, window_params = [{transform_indices = @transform_0, window_bounds = array<i64: 128, 64>}, {transform_indices = @transform_1, window_bounds = array<i64: 128, 128>}, {pipeline_mode = #tpu.pipeline_mode<synchronous>, transform_indices = @transform_2, window_bounds = array<i64: 64, 128>}, {pipeline_mode = #tpu.pipeline_mode<synchronous>, transform_indices = @transform_3, window_bounds = array<i64: 128, 128>}, {pipeline_mode = #tpu.pipeline_mode<synchronous>, transform_indices = @transform_4, window_bounds = array<i64: 128, 128>}, {pipeline_mode = #tpu.pipeline_mode<synchronous>, transform_indices = @transform_5, window_bounds = array<i64: 128, 128>}, {pipeline_mode = #tpu.pipeline_mode<synchronous>, transform_indices = @transform_6, window_bounds = array<i64: 128, 128>}, {pipeline_mode = #tpu.pipeline_mode<synchronous>, transform_indices = @transform_7, window_bounds = array<i64: 128, 256>}, {pipeline_mode = #tpu.pipeline_mode<synchronous>, transform_indices = @transform_8, window_bounds = array<i64: 15, 128>}, {pipeline_mode = #tpu.pipeline_mode<synchronous>, transform_indices = @transform_9, window_bounds = array<i64: 7, 128>}, {transform_indices = @transform_10, window_bounds = array<i64: 128, 128>}]} {
    %c0 = arith.constant 0 : index
    %c0_0 = arith.constant 0 : index
    %0 = vector.load %arg9[%c0, %c0_0] : memref<15x128xf32, #tpu.memory_space<vmem>>, vector<1x128xf32>
    %c1 = arith.constant 1 : index
    %c0_1 = arith.constant 0 : index
    %1 = vector.load %arg9[%c1, %c0_1] : memref<15x128xf32, #tpu.memory_space<vmem>>, vector<1x128xf32>
    %c2 = arith.constant 2 : index
    %c0_2 = arith.constant 0 : index
    %2 = vector.load %arg9[%c2, %c0_2] : memref<15x128xf32, #tpu.memory_space<vmem>>, vector<1x128xf32>
    %c3 = arith.constant 3 : index
    %c0_3 = arith.constant 0 : index
    %3 = vector.load %arg9[%c3, %c0_3] : memref<15x128xf32, #tpu.memory_space<vmem>>, vector<1x128xf32>
    %c4 = arith.constant 4 : index
    %c0_4 = arith.constant 0 : index
    %4 = vector.load %arg9[%c4, %c0_4] : memref<15x128xf32, #tpu.memory_space<vmem>>, vector<1x128xf32>
    %c5 = arith.constant 5 : index
    %c0_5 = arith.constant 0 : index
    %5 = vector.load %arg9[%c5, %c0_5] : memref<15x128xf32, #tpu.memory_space<vmem>>, vector<1x128xf32>
    %c6 = arith.constant 6 : index
    %c0_6 = arith.constant 0 : index
    %6 = vector.load %arg9[%c6, %c0_6] : memref<15x128xf32, #tpu.memory_space<vmem>>, vector<1x128xf32>
    %c7 = arith.constant 7 : index
    %c0_7 = arith.constant 0 : index
    %7 = vector.load %arg9[%c7, %c0_7] : memref<15x128xf32, #tpu.memory_space<vmem>>, vector<1x128xf32>
    %c8 = arith.constant 8 : index
    %c0_8 = arith.constant 0 : index
    %8 = vector.load %arg9[%c8, %c0_8] : memref<15x128xf32, #tpu.memory_space<vmem>>, vector<1x128xf32>
    %c9 = arith.constant 9 : index
    %c0_9 = arith.constant 0 : index
    %9 = vector.load %arg9[%c9, %c0_9] : memref<15x128xf32, #tpu.memory_space<vmem>>, vector<1x128xf32>
    %c10 = arith.constant 10 : index
    %c0_10 = arith.constant 0 : index
    %10 = vector.load %arg9[%c10, %c0_10] : memref<15x128xf32, #tpu.memory_space<vmem>>, vector<1x128xf32>
    %c11 = arith.constant 11 : index
    %c0_11 = arith.constant 0 : index
    %11 = vector.load %arg9[%c11, %c0_11] : memref<15x128xf32, #tpu.memory_space<vmem>>, vector<1x128xf32>
    %c12 = arith.constant 12 : index
    %c0_12 = arith.constant 0 : index
    %12 = vector.load %arg9[%c12, %c0_12] : memref<15x128xf32, #tpu.memory_space<vmem>>, vector<1x128xf32>
    %c13 = arith.constant 13 : index
    %c0_13 = arith.constant 0 : index
    %13 = vector.load %arg9[%c13, %c0_13] : memref<15x128xf32, #tpu.memory_space<vmem>>, vector<1x128xf32>
    %c14 = arith.constant 14 : index
    %c0_14 = arith.constant 0 : index
    %14 = vector.load %arg9[%c14, %c0_14] : memref<15x128xf32, #tpu.memory_space<vmem>>, vector<1x128xf32>
    %c0_15 = arith.constant 0 : index
    %c0_16 = arith.constant 0 : index
    %15 = vector.load %arg10[%c0_15, %c0_16] : memref<7x128xf32, #tpu.memory_space<vmem>>, vector<1x128xf32>
    %c1_17 = arith.constant 1 : index
    %c0_18 = arith.constant 0 : index
    %16 = vector.load %arg10[%c1_17, %c0_18] : memref<7x128xf32, #tpu.memory_space<vmem>>, vector<1x128xf32>
    %c2_19 = arith.constant 2 : index
    %c0_20 = arith.constant 0 : index
    %17 = vector.load %arg10[%c2_19, %c0_20] : memref<7x128xf32, #tpu.memory_space<vmem>>, vector<1x128xf32>
    %c3_21 = arith.constant 3 : index
    %c0_22 = arith.constant 0 : index
    %18 = vector.load %arg10[%c3_21, %c0_22] : memref<7x128xf32, #tpu.memory_space<vmem>>, vector<1x128xf32>
    %c4_23 = arith.constant 4 : index
    %c0_24 = arith.constant 0 : index
    %19 = vector.load %arg10[%c4_23, %c0_24] : memref<7x128xf32, #tpu.memory_space<vmem>>, vector<1x128xf32>
    %c5_25 = arith.constant 5 : index
    %c0_26 = arith.constant 0 : index
    %20 = vector.load %arg10[%c5_25, %c0_26] : memref<7x128xf32, #tpu.memory_space<vmem>>, vector<1x128xf32>
    %c6_27 = arith.constant 6 : index
    %c0_28 = arith.constant 0 : index
    %21 = vector.load %arg10[%c6_27, %c0_28] : memref<7x128xf32, #tpu.memory_space<vmem>>, vector<1x128xf32>
    %c0_29 = arith.constant 0 : index
    %c0_30 = arith.constant 0 : index
    %22 = vector.load %arg1[%c0_29, %c0_30] : memref<128x64xf32, #tpu.memory_space<vmem>>, vector<128x64xf32>
    %c0_31 = arith.constant 0 : index
    %c0_32 = arith.constant 0 : index
    %23 = vector.load %arg2[%c0_31, %c0_32] : memref<128x128xf32, #tpu.memory_space<vmem>>, vector<128x128xf32>
    %24 = arith.mulf %22, %22 : vector<128x64xf32>
    %cst = arith.constant dense<0.000000e+00> : vector<128xf32>
    %25 = vector.multi_reduction <add>, %24, %cst [1] : vector<128x64xf32> to vector<128xf32>
    %26 = vector.shape_cast %25 : vector<128xf32> to vector<128x1xf32>
    %27 = math.rsqrt %26 : vector<128x1xf32>
    %28 = vector.broadcast %27 : vector<128x1xf32> to vector<128x64xf32>
    %29 = arith.mulf %22, %28 : vector<128x64xf32>
    %c0_33 = arith.constant 0 : index
    %c0_34 = arith.constant 0 : index
    %30 = vector.load %arg3[%c0_33, %c0_34] : memref<64x128xf32, #tpu.memory_space<vmem>>, vector<64x128xf32>
    %cst_35 = arith.constant dense<0.000000e+00> : vector<128x128xf32>
    %31 = tpu.matmul %29, %30, %cst_35 {dimension_numbers = #tpu.dot_dimension_numbers<[1], [0], [0], [1], [0, 0, 1, 1], [], []>} : vector<128x64xf32>, vector<64x128xf32>, vector<128x128xf32> -> vector<128x128xf32>
    %32 = vector.broadcast %0 : vector<1x128xf32> to vector<128x128xf32>
    %33 = arith.addf %31, %32 : vector<128x128xf32>
    %34 = arith.negf %33 : vector<128x128xf32>
    %35 = math.exp %34 : vector<128x128xf32>
    %cst_36 = arith.constant 1.000000e+00 : f32
    %36 = vector.broadcast %cst_36 : f32 to vector<128x128xf32>
    %37 = arith.addf %36, %35 : vector<128x128xf32>
    %38 = arith.divf %36, %37 : vector<128x128xf32>
    %39 = arith.mulf %33, %38 : vector<128x128xf32>
    %cst_37 = arith.constant dense<0.000000e+00> : vector<128xf32>
    %40 = vector.multi_reduction <add>, %39, %cst_37 [1] : vector<128x128xf32> to vector<128xf32>
    %41 = vector.shape_cast %40 : vector<128xf32> to vector<128x1xf32>
    %cst_38 = arith.constant 3.125000e-02 : f32
    %42 = vector.broadcast %cst_38 : f32 to vector<128x1xf32>
    %43 = arith.mulf %41, %42 : vector<128x1xf32>
    %44 = arith.mulf %39, %39 : vector<128x128xf32>
    %cst_39 = arith.constant dense<0.000000e+00> : vector<128xf32>
    %45 = vector.multi_reduction <add>, %44, %cst_39 [1] : vector<128x128xf32> to vector<128xf32>
    %46 = vector.shape_cast %45 : vector<128xf32> to vector<128x1xf32>
    %cst_40 = arith.constant 3.125000e-02 : f32
    %47 = vector.broadcast %cst_40 : f32 to vector<128x1xf32>
    %48 = arith.mulf %46, %47 : vector<128x1xf32>
    %49 = arith.mulf %43, %43 : vector<128x1xf32>
    %50 = arith.subf %48, %49 : vector<128x1xf32>
    %51 = vector.broadcast %43 : vector<128x1xf32> to vector<128x128xf32>
    %52 = arith.subf %39, %51 : vector<128x128xf32>
    %cst_41 = arith.constant 1.000000e-01 : f32
    %53 = vector.broadcast %cst_41 : f32 to vector<128x1xf32>
    %54 = arith.addf %50, %53 : vector<128x1xf32>
    %55 = math.rsqrt %54 : vector<128x1xf32>
    %56 = vector.broadcast %55 : vector<128x1xf32> to vector<128x128xf32>
    %57 = arith.mulf %52, %56 : vector<128x128xf32>
    %58 = vector.broadcast %5 : vector<1x128xf32> to vector<128x128xf32>
    %59 = arith.mulf %57, %58 : vector<128x128xf32>
    %60 = vector.broadcast %10 : vector<1x128xf32> to vector<128x128xf32>
    %61 = arith.addf %59, %60 : vector<128x128xf32>
    %c0_42 = arith.constant 0 : index
    %c0_43 = arith.constant 0 : index
    %62 = vector.load %arg4[%c0_42, %c0_43] : memref<128x128xf32, #tpu.memory_space<vmem>>, vector<128x128xf32>
    %cst_44 = arith.constant dense<0.000000e+00> : vector<128x128xf32>
    %63 = tpu.matmul %61, %62, %cst_44 {dimension_numbers = #tpu.dot_dimension_numbers<[1], [0], [0], [1], [0, 0, 1, 1], [], []>} : vector<128x128xf32>, vector<128x128xf32>, vector<128x128xf32> -> vector<128x128xf32>
    %64 = vector.broadcast %1 : vector<1x128xf32> to vector<128x128xf32>
    %65 = arith.addf %63, %64 : vector<128x128xf32>
    %66 = arith.addf %65, %61 : vector<128x128xf32>
    %67 = arith.negf %66 : vector<128x128xf32>
    %68 = math.exp %67 : vector<128x128xf32>
    %cst_45 = arith.constant 1.000000e+00 : f32
    %69 = vector.broadcast %cst_45 : f32 to vector<128x128xf32>
    %70 = arith.addf %69, %68 : vector<128x128xf32>
    %71 = arith.divf %69, %70 : vector<128x128xf32>
    %72 = arith.mulf %66, %71 : vector<128x128xf32>
    %cst_46 = arith.constant dense<0.000000e+00> : vector<128xf32>
    %73 = vector.multi_reduction <add>, %72, %cst_46 [1] : vector<128x128xf32> to vector<128xf32>
    %74 = vector.shape_cast %73 : vector<128xf32> to vector<128x1xf32>
    %cst_47 = arith.constant 3.125000e-02 : f32
    %75 = vector.broadcast %cst_47 : f32 to vector<128x1xf32>
    %76 = arith.mulf %74, %75 : vector<128x1xf32>
    %77 = arith.mulf %72, %72 : vector<128x128xf32>
    %cst_48 = arith.constant dense<0.000000e+00> : vector<128xf32>
    %78 = vector.multi_reduction <add>, %77, %cst_48 [1] : vector<128x128xf32> to vector<128xf32>
    %79 = vector.shape_cast %78 : vector<128xf32> to vector<128x1xf32>
    %cst_49 = arith.constant 3.125000e-02 : f32
    %80 = vector.broadcast %cst_49 : f32 to vector<128x1xf32>
    %81 = arith.mulf %79, %80 : vector<128x1xf32>
    %82 = arith.mulf %76, %76 : vector<128x1xf32>
    %83 = arith.subf %81, %82 : vector<128x1xf32>
    %84 = vector.broadcast %76 : vector<128x1xf32> to vector<128x128xf32>
    %85 = arith.subf %72, %84 : vector<128x128xf32>
    %cst_50 = arith.constant 1.000000e-01 : f32
    %86 = vector.broadcast %cst_50 : f32 to vector<128x1xf32>
    %87 = arith.addf %83, %86 : vector<128x1xf32>
    %88 = math.rsqrt %87 : vector<128x1xf32>
    %89 = vector.broadcast %88 : vector<128x1xf32> to vector<128x128xf32>
    %90 = arith.mulf %85, %89 : vector<128x128xf32>
    %91 = vector.broadcast %6 : vector<1x128xf32> to vector<128x128xf32>
    %92 = arith.mulf %90, %91 : vector<128x128xf32>
    %93 = vector.broadcast %11 : vector<1x128xf32> to vector<128x128xf32>
    %94 = arith.addf %92, %93 : vector<128x128xf32>
    %95 = arith.addf %61, %94 : vector<128x128xf32>
    %c0_51 = arith.constant 0 : index
    %c0_52 = arith.constant 0 : index
    %96 = vector.load %arg5[%c0_51, %c0_52] : memref<128x128xf32, #tpu.memory_space<vmem>>, vector<128x128xf32>
    %cst_53 = arith.constant dense<0.000000e+00> : vector<128x128xf32>
    %97 = tpu.matmul %94, %96, %cst_53 {dimension_numbers = #tpu.dot_dimension_numbers<[1], [0], [0], [1], [0, 0, 1, 1], [], []>} : vector<128x128xf32>, vector<128x128xf32>, vector<128x128xf32> -> vector<128x128xf32>
    %98 = vector.broadcast %2 : vector<1x128xf32> to vector<128x128xf32>
    %99 = arith.addf %97, %98 : vector<128x128xf32>
    %100 = arith.addf %99, %95 : vector<128x128xf32>
    %101 = arith.negf %100 : vector<128x128xf32>
    %102 = math.exp %101 : vector<128x128xf32>
    %cst_54 = arith.constant 1.000000e+00 : f32
    %103 = vector.broadcast %cst_54 : f32 to vector<128x128xf32>
    %104 = arith.addf %103, %102 : vector<128x128xf32>
    %105 = arith.divf %103, %104 : vector<128x128xf32>
    %106 = arith.mulf %100, %105 : vector<128x128xf32>
    %cst_55 = arith.constant dense<0.000000e+00> : vector<128xf32>
    %107 = vector.multi_reduction <add>, %106, %cst_55 [1] : vector<128x128xf32> to vector<128xf32>
    %108 = vector.shape_cast %107 : vector<128xf32> to vector<128x1xf32>
    %cst_56 = arith.constant 3.125000e-02 : f32
    %109 = vector.broadcast %cst_56 : f32 to vector<128x1xf32>
    %110 = arith.mulf %108, %109 : vector<128x1xf32>
    %111 = arith.mulf %106, %106 : vector<128x128xf32>
    %cst_57 = arith.constant dense<0.000000e+00> : vector<128xf32>
    %112 = vector.multi_reduction <add>, %111, %cst_57 [1] : vector<128x128xf32> to vector<128xf32>
    %113 = vector.shape_cast %112 : vector<128xf32> to vector<128x1xf32>
    %cst_58 = arith.constant 3.125000e-02 : f32
    %114 = vector.broadcast %cst_58 : f32 to vector<128x1xf32>
    %115 = arith.mulf %113, %114 : vector<128x1xf32>
    %116 = arith.mulf %110, %110 : vector<128x1xf32>
    %117 = arith.subf %115, %116 : vector<128x1xf32>
    %118 = vector.broadcast %110 : vector<128x1xf32> to vector<128x128xf32>
    %119 = arith.subf %106, %118 : vector<128x128xf32>
    %cst_59 = arith.constant 1.000000e-01 : f32
    %120 = vector.broadcast %cst_59 : f32 to vector<128x1xf32>
    %121 = arith.addf %117, %120 : vector<128x1xf32>
    %122 = math.rsqrt %121 : vector<128x1xf32>
    %123 = vector.broadcast %122 : vector<128x1xf32> to vector<128x128xf32>
    %124 = arith.mulf %119, %123 : vector<128x128xf32>
    %125 = vector.broadcast %7 : vector<1x128xf32> to vector<128x128xf32>
    %126 = arith.mulf %124, %125 : vector<128x128xf32>
    %127 = vector.broadcast %12 : vector<1x128xf32> to vector<128x128xf32>
    %128 = arith.addf %126, %127 : vector<128x128xf32>
    %129 = arith.addf %95, %128 : vector<128x128xf32>
    %c0_60 = arith.constant 0 : index
    %c0_61 = arith.constant 0 : index
    %130 = vector.load %arg6[%c0_60, %c0_61] : memref<128x128xf32, #tpu.memory_space<vmem>>, vector<128x128xf32>
    %cst_62 = arith.constant dense<0.000000e+00> : vector<128x128xf32>
    %131 = tpu.matmul %128, %130, %cst_62 {dimension_numbers = #tpu.dot_dimension_numbers<[1], [0], [0], [1], [0, 0, 1, 1], [], []>} : vector<128x128xf32>, vector<128x128xf32>, vector<128x128xf32> -> vector<128x128xf32>
    %132 = vector.broadcast %3 : vector<1x128xf32> to vector<128x128xf32>
    %133 = arith.addf %131, %132 : vector<128x128xf32>
    %134 = arith.addf %133, %129 : vector<128x128xf32>
    %135 = arith.negf %134 : vector<128x128xf32>
    %136 = math.exp %135 : vector<128x128xf32>
    %cst_63 = arith.constant 1.000000e+00 : f32
    %137 = vector.broadcast %cst_63 : f32 to vector<128x128xf32>
    %138 = arith.addf %137, %136 : vector<128x128xf32>
    %139 = arith.divf %137, %138 : vector<128x128xf32>
    %140 = arith.mulf %134, %139 : vector<128x128xf32>
    %cst_64 = arith.constant dense<0.000000e+00> : vector<128xf32>
    %141 = vector.multi_reduction <add>, %140, %cst_64 [1] : vector<128x128xf32> to vector<128xf32>
    %142 = vector.shape_cast %141 : vector<128xf32> to vector<128x1xf32>
    %cst_65 = arith.constant 3.125000e-02 : f32
    %143 = vector.broadcast %cst_65 : f32 to vector<128x1xf32>
    %144 = arith.mulf %142, %143 : vector<128x1xf32>
    %145 = arith.mulf %140, %140 : vector<128x128xf32>
    %cst_66 = arith.constant dense<0.000000e+00> : vector<128xf32>
    %146 = vector.multi_reduction <add>, %145, %cst_66 [1] : vector<128x128xf32> to vector<128xf32>
    %147 = vector.shape_cast %146 : vector<128xf32> to vector<128x1xf32>
    %cst_67 = arith.constant 3.125000e-02 : f32
    %148 = vector.broadcast %cst_67 : f32 to vector<128x1xf32>
    %149 = arith.mulf %147, %148 : vector<128x1xf32>
    %150 = arith.mulf %144, %144 : vector<128x1xf32>
    %151 = arith.subf %149, %150 : vector<128x1xf32>
    %152 = vector.broadcast %144 : vector<128x1xf32> to vector<128x128xf32>
    %153 = arith.subf %140, %152 : vector<128x128xf32>
    %cst_68 = arith.constant 1.000000e-01 : f32
    %154 = vector.broadcast %cst_68 : f32 to vector<128x1xf32>
    %155 = arith.addf %151, %154 : vector<128x1xf32>
    %156 = math.rsqrt %155 : vector<128x1xf32>
    %157 = vector.broadcast %156 : vector<128x1xf32> to vector<128x128xf32>
    %158 = arith.mulf %153, %157 : vector<128x128xf32>
    %159 = vector.broadcast %8 : vector<1x128xf32> to vector<128x128xf32>
    %160 = arith.mulf %158, %159 : vector<128x128xf32>
    %161 = vector.broadcast %13 : vector<1x128xf32> to vector<128x128xf32>
    %162 = arith.addf %160, %161 : vector<128x128xf32>
    %163 = arith.addf %129, %162 : vector<128x128xf32>
    %c0_69 = arith.constant 0 : index
    %c0_70 = arith.constant 0 : index
    %164 = vector.load %arg7[%c0_69, %c0_70] : memref<128x128xf32, #tpu.memory_space<vmem>>, vector<128x128xf32>
    %cst_71 = arith.constant dense<0.000000e+00> : vector<128x128xf32>
    %165 = tpu.matmul %162, %164, %cst_71 {dimension_numbers = #tpu.dot_dimension_numbers<[1], [0], [0], [1], [0, 0, 1, 1], [], []>} : vector<128x128xf32>, vector<128x128xf32>, vector<128x128xf32> -> vector<128x128xf32>
    %166 = vector.broadcast %4 : vector<1x128xf32> to vector<128x128xf32>
    %167 = arith.addf %165, %166 : vector<128x128xf32>
    %168 = arith.addf %167, %163 : vector<128x128xf32>
    %169 = arith.negf %168 : vector<128x128xf32>
    %170 = math.exp %169 : vector<128x128xf32>
    %cst_72 = arith.constant 1.000000e+00 : f32
    %171 = vector.broadcast %cst_72 : f32 to vector<128x128xf32>
    %172 = arith.addf %171, %170 : vector<128x128xf32>
    %173 = arith.divf %171, %172 : vector<128x128xf32>
    %174 = arith.mulf %168, %173 : vector<128x128xf32>
    %cst_73 = arith.constant dense<0.000000e+00> : vector<128xf32>
    %175 = vector.multi_reduction <add>, %174, %cst_73 [1] : vector<128x128xf32> to vector<128xf32>
    %176 = vector.shape_cast %175 : vector<128xf32> to vector<128x1xf32>
    %cst_74 = arith.constant 3.125000e-02 : f32
    %177 = vector.broadcast %cst_74 : f32 to vector<128x1xf32>
    %178 = arith.mulf %176, %177 : vector<128x1xf32>
    %179 = arith.mulf %174, %174 : vector<128x128xf32>
    %cst_75 = arith.constant dense<0.000000e+00> : vector<128xf32>
    %180 = vector.multi_reduction <add>, %179, %cst_75 [1] : vector<128x128xf32> to vector<128xf32>
    %181 = vector.shape_cast %180 : vector<128xf32> to vector<128x1xf32>
    %cst_76 = arith.constant 3.125000e-02 : f32
    %182 = vector.broadcast %cst_76 : f32 to vector<128x1xf32>
    %183 = arith.mulf %181, %182 : vector<128x1xf32>
    %184 = arith.mulf %178, %178 : vector<128x1xf32>
    %185 = arith.subf %183, %184 : vector<128x1xf32>
    %186 = vector.broadcast %178 : vector<128x1xf32> to vector<128x128xf32>
    %187 = arith.subf %174, %186 : vector<128x128xf32>
    %cst_77 = arith.constant 1.000000e-01 : f32
    %188 = vector.broadcast %cst_77 : f32 to vector<128x1xf32>
    %189 = arith.addf %185, %188 : vector<128x1xf32>
    %190 = math.rsqrt %189 : vector<128x1xf32>
    %191 = vector.broadcast %190 : vector<128x1xf32> to vector<128x128xf32>
    %192 = arith.mulf %187, %191 : vector<128x128xf32>
    %193 = vector.broadcast %9 : vector<1x128xf32> to vector<128x128xf32>
    %194 = arith.mulf %192, %193 : vector<128x128xf32>
    %195 = vector.broadcast %14 : vector<1x128xf32> to vector<128x128xf32>
    %196 = arith.addf %194, %195 : vector<128x128xf32>
    %c0_78 = arith.constant 0 : index
    %c0_79 = arith.constant 0 : index
    %197 = vector.load %arg8[%c0_78, %c0_79] : memref<128x256xf32, #tpu.memory_space<vmem>>, vector<128x256xf32>
    %cst_80 = arith.constant dense<0.000000e+00> : vector<128x256xf32>
    %198 = tpu.matmul %196, %197, %cst_80 {dimension_numbers = #tpu.dot_dimension_numbers<[1], [0], [0], [1], [0, 0, 1, 1], [], []>} : vector<128x128xf32>, vector<128x256xf32>, vector<128x256xf32> -> vector<128x256xf32>
    %199 = vector.extract_strided_slice %198 {offsets = [0, 0], sizes = [128, 128], strides = [1, 1]} : vector<128x256xf32> to vector<128x128xf32>
    %200 = vector.broadcast %15 : vector<1x128xf32> to vector<128x128xf32>
    %201 = arith.addf %199, %200 : vector<128x128xf32>
    %202 = vector.extract_strided_slice %198 {offsets = [0, 128], sizes = [128, 128], strides = [1, 1]} : vector<128x256xf32> to vector<128x128xf32>
    %203 = vector.broadcast %16 : vector<1x128xf32> to vector<128x128xf32>
    %204 = arith.addf %202, %203 : vector<128x128xf32>
    %205 = vector.broadcast %17 : vector<1x128xf32> to vector<128x128xf32>
    %206 = arith.subf %23, %205 : vector<128x128xf32>
    %cst_81 = arith.constant 1.83787704 : f32
    %207 = vector.broadcast %cst_81 : f32 to vector<1x128xf32>
    %208 = arith.addf %18, %207 : vector<1x128xf32>
    %209 = arith.mulf %206, %206 : vector<128x128xf32>
    %210 = vector.broadcast %19 : vector<1x128xf32> to vector<128x128xf32>
    %211 = arith.mulf %209, %210 : vector<128x128xf32>
    %212 = vector.broadcast %208 : vector<1x128xf32> to vector<128x128xf32>
    %213 = arith.addf %212, %211 : vector<128x128xf32>
    %cst_82 = arith.constant -5.000000e-01 : f32
    %214 = vector.broadcast %cst_82 : f32 to vector<128x128xf32>
    %215 = arith.mulf %214, %213 : vector<128x128xf32>
    %cst_83 = arith.constant -1.897120e+00 : f32
    %216 = vector.broadcast %cst_83 : f32 to vector<128x128xf32>
    %217 = arith.addf %215, %216 : vector<128x128xf32>
    %cst_84 = arith.constant 0.000000e+00 : f32
    %218 = vector.broadcast %cst_84 : f32 to vector<128x128xf32>
    %219 = arith.subf %218, %204 : vector<128x128xf32>
    %220 = math.exp %219 : vector<128x128xf32>
    %221 = arith.subf %23, %201 : vector<128x128xf32>
    %cst_85 = arith.constant 1.83787704 : f32
    %222 = vector.broadcast %cst_85 : f32 to vector<128x128xf32>
    %223 = arith.addf %204, %222 : vector<128x128xf32>
    %224 = arith.mulf %221, %221 : vector<128x128xf32>
    %225 = arith.mulf %224, %220 : vector<128x128xf32>
    %226 = arith.addf %223, %225 : vector<128x128xf32>
    %cst_86 = arith.constant -5.000000e-01 : f32
    %227 = vector.broadcast %cst_86 : f32 to vector<128x128xf32>
    %228 = arith.mulf %227, %226 : vector<128x128xf32>
    %cst_87 = arith.constant -0.287682086 : f32
    %229 = vector.broadcast %cst_87 : f32 to vector<128x128xf32>
    %230 = arith.addf %228, %229 : vector<128x128xf32>
    %231 = vector.broadcast %17 : vector<1x128xf32> to vector<128x128xf32>
    %232 = arith.subf %23, %231 : vector<128x128xf32>
    %cst_88 = arith.constant 1.83787704 : f32
    %233 = vector.broadcast %cst_88 : f32 to vector<1x128xf32>
    %234 = arith.addf %20, %233 : vector<1x128xf32>
    %235 = arith.mulf %232, %232 : vector<128x128xf32>
    %236 = vector.broadcast %21 : vector<1x128xf32> to vector<128x128xf32>
    %237 = arith.mulf %235, %236 : vector<128x128xf32>
    %238 = vector.broadcast %234 : vector<1x128xf32> to vector<128x128xf32>
    %239 = arith.addf %238, %237 : vector<128x128xf32>
    %cst_89 = arith.constant -5.000000e-01 : f32
    %240 = vector.broadcast %cst_89 : f32 to vector<128x128xf32>
    %241 = arith.mulf %240, %239 : vector<128x128xf32>
    %cst_90 = arith.constant -2.30258512 : f32
    %242 = vector.broadcast %cst_90 : f32 to vector<128x128xf32>
    %243 = arith.addf %241, %242 : vector<128x128xf32>
    %244 = arith.maximumf %217, %230 : vector<128x128xf32>
    %245 = arith.maximumf %244, %243 : vector<128x128xf32>
    %246 = arith.subf %217, %245 : vector<128x128xf32>
    %247 = math.exp %246 : vector<128x128xf32>
    %248 = arith.subf %230, %245 : vector<128x128xf32>
    %249 = math.exp %248 : vector<128x128xf32>
    %250 = arith.addf %247, %249 : vector<128x128xf32>
    %251 = arith.subf %243, %245 : vector<128x128xf32>
    %252 = math.exp %251 : vector<128x128xf32>
    %253 = arith.addf %250, %252 : vector<128x128xf32>
    %254 = math.log %253 : vector<128x128xf32>
    %255 = arith.addf %245, %254 : vector<128x128xf32>
    %c0_91 = arith.constant 0 : index
    %c0_92 = arith.constant 0 : index
    %256 = vector.load %arg11[%c0_91, %c0_92] : memref<128x128xf32, #tpu.memory_space<vmem>>, vector<128x128xf32>
    tpu.vector_store %arg11[%c0_91, %c0_92], %255 {strides = array<i32>} : memref<128x128xf32, #tpu.memory_space<vmem>>, vector<128x128xf32>,
    return
  }
  func.func @transform_0(%arg0: i32) -> (i32, i32) {
    %c0_i32 = arith.constant 0 : i32
    %c0_i32_0 = arith.constant 0 : i32
    return %arg0, %c0_i32 : i32, i32
  }
  func.func @transform_1(%arg0: i32) -> (i32, i32) {
    %c0_i32 = arith.constant 0 : i32
    %c0_i32_0 = arith.constant 0 : i32
    return %arg0, %c0_i32 : i32, i32
  }
  func.func @transform_2(%arg0: i32) -> (i32, i32) {
    %c0_i32 = arith.constant 0 : i32
    %c0_i32_0 = arith.constant 0 : i32
    %c0_i32_1 = arith.constant 0 : i32
    return %c0_i32, %c0_i32_0 : i32, i32
  }
  func.func @transform_3(%arg0: i32) -> (i32, i32) {
    %c0_i32 = arith.constant 0 : i32
    %c0_i32_0 = arith.constant 0 : i32
    %c0_i32_1 = arith.constant 0 : i32
    return %c0_i32, %c0_i32_0 : i32, i32
  }
  func.func @transform_4(%arg0: i32) -> (i32, i32) {
    %c0_i32 = arith.constant 0 : i32
    %c0_i32_0 = arith.constant 0 : i32
    %c0_i32_1 = arith.constant 0 : i32
    return %c0_i32, %c0_i32_0 : i32, i32
  }
  func.func @transform_5(%arg0: i32) -> (i32, i32) {
    %c0_i32 = arith.constant 0 : i32
    %c0_i32_0 = arith.constant 0 : i32
    %c0_i32_1 = arith.constant 0 : i32
    return %c0_i32, %c0_i32_0 : i32, i32
  }
  func.func @transform_6(%arg0: i32) -> (i32, i32) {
    %c0_i32 = arith.constant 0 : i32
    %c0_i32_0 = arith.constant 0 : i32
    %c0_i32_1 = arith.constant 0 : i32
    return %c0_i32, %c0_i32_0 : i32, i32
  }
  func.func @transform_7(%arg0: i32) -> (i32, i32) {
    %c0_i32 = arith.constant 0 : i32
    %c0_i32_0 = arith.constant 0 : i32
    %c0_i32_1 = arith.constant 0 : i32
    return %c0_i32, %c0_i32_0 : i32, i32
  }
  func.func @transform_8(%arg0: i32) -> (i32, i32) {
    %c0_i32 = arith.constant 0 : i32
    %c0_i32_0 = arith.constant 0 : i32
    %c0_i32_1 = arith.constant 0 : i32
    return %c0_i32, %c0_i32_0 : i32, i32
  }
  func.func @transform_9(%arg0: i32) -> (i32, i32) {
    %c0_i32 = arith.constant 0 : i32
    %c0_i32_0 = arith.constant 0 : i32
    %c0_i32_1 = arith.constant 0 : i32
    return %c0_i32, %c0_i32_0 : i32, i32
  }
  func.func @transform_10(%arg0: i32) -> (i32, i32) {
    %c0_i32 = arith.constant 0 : i32
    %c0_i32_0 = arith.constant 0 : i32
    return %arg0, %c0_i32 : i32, i32
  }
}

module attributes {stable_mosaic.version = 11 : i64} {
  func.func @kernel(%arg0: i32, %arg1: memref<128x64xf32, #tpu.memory_space<vmem>>, %arg2: memref<128x128xf32, #tpu.memory_space<vmem>>, %arg3: memref<64x128xf32, #tpu.memory_space<vmem>>, %arg4: memref<128x128xf32, #tpu.memory_space<vmem>>, %arg5: memref<128x128xf32, #tpu.memory_space<vmem>>, %arg6: memref<128x128xf32, #tpu.memory_space<vmem>>, %arg7: memref<128x128xf32, #tpu.memory_space<vmem>>, %arg8: memref<128x256xf32, #tpu.memory_space<vmem>>, %arg9: memref<15x128xf32, #tpu.memory_space<vmem>>, %arg10: memref<7x128xf32, #tpu.memory_space<vmem>>, %arg11: memref<128x128xf32, #tpu.memory_space<vmem>>) attributes {dimension_semantics = [#tpu.dimension_semantics<parallel>], iteration_bounds = array<i64: 2>, scalar_prefetch = 0 : i64, scratch_operands = 0 : i64, tpu.core_type = #tpu.core_type<tc>, window_params = [{transform_indices = @transform_0, window_bounds = array<i64: 128, 64>}, {transform_indices = @transform_1, window_bounds = array<i64: 128, 128>}, {pipeline_mode = #tpu.pipeline_mode<synchronous>, transform_indices = @transform_2, window_bounds = array<i64: 64, 128>}, {pipeline_mode = #tpu.pipeline_mode<synchronous>, transform_indices = @transform_3, window_bounds = array<i64: 128, 128>}, {pipeline_mode = #tpu.pipeline_mode<synchronous>, transform_indices = @transform_4, window_bounds = array<i64: 128, 128>}, {pipeline_mode = #tpu.pipeline_mode<synchronous>, transform_indices = @transform_5, window_bounds = array<i64: 128, 128>}, {pipeline_mode = #tpu.pipeline_mode<synchronous>, transform_indices = @transform_6, window_bounds = array<i64: 128, 128>}, {pipeline_mode = #tpu.pipeline_mode<synchronous>, transform_indices = @transform_7, window_bounds = array<i64: 128, 256>}, {pipeline_mode = #tpu.pipeline_mode<synchronous>, transform_indices = @transform_8, window_bounds = array<i64: 15, 128>}, {pipeline_mode = #tpu.pipeline_mode<synchronous>, transform_indices = @transform_9, window_bounds = array<i64: 7, 128>}, {transform_indices = @transform_10, window_bounds = array<i64: 128, 128>}]} {
    %c0 = arith.constant 0 : index
    %c0_0 = arith.constant 0 : index
    %0 = vector.load %arg9[%c0, %c0_0] : memref<15x128xf32, #tpu.memory_space<vmem>>, vector<1x128xf32>
    %c1 = arith.constant 1 : index
    %c0_1 = arith.constant 0 : index
    %1 = vector.load %arg9[%c1, %c0_1] : memref<15x128xf32, #tpu.memory_space<vmem>>, vector<1x128xf32>
    %c2 = arith.constant 2 : index
    %c0_2 = arith.constant 0 : index
    %2 = vector.load %arg9[%c2, %c0_2] : memref<15x128xf32, #tpu.memory_space<vmem>>, vector<1x128xf32>
    %c3 = arith.constant 3 : index
    %c0_3 = arith.constant 0 : index
    %3 = vector.load %arg9[%c3, %c0_3] : memref<15x128xf32, #tpu.memory_space<vmem>>, vector<1x128xf32>
    %c4 = arith.constant 4 : index
    %c0_4 = arith.constant 0 : index
    %4 = vector.load %arg9[%c4, %c0_4] : memref<15x128xf32, #tpu.memory_space<vmem>>, vector<1x128xf32>
    %c5 = arith.constant 5 : index
    %c0_5 = arith.constant 0 : index
    %5 = vector.load %arg9[%c5, %c0_5] : memref<15x128xf32, #tpu.memory_space<vmem>>, vector<1x128xf32>
    %c6 = arith.constant 6 : index
    %c0_6 = arith.constant 0 : index
    %6 = vector.load %arg9[%c6, %c0_6] : memref<15x128xf32, #tpu.memory_space<vmem>>, vector<1x128xf32>
    %c7 = arith.constant 7 : index
    %c0_7 = arith.constant 0 : index
    %7 = vector.load %arg9[%c7, %c0_7] : memref<15x128xf32, #tpu.memory_space<vmem>>, vector<1x128xf32>
    %c8 = arith.constant 8 : index
    %c0_8 = arith.constant 0 : index
    %8 = vector.load %arg9[%c8, %c0_8] : memref<15x128xf32, #tpu.memory_space<vmem>>, vector<1x128xf32>
    %c9 = arith.constant 9 : index
    %c0_9 = arith.constant 0 : index
    %9 = vector.load %arg9[%c9, %c0_9] : memref<15x128xf32, #tpu.memory_space<vmem>>, vector<1x128xf32>
    %c10 = arith.constant 10 : index
    %c0_10 = arith.constant 0 : index
    %10 = vector.load %arg9[%c10, %c0_10] : memref<15x128xf32, #tpu.memory_space<vmem>>, vector<1x128xf32>
    %c11 = arith.constant 11 : index
    %c0_11 = arith.constant 0 : index
    %11 = vector.load %arg9[%c11, %c0_11] : memref<15x128xf32, #tpu.memory_space<vmem>>, vector<1x128xf32>
    %c12 = arith.constant 12 : index
    %c0_12 = arith.constant 0 : index
    %12 = vector.load %arg9[%c12, %c0_12] : memref<15x128xf32, #tpu.memory_space<vmem>>, vector<1x128xf32>
    %c13 = arith.constant 13 : index
    %c0_13 = arith.constant 0 : index
    %13 = vector.load %arg9[%c13, %c0_13] : memref<15x128xf32, #tpu.memory_space<vmem>>, vector<1x128xf32>
    %c14 = arith.constant 14 : index
    %c0_14 = arith.constant 0 : index
    %14 = vector.load %arg9[%c14, %c0_14] : memref<15x128xf32, #tpu.memory_space<vmem>>, vector<1x128xf32>
    %c0_15 = arith.constant 0 : index
    %c0_16 = arith.constant 0 : index
    %15 = vector.load %arg10[%c0_15, %c0_16] : memref<7x128xf32, #tpu.memory_space<vmem>>, vector<1x128xf32>
    %c1_17 = arith.constant 1 : index
    %c0_18 = arith.constant 0 : index
    %16 = vector.load %arg10[%c1_17, %c0_18] : memref<7x128xf32, #tpu.memory_space<vmem>>, vector<1x128xf32>
    %c2_19 = arith.constant 2 : index
    %c0_20 = arith.constant 0 : index
    %17 = vector.load %arg10[%c2_19, %c0_20] : memref<7x128xf32, #tpu.memory_space<vmem>>, vector<1x128xf32>
    %c3_21 = arith.constant 3 : index
    %c0_22 = arith.constant 0 : index
    %18 = vector.load %arg10[%c3_21, %c0_22] : memref<7x128xf32, #tpu.memory_space<vmem>>, vector<1x128xf32>
    %c4_23 = arith.constant 4 : index
    %c0_24 = arith.constant 0 : index
    %19 = vector.load %arg10[%c4_23, %c0_24] : memref<7x128xf32, #tpu.memory_space<vmem>>, vector<1x128xf32>
    %c5_25 = arith.constant 5 : index
    %c0_26 = arith.constant 0 : index
    %20 = vector.load %arg10[%c5_25, %c0_26] : memref<7x128xf32, #tpu.memory_space<vmem>>, vector<1x128xf32>
    %c6_27 = arith.constant 6 : index
    %c0_28 = arith.constant 0 : index
    %21 = vector.load %arg10[%c6_27, %c0_28] : memref<7x128xf32, #tpu.memory_space<vmem>>, vector<1x128xf32>
    %c0_29 = arith.constant 0 : index
    %c0_30 = arith.constant 0 : index
    %22 = vector.load %arg1[%c0_29, %c0_30] : memref<128x64xf32, #tpu.memory_space<vmem>>, vector<128x64xf32>
    %c0_31 = arith.constant 0 : index
    %c0_32 = arith.constant 0 : index
    %23 = vector.load %arg2[%c0_31, %c0_32] : memref<128x128xf32, #tpu.memory_space<vmem>>, vector<128x128xf32>
    %24 = arith.mulf %22, %22 : vector<128x64xf32>
    %cst = arith.constant dense<0.000000e+00> : vector<128xf32>
    %25 = vector.multi_reduction <add>, %24, %cst [1] : vector<128x64xf32> to vector<128xf32>
    %26 = vector.shape_cast %25 : vector<128xf32> to vector<128x1xf32>
    %27 = math.rsqrt %26 : vector<128x1xf32>
    %28 = vector.broadcast %27 : vector<128x1xf32> to vector<128x64xf32>
    %29 = arith.mulf %22, %28 : vector<128x64xf32>
    %c0_33 = arith.constant 0 : index
    %c0_34 = arith.constant 0 : index
    %30 = vector.load %arg3[%c0_33, %c0_34] : memref<64x128xf32, #tpu.memory_space<vmem>>, vector<64x128xf32>
    %cst_35 = arith.constant dense<0.000000e+00> : vector<128x128xf32>
    %31 = tpu.matmul %29, %30, %cst_35 {dimension_numbers = #tpu.dot_dimension_numbers<[1], [0], [0], [1], [0, 0, 1, 1], [], []>} : vector<128x64xf32>, vector<64x128xf32>, vector<128x128xf32> -> vector<128x128xf32>
    %32 = vector.broadcast %0 : vector<1x128xf32> to vector<128x128xf32>
    %33 = arith.addf %31, %32 : vector<128x128xf32>
    %34 = arith.negf %33 : vector<128x128xf32>
    %35 = math.exp %34 : vector<128x128xf32>
    %cst_36 = arith.constant 1.000000e+00 : f32
    %36 = vector.broadcast %cst_36 : f32 to vector<128x128xf32>
    %37 = arith.addf %36, %35 : vector<128x128xf32>
    %38 = arith.divf %36, %37 : vector<128x128xf32>
    %39 = arith.mulf %33, %38 : vector<128x128xf32>
    %cst_37 = arith.constant dense<0.000000e+00> : vector<128xf32>
    %40 = vector.multi_reduction <add>, %39, %cst_37 [1] : vector<128x128xf32> to vector<128xf32>
    %41 = vector.shape_cast %40 : vector<128xf32> to vector<128x1xf32>
    %cst_38 = arith.constant 3.125000e-02 : f32
    %42 = vector.broadcast %cst_38 : f32 to vector<128x1xf32>
    %43 = arith.mulf %41, %42 : vector<128x1xf32>
    %44 = arith.mulf %39, %39 : vector<128x128xf32>
    %cst_39 = arith.constant dense<0.000000e+00> : vector<128xf32>
    %45 = vector.multi_reduction <add>, %44, %cst_39 [1] : vector<128x128xf32> to vector<128xf32>
    %46 = vector.shape_cast %45 : vector<128xf32> to vector<128x1xf32>
    %cst_40 = arith.constant 3.125000e-02 : f32
    %47 = vector.broadcast %cst_40 : f32 to vector<128x1xf32>
    %48 = arith.mulf %46, %47 : vector<128x1xf32>
    %49 = arith.mulf %43, %43 : vector<128x1xf32>
    %50 = arith.subf %48, %49 : vector<128x1xf32>
    %51 = vector.broadcast %43 : vector<128x1xf32> to vector<128x128xf32>
    %52 = arith.subf %39, %51 : vector<128x128xf32>
    %cst_41 = arith.constant 1.000000e-01 : f32
    %53 = vector.broadcast %cst_41 : f32 to vector<128x1xf32>
    %54 = arith.addf %50, %53 : vector<128x1xf32>
    %55 = math.rsqrt %54 : vector<128x1xf32>
    %56 = vector.broadcast %55 : vector<128x1xf32> to vector<128x128xf32>
    %57 = arith.mulf %52, %56 : vector<128x128xf32>
    %58 = vector.broadcast %5 : vector<1x128xf32> to vector<128x128xf32>
    %59 = arith.mulf %57, %58 : vector<128x128xf32>
    %60 = vector.broadcast %10 : vector<1x128xf32> to vector<128x128xf32>
    %61 = arith.addf %59, %60 : vector<128x128xf32>
    %c0_42 = arith.constant 0 : index
    %c0_43 = arith.constant 0 : index
    %62 = vector.load %arg4[%c0_42, %c0_43] : memref<128x128xf32, #tpu.memory_space<vmem>>, vector<128x128xf32>
    %cst_44 = arith.constant dense<0.000000e+00> : vector<128x128xf32>
    %63 = tpu.matmul %61, %62, %cst_44 {dimension_numbers = #tpu.dot_dimension_numbers<[1], [0], [0], [1], [0, 0, 1, 1], [], []>} : vector<128x128xf32>, vector<128x128xf32>, vector<128x128xf32> -> vector<128x128xf32>
    %64 = vector.broadcast %1 : vector<1x128xf32> to vector<128x128xf32>
    %65 = arith.addf %63, %64 : vector<128x128xf32>
    %66 = arith.addf %65, %61 : vector<128x128xf32>
    %67 = arith.negf %66 : vector<128x128xf32>
    %68 = math.exp %67 : vector<128x128xf32>
    %cst_45 = arith.constant 1.000000e+00 : f32
    %69 = vector.broadcast %cst_45 : f32 to vector<128x128xf32>
    %70 = arith.addf %69, %68 : vector<128x128xf32>
    %71 = arith.divf %69, %70 : vector<128x128xf32>
    %72 = arith.mulf %66, %71 : vector<128x128xf32>
    %cst_46 = arith.constant dense<0.000000e+00> : vector<128xf32>
    %73 = vector.multi_reduction <add>, %72, %cst_46 [1] : vector<128x128xf32> to vector<128xf32>
    %74 = vector.shape_cast %73 : vector<128xf32> to vector<128x1xf32>
    %cst_47 = arith.constant 3.125000e-02 : f32
    %75 = vector.broadcast %cst_47 : f32 to vector<128x1xf32>
    %76 = arith.mulf %74, %75 : vector<128x1xf32>
    %77 = arith.mulf %72, %72 : vector<128x128xf32>
    %cst_48 = arith.constant dense<0.000000e+00> : vector<128xf32>
    %78 = vector.multi_reduction <add>, %77, %cst_48 [1] : vector<128x128xf32> to vector<128xf32>
    %79 = vector.shape_cast %78 : vector<128xf32> to vector<128x1xf32>
    %cst_49 = arith.constant 3.125000e-02 : f32
    %80 = vector.broadcast %cst_49 : f32 to vector<128x1xf32>
    %81 = arith.mulf %79, %80 : vector<128x1xf32>
    %82 = arith.mulf %76, %76 : vector<128x1xf32>
    %83 = arith.subf %81, %82 : vector<128x1xf32>
    %84 = vector.broadcast %76 : vector<128x1xf32> to vector<128x128xf32>
    %85 = arith.subf %72, %84 : vector<128x128xf32>
    %cst_50 = arith.constant 1.000000e-01 : f32
    %86 = vector.broadcast %cst_50 : f32 to vector<128x1xf32>
    %87 = arith.addf %83, %86 : vector<128x1xf32>
    %88 = math.rsqrt %87 : vector<128x1xf32>
    %89 = vector.broadcast %88 : vector<128x1xf32> to vector<128x128xf32>
    %90 = arith.mulf %85, %89 : vector<128x128xf32>
    %91 = vector.broadcast %6 : vector<1x128xf32> to vector<128x128xf32>
    %92 = arith.mulf %90, %91 : vector<128x128xf32>
    %93 = vector.broadcast %11 : vector<1x128xf32> to vector<128x128xf32>
    %94 = arith.addf %92, %93 : vector<128x128xf32>
    %95 = arith.addf %61, %94 : vector<128x128xf32>
    %c0_51 = arith.constant 0 : index
    %c0_52 = arith.constant 0 : index
    %96 = vector.load %arg5[%c0_51, %c0_52] : memref<128x128xf32, #tpu.memory_space<vmem>>, vector<128x128xf32>
    %cst_53 = arith.constant dense<0.000000e+00> : vector<128x128xf32>
    %97 = tpu.matmul %94, %96, %cst_53 {dimension_numbers = #tpu.dot_dimension_numbers<[1], [0], [0], [1], [0, 0, 1, 1], [], []>} : vector<128x128xf32>, vector<128x128xf32>, vector<128x128xf32> -> vector<128x128xf32>
    %98 = vector.broadcast %2 : vector<1x128xf32> to vector<128x128xf32>
    %99 = arith.addf %97, %98 : vector<128x128xf32>
    %100 = arith.addf %99, %95 : vector<128x128xf32>
    %101 = arith.negf %100 : vector<128x128xf32>
    %102 = math.exp %101 : vector<128x128xf32>
    %cst_54 = arith.constant 1.000000e+00 : f32
    %103 = vector.broadcast %cst_54 : f32 to vector<128x128xf32>
    %104 = arith.addf %103, %102 : vector<128x128xf32>
    %105 = arith.divf %103, %104 : vector<128x128xf32>
    %106 = arith.mulf %100, %105 : vector<128x128xf32>
    %cst_55 = arith.constant dense<0.000000e+00> : vector<128xf32>
    %107 = vector.multi_reduction <add>, %106, %cst_55 [1] : vector<128x128xf32> to vector<128xf32>
    %108 = vector.shape_cast %107 : vector<128xf32> to vector<128x1xf32>
    %cst_56 = arith.constant 3.125000e-02 : f32
    %109 = vector.broadcast %cst_56 : f32 to vector<128x1xf32>
    %110 = arith.mulf %108, %109 : vector<128x1xf32>
    %111 = arith.mulf %106, %106 : vector<128x128xf32>
    %cst_57 = arith.constant dense<0.000000e+00> : vector<128xf32>
    %112 = vector.multi_reduction <add>, %111, %cst_57 [1] : vector<128x128xf32> to vector<128xf32>
    %113 = vector.shape_cast %112 : vector<128xf32> to vector<128x1xf32>
    %cst_58 = arith.constant 3.125000e-02 : f32
    %114 = vector.broadcast %cst_58 : f32 to vector<128x1xf32>
    %115 = arith.mulf %113, %114 : vector<128x1xf32>
    %116 = arith.mulf %110, %110 : vector<128x1xf32>
    %117 = arith.subf %115, %116 : vector<128x1xf32>
    %118 = vector.broadcast %110 : vector<128x1xf32> to vector<128x128xf32>
    %119 = arith.subf %106, %118 : vector<128x128xf32>
    %cst_59 = arith.constant 1.000000e-01 : f32
    %120 = vector.broadcast %cst_59 : f32 to vector<128x1xf32>
    %121 = arith.addf %117, %120 : vector<128x1xf32>
    %122 = math.rsqrt %121 : vector<128x1xf32>
    %123 = vector.broadcast %122 : vector<128x1xf32> to vector<128x128xf32>
    %124 = arith.mulf %119, %123 : vector<128x128xf32>
    %125 = vector.broadcast %7 : vector<1x128xf32> to vector<128x128xf32>
    %126 = arith.mulf %124, %125 : vector<128x128xf32>
    %127 = vector.broadcast %12 : vector<1x128xf32> to vector<128x128xf32>
    %128 = arith.addf %126, %127 : vector<128x128xf32>
    %129 = arith.addf %95, %128 : vector<128x128xf32>
    %c0_60 = arith.constant 0 : index
    %c0_61 = arith.constant 0 : index
    %130 = vector.load %arg6[%c0_60, %c0_61] : memref<128x128xf32, #tpu.memory_space<vmem>>, vector<128x128xf32>
    %cst_62 = arith.constant dense<0.000000e+00> : vector<128x128xf32>
    %131 = tpu.matmul %128, %130, %cst_62 {dimension_numbers = #tpu.dot_dimension_numbers<[1], [0], [0], [1], [0, 0, 1, 1], [], []>} : vector<128x128xf32>, vector<128x128xf32>, vector<128x128xf32> -> vector<128x128xf32>
    %132 = vector.broadcast %3 : vector<1x128xf32> to vector<128x128xf32>
    %133 = arith.addf %131, %132 : vector<128x128xf32>
    %134 = arith.addf %133, %129 : vector<128x128xf32>
    %135 = arith.negf %134 : vector<128x128xf32>
    %136 = math.exp %135 : vector<128x128xf32>
    %cst_63 = arith.constant 1.000000e+00 : f32
    %137 = vector.broadcast %cst_63 : f32 to vector<128x128xf32>
    %138 = arith.addf %137, %136 : vector<128x128xf32>
    %139 = arith.divf %137, %138 : vector<128x128xf32>
    %140 = arith.mulf %134, %139 : vector<128x128xf32>
    %cst_64 = arith.constant dense<0.000000e+00> : vector<128xf32>
    %141 = vector.multi_reduction <add>, %140, %cst_64 [1] : vector<128x128xf32> to vector<128xf32>
    %142 = vector.shape_cast %141 : vector<128xf32> to vector<128x1xf32>
    %cst_65 = arith.constant 3.125000e-02 : f32
    %143 = vector.broadcast %cst_65 : f32 to vector<128x1xf32>
    %144 = arith.mulf %142, %143 : vector<128x1xf32>
    %145 = arith.mulf %140, %140 : vector<128x128xf32>
    %cst_66 = arith.constant dense<0.000000e+00> : vector<128xf32>
    %146 = vector.multi_reduction <add>, %145, %cst_66 [1] : vector<128x128xf32> to vector<128xf32>
    %147 = vector.shape_cast %146 : vector<128xf32> to vector<128x1xf32>
    %cst_67 = arith.constant 3.125000e-02 : f32
    %148 = vector.broadcast %cst_67 : f32 to vector<128x1xf32>
    %149 = arith.mulf %147, %148 : vector<128x1xf32>
    %150 = arith.mulf %144, %144 : vector<128x1xf32>
    %151 = arith.subf %149, %150 : vector<128x1xf32>
    %152 = vector.broadcast %144 : vector<128x1xf32> to vector<128x128xf32>
    %153 = arith.subf %140, %152 : vector<128x128xf32>
    %cst_68 = arith.constant 1.000000e-01 : f32
    %154 = vector.broadcast %cst_68 : f32 to vector<128x1xf32>
    %155 = arith.addf %151, %154 : vector<128x1xf32>
    %156 = math.rsqrt %155 : vector<128x1xf32>
    %157 = vector.broadcast %156 : vector<128x1xf32> to vector<128x128xf32>
    %158 = arith.mulf %153, %157 : vector<128x128xf32>
    %159 = vector.broadcast %8 : vector<1x128xf32> to vector<128x128xf32>
    %160 = arith.mulf %158, %159 : vector<128x128xf32>
    %161 = vector.broadcast %13 : vector<1x128xf32> to vector<128x128xf32>
    %162 = arith.addf %160, %161 : vector<128x128xf32>
    %163 = arith.addf %129, %162 : vector<128x128xf32>
    %c0_69 = arith.constant 0 : index
    %c0_70 = arith.constant 0 : index
    %164 = vector.load %arg7[%c0_69, %c0_70] : memref<128x128xf32, #tpu.memory_space<vmem>>, vector<128x128xf32>
    %cst_71 = arith.constant dense<0.000000e+00> : vector<128x128xf32>
    %165 = tpu.matmul %162, %164, %cst_71 {dimension_numbers = #tpu.dot_dimension_numbers<[1], [0], [0], [1], [0, 0, 1, 1], [], []>} : vector<128x128xf32>, vector<128x128xf32>, vector<128x128xf32> -> vector<128x128xf32>
    %166 = vector.broadcast %4 : vector<1x128xf32> to vector<128x128xf32>
    %167 = arith.addf %165, %166 : vector<128x128xf32>
    %168 = arith.addf %167, %163 : vector<128x128xf32>
    %169 = arith.negf %168 : vector<128x128xf32>
    %170 = math.exp %169 : vector<128x128xf32>
    %cst_72 = arith.constant 1.000000e+00 : f32
    %171 = vector.broadcast %cst_72 : f32 to vector<128x128xf32>
    %172 = arith.addf %171, %170 : vector<128x128xf32>
    %173 = arith.divf %171, %172 : vector<128x128xf32>
    %174 = arith.mulf %168, %173 : vector<128x128xf32>
    %cst_73 = arith.constant dense<0.000000e+00> : vector<128xf32>
    %175 = vector.multi_reduction <add>, %174, %cst_73 [1] : vector<128x128xf32> to vector<128xf32>
    %176 = vector.shape_cast %175 : vector<128xf32> to vector<128x1xf32>
    %cst_74 = arith.constant 3.125000e-02 : f32
    %177 = vector.broadcast %cst_74 : f32 to vector<128x1xf32>
    %178 = arith.mulf %176, %177 : vector<128x1xf32>
    %179 = arith.mulf %174, %174 : vector<128x128xf32>
    %cst_75 = arith.constant dense<0.000000e+00> : vector<128xf32>
    %180 = vector.multi_reduction <add>, %179, %cst_75 [1] : vector<128x128xf32> to vector<128xf32>
    %181 = vector.shape_cast %180 : vector<128xf32> to vector<128x1xf32>
    %cst_76 = arith.constant 3.125000e-02 : f32
    %182 = vector.broadcast %cst_76 : f32 to vector<128x1xf32>
    %183 = arith.mulf %181, %182 : vector<128x1xf32>
    %184 = arith.mulf %178, %178 : vector<128x1xf32>
    %185 = arith.subf %183, %184 : vector<128x1xf32>
    %186 = vector.broadcast %178 : vector<128x1xf32> to vector<128x128xf32>
    %187 = arith.subf %174, %186 : vector<128x128xf32>
    %cst_77 = arith.constant 1.000000e-01 : f32
    %188 = vector.broadcast %cst_77 : f32 to vector<128x1xf32>
    %189 = arith.addf %185, %188 : vector<128x1xf32>
    %190 = math.rsqrt %189 : vector<128x1xf32>
    %191 = vector.broadcast %190 : vector<128x1xf32> to vector<128x128xf32>
    %192 = arith.mulf %187, %191 : vector<128x128xf32>
    %193 = vector.broadcast %9 : vector<1x128xf32> to vector<128x128xf32>
    %194 = arith.mulf %192, %193 : vector<128x128xf32>
    %195 = vector.broadcast %14 : vector<1x128xf32> to vector<128x128xf32>
    %196 = arith.addf %194, %195 : vector<128x128xf32>
    %c0_78 = arith.constant 0 : index
    %c0_79 = arith.constant 0 : index
    %197 = vector.load %arg8[%c0_78, %c0_79] : memref<128x256xf32, #tpu.memory_space<vmem>>, vector<128x256xf32>
    %cst_80 = arith.constant dense<0.000000e+00> : vector<128x256xf32>
    %198 = tpu.matmul %196, %197, %cst_80 {dimension_numbers = #tpu.dot_dimension_numbers<[1], [0], [0], [1], [0, 0, 1, 1], [], []>} : vector<128x128xf32>, vector<128x256xf32>, vector<128x256xf32> -> vector<128x256xf32>
    %199 = vector.extract_strided_slice %198 {offsets = [0, 0], sizes = [128, 128], strides = [1, 1]} : vector<128x256xf32> to vector<128x128xf32>
    %200 = vector.broadcast %15 : vector<1x128xf32> to vector<128x128xf32>
    %201 = arith.addf %199, %200 : vector<128x128xf32>
    %202 = vector.extract_strided_slice %198 {offsets = [0, 128], sizes = [128, 128], strides = [1, 1]} : vector<128x256xf32> to vector<128x128xf32>
    %203 = vector.broadcast %16 : vector<1x128xf32> to vector<128x128xf32>
    %204 = arith.addf %202, %203 : vector<128x128xf32>
    %205 = vector.broadcast %17 : vector<1x128xf32> to vector<128x128xf32>
    %206 = arith.subf %23, %205 : vector<128x128xf32>
    %cst_81 = arith.constant 1.83787704 : f32
    %207 = vector.broadcast %cst_81 : f32 to vector<1x128xf32>
    %208 = arith.addf %18, %207 : vector<1x128xf32>
    %209 = arith.mulf %206, %206 : vector<128x128xf32>
    %210 = vector.broadcast %19 : vector<1x128xf32> to vector<128x128xf32>
    %211 = arith.mulf %209, %210 : vector<128x128xf32>
    %212 = vector.broadcast %208 : vector<1x128xf32> to vector<128x128xf32>
    %213 = arith.addf %212, %211 : vector<128x128xf32>
    %cst_82 = arith.constant -5.000000e-01 : f32
    %214 = vector.broadcast %cst_82 : f32 to vector<128x128xf32>
    %215 = arith.mulf %214, %213 : vector<128x128xf32>
    %cst_83 = arith.constant -1.897120e+00 : f32
    %216 = vector.broadcast %cst_83 : f32 to vector<128x128xf32>
    %217 = arith.addf %215, %216 : vector<128x128xf32>
    %cst_84 = arith.constant 0.000000e+00 : f32
    %218 = vector.broadcast %cst_84 : f32 to vector<128x128xf32>
    %219 = arith.subf %218, %204 : vector<128x128xf32>
    %220 = math.exp %219 : vector<128x128xf32>
    %221 = arith.subf %23, %201 : vector<128x128xf32>
    %cst_85 = arith.constant 1.83787704 : f32
    %222 = vector.broadcast %cst_85 : f32 to vector<128x128xf32>
    %223 = arith.addf %204, %222 : vector<128x128xf32>
    %224 = arith.mulf %221, %221 : vector<128x128xf32>
    %225 = arith.mulf %224, %220 : vector<128x128xf32>
    %226 = arith.addf %223, %225 : vector<128x128xf32>
    %cst_86 = arith.constant -5.000000e-01 : f32
    %227 = vector.broadcast %cst_86 : f32 to vector<128x128xf32>
    %228 = arith.mulf %227, %226 : vector<128x128xf32>
    %cst_87 = arith.constant -0.287682086 : f32
    %229 = vector.broadcast %cst_87 : f32 to vector<128x128xf32>
    %230 = arith.addf %228, %229 : vector<128x128xf32>
    %231 = vector.broadcast %17 : vector<1x128xf32> to vector<128x128xf32>
    %232 = arith.subf %23, %231 : vector<128x128xf32>
    %cst_88 = arith.constant 1.83787704 : f32
    %233 = vector.broadcast %cst_88 : f32 to vector<1x128xf32>
    %234 = arith.addf %20, %233 : vector<1x128xf32>
    %235 = arith.mulf %232, %232 : vector<128x128xf32>
    %236 = vector.broadcast %21 : vector<1x128xf32> to vector<128x128xf32>
    %237 = arith.mulf %235, %236 : vector<128x128xf32>
    %238 = vector.broadcast %234 : vector<1x128xf32> to vector<128x128xf32>
    %239 = arith.addf %238, %237 : vector<128x128xf32>
    %cst_89 = arith.constant -5.000000e-01 : f32
    %240 = vector.broadcast %cst_89 : f32 to vector<128x128xf32>
    %241 = arith.mulf %240, %239 : vector<128x128xf32>
    %cst_90 = arith.constant -2.30258512 : f32
    %242 = vector.broadcast %cst_90 : f32 to vector<128x128xf32>
    %243 = arith.addf %241, %242 : vector<128x128xf32>
    %244 = arith.maximumf %217, %230 : vector<128x128xf32>
    %245 = arith.maximumf %244, %243 : vector<128x128xf32>
    %246 = arith.subf %217, %245 : vector<128x128xf32>
    %247 = math.exp %246 : vector<128x128xf32>
    %248 = arith.subf %230, %245 : vector<128x128xf32>
    %249 = math.exp %248 : vector<128x128xf32>
    %250 = arith.addf %247, %249 : vector<128x128xf32>
    %251 = arith.subf %243, %245 : vector<128x128xf32>
    %252 = math.exp %251 : vector<128x128xf32>
    %253 = arith.addf %250, %252 : vector<128x128xf32>
    %254 = math.log %253 : vector<128x128xf32>
    %255 = arith.addf %245, %254 : vector<128x128xf32>
    %c0_91 = arith.constant 0 : index
    %c0_92 = arith.constant 0 : index
    %256 = vector.load %arg11[%c0_91, %c0_92] : memref<128x128xf32, #tpu.memory_space<vmem>>, vector<128x128xf32>
    tpu.vector_store %arg11[%c0_91, %c0_92], %255 {strides = array<i32>} : memref<128x128xf32, #tpu.memory_space<vmem>>, vector<128x128xf32>,
    return
  }
  func.func @transform_0(%arg0: i32) -> (i32, i32) {
    %c0_i32 = arith.constant 0 : i32
    %c0_i32_0 = arith.constant 0 : i32
    return %arg0, %c0_i32 : i32, i32
  }
  func.func @transform_1(%arg0: i32) -> (i32, i32) {
    %c0_i32 = arith.constant 0 : i32
    %c0_i32_0 = arith.constant 0 : i32
    return %arg0, %c0_i32 : i32, i32
  }
  func.func @transform_2(%arg0: i32) -> (i32, i32) {
    %c0_i32 = arith.constant 0 : i32
    %c0_i32_0 = arith.constant 0 : i32
    %c0_i32_1 = arith.constant 0 : i32
    return %c0_i32, %c0_i32_0 : i32, i32
  }
  func.func @transform_3(%arg0: i32) -> (i32, i32) {
    %c0_i32 = arith.constant 0 : i32
    %c0_i32_0 = arith.constant 0 : i32
    %c0_i32_1 = arith.constant 0 : i32
    return %c0_i32, %c0_i32_0 : i32, i32
  }
  func.func @transform_4(%arg0: i32) -> (i32, i32) {
    %c0_i32 = arith.constant 0 : i32
    %c0_i32_0 = arith.constant 0 : i32
    %c0_i32_1 = arith.constant 0 : i32
    return %c0_i32, %c0_i32_0 : i32, i32
  }
  func.func @transform_5(%arg0: i32) -> (i32, i32) {
    %c0_i32 = arith.constant 0 : i32
    %c0_i32_0 = arith.constant 0 : i32
    %c0_i32_1 = arith.constant 0 : i32
    return %c0_i32, %c0_i32_0 : i32, i32
  }
  func.func @transform_6(%arg0: i32) -> (i32, i32) {
    %c0_i32 = arith.constant 0 : i32
    %c0_i32_0 = arith.constant 0 : i32
    %c0_i32_1 = arith.constant 0 : i32
    return %c0_i32, %c0_i32_0 : i32, i32
  }
  func.func @transform_7(%arg0: i32) -> (i32, i32) {
    %c0_i32 = arith.constant 0 : i32
    %c0_i32_0 = arith.constant 0 : i32
    %c0_i32_1 = arith.constant 0 : i32
    return %c0_i32, %c0_i32_0 : i32, i32
  }
  func.func @transform_8(%arg0: i32) -> (i32, i32) {
    %c0_i32 = arith.constant 0 : i32
    %c0_i32_0 = arith.constant 0 : i32
    %c0_i32_1 = arith.constant 0 : i32
    return %c0_i32, %c0_i32_0 : i32, i32
  }
  func.func @transform_9(%arg0: i32) -> (i32, i32) {
    %c0_i32 = arith.constant 0 : i32
    %c0_i32_0 = arith.constant 0 : i32
    %c0_i32_1 = arith.constant 0 : i32
    return %c0_i32, %c0_i32_0 : i32, i32
  }
  func.func @transform_10(%arg0: i32) -> (i32, i32) {
    %c0_i32 = arith.constant 0 : i32
    %c0_i32_0 = arith.constant 0 : i32
    return %arg0, %c0_i32 : i32, i32
  }
}

</mosaic_0001>

<llo_original>
// kernel: tpu_custom_call.1
$region0: #{tpu_custom_call.1}
  #allocation0 [shape = 'u32[]', space=smem, size = 0x4, offset = 0x4, fixed_abs, tag = 'smem constant byte address 0x4 - core index']
  #allocation1 [shape = 'u32[144,128]{1,0:T(1,128)}', space=vmem, size = 0x12000, scoped, tag = 'internal scratch']
  %s0 = inlined_call_operand.vmem [shape: f32[256,64], index: 0, kind: input, shape index: {}]
  %s1 = inlined_call_operand.vmem [shape: f32[256,128], index: 1, kind: input, shape index: {}]
  %s2 = inlined_call_operand.hbm [shape: f32[64,128], index: 2, kind: input, shape index: {}]
  %s3 = inlined_call_operand.vmem [shape: f32[128,128], index: 3, kind: input, shape index: {}]
  %s4 = inlined_call_operand.hbm [shape: f32[128,128], index: 4, kind: input, shape index: {}]
  %s5 = inlined_call_operand.hbm [shape: f32[128,128], index: 5, kind: input, shape index: {}]
  %s6 = inlined_call_operand.hbm [shape: f32[128,128], index: 6, kind: input, shape index: {}]
  %s7 = inlined_call_operand.hbm [shape: f32[128,256], index: 7, kind: input, shape index: {}]
  %s8 = inlined_call_operand.vmem [shape: f32[15,128], index: 8, kind: input, shape index: {}]
  %s9 = inlined_call_operand.vmem [shape: f32[7,128], index: 9, kind: input, shape index: {}]
  %s10 = inlined_call_operand.hbm [shape: f32[256,128], index: 10, kind: output, shape index: {}]
  %s11 = sld [smem:[#allocation0]]
  $region93: #{tpu_custom_call.1} parent=0
    _
  %s13 = ssub.s32 1, %s11
  %s14 = scalar_select 0, %s13, %s11
  $region1: #{tpu_custom_call.1} parent=0
    #allocation2 [shape = 'u8[32768]{0}', space=vmem, size = 0x8000, scoped, tag = 'input window, operand 2, single buffered']
    #allocation3 [shape = 's32[2]{0}', space=sflag, size = 0x8, scoped, tag = 'scoped memory for tpu_custom_call.1']
    #allocation4 [shape = 's32[2]{0}', space=sflag, size = 0x8, scoped, tag = 'scoped memory for tpu_custom_call.1']
    #allocation5 [shape = 'u8[65536]{0}', space=vmem, size = 0x10000, scoped, tag = 'input window, operand 4, single buffered']
    #allocation6 [shape = 's32[1]{0}', space=sflag, size = 0x4, scoped, tag = 'scoped memory for tpu_custom_call.1']
    #allocation7 [shape = 'u8[65536]{0}', space=vmem, size = 0x10000, scoped, tag = 'input window, operand 5, single buffered']
    #allocation8 [shape = 'u8[65536]{0}', space=vmem, size = 0x10000, scoped, tag = 'input window, operand 6, single buffered']
    #allocation9 [shape = 's32[1]{0}', space=sflag, size = 0x4, scoped, tag = 'scoped memory for tpu_custom_call.1']
    #allocation10 [shape = 'u8[131072]{0}', space=vmem, size = 0x20000, scoped, tag = 'input window, operand 7, single buffered']
    #allocation11 [shape = 'u8[131072]{0}', space=vmem, size = 0x20000, scoped, tag = 'output window, operand 0']
    %15 = vsyncpa [#allocation3], 0
    %16 = vsyncpa [#allocation6], 0
    %17 = vsyncpa [#allocation9], 0
    %18 = vsyncpa [#allocation4], 0
    %s19 = scalar_lea.sflag [#allocation4], 1
    %20 = vsyncpa %s19, 0
    loop: start=0, step=1, limit=4
    $region2: #{tpu_custom_call.1} parent=1 // loop_pre_header
      _
    $region3: #{tpu_custom_call.1} parent=1 // loop_header
      %s22 = sphi 0, %s26
      %p23 = scmp.ge.s32.totalorder %s22, 4
      %s32 = sphi 0, %s34
      %s35 = sphi 0, %s32
      %s36 = sphi 0, %s35
      %s52 = sphi 0, %s36
      %s58 = sphi 0, %s60
      %s61 = sphi 0, %s58
      %s62 = sphi 0, %s61
      %s78 = sphi 0, %s62
      %s82 = sphi 0, %s82
      %s84 = sphi 0, %s82
      %s85 = sphi 0, %s84
      %s99 = sphi 0, %s85
      %s103 = sphi 0, %s103
      %s105 = sphi 0, %s103
      %s106 = sphi 0, %s105
      %s120 = sphi 0, %s106
      %s124 = sphi 0, %s124
      %s126 = sphi 0, %s124
      %s127 = sphi 0, %s126
      %s141 = sphi 0, %s127
      %s145 = sphi 0, %s145
      %s147 = sphi 0, %s145
      %s148 = sphi 0, %s147
      %s162 = sphi 0, %s148
      %s166 = sphi 0, %s166
      %s168 = sphi 0, %s166
      %s169 = sphi 0, %s168
      %s183 = sphi 0, %s169
      %s187 = sphi 0, %s187
      %s189 = sphi 0, %s187
      %s190 = sphi 0, %s189
      %s204 = sphi 0, %s190
      %s208 = sphi 0, %s208
      %s210 = sphi 0, %s208
      %s211 = sphi 0, %s210
      %s225 = sphi 0, %s211
      %s229 = sphi 0, %s229
      %s231 = sphi 0, %s229
      %s232 = sphi 0, %s231
      %s246 = sphi 0, %s232
      %s252 = sphi 0, %s254
      %s255 = sphi 0, %s252
      %s256 = sphi 0, %s255
      %s272 = sphi 0, %s256
    $region4: #{tpu_custom_call.1} parent=1 // loop_header_branch
      %25 = sbr.rel (%p23) target = $region8
    $region5: #{tpu_custom_call.1} parent=1 // loop_body
      %s27 = ssub.s32 %s22, 1
      %s28 = ssub.s32 %s22, 2
      %s29 = sadd.s32 %s22, 1
      %s30 = ssub.s32 %s22, %s29
      %p31 = scmp.eq.s32.totalorder %s30, 0
      %s33 = sadd.s32 %s32, 1
      %s34 = scalar_select %p31, %s32, %s33
      %p37 = pneg %p31
      %p38 = scmp.eq.s32.totalorder %s22, 1
      %p39 = por %p37, %p38
      %p40 = scmp.ne.s32.totalorder %s32, %s35
      %p41 = scmp.eq.s32.totalorder %s22, 0
      %p42 = por %p40, %p41
      %p43 = scmp.ne.s32.totalorder %s32, %s35
      %p44 = scmp.eq.s32.totalorder %s27, 1
      %p45 = por %p43, %p44
      %p46 = scmp.ne.s32.totalorder %s35, %s36
      %p47 = scmp.eq.s32.totalorder %s27, 0
      %p48 = por %p46, %p47
      %p49 = scmp.ne.s32.totalorder %s35, %s36
      %p50 = scmp.eq.s32.totalorder %s28, 1
      %p51 = por %p49, %p50
      %p53 = scmp.ne.s32.totalorder %s36, %s52
      %p54 = scmp.eq.s32.totalorder %s28, 0
      %p55 = por %p53, %p54
      %s56 = ssub.s32 %s22, %s29
      %p57 = scmp.eq.s32.totalorder %s56, 0
      %s59 = sadd.s32 %s58, 1
      %s60 = scalar_select %p57, %s58, %s59
      %p63 = pneg %p57
      %p64 = scmp.eq.s32.totalorder %s22, 1
      %p65 = por %p63, %p64
      %p66 = scmp.ne.s32.totalorder %s58, %s61
      %p67 = scmp.eq.s32.totalorder %s22, 0
      %p68 = por %p66, %p67
      %p69 = scmp.ne.s32.totalorder %s58, %s61
      %p70 = scmp.eq.s32.totalorder %s27, 1
      %p71 = por %p69, %p70
      %p72 = scmp.ne.s32.totalorder %s61, %s62
      %p73 = scmp.eq.s32.totalorder %s27, 0
      %p74 = por %p72, %p73
      %p75 = scmp.ne.s32.totalorder %s61, %s62
      %p76 = scmp.eq.s32.totalorder %s28, 1
      %p77 = por %p75, %p76
      %p79 = scmp.ne.s32.totalorder %s62, %s78
      %p80 = scmp.eq.s32.totalorder %s28, 0
      %p81 = por %p79, %p80
      %s83 = sadd.s32 %s82, 1
      %p86 = scmp.eq.s32.totalorder %s22, 1
      %p87 = scmp.ne.s32.totalorder %s82, %s84
      %p88 = scmp.eq.s32.totalorder %s22, 0
      %p89 = por %p87, %p88
      %p90 = scmp.ne.s32.totalorder %s82, %s84
      %p91 = scmp.eq.s32.totalorder %s27, 1
      %p92 = por %p90, %p91
      %p93 = scmp.ne.s32.totalorder %s84, %s85
      %p94 = scmp.eq.s32.totalorder %s27, 0
      %p95 = por %p93, %p94
      %p96 = scmp.ne.s32.totalorder %s84, %s85
      %p97 = scmp.eq.s32.totalorder %s28, 1
      %p98 = por %p96, %p97
      %p100 = scmp.ne.s32.totalorder %s85, %s99
      %p101 = scmp.eq.s32.totalorder %s28, 0
      %p102 = por %p100, %p101
      %s104 = sadd.s32 %s103, 1
      %p107 = scmp.eq.s32.totalorder %s22, 1
      %p108 = scmp.ne.s32.totalorder %s103, %s105
      %p109 = scmp.eq.s32.totalorder %s22, 0
      %p110 = por %p108, %p109
      %p111 = scmp.ne.s32.totalorder %s103, %s105
      %p112 = scmp.eq.s32.totalorder %s27, 1
      %p113 = por %p111, %p112
      %p114 = scmp.ne.s32.totalorder %s105, %s106
      %p115 = scmp.eq.s32.totalorder %s27, 0
      %p116 = por %p114, %p115
      %p117 = scmp.ne.s32.totalorder %s105, %s106
      %p118 = scmp.eq.s32.totalorder %s28, 1
      %p119 = por %p117, %p118
      %p121 = scmp.ne.s32.totalorder %s106, %s120
      %p122 = scmp.eq.s32.totalorder %s28, 0
      %p123 = por %p121, %p122
      %s125 = sadd.s32 %s124, 1
      %p128 = scmp.eq.s32.totalorder %s22, 1
      %p129 = scmp.ne.s32.totalorder %s124, %s126
      %p130 = scmp.eq.s32.totalorder %s22, 0
      %p131 = por %p129, %p130
      %p132 = scmp.ne.s32.totalorder %s124, %s126
      %p133 = scmp.eq.s32.totalorder %s27, 1
      %p134 = por %p132, %p133
      %p135 = scmp.ne.s32.totalorder %s126, %s127
      %p136 = scmp.eq.s32.totalorder %s27, 0
      %p137 = por %p135, %p136
      %p138 = scmp.ne.s32.totalorder %s126, %s127
      %p139 = scmp.eq.s32.totalorder %s28, 1
      %p140 = por %p138, %p139
      %p142 = scmp.ne.s32.totalorder %s127, %s141
      %p143 = scmp.eq.s32.totalorder %s28, 0
      %p144 = por %p142, %p143
      %s146 = sadd.s32 %s145, 1
      %p149 = scmp.eq.s32.totalorder %s22, 1
      %p150 = scmp.ne.s32.totalorder %s145, %s147
      %p151 = scmp.eq.s32.totalorder %s22, 0
      %p152 = por %p150, %p151
      %p153 = scmp.ne.s32.totalorder %s145, %s147
      %p154 = scmp.eq.s32.totalorder %s27, 1
      %p155 = por %p153, %p154
      %p156 = scmp.ne.s32.totalorder %s147, %s148
      %p157 = scmp.eq.s32.totalorder %s27, 0
      %p158 = por %p156, %p157
      %p159 = scmp.ne.s32.totalorder %s147, %s148
      %p160 = scmp.eq.s32.totalorder %s28, 1
      %p161 = por %p159, %p160
      %p163 = scmp.ne.s32.totalorder %s148, %s162
      %p164 = scmp.eq.s32.totalorder %s28, 0
      %p165 = por %p163, %p164
      %s167 = sadd.s32 %s166, 1
      %p170 = scmp.eq.s32.totalorder %s22, 1
      %p171 = scmp.ne.s32.totalorder %s166, %s168
      %p172 = scmp.eq.s32.totalorder %s22, 0
      %p173 = por %p171, %p172
      %p174 = scmp.ne.s32.totalorder %s166, %s168
      %p175 = scmp.eq.s32.totalorder %s27, 1
      %p176 = por %p174, %p175
      %p177 = scmp.ne.s32.totalorder %s168, %s169
      %p178 = scmp.eq.s32.totalorder %s27, 0
      %p179 = por %p177, %p178
      %p180 = scmp.ne.s32.totalorder %s168, %s169
      %p181 = scmp.eq.s32.totalorder %s28, 1
      %p182 = por %p180, %p181
      %p184 = scmp.ne.s32.totalorder %s169, %s183
      %p185 = scmp.eq.s32.totalorder %s28, 0
      %p186 = por %p184, %p185
      %s188 = sadd.s32 %s187, 1
      %p191 = scmp.eq.s32.totalorder %s22, 1
      %p192 = scmp.ne.s32.totalorder %s187, %s189
      %p193 = scmp.eq.s32.totalorder %s22, 0
      %p194 = por %p192, %p193
      %p195 = scmp.ne.s32.totalorder %s187, %s189
      %p196 = scmp.eq.s32.totalorder %s27, 1
      %p197 = por %p195, %p196
      %p198 = scmp.ne.s32.totalorder %s189, %s190
      %p199 = scmp.eq.s32.totalorder %s27, 0
      %p200 = por %p198, %p199
      %p201 = scmp.ne.s32.totalorder %s189, %s190
      %p202 = scmp.eq.s32.totalorder %s28, 1
      %p203 = por %p201, %p202
      %p205 = scmp.ne.s32.totalorder %s190, %s204
      %p206 = scmp.eq.s32.totalorder %s28, 0
      %p207 = por %p205, %p206
      %s209 = sadd.s32 %s208, 1
      %p212 = scmp.eq.s32.totalorder %s22, 1
      %p213 = scmp.ne.s32.totalorder %s208, %s210
      %p214 = scmp.eq.s32.totalorder %s22, 0
      %p215 = por %p213, %p214
      %p216 = scmp.ne.s32.totalorder %s208, %s210
      %p217 = scmp.eq.s32.totalorder %s27, 1
      %p218 = por %p216, %p217
      %p219 = scmp.ne.s32.totalorder %s210, %s211
      %p220 = scmp.eq.s32.totalorder %s27, 0
      %p221 = por %p219, %p220
      %p222 = scmp.ne.s32.totalorder %s210, %s211
      %p223 = scmp.eq.s32.totalorder %s28, 1
      %p224 = por %p222, %p223
      %p226 = scmp.ne.s32.totalorder %s211, %s225
      %p227 = scmp.eq.s32.totalorder %s28, 0
      %p228 = por %p226, %p227
      %s230 = sadd.s32 %s229, 1
      %p233 = scmp.eq.s32.totalorder %s22, 1
      %p234 = scmp.ne.s32.totalorder %s229, %s231
      %p235 = scmp.eq.s32.totalorder %s22, 0
      %p236 = por %p234, %p235
      %p237 = scmp.ne.s32.totalorder %s229, %s231
      %p238 = scmp.eq.s32.totalorder %s27, 1
      %p239 = por %p237, %p238
      %p240 = scmp.ne.s32.totalorder %s231, %s232
      %p241 = scmp.eq.s32.totalorder %s27, 0
      %p242 = por %p240, %p241
      %p243 = scmp.ne.s32.totalorder %s231, %s232
      %p244 = scmp.eq.s32.totalorder %s28, 1
      %p245 = por %p243, %p244
      %p247 = scmp.ne.s32.totalorder %s232, %s246
      %p248 = scmp.eq.s32.totalorder %s28, 0
      %p249 = por %p247, %p248
      %s250 = ssub.s32 %s22, %s29
      %p251 = scmp.eq.s32.totalorder %s250, 0
      %s253 = sadd.s32 %s252, 1
      %s254 = scalar_select %p251, %s252, %s253
      %p257 = pneg %p251
      %p258 = scmp.eq.s32.totalorder %s22, 1
      %p259 = por %p257, %p258
      %p260 = scmp.ne.s32.totalorder %s252, %s255
      %p261 = scmp.eq.s32.totalorder %s22, 0
      %p262 = por %p260, %p261
      %p263 = scmp.ne.s32.totalorder %s252, %s255
      %p264 = scmp.eq.s32.totalorder %s27, 1
      %p265 = por %p263, %p264
      %p266 = scmp.ne.s32.totalorder %s255, %s256
      %p267 = scmp.eq.s32.totalorder %s27, 0
      %p268 = por %p266, %p267
      %p269 = scmp.ne.s32.totalorder %s255, %s256
      %p270 = scmp.eq.s32.totalorder %s28, 1
      %p271 = por %p269, %p270
      %p273 = scmp.ne.s32.totalorder %s256, %s272
      %p274 = scmp.eq.s32.totalorder %s28, 0
      %p275 = por %p273, %p274
      %p276 = scmp.le.s32.totalorder 1, %s22
      %p277 = scmp.lt.s32.totalorder %s22, 3
      %p278 = pnand %p276, %p277
      %p279 = pneg %p278
      // Predicated region
      $region9: #{tpu_custom_call.1} parent=5 // pred_check
        _
      $region10: #{tpu_custom_call.1} parent=5 // pred_check_branch
        %281 = sbr.rel (%p278) target = $region12
      $region11: #{tpu_custom_call.1} parent=5 // pred_region
        %s282 = ssub.s32 %s22, 1
        // Predicated region
        $region13: #{tpu_custom_call.1} parent=11 // pred_check
          %p283 = pneg %p95
        $region14: #{tpu_custom_call.1} parent=11 // pred_check_branch
          %285 = sbr.rel (%p283) target = $region16
        $region15: #{tpu_custom_call.1} parent=11 // pred_region
          %s287 = ssub.s32 1024, 1024
          %288 = vsyncadd [#allocation3], %s287
          %s289 = sshll.u32 [#allocation2], 4
          %s290 = int_to_ptr.vmem [resolvable:$true] %s289
          %295 = dma.hbm_to_vmem [thread:$0]  %s2, 1024, %s290, [#allocation3], 128, 128, 8
        $region16: #{tpu_custom_call.1} parent=11 // pred_fallthru
          _
        // Predicated region
        $region17: #{tpu_custom_call.1} parent=11 // pred_check
          %p296 = pneg %p116
        $region18: #{tpu_custom_call.1} parent=11 // pred_check_branch
          %298 = sbr.rel (%p296) target = $region20
        $region19: #{tpu_custom_call.1} parent=11 // pred_region
          _
        $region20: #{tpu_custom_call.1} parent=11 // pred_fallthru
          _
        // Predicated region
        $region21: #{tpu_custom_call.1} parent=11 // pred_check
          %p299 = pneg %p137
        $region22: #{tpu_custom_call.1} parent=11 // pred_check_branch
          %301 = sbr.rel (%p299) target = $region24
        $region23: #{tpu_custom_call.1} parent=11 // pred_region
          %s303 = ssub.s32 2048, 2048
          %304 = vsyncadd [#allocation6], %s303
          %s305 = sshll.u32 [#allocation5], 4
          %s306 = int_to_ptr.vmem [resolvable:$true] %s305
          %311 = dma.hbm_to_vmem [thread:$0]  %s4, 2048, %s306, [#allocation6], 128, 128, 8
        $region24: #{tpu_custom_call.1} parent=11 // pred_fallthru
          _
        // Predicated region
        $region25: #{tpu_custom_call.1} parent=11 // pred_check
          %p312 = pneg %p158
        $region26: #{tpu_custom_call.1} parent=11 // pred_check_branch
          %314 = sbr.rel (%p312) target = $region28
        $region27: #{tpu_custom_call.1} parent=11 // pred_region
          %s316 = ssub.s32 2048, 2048
          %317 = vsyncadd [#allocation6], %s316
          %s318 = sshll.u32 [#allocation7], 4
          %s319 = int_to_ptr.vmem [resolvable:$true] %s318
          %324 = dma.hbm_to_vmem [thread:$0]  %s5, 2048, %s319, [#allocation6], 128, 128, 8
        $region28: #{tpu_custom_call.1} parent=11 // pred_fallthru
          _
        // Predicated region
        $region29: #{tpu_custom_call.1} parent=11 // pred_check
          %p325 = pneg %p179
        $region30: #{tpu_custom_call.1} parent=11 // pred_check_branch
          %327 = sbr.rel (%p325) target = $region32
        $region31: #{tpu_custom_call.1} parent=11 // pred_region
          %s329 = ssub.s32 2048, 2048
          %330 = vsyncadd [#allocation9], %s329
          %s331 = sshll.u32 [#allocation8], 4
          %s332 = int_to_ptr.vmem [resolvable:$true] %s331
          %337 = dma.hbm_to_vmem [thread:$0]  %s6, 2048, %s332, [#allocation9], 128, 128, 8
        $region32: #{tpu_custom_call.1} parent=11 // pred_fallthru
          _
        // Predicated region
        $region33: #{tpu_custom_call.1} parent=11 // pred_check
          %p338 = pneg %p200
        $region34: #{tpu_custom_call.1} parent=11 // pred_check_branch
          %340 = sbr.rel (%p338) target = $region36
        $region35: #{tpu_custom_call.1} parent=11 // pred_region
          %s342 = ssub.s32 4096, 4096
          %343 = vsyncadd [#allocation9], %s342
          %s344 = sshll.u32 [#allocation10], 4
          %s345 = int_to_ptr.vmem [resolvable:$true] %s344
          %350 = dma.hbm_to_vmem [thread:$0]  %s7, 4096, %s345, [#allocation9], 256, 256, 16
        $region36: #{tpu_custom_call.1} parent=11 // pred_fallthru
          _
        // Predicated region
        $region37: #{tpu_custom_call.1} parent=11 // pred_check
          %p351 = pneg %p221
        $region38: #{tpu_custom_call.1} parent=11 // pred_check_branch
          %353 = sbr.rel (%p351) target = $region40
        $region39: #{tpu_custom_call.1} parent=11 // pred_region
          _
        $region40: #{tpu_custom_call.1} parent=11 // pred_fallthru
          _
        // Predicated region
        $region41: #{tpu_custom_call.1} parent=11 // pred_check
          %p354 = pneg %p242
        $region42: #{tpu_custom_call.1} parent=11 // pred_check_branch
          %356 = sbr.rel (%p354) target = $region44
        $region43: #{tpu_custom_call.1} parent=11 // pred_region
          _
        $region44: #{tpu_custom_call.1} parent=11 // pred_fallthru
          _
      $region12: #{tpu_custom_call.1} parent=5 // pred_fallthru
        _
      %p357 = scmp.lt.s32.totalorder %s22, 2
      // Predicated region
      $region45: #{tpu_custom_call.1} parent=5 // pred_check
        %p358 = pneg %p357
      $region46: #{tpu_custom_call.1} parent=5 // pred_check_branch
        %360 = sbr.rel (%p358) target = $region48
      $region47: #{tpu_custom_call.1} parent=5 // pred_region
        // Predicated region
        $region49: #{tpu_custom_call.1} parent=47 // pred_check
          %p361 = pneg %p42
        $region50: #{tpu_custom_call.1} parent=47 // pred_check_branch
          %363 = sbr.rel (%p361) target = $region52
        $region51: #{tpu_custom_call.1} parent=47 // pred_region
          %s364 = smul.u32 16, %s22
          %p365 = scmp.lt.s32.totalorder %s364, 31
          %s366 = scalar_select %p365, %s364, 31
          %s367 = smul.addr %s366, 8
          %s368 = scalar_lea.vmem %s0, %s367
          %s369 = smul.u32 16, %s22
        $region52: #{tpu_custom_call.1} parent=47 // pred_fallthru
          _
        // Predicated region
        $region53: #{tpu_custom_call.1} parent=47 // pred_check
          %p370 = pneg %p68
        $region54: #{tpu_custom_call.1} parent=47 // pred_check_branch
          %372 = sbr.rel (%p370) target = $region56
        $region55: #{tpu_custom_call.1} parent=47 // pred_region
          %s373 = smul.u32 16, %s22
          %p374 = scmp.lt.s32.totalorder %s373, 31
          %s375 = scalar_select %p374, %s373, 31
          %s376 = smul.addr %s375, 8
          %s377 = scalar_lea.vmem %s1, %s376
          %s378 = smul.u32 16, %s22
        $region56: #{tpu_custom_call.1} parent=47 // pred_fallthru
          _
      $region48: #{tpu_custom_call.1} parent=5 // pred_fallthru
        _
      %p379 = scmp.le.s32.totalorder 1, %s22
      %p380 = scmp.lt.s32.totalorder %s22, 3
      %p381 = pnand %p379, %p380
      %p382 = pneg %p381
      // Predicated region
      $region57: #{tpu_custom_call.1} parent=5 // pred_check
        _
      $region58: #{tpu_custom_call.1} parent=5 // pred_check_branch
        %384 = sbr.rel (%p381) target = $region60
      $region59: #{tpu_custom_call.1} parent=5 // pred_region
        %s385 = ssub.s32 %s22, 1
        // Predicated region
        $region61: #{tpu_custom_call.1} parent=59 // pred_check
          %p386 = pneg %p95
        $region62: #{tpu_custom_call.1} parent=59 // pred_check_branch
          %388 = sbr.rel (%p386) target = $region64
        $region63: #{tpu_custom_call.1} parent=59 // pred_region
          %389 = dma.done [#allocation3], 1024
        $region64: #{tpu_custom_call.1} parent=59 // pred_fallthru
          _
        // Predicated region
        $region65: #{tpu_custom_call.1} parent=59 // pred_check
          %p390 = pneg %p137
        $region66: #{tpu_custom_call.1} parent=59 // pred_check_branch
          %392 = sbr.rel (%p390) target = $region68
        $region67: #{tpu_custom_call.1} parent=59 // pred_region
          %393 = dma.done [#allocation6], 2048
        $region68: #{tpu_custom_call.1} parent=59 // pred_fallthru
          _
        // Predicated region
        $region69: #{tpu_custom_call.1} parent=59 // pred_check
          %p394 = pneg %p158
        $region70: #{tpu_custom_call.1} parent=59 // pred_check_branch
          %396 = sbr.rel (%p394) target = $region72
        $region71: #{tpu_custom_call.1} parent=59 // pred_region
          %397 = dma.done [#allocation6], 2048
        $region72: #{tpu_custom_call.1} parent=59 // pred_fallthru
          _
        // Predicated region
        $region73: #{tpu_custom_call.1} parent=59 // pred_check
          %p398 = pneg %p179
        $region74: #{tpu_custom_call.1} parent=59 // pred_check_branch
          %400 = sbr.rel (%p398) target = $region76
        $region75: #{tpu_custom_call.1} parent=59 // pred_region
          %401 = dma.done [#allocation9], 2048
        $region76: #{tpu_custom_call.1} parent=59 // pred_fallthru
          _
        // Predicated region
        $region77: #{tpu_custom_call.1} parent=59 // pred_check
          %p402 = pneg %p200
        $region78: #{tpu_custom_call.1} parent=59 // pred_check_branch
          %404 = sbr.rel (%p402) target = $region80
        $region79: #{tpu_custom_call.1} parent=59 // pred_region
          %405 = dma.done [#allocation9], 4096
        $region80: #{tpu_custom_call.1} parent=59 // pred_fallthru
          _
        %s406 = smul.u32 16, %s27
        %p407 = scmp.lt.s32.totalorder %s406, 31
        %s408 = scalar_select %p407, %s406, 31
        %s409 = smul.addr %s408, 8
        %s410 = scalar_lea.vmem %s0, %s409
        %p411 = pneg %p48
        %p412 = pneg %p45
        %s413 = smul.u32 16, %s27
        %p414 = scmp.lt.s32.totalorder %s413, 31
        %s415 = scalar_select %p414, %s413, 31
        %s416 = smul.addr %s415, 8
        %s417 = scalar_lea.vmem %s1, %s416
        %p418 = pneg %p74
        %p419 = pneg %p71
        %p420 = pneg %p95
        %p421 = pneg %p92
        %p422 = pneg %p116
        %p423 = pneg %p113
        %p424 = pneg %p137
        %p425 = pneg %p134
        %p426 = pneg %p158
        %p427 = pneg %p155
        %p428 = pneg %p179
        %p429 = pneg %p176
        %p430 = pneg %p200
        %p431 = pneg %p197
        %p432 = pneg %p221
        %p433 = pneg %p218
        %p434 = pneg %p242
        %p435 = pneg %p239
        %p436 = pneg %p268
        %p437 = pneg %p265
        %s438 = sand.u32 %s255, 1
        %s439 = scalar_lea.sflag [#allocation4], %s438
        %s440 = sand.u32 %s255, 1
        %s441 = smul.addr %s440, 128
        %s442 = scalar_lea.vmem [#allocation11], %s441
        %s443 = smul.u32 16, %s27
        %p444 = scmp.lt.s32.totalorder %s443, 31
        %s445 = scalar_select %p444, %s443, 31
        %s446 = smul.addr %s445, 8
        %s447 = scalar_lea.vmem %s0, %s446
        %s448 = smul.u32 16, %s27
        %s449 = smul.u32 16, %s27
        %p450 = scmp.lt.s32.totalorder %s449, 31
        %s451 = scalar_select %p450, %s449, 31
        %s452 = smul.addr %s451, 8
        %s453 = scalar_lea.vmem %s1, %s452
        %s454 = smul.u32 16, %s27
        %s455 = smul.u32 16, %s27
        %v456 = vld [vmem:[%s8] sm:$0x1]
        %v457 = vld [vmem:[%s8 + $0x1] sm:$0x1]
        %v458 = vld [vmem:[%s8 + $0x2] sm:$0x1]
        %v459 = vld [vmem:[%s8 + $0x3] sm:$0x1]
        %v460 = vld [vmem:[%s8 + $0x4] sm:$0x1]
        %v461 = vld [vmem:[%s8 + $0x5] sm:$0x1]
        %v462 = vld [vmem:[%s8 + $0x6] sm:$0x1]
        %v463 = vld [vmem:[%s8 + $0x7] sm:$0x1]
        %v464 = vld [vmem:[%s8 + $0x8] sm:$0x1]
        %v465 = vld [vmem:[%s8 + $0x9] sm:$0x1]
        %v466 = vld [vmem:[%s8 + $0xa] sm:$0x1]
        %v467 = vld [vmem:[%s8 + $0xb] sm:$0x1]
        %v468 = vld [vmem:[%s8 + $0xc] sm:$0x1]
        %v469 = vld [vmem:[%s8 + $0xd] sm:$0x1]
        %v470 = vld [vmem:[%s8 + $0xe] sm:$0x1]
        %v471 = vld [vmem:[%s9] sm:$0x1]
        %v472 = vld [vmem:[%s9 + $0x1] sm:$0x1]
        %v473 = vld [vmem:[%s9 + $0x2] sm:$0x1]
        %v474 = vld [vmem:[%s9 + $0x3] sm:$0x1]
        %v475 = vld [vmem:[%s9 + $0x4] sm:$0x1]
        %v476 = vld [vmem:[%s9 + $0x5] sm:$0x1]
        %v477 = vld [vmem:[%s9 + $0x6] sm:$0x1]
        %v478 = vld [vmem:[%s447] sm:$0xff]
        %v479 = vld [vmem:[%s447 + $0x8] sm:$0xff]
        %v480 = vld [vmem:[%s447 + $0x10] sm:$0xff]
        %v481 = vld [vmem:[%s447 + $0x18] sm:$0xff]
        %v482 = vld [vmem:[%s447 + $0x20] sm:$0xff]
        %v483 = vld [vmem:[%s447 + $0x28] sm:$0xff]
        %v484 = vld [vmem:[%s447 + $0x30] sm:$0xff]
        %v485 = vld [vmem:[%s447 + $0x38] sm:$0xff]
        %v486 = vld [vmem:[%s447 + $0x40] sm:$0xff]
        %v487 = vld [vmem:[%s447 + $0x48] sm:$0xff]
        %v488 = vld [vmem:[%s447 + $0x50] sm:$0xff]
        %v489 = vld [vmem:[%s447 + $0x58] sm:$0xff]
        %v490 = vld [vmem:[%s447 + $0x60] sm:$0xff]
        %v491 = vld [vmem:[%s447 + $0x68] sm:$0xff]
        %v492 = vld [vmem:[%s447 + $0x70] sm:$0xff]
        %v493 = vld [vmem:[%s447 + $0x78] sm:$0xff]
        %v494 = vld [vmem:[%s453] sm:$0xff]
        %v495 = vld [vmem:[%s453 + $0x8] sm:$0xff]
        %v496 = vld [vmem:[%s453 + $0x10] sm:$0xff]
        %v497 = vld [vmem:[%s453 + $0x18] sm:$0xff]
        %v498 = vld [vmem:[%s453 + $0x20] sm:$0xff]
        %v499 = vld [vmem:[%s453 + $0x28] sm:$0xff]
        %v500 = vld [vmem:[%s453 + $0x30] sm:$0xff]
        %v501 = vld [vmem:[%s453 + $0x38] sm:$0xff]
        %v502 = vld [vmem:[%s453 + $0x40] sm:$0xff]
        %v503 = vld [vmem:[%s453 + $0x48] sm:$0xff]
        %v504 = vld [vmem:[%s453 + $0x50] sm:$0xff]
        %v505 = vld [vmem:[%s453 + $0x58] sm:$0xff]
        %v506 = vld [vmem:[%s453 + $0x60] sm:$0xff]
        %v507 = vld [vmem:[%s453 + $0x68] sm:$0xff]
        %v508 = vld [vmem:[%s453 + $0x70] sm:$0xff]
        %v509 = vld [vmem:[%s453 + $0x78] sm:$0xff]
        %v510 = vmul.f32 %v478, %v478
        %v511 = vmul.f32 %v479, %v479
        %v512 = vmul.f32 %v480, %v480
        %v513 = vmul.f32 %v481, %v481
        %v514 = vmul.f32 %v482, %v482
        %v515 = vmul.f32 %v483, %v483
        %v516 = vmul.f32 %v484, %v484
        %v517 = vmul.f32 %v485, %v485
        %v518 = vmul.f32 %v486, %v486
        %v519 = vmul.f32 %v487, %v487
        %v520 = vmul.f32 %v488, %v488
        %v521 = vmul.f32 %v489, %v489
        %v522 = vmul.f32 %v490, %v490
        %v523 = vmul.f32 %v491, %v491
        %v524 = vmul.f32 %v492, %v492
        %v525 = vmul.f32 %v493, %v493
        %vm526 = vcmask 523264
        %v527 = vsel %vm526, %v510, 0.0
        %528 = vadd.xlane.f32.xlu0 %v527
        %v529 = vpop.xlane.xlu0 %528
        %v530 = vsel %vm526, %v511, 0.0
        %531 = vadd.xlane.f32.xlu0 %v530
        %v532 = vpop.xlane.xlu0 %531
        %v533 = vsel %vm526, %v512, 0.0
        %534 = vadd.xlane.f32.xlu0 %v533
        %v535 = vpop.xlane.xlu0 %534
        %v536 = vsel %vm526, %v513, 0.0
        %537 = vadd.xlane.f32.xlu0 %v536
        %v538 = vpop.xlane.xlu0 %537
        %v539 = vsel %vm526, %v514, 0.0
        %540 = vadd.xlane.f32.xlu0 %v539
        %v541 = vpop.xlane.xlu0 %540
        %v542 = vsel %vm526, %v515, 0.0
        %543 = vadd.xlane.f32.xlu0 %v542
        %v544 = vpop.xlane.xlu0 %543
        %v545 = vsel %vm526, %v516, 0.0
        %546 = vadd.xlane.f32.xlu0 %v545
        %v547 = vpop.xlane.xlu0 %546
        %v548 = vsel %vm526, %v517, 0.0
        %549 = vadd.xlane.f32.xlu0 %v548
        %v550 = vpop.xlane.xlu0 %549
        %v551 = vsel %vm526, %v518, 0.0
        %552 = vadd.xlane.f32.xlu0 %v551
        %v553 = vpop.xlane.xlu0 %552
        %v554 = vsel %vm526, %v519, 0.0
        %555 = vadd.xlane.f32.xlu0 %v554
        %v556 = vpop.xlane.xlu0 %555
        %v557 = vsel %vm526, %v520, 0.0
        %558 = vadd.xlane.f32.xlu0 %v557
        %v559 = vpop.xlane.xlu0 %558
        %v560 = vsel %vm526, %v521, 0.0
        %561 = vadd.xlane.f32.xlu0 %v560
        %v562 = vpop.xlane.xlu0 %561
        %v563 = vsel %vm526, %v522, 0.0
        %564 = vadd.xlane.f32.xlu0 %v563
        %v565 = vpop.xlane.xlu0 %564
        %v566 = vsel %vm526, %v523, 0.0
        %567 = vadd.xlane.f32.xlu0 %v566
        %v568 = vpop.xlane.xlu0 %567
        %v569 = vsel %vm526, %v524, 0.0
        %570 = vadd.xlane.f32.xlu0 %v569
        %v571 = vpop.xlane.xlu0 %570
        %v572 = vsel %vm526, %v525, 0.0
        %573 = vadd.xlane.f32.xlu0 %v572
        %v574 = vpop.xlane.xlu0 %573
        %v575 = vrsqrt.pop %v529
        %v576 = vrsqrt.pop %v532
        %v577 = vrsqrt.pop %v535
        %v578 = vrsqrt.pop %v538
        %v579 = vrsqrt.pop %v541
        %v580 = vrsqrt.pop %v544
        %v581 = vrsqrt.pop %v547
        %v582 = vrsqrt.pop %v550
        %v583 = vrsqrt.pop %v553
        %v584 = vrsqrt.pop %v556
        %v585 = vrsqrt.pop %v559
        %v586 = vrsqrt.pop %v562
        %v587 = vrsqrt.pop %v565
        %v588 = vrsqrt.pop %v568
        %v589 = vrsqrt.pop %v571
        %v590 = vrsqrt.pop %v574
        %v591 = vmul.f32 %v478, %v575
        %v592 = vmul.f32 %v479, %v576
        %v593 = vmul.f32 %v480, %v577
        %v594 = vmul.f32 %v481, %v578
        %v595 = vmul.f32 %v482, %v579
        %v596 = vmul.f32 %v483, %v580
        %v597 = vmul.f32 %v484, %v581
        %v598 = vmul.f32 %v485, %v582
        %v599 = vmul.f32 %v486, %v583
        %v600 = vmul.f32 %v487, %v584
        %v601 = vmul.f32 %v488, %v585
        %v602 = vmul.f32 %v489, %v586
        %v603 = vmul.f32 %v490, %v587
        %v604 = vmul.f32 %v491, %v588
        %v605 = vmul.f32 %v492, %v589
        %v606 = vmul.f32 %v493, %v590
        %v607 = vld [vmem:[#allocation2] sm:$0xff]
        %v608 = vld [vmem:[#allocation2 + $0x8] sm:$0xff]
        %v609 = vld [vmem:[#allocation2 + $0x10] sm:$0xff]
        %v610 = vld [vmem:[#allocation2 + $0x18] sm:$0xff]
        %v611 = vld [vmem:[#allocation2 + $0x20] sm:$0xff]
        %v612 = vld [vmem:[#allocation2 + $0x28] sm:$0xff]
        %v613 = vld [vmem:[#allocation2 + $0x30] sm:$0xff]
        %v614 = vld [vmem:[#allocation2 + $0x38] sm:$0xff]
        %v615 = vlaneseq
        %v616 = vshrl.u32 %v615, 7
        %v617 = vsub.s32 0, %v616
        %v618 = vrot.slane %v456, %v617
        %v620 = vsel %vm526, %v591, 0
        %v623 = vsel %vm526, %v592, 0
        %v626 = vsel %vm526, %v593, 0
        %v629 = vsel %vm526, %v594, 0
        %v632 = vsel %vm526, %v595, 0
        %v635 = vsel %vm526, %v596, 0
        %v638 = vsel %vm526, %v597, 0
        %v641 = vsel %vm526, %v598, 0
        %v644 = vsel %vm526, %v599, 0
        %v647 = vsel %vm526, %v600, 0
        %v650 = vsel %vm526, %v601, 0
        %v653 = vsel %vm526, %v602, 0
        %v656 = vsel %vm526, %v603, 0
        %v659 = vsel %vm526, %v604, 0
        %v662 = vsel %vm526, %v605, 0
        %v665 = vsel %vm526, %v606, 0
        %667 = vmatprep.subr.mxu0 0.0
        %668 = vmatpush1.msra.mxu0 %v607
        %669 = vmatprep.subr.mxu0 0.0
        %670 = vmatpush1.msra.mxu0 %v608
        %671 = vmatprep.subr.mxu0 0.0
        %672 = vmatpush1.msra.mxu0 %v609
        %673 = vmatprep.subr.mxu0 0.0
        %674 = vmatpush1.msra.mxu0 %v610
        %675 = vmatprep.subr.mxu0 0.0
        %676 = vmatpush1.msra.mxu0 %v611
        %677 = vmatprep.subr.mxu0 0.0
        %678 = vmatpush1.msra.mxu0 %v612
        %679 = vmatprep.subr.mxu0 0.0
        %680 = vmatpush1.msra.mxu0 %v613
        %681 = vmatprep.subr.mxu0 0.0
        %682 = vmatpush1.msra.mxu0 %v614
        %683 = vmatprep.subr.mxu0 0.0
        %684 = vmatpush1.msra.mxu0 0.0
        %685 = vmatprep.subr.mxu0 0.0
        %686 = vmatpush1.msra.mxu0 0.0
        %687 = vmatprep.subr.mxu0 0.0
        %688 = vmatpush1.msra.mxu0 0.0
        %689 = vmatprep.subr.mxu0 0.0
        %690 = vmatpush1.msra.mxu0 0.0
        %691 = vmatprep.subr.mxu0 0.0
        %692 = vmatpush1.msra.mxu0 0.0
        %693 = vmatprep.subr.mxu0 0.0
        %694 = vmatpush1.msra.mxu0 0.0
        %695 = vmatprep.subr.mxu0 0.0
        %696 = vmatpush1.msra.mxu0 0.0
        %697 = vmatprep.subr.mxu0 0.0
        %698 = vmatpush1.msra.mxu0 0.0
        %699 = vmatprep.subr.mxu0 0.0
        %700 = vmatpush1.msra.mxu0 0.0
        %701 = vmatprep.subr.mxu0 0.0
        %702 = vmatpush1.msra.mxu0 0.0
        %703 = vmatprep.subr.mxu0 0.0
        %704 = vmatpush1.msra.mxu0 0.0
        %705 = vmatprep.subr.mxu0 0.0
        %706 = vmatpush1.msra.mxu0 0.0
        %707 = vmatprep.subr.mxu0 0.0
        %708 = vmatpush1.msra.mxu0 0.0
        %709 = vmatprep.subr.mxu0 0.0
        %710 = vmatpush1.msra.mxu0 0.0
        %711 = vmatprep.subr.mxu0 0.0
        %712 = vmatpush1.msra.mxu0 0.0
        %713 = vmatprep.subr.mxu0 0.0
        %714 = vmatpush1.msra.mxu0 0.0
        %715 = vmatprep.subr.mxu0 0.0
        %716 = vmatpush1.msra.mxu0 0.0
        %717 = vmatprep.subr.mxu0 0.0
        %718 = vmatpush1.msra.mxu0 0.0
        %719 = vmatprep.subr.mxu0 0.0
        %720 = vmatpush1.msra.mxu0 0.0
        %721 = vmatprep.subr.mxu0 0.0
        %722 = vmatpush1.msra.mxu0 0.0
        %723 = vmatprep.subr.mxu0 0.0
        %724 = vmatpush1.msra.mxu0 0.0
        %725 = vmatprep.subr.mxu0 0.0
        %726 = vmatpush1.msra.mxu0 0.0
        %727 = vmatprep.subr.mxu0 0.0
        %728 = vmatpush1.msra.mxu0 0.0
        %729 = vmatprep.subr.mxu0 0.0
        %730 = vmatpush1.msra.mxu0 0.0
        %731 = vmatprep.mubr.f32.mxu0 0.0
        %732 = vmatmul.mubr.f32.gmra.mrb[0].mxu0 %v620
        %v733 = vpop.f32.mrb[0].mxu0
        %v734 = vadd.f32 %v618, %v733
        %v735 = vpop.f32.mrb[0].mxu0
        %736 = vmatprep.mubr.f32.mxu0 0.0
        %737 = vmatmul.mubr.f32.gmra.mrb[0].mxu0 %v623
        %v738 = vpop.f32.mrb[0].mxu0
        %v739 = vadd.f32 %v618, %v738
        %v740 = vpop.f32.mrb[0].mxu0
        %741 = vmatprep.mubr.f32.mxu0 0.0
        %742 = vmatmul.mubr.f32.gmra.mrb[0].mxu0 %v626
        %v743 = vpop.f32.mrb[0].mxu0
        %v744 = vadd.f32 %v618, %v743
        %v745 = vpop.f32.mrb[0].mxu0
        %746 = vmatprep.mubr.f32.mxu0 0.0
        %747 = vmatmul.mubr.f32.gmra.mrb[0].mxu0 %v629
        %v748 = vpop.f32.mrb[0].mxu0
        %v749 = vadd.f32 %v618, %v748
        %v750 = vpop.f32.mrb[0].mxu0
        %751 = vmatprep.mubr.f32.mxu0 0.0
        %752 = vmatmul.mubr.f32.gmra.mrb[0].mxu0 %v632
        %v753 = vpop.f32.mrb[0].mxu0
        %v754 = vadd.f32 %v618, %v753
        %v755 = vpop.f32.mrb[0].mxu0
        %756 = vmatprep.mubr.f32.mxu0 0.0
        %757 = vmatmul.mubr.f32.gmra.mrb[0].mxu0 %v635
        %v758 = vpop.f32.mrb[0].mxu0
        %v759 = vadd.f32 %v618, %v758
        %v760 = vpop.f32.mrb[0].mxu0
        %761 = vmatprep.mubr.f32.mxu0 0.0
        %762 = vmatmul.mubr.f32.gmra.mrb[0].mxu0 %v638
        %v763 = vpop.f32.mrb[0].mxu0
        %v764 = vadd.f32 %v618, %v763
        %v765 = vpop.f32.mrb[0].mxu0
        %766 = vmatprep.mubr.f32.mxu0 0.0
        %767 = vmatmul.mubr.f32.gmra.mrb[0].mxu0 %v641
        %v768 = vpop.f32.mrb[0].mxu0
        %v769 = vadd.f32 %v618, %v768
        %v770 = vpop.f32.mrb[0].mxu0
        %771 = vmatprep.mubr.f32.mxu0 0.0
        %772 = vmatmul.mubr.f32.gmra.mrb[0].mxu0 %v644
        %v773 = vpop.f32.mrb[0].mxu0
        %v774 = vadd.f32 %v618, %v773
        %v775 = vpop.f32.mrb[0].mxu0
        %776 = vmatprep.mubr.f32.mxu0 0.0
        %777 = vmatmul.mubr.f32.gmra.mrb[0].mxu0 %v647
        %v778 = vpop.f32.mrb[0].mxu0
        %v779 = vadd.f32 %v618, %v778
        %v780 = vpop.f32.mrb[0].mxu0
        %781 = vmatprep.mubr.f32.mxu0 0.0
        %782 = vmatmul.mubr.f32.gmra.mrb[0].mxu0 %v650
        %v783 = vpop.f32.mrb[0].mxu0
        %v784 = vadd.f32 %v618, %v783
        %v785 = vpop.f32.mrb[0].mxu0
        %786 = vmatprep.mubr.f32.mxu0 0.0
        %787 = vmatmul.mubr.f32.gmra.mrb[0].mxu0 %v653
        %v788 = vpop.f32.mrb[0].mxu0
        %v789 = vadd.f32 %v618, %v788
        %v790 = vpop.f32.mrb[0].mxu0
        %791 = vmatprep.mubr.f32.mxu0 0.0
        %792 = vmatmul.mubr.f32.gmra.mrb[0].mxu0 %v656
        %v793 = vpop.f32.mrb[0].mxu0
        %v794 = vadd.f32 %v618, %v793
        %v795 = vpop.f32.mrb[0].mxu0
        %796 = vmatprep.mubr.f32.mxu0 0.0
        %797 = vmatmul.mubr.f32.gmra.mrb[0].mxu0 %v659
        %v798 = vpop.f32.mrb[0].mxu0
        %v799 = vadd.f32 %v618, %v798
        %v800 = vpop.f32.mrb[0].mxu0
        %801 = vmatprep.mubr.f32.mxu0 0.0
        %802 = vmatmul.mubr.f32.gmra.mrb[0].mxu0 %v662
        %v803 = vpop.f32.mrb[0].mxu0
        %v804 = vadd.f32 %v618, %v803
        %v805 = vpop.f32.mrb[0].mxu0
        %806 = vmatprep.mubr.f32.mxu0 0.0
        %807 = vmatmul.mubr.f32.gmra.mrb[0].mxu0 %v665
        %v808 = vpop.f32.mrb[0].mxu0
        %v809 = vadd.f32 %v618, %v808
        %v810 = vpop.f32.mrb[0].mxu0
        %811 = vdwg.mxu0
        %v812 = vxor.u32 %v734, 2147483648
        %v813 = vxor.u32 %v739, 2147483648
        %v814 = vxor.u32 %v744, 2147483648
        %v815 = vxor.u32 %v749, 2147483648
        %v816 = vxor.u32 %v754, 2147483648
        %v817 = vxor.u32 %v759, 2147483648
        %v818 = vxor.u32 %v764, 2147483648
        %v819 = vxor.u32 %v769, 2147483648
        %v820 = vxor.u32 %v774, 2147483648
        %v821 = vxor.u32 %v779, 2147483648
        %v822 = vxor.u32 %v784, 2147483648
        %v823 = vxor.u32 %v789, 2147483648
        %v824 = vxor.u32 %v794, 2147483648
        %v825 = vxor.u32 %v799, 2147483648
        %v826 = vxor.u32 %v804, 2147483648
        %v827 = vxor.u32 %v809, 2147483648
        %v828 = vmul.f32 %v812, 1.442695
        %v829 = vpow.pop %v828
        %v830 = vmul.f32 %v813, 1.442695
        %v831 = vpow.pop %v830
        %v832 = vmul.f32 %v814, 1.442695
        %v833 = vpow.pop %v832
        %v834 = vmul.f32 %v815, 1.442695
        %v835 = vpow.pop %v834
        %v836 = vmul.f32 %v816, 1.442695
        %v837 = vpow.pop %v836
        %v838 = vmul.f32 %v817, 1.442695
        %v839 = vpow.pop %v838
        %v840 = vmul.f32 %v818, 1.442695
        %v841 = vpow.pop %v840
        %v842 = vmul.f32 %v819, 1.442695
        %v843 = vpow.pop %v842
        %v844 = vmul.f32 %v820, 1.442695
        %v845 = vpow.pop %v844
        %v846 = vmul.f32 %v821, 1.442695
        %v847 = vpow.pop %v846
        %v848 = vmul.f32 %v822, 1.442695
        %v849 = vpow.pop %v848
        %v850 = vmul.f32 %v823, 1.442695
        %v851 = vpow.pop %v850
        %v852 = vmul.f32 %v824, 1.442695
        %v853 = vpow.pop %v852
        %v854 = vmul.f32 %v825, 1.442695
        %v855 = vpow.pop %v854
        %v856 = vmul.f32 %v826, 1.442695
        %v857 = vpow.pop %v856
        %v858 = vmul.f32 %v827, 1.442695
        %v859 = vpow.pop %v858
        %v860 = vadd.f32 %v829, 1.0
        %v861 = vadd.f32 %v831, 1.0
        %v862 = vadd.f32 %v833, 1.0
        %v863 = vadd.f32 %v835, 1.0
        %v864 = vadd.f32 %v837, 1.0
        %v865 = vadd.f32 %v839, 1.0
        %v866 = vadd.f32 %v841, 1.0
        %v867 = vadd.f32 %v843, 1.0
        %v868 = vadd.f32 %v845, 1.0
        %v869 = vadd.f32 %v847, 1.0
        %v870 = vadd.f32 %v849, 1.0
        %v871 = vadd.f32 %v851, 1.0
        %v872 = vadd.f32 %v853, 1.0
        %v873 = vadd.f32 %v855, 1.0
        %v874 = vadd.f32 %v857, 1.0
        %v875 = vadd.f32 %v859, 1.0
        %v876 = vrcp.pop %v860
        %v877 = vmul.f32 1.0, %v876
        %v878 = vrcp.pop %v861
        %v879 = vmul.f32 1.0, %v878
        %v880 = vrcp.pop %v862
        %v881 = vmul.f32 1.0, %v880
        %v882 = vrcp.pop %v863
        %v883 = vmul.f32 1.0, %v882
        %v884 = vrcp.pop %v864
        %v885 = vmul.f32 1.0, %v884
        %v886 = vrcp.pop %v865
        %v887 = vmul.f32 1.0, %v886
        %v888 = vrcp.pop %v866
        %v889 = vmul.f32 1.0, %v888
        %v890 = vrcp.pop %v867
        %v891 = vmul.f32 1.0, %v890
        %v892 = vrcp.pop %v868
        %v893 = vmul.f32 1.0, %v892
        %v894 = vrcp.pop %v869
        %v895 = vmul.f32 1.0, %v894
        %v896 = vrcp.pop %v870
        %v897 = vmul.f32 1.0, %v896
        %v898 = vrcp.pop %v871
        %v899 = vmul.f32 1.0, %v898
        %v900 = vrcp.pop %v872
        %v901 = vmul.f32 1.0, %v900
        %v902 = vrcp.pop %v873
        %v903 = vmul.f32 1.0, %v902
        %v904 = vrcp.pop %v874
        %v905 = vmul.f32 1.0, %v904
        %v906 = vrcp.pop %v875
        %v907 = vmul.f32 1.0, %v906
        %v908 = vmul.f32 %v734, %v877
        %v909 = vmul.f32 %v739, %v879
        %v910 = vmul.f32 %v744, %v881
        %v911 = vmul.f32 %v749, %v883
        %v912 = vmul.f32 %v754, %v885
        %v913 = vmul.f32 %v759, %v887
        %v914 = vmul.f32 %v764, %v889
        %v915 = vmul.f32 %v769, %v891
        %v916 = vmul.f32 %v774, %v893
        %v917 = vmul.f32 %v779, %v895
        %v918 = vmul.f32 %v784, %v897
        %v919 = vmul.f32 %v789, %v899
        %v920 = vmul.f32 %v794, %v901
        %v921 = vmul.f32 %v799, %v903
        %v922 = vmul.f32 %v804, %v905
        %v923 = vmul.f32 %v809, %v907
        %924 = vadd.xlane.f32.xlu0 %v908
        %v925 = vpop.xlane.xlu0 %924
        %926 = vadd.xlane.f32.xlu0 %v909
        %v927 = vpop.xlane.xlu0 %926
        %928 = vadd.xlane.f32.xlu0 %v910
        %v929 = vpop.xlane.xlu0 %928
        %930 = vadd.xlane.f32.xlu0 %v911
        %v931 = vpop.xlane.xlu0 %930
        %932 = vadd.xlane.f32.xlu0 %v912
        %v933 = vpop.xlane.xlu0 %932
        %934 = vadd.xlane.f32.xlu0 %v913
        %v935 = vpop.xlane.xlu0 %934
        %936 = vadd.xlane.f32.xlu0 %v914
        %v937 = vpop.xlane.xlu0 %936
        %938 = vadd.xlane.f32.xlu0 %v915
        %v939 = vpop.xlane.xlu0 %938
        %940 = vadd.xlane.f32.xlu0 %v916
        %v941 = vpop.xlane.xlu0 %940
        %942 = vadd.xlane.f32.xlu0 %v917
        %v943 = vpop.xlane.xlu0 %942
        %944 = vadd.xlane.f32.xlu0 %v918
        %v945 = vpop.xlane.xlu0 %944
        %946 = vadd.xlane.f32.xlu0 %v919
        %v947 = vpop.xlane.xlu0 %946
        %948 = vadd.xlane.f32.xlu0 %v920
        %v949 = vpop.xlane.xlu0 %948
        %950 = vadd.xlane.f32.xlu0 %v921
        %v951 = vpop.xlane.xlu0 %950
        %952 = vadd.xlane.f32.xlu0 %v922
        %v953 = vpop.xlane.xlu0 %952
        %954 = vadd.xlane.f32.xlu0 %v923
        %v955 = vpop.xlane.xlu0 %954
        %v956 = vmul.f32 %v925, 0.03125
        %v957 = vmul.f32 %v927, 0.03125
        %v958 = vmul.f32 %v929, 0.03125
        %v959 = vmul.f32 %v931, 0.03125
        %v960 = vmul.f32 %v933, 0.03125
        %v961 = vmul.f32 %v935, 0.03125
        %v962 = vmul.f32 %v937, 0.03125
        %v963 = vmul.f32 %v939, 0.03125
        %v964 = vmul.f32 %v941, 0.03125
        %v965 = vmul.f32 %v943, 0.03125
        %v966 = vmul.f32 %v945, 0.03125
        %v967 = vmul.f32 %v947, 0.03125
        %v968 = vmul.f32 %v949, 0.03125
        %v969 = vmul.f32 %v951, 0.03125
        %v970 = vmul.f32 %v953, 0.03125
        %v971 = vmul.f32 %v955, 0.03125
        %v972 = vmul.f32 %v908, %v908
        %v973 = vmul.f32 %v909, %v909
        %v974 = vmul.f32 %v910, %v910
        %v975 = vmul.f32 %v911, %v911
        %v976 = vmul.f32 %v912, %v912
        %v977 = vmul.f32 %v913, %v913
        %v978 = vmul.f32 %v914, %v914
        %v979 = vmul.f32 %v915, %v915
        %v980 = vmul.f32 %v916, %v916
        %v981 = vmul.f32 %v917, %v917
        %v982 = vmul.f32 %v918, %v918
        %v983 = vmul.f32 %v919, %v919
        %v984 = vmul.f32 %v920, %v920
        %v985 = vmul.f32 %v921, %v921
        %v986 = vmul.f32 %v922, %v922
        %v987 = vmul.f32 %v923, %v923
        %988 = vadd.xlane.f32.xlu0 %v972
        %v989 = vpop.xlane.xlu0 %988
        %990 = vadd.xlane.f32.xlu0 %v973
        %v991 = vpop.xlane.xlu0 %990
        %992 = vadd.xlane.f32.xlu0 %v974
        %v993 = vpop.xlane.xlu0 %992
        %994 = vadd.xlane.f32.xlu0 %v975
        %v995 = vpop.xlane.xlu0 %994
        %996 = vadd.xlane.f32.xlu0 %v976
        %v997 = vpop.xlane.xlu0 %996
        %998 = vadd.xlane.f32.xlu0 %v977
        %v999 = vpop.xlane.xlu0 %998
        %1000 = vadd.xlane.f32.xlu0 %v978
        %v1001 = vpop.xlane.xlu0 %1000
        %1002 = vadd.xlane.f32.xlu0 %v979
        %v1003 = vpop.xlane.xlu0 %1002
        %1004 = vadd.xlane.f32.xlu0 %v980
        %v1005 = vpop.xlane.xlu0 %1004
        %1006 = vadd.xlane.f32.xlu0 %v981
        %v1007 = vpop.xlane.xlu0 %1006
        %1008 = vadd.xlane.f32.xlu0 %v982
        %v1009 = vpop.xlane.xlu0 %1008
        %1010 = vadd.xlane.f32.xlu0 %v983
        %v1011 = vpop.xlane.xlu0 %1010
        %1012 = vadd.xlane.f32.xlu0 %v984
        %v1013 = vpop.xlane.xlu0 %1012
        %1014 = vadd.xlane.f32.xlu0 %v985
        %v1015 = vpop.xlane.xlu0 %1014
        %1016 = vadd.xlane.f32.xlu0 %v986
        %v1017 = vpop.xlane.xlu0 %1016
        %1018 = vadd.xlane.f32.xlu0 %v987
        %v1019 = vpop.xlane.xlu0 %1018
        %v1020 = vmul.f32 %v989, 0.03125
        %v1021 = vmul.f32 %v991, 0.03125
        %v1022 = vmul.f32 %v993, 0.03125
        %v1023 = vmul.f32 %v995, 0.03125
        %v1024 = vmul.f32 %v997, 0.03125
        %v1025 = vmul.f32 %v999, 0.03125
        %v1026 = vmul.f32 %v1001, 0.03125
        %v1027 = vmul.f32 %v1003, 0.03125
        %v1028 = vmul.f32 %v1005, 0.03125
        %v1029 = vmul.f32 %v1007, 0.03125
        %v1030 = vmul.f32 %v1009, 0.03125
        %v1031 = vmul.f32 %v1011, 0.03125
        %v1032 = vmul.f32 %v1013, 0.03125
        %v1033 = vmul.f32 %v1015, 0.03125
        %v1034 = vmul.f32 %v1017, 0.03125
        %v1035 = vmul.f32 %v1019, 0.03125
        %v1036 = vmul.f32 %v956, %v956
        %v1037 = vmul.f32 %v957, %v957
        %v1038 = vmul.f32 %v958, %v958
        %v1039 = vmul.f32 %v959, %v959
        %v1040 = vmul.f32 %v960, %v960
        %v1041 = vmul.f32 %v961, %v961
        %v1042 = vmul.f32 %v962, %v962
        %v1043 = vmul.f32 %v963, %v963
        %v1044 = vmul.f32 %v964, %v964
        %v1045 = vmul.f32 %v965, %v965
        %v1046 = vmul.f32 %v966, %v966
        %v1047 = vmul.f32 %v967, %v967
        %v1048 = vmul.f32 %v968, %v968
        %v1049 = vmul.f32 %v969, %v969
        %v1050 = vmul.f32 %v970, %v970
        %v1051 = vmul.f32 %v971, %v971
        %v1052 = vsub.f32 %v1020, %v1036
        %v1053 = vsub.f32 %v1021, %v1037
        %v1054 = vsub.f32 %v1022, %v1038
        %v1055 = vsub.f32 %v1023, %v1039
        %v1056 = vsub.f32 %v1024, %v1040
        %v1057 = vsub.f32 %v1025, %v1041
        %v1058 = vsub.f32 %v1026, %v1042
        %v1059 = vsub.f32 %v1027, %v1043
        %v1060 = vsub.f32 %v1028, %v1044
        %v1061 = vsub.f32 %v1029, %v1045
        %v1062 = vsub.f32 %v1030, %v1046
        %v1063 = vsub.f32 %v1031, %v1047
        %v1064 = vsub.f32 %v1032, %v1048
        %v1065 = vsub.f32 %v1033, %v1049
        %v1066 = vsub.f32 %v1034, %v1050
        %v1067 = vsub.f32 %v1035, %v1051
        %v1068 = vsub.f32 %v908, %v956
        %v1069 = vsub.f32 %v909, %v957
        %v1070 = vsub.f32 %v910, %v958
        %v1071 = vsub.f32 %v911, %v959
        %v1072 = vsub.f32 %v912, %v960
        %v1073 = vsub.f32 %v913, %v961
        %v1074 = vsub.f32 %v914, %v962
        %v1075 = vsub.f32 %v915, %v963
        %v1076 = vsub.f32 %v916, %v964
        %v1077 = vsub.f32 %v917, %v965
        %v1078 = vsub.f32 %v918, %v966
        %v1079 = vsub.f32 %v919, %v967
        %v1080 = vsub.f32 %v920, %v968
        %v1081 = vsub.f32 %v921, %v969
        %v1082 = vsub.f32 %v922, %v970
        %v1083 = vsub.f32 %v923, %v971
        %v1084 = vadd.f32 %v1052, 0.1
        %v1085 = vadd.f32 %v1053, 0.1
        %v1086 = vadd.f32 %v1054, 0.1
        %v1087 = vadd.f32 %v1055, 0.1
        %v1088 = vadd.f32 %v1056, 0.1
        %v1089 = vadd.f32 %v1057, 0.1
        %v1090 = vadd.f32 %v1058, 0.1
        %v1091 = vadd.f32 %v1059, 0.1
        %v1092 = vadd.f32 %v1060, 0.1
        %v1093 = vadd.f32 %v1061, 0.1
        %v1094 = vadd.f32 %v1062, 0.1
        %v1095 = vadd.f32 %v1063, 0.1
        %v1096 = vadd.f32 %v1064, 0.1
        %v1097 = vadd.f32 %v1065, 0.1
        %v1098 = vadd.f32 %v1066, 0.1
        %v1099 = vadd.f32 %v1067, 0.1
        %v1100 = vrsqrt.pop %v1084
        %v1101 = vrsqrt.pop %v1085
        %v1102 = vrsqrt.pop %v1086
        %v1103 = vrsqrt.pop %v1087
        %v1104 = vrsqrt.pop %v1088
        %v1105 = vrsqrt.pop %v1089
        %v1106 = vrsqrt.pop %v1090
        %v1107 = vrsqrt.pop %v1091
        %v1108 = vrsqrt.pop %v1092
        %v1109 = vrsqrt.pop %v1093
        %v1110 = vrsqrt.pop %v1094
        %v1111 = vrsqrt.pop %v1095
        %v1112 = vrsqrt.pop %v1096
        %v1113 = vrsqrt.pop %v1097
        %v1114 = vrsqrt.pop %v1098
        %v1115 = vrsqrt.pop %v1099
        %v1116 = vmul.f32 %v1068, %v1100
        %v1117 = vmul.f32 %v1069, %v1101
        %v1118 = vmul.f32 %v1070, %v1102
        %v1119 = vmul.f32 %v1071, %v1103
        %v1120 = vmul.f32 %v1072, %v1104
        %v1121 = vmul.f32 %v1073, %v1105
        %v1122 = vmul.f32 %v1074, %v1106
        %v1123 = vmul.f32 %v1075, %v1107
        %v1124 = vmul.f32 %v1076, %v1108
        %v1125 = vmul.f32 %v1077, %v1109
        %v1126 = vmul.f32 %v1078, %v1110
        %v1127 = vmul.f32 %v1079, %v1111
        %v1128 = vmul.f32 %v1080, %v1112
        %v1129 = vmul.f32 %v1081, %v1113
        %v1130 = vmul.f32 %v1082, %v1114
        %v1131 = vmul.f32 %v1083, %v1115
        %v1132 = vlaneseq
        %v1133 = vshrl.u32 %v1132, 7
        %v1134 = vsub.s32 0, %v1133
        %v1135 = vrot.slane %v461, %v1134
        %v1136 = vmul.f32 %v1116, %v1135
        %v1137 = vmul.f32 %v1117, %v1135
        %v1138 = vmul.f32 %v1118, %v1135
        %v1139 = vmul.f32 %v1119, %v1135
        %v1140 = vmul.f32 %v1120, %v1135
        %v1141 = vmul.f32 %v1121, %v1135
        %v1142 = vmul.f32 %v1122, %v1135
        %v1143 = vmul.f32 %v1123, %v1135
        %v1144 = vmul.f32 %v1124, %v1135
        %v1145 = vmul.f32 %v1125, %v1135
        %v1146 = vmul.f32 %v1126, %v1135
        %v1147 = vmul.f32 %v1127, %v1135
        %v1148 = vmul.f32 %v1128, %v1135
        %v1149 = vmul.f32 %v1129, %v1135
        %v1150 = vmul.f32 %v1130, %v1135
        %v1151 = vmul.f32 %v1131, %v1135
        %v1152 = vlaneseq
        %v1153 = vshrl.u32 %v1152, 7
        %v1154 = vsub.s32 0, %v1153
        %v1155 = vrot.slane %v466, %v1154
        %v1156 = vadd.f32 %v1136, %v1155
        %v1157 = vadd.f32 %v1137, %v1155
        %v1158 = vadd.f32 %v1138, %v1155
        %v1159 = vadd.f32 %v1139, %v1155
        %v1160 = vadd.f32 %v1140, %v1155
        %v1161 = vadd.f32 %v1141, %v1155
        %v1162 = vadd.f32 %v1142, %v1155
        %v1163 = vadd.f32 %v1143, %v1155
        %v1164 = vadd.f32 %v1144, %v1155
        %v1165 = vadd.f32 %v1145, %v1155
        %v1166 = vadd.f32 %v1146, %v1155
        %v1167 = vadd.f32 %v1147, %v1155
        %v1168 = vadd.f32 %v1148, %v1155
        %v1169 = vadd.f32 %v1149, %v1155
        %v1170 = vadd.f32 %v1150, %v1155
        %v1171 = vadd.f32 %v1151, %v1155
        %v1172 = vld [vmem:[%s3] sm:$0xff]
        %v1173 = vld [vmem:[%s3 + $0x8] sm:$0xff]
        %v1174 = vld [vmem:[%s3 + $0x10] sm:$0xff]
        %v1175 = vld [vmem:[%s3 + $0x18] sm:$0xff]
        %v1176 = vld [vmem:[%s3 + $0x20] sm:$0xff]
        %v1177 = vld [vmem:[%s3 + $0x28] sm:$0xff]
        %v1178 = vld [vmem:[%s3 + $0x30] sm:$0xff]
        %v1179 = vld [vmem:[%s3 + $0x38] sm:$0xff]
        %v1180 = vld [vmem:[%s3 + $0x40] sm:$0xff]
        %v1181 = vld [vmem:[%s3 + $0x48] sm:$0xff]
        %v1182 = vld [vmem:[%s3 + $0x50] sm:$0xff]
        %v1183 = vld [vmem:[%s3 + $0x58] sm:$0xff]
        %v1184 = vld [vmem:[%s3 + $0x60] sm:$0xff]
        %v1185 = vld [vmem:[%s3 + $0x68] sm:$0xff]
        %v1186 = vld [vmem:[%s3 + $0x70] sm:$0xff]
        %v1187 = vld [vmem:[%s3 + $0x78] sm:$0xff]
        %v1188 = vlaneseq
        %v1189 = vshrl.u32 %v1188, 7
        %v1190 = vsub.s32 0, %v1189
        %v1191 = vrot.slane %v457, %v1190
        %1192 = vmatprep.subr.mxu0 0.0
        %1193 = vmatpush1.msra.mxu0 %v1172
        %1194 = vmatprep.subr.mxu0 0.0
        %1195 = vmatpush1.msra.mxu0 %v1173
        %1196 = vmatprep.subr.mxu0 0.0
        %1197 = vmatpush1.msra.mxu0 %v1174
        %1198 = vmatprep.subr.mxu0 0.0
        %1199 = vmatpush1.msra.mxu0 %v1175
        %1200 = vmatprep.subr.mxu0 0.0
        %1201 = vmatpush1.msra.mxu0 %v1176
        %1202 = vmatprep.subr.mxu0 0.0
        %1203 = vmatpush1.msra.mxu0 %v1177
        %1204 = vmatprep.subr.mxu0 0.0
        %1205 = vmatpush1.msra.mxu0 %v1178
        %1206 = vmatprep.subr.mxu0 0.0
        %1207 = vmatpush1.msra.mxu0 %v1179
        %1208 = vmatprep.subr.mxu0 0.0
        %1209 = vmatpush1.msra.mxu0 %v1180
        %1210 = vmatprep.subr.mxu0 0.0
        %1211 = vmatpush1.msra.mxu0 %v1181
        %1212 = vmatprep.subr.mxu0 0.0
        %1213 = vmatpush1.msra.mxu0 %v1182
        %1214 = vmatprep.subr.mxu0 0.0
        %1215 = vmatpush1.msra.mxu0 %v1183
        %1216 = vmatprep.subr.mxu0 0.0
        %1217 = vmatpush1.msra.mxu0 %v1184
        %1218 = vmatprep.subr.mxu0 0.0
        %1219 = vmatpush1.msra.mxu0 %v1185
        %1220 = vmatprep.subr.mxu0 0.0
        %1221 = vmatpush1.msra.mxu0 %v1186
        %1222 = vmatprep.subr.mxu0 0.0
        %1223 = vmatpush1.msra.mxu0 %v1187
        %1224 = vmatprep.subr.mxu0 0.0
        %1225 = vmatpush1.msra.mxu0 0.0
        %1226 = vmatprep.subr.mxu0 0.0
        %1227 = vmatpush1.msra.mxu0 0.0
        %1228 = vmatprep.subr.mxu0 0.0
        %1229 = vmatpush1.msra.mxu0 0.0
        %1230 = vmatprep.subr.mxu0 0.0
        %1231 = vmatpush1.msra.mxu0 0.0
        %1232 = vmatprep.subr.mxu0 0.0
        %1233 = vmatpush1.msra.mxu0 0.0
        %1234 = vmatprep.subr.mxu0 0.0
        %1235 = vmatpush1.msra.mxu0 0.0
        %1236 = vmatprep.subr.mxu0 0.0
        %1237 = vmatpush1.msra.mxu0 0.0
        %1238 = vmatprep.subr.mxu0 0.0
        %1239 = vmatpush1.msra.mxu0 0.0
        %1240 = vmatprep.subr.mxu0 0.0
        %1241 = vmatpush1.msra.mxu0 0.0
        %1242 = vmatprep.subr.mxu0 0.0
        %1243 = vmatpush1.msra.mxu0 0.0
        %1244 = vmatprep.subr.mxu0 0.0
        %1245 = vmatpush1.msra.mxu0 0.0
        %1246 = vmatprep.subr.mxu0 0.0
        %1247 = vmatpush1.msra.mxu0 0.0
        %1248 = vmatprep.subr.mxu0 0.0
        %1249 = vmatpush1.msra.mxu0 0.0
        %1250 = vmatprep.subr.mxu0 0.0
        %1251 = vmatpush1.msra.mxu0 0.0
        %1252 = vmatprep.subr.mxu0 0.0
        %1253 = vmatpush1.msra.mxu0 0.0
        %1254 = vmatprep.subr.mxu0 0.0
        %1255 = vmatpush1.msra.mxu0 0.0
        %1256 = vmatprep.mubr.f32.mxu0 0.0
        %1257 = vmatmul.mubr.f32.gmra.mrb[0].mxu0 %v1156
        %v1258 = vpop.f32.mrb[0].mxu0
        %v1259 = vadd.f32 %v1191, %v1258
        %v1260 = vpop.f32.mrb[0].mxu0
        %1261 = vmatprep.mubr.f32.mxu0 0.0
        %1262 = vmatmul.mubr.f32.gmra.mrb[0].mxu0 %v1157
        %v1263 = vpop.f32.mrb[0].mxu0
        %v1264 = vadd.f32 %v1191, %v1263
        %v1265 = vpop.f32.mrb[0].mxu0
        %1266 = vmatprep.mubr.f32.mxu0 0.0
        %1267 = vmatmul.mubr.f32.gmra.mrb[0].mxu0 %v1158
        %v1268 = vpop.f32.mrb[0].mxu0
        %v1269 = vadd.f32 %v1191, %v1268
        %v1270 = vpop.f32.mrb[0].mxu0
        %1271 = vmatprep.mubr.f32.mxu0 0.0
        %1272 = vmatmul.mubr.f32.gmra.mrb[0].mxu0 %v1159
        %v1273 = vpop.f32.mrb[0].mxu0
        %v1274 = vadd.f32 %v1191, %v1273
        %v1275 = vpop.f32.mrb[0].mxu0
        %1276 = vmatprep.mubr.f32.mxu0 0.0
        %1277 = vmatmul.mubr.f32.gmra.mrb[0].mxu0 %v1160
        %v1278 = vpop.f32.mrb[0].mxu0
        %v1279 = vadd.f32 %v1191, %v1278
        %v1280 = vpop.f32.mrb[0].mxu0
        %1281 = vmatprep.mubr.f32.mxu0 0.0
        %1282 = vmatmul.mubr.f32.gmra.mrb[0].mxu0 %v1161
        %v1283 = vpop.f32.mrb[0].mxu0
        %v1284 = vadd.f32 %v1191, %v1283
        %v1285 = vpop.f32.mrb[0].mxu0
        %1286 = vmatprep.mubr.f32.mxu0 0.0
        %1287 = vmatmul.mubr.f32.gmra.mrb[0].mxu0 %v1162
        %v1288 = vpop.f32.mrb[0].mxu0
        %v1289 = vadd.f32 %v1191, %v1288
        %v1290 = vpop.f32.mrb[0].mxu0
        %1291 = vmatprep.mubr.f32.mxu0 0.0
        %1292 = vmatmul.mubr.f32.gmra.mrb[0].mxu0 %v1163
        %v1293 = vpop.f32.mrb[0].mxu0
        %v1294 = vadd.f32 %v1191, %v1293
        %v1295 = vpop.f32.mrb[0].mxu0
        %1296 = vmatprep.mubr.f32.mxu0 0.0
        %1297 = vmatmul.mubr.f32.gmra.mrb[0].mxu0 %v1164
        %v1298 = vpop.f32.mrb[0].mxu0
        %v1299 = vadd.f32 %v1191, %v1298
        %v1300 = vpop.f32.mrb[0].mxu0
        %1301 = vmatprep.mubr.f32.mxu0 0.0
        %1302 = vmatmul.mubr.f32.gmra.mrb[0].mxu0 %v1165
        %v1303 = vpop.f32.mrb[0].mxu0
        %v1304 = vadd.f32 %v1191, %v1303
        %v1305 = vpop.f32.mrb[0].mxu0
        %1306 = vmatprep.mubr.f32.mxu0 0.0
        %1307 = vmatmul.mubr.f32.gmra.mrb[0].mxu0 %v1166
        %v1308 = vpop.f32.mrb[0].mxu0
        %v1309 = vadd.f32 %v1191, %v1308
        %v1310 = vpop.f32.mrb[0].mxu0
        %1311 = vmatprep.mubr.f32.mxu0 0.0
        %1312 = vmatmul.mubr.f32.gmra.mrb[0].mxu0 %v1167
        %v1313 = vpop.f32.mrb[0].mxu0
        %v1314 = vadd.f32 %v1191, %v1313
        %v1315 = vpop.f32.mrb[0].mxu0
        %1316 = vmatprep.mubr.f32.mxu0 0.0
        %1317 = vmatmul.mubr.f32.gmra.mrb[0].mxu0 %v1168
        %v1318 = vpop.f32.mrb[0].mxu0
        %v1319 = vadd.f32 %v1191, %v1318
        %v1320 = vpop.f32.mrb[0].mxu0
        %1321 = vmatprep.mubr.f32.mxu0 0.0
        %1322 = vmatmul.mubr.f32.gmra.mrb[0].mxu0 %v1169
        %v1323 = vpop.f32.mrb[0].mxu0
        %v1324 = vadd.f32 %v1191, %v1323
        %v1325 = vpop.f32.mrb[0].mxu0
        %1326 = vmatprep.mubr.f32.mxu0 0.0
        %1327 = vmatmul.mubr.f32.gmra.mrb[0].mxu0 %v1170
        %v1328 = vpop.f32.mrb[0].mxu0
        %v1329 = vadd.f32 %v1191, %v1328
        %v1330 = vpop.f32.mrb[0].mxu0
        %1331 = vmatprep.mubr.f32.mxu0 0.0
        %1332 = vmatmul.mubr.f32.gmra.mrb[0].mxu0 %v1171
        %v1333 = vpop.f32.mrb[0].mxu0
        %v1334 = vadd.f32 %v1191, %v1333
        %v1335 = vpop.f32.mrb[0].mxu0
        %1336 = vdwg.mxu0
        %v1337 = vadd.f32 %v1259, %v1156
        %v1338 = vadd.f32 %v1264, %v1157
        %v1339 = vadd.f32 %v1269, %v1158
        %v1340 = vadd.f32 %v1274, %v1159
        %v1341 = vadd.f32 %v1279, %v1160
        %v1342 = vadd.f32 %v1284, %v1161
        %v1343 = vadd.f32 %v1289, %v1162
        %v1344 = vadd.f32 %v1294, %v1163
        %v1345 = vadd.f32 %v1299, %v1164
        %v1346 = vadd.f32 %v1304, %v1165
        %v1347 = vadd.f32 %v1309, %v1166
        %v1348 = vadd.f32 %v1314, %v1167
        %v1349 = vadd.f32 %v1319, %v1168
        %v1350 = vadd.f32 %v1324, %v1169
        %v1351 = vadd.f32 %v1329, %v1170
        %v1352 = vadd.f32 %v1334, %v1171
        %v1353 = vxor.u32 %v1337, 2147483648
        %v1354 = vxor.u32 %v1338, 2147483648
        %v1355 = vxor.u32 %v1339, 2147483648
        %v1356 = vxor.u32 %v1340, 2147483648
        %v1357 = vxor.u32 %v1341, 2147483648
        %v1358 = vxor.u32 %v1342, 2147483648
        %v1359 = vxor.u32 %v1343, 2147483648
        %v1360 = vxor.u32 %v1344, 2147483648
        %v1361 = vxor.u32 %v1345, 2147483648
        %v1362 = vxor.u32 %v1346, 2147483648
        %v1363 = vxor.u32 %v1347, 2147483648
        %v1364 = vxor.u32 %v1348, 2147483648
        %v1365 = vxor.u32 %v1349, 2147483648
        %v1366 = vxor.u32 %v1350, 2147483648
        %v1367 = vxor.u32 %v1351, 2147483648
        %v1368 = vxor.u32 %v1352, 2147483648
        %v1369 = vmul.f32 %v1353, 1.442695
        %v1370 = vpow.pop %v1369
        %v1371 = vmul.f32 %v1354, 1.442695
        %v1372 = vpow.pop %v1371
        %v1373 = vmul.f32 %v1355, 1.442695
        %v1374 = vpow.pop %v1373
        %v1375 = vmul.f32 %v1356, 1.442695
        %v1376 = vpow.pop %v1375
        %v1377 = vmul.f32 %v1357, 1.442695
        %v1378 = vpow.pop %v1377
        %v1379 = vmul.f32 %v1358, 1.442695
        %v1380 = vpow.pop %v1379
        %v1381 = vmul.f32 %v1359, 1.442695
        %v1382 = vpow.pop %v1381
        %v1383 = vmul.f32 %v1360, 1.442695
        %v1384 = vpow.pop %v1383
        %v1385 = vmul.f32 %v1361, 1.442695
        %v1386 = vpow.pop %v1385
        %v1387 = vmul.f32 %v1362, 1.442695
        %v1388 = vpow.pop %v1387
        %v1389 = vmul.f32 %v1363, 1.442695
        %v1390 = vpow.pop %v1389
        %v1391 = vmul.f32 %v1364, 1.442695
        %v1392 = vpow.pop %v1391
        %v1393 = vmul.f32 %v1365, 1.442695
        %v1394 = vpow.pop %v1393
        %v1395 = vmul.f32 %v1366, 1.442695
        %v1396 = vpow.pop %v1395
        %v1397 = vmul.f32 %v1367, 1.442695
        %v1398 = vpow.pop %v1397
        %v1399 = vmul.f32 %v1368, 1.442695
        %v1400 = vpow.pop %v1399
        %v1401 = vadd.f32 %v1370, 1.0
        %v1402 = vadd.f32 %v1372, 1.0
        %v1403 = vadd.f32 %v1374, 1.0
        %v1404 = vadd.f32 %v1376, 1.0
        %v1405 = vadd.f32 %v1378, 1.0
        %v1406 = vadd.f32 %v1380, 1.0
        %v1407 = vadd.f32 %v1382, 1.0
        %v1408 = vadd.f32 %v1384, 1.0
        %v1409 = vadd.f32 %v1386, 1.0
        %v1410 = vadd.f32 %v1388, 1.0
        %v1411 = vadd.f32 %v1390, 1.0
        %v1412 = vadd.f32 %v1392, 1.0
        %v1413 = vadd.f32 %v1394, 1.0
        %v1414 = vadd.f32 %v1396, 1.0
        %v1415 = vadd.f32 %v1398, 1.0
        %v1416 = vadd.f32 %v1400, 1.0
        %v1417 = vrcp.pop %v1401
        %v1418 = vmul.f32 1.0, %v1417
        %v1419 = vrcp.pop %v1402
        %v1420 = vmul.f32 1.0, %v1419
        %v1421 = vrcp.pop %v1403
        %v1422 = vmul.f32 1.0, %v1421
        %v1423 = vrcp.pop %v1404
        %v1424 = vmul.f32 1.0, %v1423
        %v1425 = vrcp.pop %v1405
        %v1426 = vmul.f32 1.0, %v1425
        %v1427 = vrcp.pop %v1406
        %v1428 = vmul.f32 1.0, %v1427
        %v1429 = vrcp.pop %v1407
        %v1430 = vmul.f32 1.0, %v1429
        %v1431 = vrcp.pop %v1408
        %v1432 = vmul.f32 1.0, %v1431
        %v1433 = vrcp.pop %v1409
        %v1434 = vmul.f32 1.0, %v1433
        %v1435 = vrcp.pop %v1410
        %v1436 = vmul.f32 1.0, %v1435
        %v1437 = vrcp.pop %v1411
        %v1438 = vmul.f32 1.0, %v1437
        %v1439 = vrcp.pop %v1412
        %v1440 = vmul.f32 1.0, %v1439
        %v1441 = vrcp.pop %v1413
        %v1442 = vmul.f32 1.0, %v1441
        %v1443 = vrcp.pop %v1414
        %v1444 = vmul.f32 1.0, %v1443
        %v1445 = vrcp.pop %v1415
        %v1446 = vmul.f32 1.0, %v1445
        %v1447 = vrcp.pop %v1416
        %v1448 = vmul.f32 1.0, %v1447
        %v1449 = vmul.f32 %v1337, %v1418
        %v1450 = vmul.f32 %v1338, %v1420
        %v1451 = vmul.f32 %v1339, %v1422
        %v1452 = vmul.f32 %v1340, %v1424
        %v1453 = vmul.f32 %v1341, %v1426
        %v1454 = vmul.f32 %v1342, %v1428
        %v1455 = vmul.f32 %v1343, %v1430
        %v1456 = vmul.f32 %v1344, %v1432
        %v1457 = vmul.f32 %v1345, %v1434
        %v1458 = vmul.f32 %v1346, %v1436
        %v1459 = vmul.f32 %v1347, %v1438
        %v1460 = vmul.f32 %v1348, %v1440
        %v1461 = vmul.f32 %v1349, %v1442
        %v1462 = vmul.f32 %v1350, %v1444
        %v1463 = vmul.f32 %v1351, %v1446
        %v1464 = vmul.f32 %v1352, %v1448
        %1465 = vadd.xlane.f32.xlu0 %v1449
        %v1466 = vpop.xlane.xlu0 %1465
        %1467 = vadd.xlane.f32.xlu0 %v1450
        %v1468 = vpop.xlane.xlu0 %1467
        %1469 = vadd.xlane.f32.xlu0 %v1451
        %v1470 = vpop.xlane.xlu0 %1469
        %1471 = vadd.xlane.f32.xlu0 %v1452
        %v1472 = vpop.xlane.xlu0 %1471
        %1473 = vadd.xlane.f32.xlu0 %v1453
        %v1474 = vpop.xlane.xlu0 %1473
        %1475 = vadd.xlane.f32.xlu0 %v1454
        %v1476 = vpop.xlane.xlu0 %1475
        %1477 = vadd.xlane.f32.xlu0 %v1455
        %v1478 = vpop.xlane.xlu0 %1477
        %1479 = vadd.xlane.f32.xlu0 %v1456
        %v1480 = vpop.xlane.xlu0 %1479
        %1481 = vadd.xlane.f32.xlu0 %v1457
        %v1482 = vpop.xlane.xlu0 %1481
        %1483 = vadd.xlane.f32.xlu0 %v1458
        %v1484 = vpop.xlane.xlu0 %1483
        %1485 = vadd.xlane.f32.xlu0 %v1459
        %v1486 = vpop.xlane.xlu0 %1485
        %1487 = vadd.xlane.f32.xlu0 %v1460
        %v1488 = vpop.xlane.xlu0 %1487
        %1489 = vadd.xlane.f32.xlu0 %v1461
        %v1490 = vpop.xlane.xlu0 %1489
        %1491 = vadd.xlane.f32.xlu0 %v1462
        %v1492 = vpop.xlane.xlu0 %1491
        %1493 = vadd.xlane.f32.xlu0 %v1463
        %v1494 = vpop.xlane.xlu0 %1493
        %1495 = vadd.xlane.f32.xlu0 %v1464
        %v1496 = vpop.xlane.xlu0 %1495
        %v1497 = vmul.f32 %v1466, 0.03125
        %v1498 = vmul.f32 %v1468, 0.03125
        %v1499 = vmul.f32 %v1470, 0.03125
        %v1500 = vmul.f32 %v1472, 0.03125
        %v1501 = vmul.f32 %v1474, 0.03125
        %v1502 = vmul.f32 %v1476, 0.03125
        %v1503 = vmul.f32 %v1478, 0.03125
        %v1504 = vmul.f32 %v1480, 0.03125
        %v1505 = vmul.f32 %v1482, 0.03125
        %v1506 = vmul.f32 %v1484, 0.03125
        %v1507 = vmul.f32 %v1486, 0.03125
        %v1508 = vmul.f32 %v1488, 0.03125
        %v1509 = vmul.f32 %v1490, 0.03125
        %v1510 = vmul.f32 %v1492, 0.03125
        %v1511 = vmul.f32 %v1494, 0.03125
        %v1512 = vmul.f32 %v1496, 0.03125
        %v1513 = vmul.f32 %v1449, %v1449
        %v1514 = vmul.f32 %v1450, %v1450
        %v1515 = vmul.f32 %v1451, %v1451
        %v1516 = vmul.f32 %v1452, %v1452
        %v1517 = vmul.f32 %v1453, %v1453
        %v1518 = vmul.f32 %v1454, %v1454
        %v1519 = vmul.f32 %v1455, %v1455
        %v1520 = vmul.f32 %v1456, %v1456
        %v1521 = vmul.f32 %v1457, %v1457
        %v1522 = vmul.f32 %v1458, %v1458
        %v1523 = vmul.f32 %v1459, %v1459
        %v1524 = vmul.f32 %v1460, %v1460
        %v1525 = vmul.f32 %v1461, %v1461
        %v1526 = vmul.f32 %v1462, %v1462
        %v1527 = vmul.f32 %v1463, %v1463
        %v1528 = vmul.f32 %v1464, %v1464
        %1529 = vadd.xlane.f32.xlu0 %v1513
        %v1530 = vpop.xlane.xlu0 %1529
        %1531 = vadd.xlane.f32.xlu0 %v1514
        %v1532 = vpop.xlane.xlu0 %1531
        %1533 = vadd.xlane.f32.xlu0 %v1515
        %v1534 = vpop.xlane.xlu0 %1533
        %1535 = vadd.xlane.f32.xlu0 %v1516
        %v1536 = vpop.xlane.xlu0 %1535
        %1537 = vadd.xlane.f32.xlu0 %v1517
        %v1538 = vpop.xlane.xlu0 %1537
        %1539 = vadd.xlane.f32.xlu0 %v1518
        %v1540 = vpop.xlane.xlu0 %1539
        %1541 = vadd.xlane.f32.xlu0 %v1519
        %v1542 = vpop.xlane.xlu0 %1541
        %1543 = vadd.xlane.f32.xlu0 %v1520
        %v1544 = vpop.xlane.xlu0 %1543
        %1545 = vadd.xlane.f32.xlu0 %v1521
        %v1546 = vpop.xlane.xlu0 %1545
        %1547 = vadd.xlane.f32.xlu0 %v1522
        %v1548 = vpop.xlane.xlu0 %1547
        %1549 = vadd.xlane.f32.xlu0 %v1523
        %v1550 = vpop.xlane.xlu0 %1549
        %1551 = vadd.xlane.f32.xlu0 %v1524
        %v1552 = vpop.xlane.xlu0 %1551
        %1553 = vadd.xlane.f32.xlu0 %v1525
        %v1554 = vpop.xlane.xlu0 %1553
        %1555 = vadd.xlane.f32.xlu0 %v1526
        %v1556 = vpop.xlane.xlu0 %1555
        %1557 = vadd.xlane.f32.xlu0 %v1527
        %v1558 = vpop.xlane.xlu0 %1557
        %1559 = vadd.xlane.f32.xlu0 %v1528
        %v1560 = vpop.xlane.xlu0 %1559
        %v1561 = vmul.f32 %v1530, 0.03125
        %v1562 = vmul.f32 %v1532, 0.03125
        %v1563 = vmul.f32 %v1534, 0.03125
        %v1564 = vmul.f32 %v1536, 0.03125
        %v1565 = vmul.f32 %v1538, 0.03125
        %v1566 = vmul.f32 %v1540, 0.03125
        %v1567 = vmul.f32 %v1542, 0.03125
        %v1568 = vmul.f32 %v1544, 0.03125
        %v1569 = vmul.f32 %v1546, 0.03125
        %v1570 = vmul.f32 %v1548, 0.03125
        %v1571 = vmul.f32 %v1550, 0.03125
        %v1572 = vmul.f32 %v1552, 0.03125
        %v1573 = vmul.f32 %v1554, 0.03125
        %v1574 = vmul.f32 %v1556, 0.03125
        %v1575 = vmul.f32 %v1558, 0.03125
        %v1576 = vmul.f32 %v1560, 0.03125
        %v1577 = vmul.f32 %v1497, %v1497
        %v1578 = vmul.f32 %v1498, %v1498
        %v1579 = vmul.f32 %v1499, %v1499
        %v1580 = vmul.f32 %v1500, %v1500
        %v1581 = vmul.f32 %v1501, %v1501
        %v1582 = vmul.f32 %v1502, %v1502
        %v1583 = vmul.f32 %v1503, %v1503
        %v1584 = vmul.f32 %v1504, %v1504
        %v1585 = vmul.f32 %v1505, %v1505
        %v1586 = vmul.f32 %v1506, %v1506
        %v1587 = vmul.f32 %v1507, %v1507
        %v1588 = vmul.f32 %v1508, %v1508
        %v1589 = vmul.f32 %v1509, %v1509
        %v1590 = vmul.f32 %v1510, %v1510
        %v1591 = vmul.f32 %v1511, %v1511
        %v1592 = vmul.f32 %v1512, %v1512
        %v1593 = vsub.f32 %v1561, %v1577
        %v1594 = vsub.f32 %v1562, %v1578
        %v1595 = vsub.f32 %v1563, %v1579
        %v1596 = vsub.f32 %v1564, %v1580
        %v1597 = vsub.f32 %v1565, %v1581
        %v1598 = vsub.f32 %v1566, %v1582
        %v1599 = vsub.f32 %v1567, %v1583
        %v1600 = vsub.f32 %v1568, %v1584
        %v1601 = vsub.f32 %v1569, %v1585
        %v1602 = vsub.f32 %v1570, %v1586
        %v1603 = vsub.f32 %v1571, %v1587
        %v1604 = vsub.f32 %v1572, %v1588
        %v1605 = vsub.f32 %v1573, %v1589
        %v1606 = vsub.f32 %v1574, %v1590
        %v1607 = vsub.f32 %v1575, %v1591
        %v1608 = vsub.f32 %v1576, %v1592
        %v1609 = vsub.f32 %v1449, %v1497
        %v1610 = vsub.f32 %v1450, %v1498
        %v1611 = vsub.f32 %v1451, %v1499
        %v1612 = vsub.f32 %v1452, %v1500
        %v1613 = vsub.f32 %v1453, %v1501
        %v1614 = vsub.f32 %v1454, %v1502
        %v1615 = vsub.f32 %v1455, %v1503
        %v1616 = vsub.f32 %v1456, %v1504
        %v1617 = vsub.f32 %v1457, %v1505
        %v1618 = vsub.f32 %v1458, %v1506
        %v1619 = vsub.f32 %v1459, %v1507
        %v1620 = vsub.f32 %v1460, %v1508
        %v1621 = vsub.f32 %v1461, %v1509
        %v1622 = vsub.f32 %v1462, %v1510
        %v1623 = vsub.f32 %v1463, %v1511
        %v1624 = vsub.f32 %v1464, %v1512
        %v1625 = vadd.f32 %v1593, 0.1
        %v1626 = vadd.f32 %v1594, 0.1
        %v1627 = vadd.f32 %v1595, 0.1
        %v1628 = vadd.f32 %v1596, 0.1
        %v1629 = vadd.f32 %v1597, 0.1
        %v1630 = vadd.f32 %v1598, 0.1
        %v1631 = vadd.f32 %v1599, 0.1
        %v1632 = vadd.f32 %v1600, 0.1
        %v1633 = vadd.f32 %v1601, 0.1
        %v1634 = vadd.f32 %v1602, 0.1
        %v1635 = vadd.f32 %v1603, 0.1
        %v1636 = vadd.f32 %v1604, 0.1
        %v1637 = vadd.f32 %v1605, 0.1
        %v1638 = vadd.f32 %v1606, 0.1
        %v1639 = vadd.f32 %v1607, 0.1
        %v1640 = vadd.f32 %v1608, 0.1
        %v1641 = vrsqrt.pop %v1625
        %v1642 = vrsqrt.pop %v1626
        %v1643 = vrsqrt.pop %v1627
        %v1644 = vrsqrt.pop %v1628
        %v1645 = vrsqrt.pop %v1629
        %v1646 = vrsqrt.pop %v1630
        %v1647 = vrsqrt.pop %v1631
        %v1648 = vrsqrt.pop %v1632
        %v1649 = vrsqrt.pop %v1633
        %v1650 = vrsqrt.pop %v1634
        %v1651 = vrsqrt.pop %v1635
        %v1652 = vrsqrt.pop %v1636
        %v1653 = vrsqrt.pop %v1637
        %v1654 = vrsqrt.pop %v1638
        %v1655 = vrsqrt.pop %v1639
        %v1656 = vrsqrt.pop %v1640
        %v1657 = vmul.f32 %v1609, %v1641
        %v1658 = vmul.f32 %v1610, %v1642
        %v1659 = vmul.f32 %v1611, %v1643
        %v1660 = vmul.f32 %v1612, %v1644
        %v1661 = vmul.f32 %v1613, %v1645
        %v1662 = vmul.f32 %v1614, %v1646
        %v1663 = vmul.f32 %v1615, %v1647
        %v1664 = vmul.f32 %v1616, %v1648
        %v1665 = vmul.f32 %v1617, %v1649
        %v1666 = vmul.f32 %v1618, %v1650
        %v1667 = vmul.f32 %v1619, %v1651
        %v1668 = vmul.f32 %v1620, %v1652
        %v1669 = vmul.f32 %v1621, %v1653
        %v1670 = vmul.f32 %v1622, %v1654
        %v1671 = vmul.f32 %v1623, %v1655
        %v1672 = vmul.f32 %v1624, %v1656
        %v1673 = vlaneseq
        %v1674 = vshrl.u32 %v1673, 7
        %v1675 = vsub.s32 0, %v1674
        %v1676 = vrot.slane %v462, %v1675
        %v1677 = vmul.f32 %v1657, %v1676
        %v1678 = vmul.f32 %v1658, %v1676
        %v1679 = vmul.f32 %v1659, %v1676
        %v1680 = vmul.f32 %v1660, %v1676
        %v1681 = vmul.f32 %v1661, %v1676
        %v1682 = vmul.f32 %v1662, %v1676
        %v1683 = vmul.f32 %v1663, %v1676
        %v1684 = vmul.f32 %v1664, %v1676
        %v1685 = vmul.f32 %v1665, %v1676
        %v1686 = vmul.f32 %v1666, %v1676
        %v1687 = vmul.f32 %v1667, %v1676
        %v1688 = vmul.f32 %v1668, %v1676
        %v1689 = vmul.f32 %v1669, %v1676
        %v1690 = vmul.f32 %v1670, %v1676
        %v1691 = vmul.f32 %v1671, %v1676
        %v1692 = vmul.f32 %v1672, %v1676
        %v1693 = vlaneseq
        %v1694 = vshrl.u32 %v1693, 7
        %v1695 = vsub.s32 0, %v1694
        %v1696 = vrot.slane %v467, %v1695
        %v1697 = vadd.f32 %v1677, %v1696
        %v1698 = vadd.f32 %v1678, %v1696
        %v1699 = vadd.f32 %v1679, %v1696
        %v1700 = vadd.f32 %v1680, %v1696
        %v1701 = vadd.f32 %v1681, %v1696
        %v1702 = vadd.f32 %v1682, %v1696
        %v1703 = vadd.f32 %v1683, %v1696
        %v1704 = vadd.f32 %v1684, %v1696
        %v1705 = vadd.f32 %v1685, %v1696
        %v1706 = vadd.f32 %v1686, %v1696
        %v1707 = vadd.f32 %v1687, %v1696
        %v1708 = vadd.f32 %v1688, %v1696
        %v1709 = vadd.f32 %v1689, %v1696
        %v1710 = vadd.f32 %v1690, %v1696
        %v1711 = vadd.f32 %v1691, %v1696
        %v1712 = vadd.f32 %v1692, %v1696
        %v1713 = vadd.f32 %v1156, %v1697
        %v1714 = vadd.f32 %v1157, %v1698
        %v1715 = vadd.f32 %v1158, %v1699
        %v1716 = vadd.f32 %v1159, %v1700
        %v1717 = vadd.f32 %v1160, %v1701
        %v1718 = vadd.f32 %v1161, %v1702
        %v1719 = vadd.f32 %v1162, %v1703
        %v1720 = vadd.f32 %v1163, %v1704
        %v1721 = vadd.f32 %v1164, %v1705
        %v1722 = vadd.f32 %v1165, %v1706
        %v1723 = vadd.f32 %v1166, %v1707
        %v1724 = vadd.f32 %v1167, %v1708
        %v1725 = vadd.f32 %v1168, %v1709
        %v1726 = vadd.f32 %v1169, %v1710
        %v1727 = vadd.f32 %v1170, %v1711
        %v1728 = vadd.f32 %v1171, %v1712
        %v1729 = vld [vmem:[#allocation5] sm:$0xff]
        %v1730 = vld [vmem:[#allocation5 + $0x8] sm:$0xff]
        %v1731 = vld [vmem:[#allocation5 + $0x10] sm:$0xff]
        %v1732 = vld [vmem:[#allocation5 + $0x18] sm:$0xff]
        %v1733 = vld [vmem:[#allocation5 + $0x20] sm:$0xff]
        %v1734 = vld [vmem:[#allocation5 + $0x28] sm:$0xff]
        %v1735 = vld [vmem:[#allocation5 + $0x30] sm:$0xff]
        %v1736 = vld [vmem:[#allocation5 + $0x38] sm:$0xff]
        %v1737 = vld [vmem:[#allocation5 + $0x40] sm:$0xff]
        %v1738 = vld [vmem:[#allocation5 + $0x48] sm:$0xff]
        %v1739 = vld [vmem:[#allocation5 + $0x50] sm:$0xff]
        %v1740 = vld [vmem:[#allocation5 + $0x58] sm:$0xff]
        %v1741 = vld [vmem:[#allocation5 + $0x60] sm:$0xff]
        %v1742 = vld [vmem:[#allocation5 + $0x68] sm:$0xff]
        %v1743 = vld [vmem:[#allocation5 + $0x70] sm:$0xff]
        %v1744 = vld [vmem:[#allocation5 + $0x78] sm:$0xff]
        %v1745 = vlaneseq
        %v1746 = vshrl.u32 %v1745, 7
        %v1747 = vsub.s32 0, %v1746
        %v1748 = vrot.slane %v458, %v1747
        %1749 = vmatprep.subr.mxu0 0.0
        %1750 = vmatpush1.msra.mxu0 %v1729
        %1751 = vmatprep.subr.mxu0 0.0
        %1752 = vmatpush1.msra.mxu0 %v1730
        %1753 = vmatprep.subr.mxu0 0.0
        %1754 = vmatpush1.msra.mxu0 %v1731
        %1755 = vmatprep.subr.mxu0 0.0
        %1756 = vmatpush1.msra.mxu0 %v1732
        %1757 = vmatprep.subr.mxu0 0.0
        %1758 = vmatpush1.msra.mxu0 %v1733
        %1759 = vmatprep.subr.mxu0 0.0
        %1760 = vmatpush1.msra.mxu0 %v1734
        %1761 = vmatprep.subr.mxu0 0.0
        %1762 = vmatpush1.msra.mxu0 %v1735
        %1763 = vmatprep.subr.mxu0 0.0
        %1764 = vmatpush1.msra.mxu0 %v1736
        %1765 = vmatprep.subr.mxu0 0.0
        %1766 = vmatpush1.msra.mxu0 %v1737
        %1767 = vmatprep.subr.mxu0 0.0
        %1768 = vmatpush1.msra.mxu0 %v1738
        %1769 = vmatprep.subr.mxu0 0.0
        %1770 = vmatpush1.msra.mxu0 %v1739
        %1771 = vmatprep.subr.mxu0 0.0
        %1772 = vmatpush1.msra.mxu0 %v1740
        %1773 = vmatprep.subr.mxu0 0.0
        %1774 = vmatpush1.msra.mxu0 %v1741
        %1775 = vmatprep.subr.mxu0 0.0
        %1776 = vmatpush1.msra.mxu0 %v1742
        %1777 = vmatprep.subr.mxu0 0.0
        %1778 = vmatpush1.msra.mxu0 %v1743
        %1779 = vmatprep.subr.mxu0 0.0
        %1780 = vmatpush1.msra.mxu0 %v1744
        %1781 = vmatprep.subr.mxu0 0.0
        %1782 = vmatpush1.msra.mxu0 0.0
        %1783 = vmatprep.subr.mxu0 0.0
        %1784 = vmatpush1.msra.mxu0 0.0
        %1785 = vmatprep.subr.mxu0 0.0
        %1786 = vmatpush1.msra.mxu0 0.0
        %1787 = vmatprep.subr.mxu0 0.0
        %1788 = vmatpush1.msra.mxu0 0.0
        %1789 = vmatprep.subr.mxu0 0.0
        %1790 = vmatpush1.msra.mxu0 0.0
        %1791 = vmatprep.subr.mxu0 0.0
        %1792 = vmatpush1.msra.mxu0 0.0
        %1793 = vmatprep.subr.mxu0 0.0
        %1794 = vmatpush1.msra.mxu0 0.0
        %1795 = vmatprep.subr.mxu0 0.0
        %1796 = vmatpush1.msra.mxu0 0.0
        %1797 = vmatprep.subr.mxu0 0.0
        %1798 = vmatpush1.msra.mxu0 0.0
        %1799 = vmatprep.subr.mxu0 0.0
        %1800 = vmatpush1.msra.mxu0 0.0
        %1801 = vmatprep.subr.mxu0 0.0
        %1802 = vmatpush1.msra.mxu0 0.0
        %1803 = vmatprep.subr.mxu0 0.0
        %1804 = vmatpush1.msra.mxu0 0.0
        %1805 = vmatprep.subr.mxu0 0.0
        %1806 = vmatpush1.msra.mxu0 0.0
        %1807 = vmatprep.subr.mxu0 0.0
        %1808 = vmatpush1.msra.mxu0 0.0
        %1809 = vmatprep.subr.mxu0 0.0
        %1810 = vmatpush1.msra.mxu0 0.0
        %1811 = vmatprep.subr.mxu0 0.0
        %1812 = vmatpush1.msra.mxu0 0.0
        %1813 = vmatprep.mubr.f32.mxu0 0.0
        %1814 = vmatmul.mubr.f32.gmra.mrb[0].mxu0 %v1697
        %v1815 = vpop.f32.mrb[0].mxu0
        %v1816 = vadd.f32 %v1748, %v1815
        %v1817 = vpop.f32.mrb[0].mxu0
        %1818 = vmatprep.mubr.f32.mxu0 0.0
        %1819 = vmatmul.mubr.f32.gmra.mrb[0].mxu0 %v1698
        %v1820 = vpop.f32.mrb[0].mxu0
        %v1821 = vadd.f32 %v1748, %v1820
        %v1822 = vpop.f32.mrb[0].mxu0
        %1823 = vmatprep.mubr.f32.mxu0 0.0
        %1824 = vmatmul.mubr.f32.gmra.mrb[0].mxu0 %v1699
        %v1825 = vpop.f32.mrb[0].mxu0
        %v1826 = vadd.f32 %v1748, %v1825
        %v1827 = vpop.f32.mrb[0].mxu0
        %1828 = vmatprep.mubr.f32.mxu0 0.0
        %1829 = vmatmul.mubr.f32.gmra.mrb[0].mxu0 %v1700
        %v1830 = vpop.f32.mrb[0].mxu0
        %v1831 = vadd.f32 %v1748, %v1830
        %v1832 = vpop.f32.mrb[0].mxu0
        %1833 = vmatprep.mubr.f32.mxu0 0.0
        %1834 = vmatmul.mubr.f32.gmra.mrb[0].mxu0 %v1701
        %v1835 = vpop.f32.mrb[0].mxu0
        %v1836 = vadd.f32 %v1748, %v1835
        %v1837 = vpop.f32.mrb[0].mxu0
        %1838 = vmatprep.mubr.f32.mxu0 0.0
        %1839 = vmatmul.mubr.f32.gmra.mrb[0].mxu0 %v1702
        %v1840 = vpop.f32.mrb[0].mxu0
        %v1841 = vadd.f32 %v1748, %v1840
        %v1842 = vpop.f32.mrb[0].mxu0
        %1843 = vmatprep.mubr.f32.mxu0 0.0
        %1844 = vmatmul.mubr.f32.gmra.mrb[0].mxu0 %v1703
        %v1845 = vpop.f32.mrb[0].mxu0
        %v1846 = vadd.f32 %v1748, %v1845
        %v1847 = vpop.f32.mrb[0].mxu0
        %1848 = vmatprep.mubr.f32.mxu0 0.0
        %1849 = vmatmul.mubr.f32.gmra.mrb[0].mxu0 %v1704
        %v1850 = vpop.f32.mrb[0].mxu0
        %v1851 = vadd.f32 %v1748, %v1850
        %v1852 = vpop.f32.mrb[0].mxu0
        %1853 = vmatprep.mubr.f32.mxu0 0.0
        %1854 = vmatmul.mubr.f32.gmra.mrb[0].mxu0 %v1705
        %v1855 = vpop.f32.mrb[0].mxu0
        %v1856 = vadd.f32 %v1748, %v1855
        %v1857 = vpop.f32.mrb[0].mxu0
        %1858 = vmatprep.mubr.f32.mxu0 0.0
        %1859 = vmatmul.mubr.f32.gmra.mrb[0].mxu0 %v1706
        %v1860 = vpop.f32.mrb[0].mxu0
        %v1861 = vadd.f32 %v1748, %v1860
        %v1862 = vpop.f32.mrb[0].mxu0
        %1863 = vmatprep.mubr.f32.mxu0 0.0
        %1864 = vmatmul.mubr.f32.gmra.mrb[0].mxu0 %v1707
        %v1865 = vpop.f32.mrb[0].mxu0
        %v1866 = vadd.f32 %v1748, %v1865
        %v1867 = vpop.f32.mrb[0].mxu0
        %1868 = vmatprep.mubr.f32.mxu0 0.0
        %1869 = vmatmul.mubr.f32.gmra.mrb[0].mxu0 %v1708
        %v1870 = vpop.f32.mrb[0].mxu0
        %v1871 = vadd.f32 %v1748, %v1870
        %v1872 = vpop.f32.mrb[0].mxu0
        %1873 = vmatprep.mubr.f32.mxu0 0.0
        %1874 = vmatmul.mubr.f32.gmra.mrb[0].mxu0 %v1709
        %v1875 = vpop.f32.mrb[0].mxu0
        %v1876 = vadd.f32 %v1748, %v1875
        %v1877 = vpop.f32.mrb[0].mxu0
        %1878 = vmatprep.mubr.f32.mxu0 0.0
        %1879 = vmatmul.mubr.f32.gmra.mrb[0].mxu0 %v1710
        %v1880 = vpop.f32.mrb[0].mxu0
        %v1881 = vadd.f32 %v1748, %v1880
        %v1882 = vpop.f32.mrb[0].mxu0
        %1883 = vmatprep.mubr.f32.mxu0 0.0
        %1884 = vmatmul.mubr.f32.gmra.mrb[0].mxu0 %v1711
        %v1885 = vpop.f32.mrb[0].mxu0
        %v1886 = vadd.f32 %v1748, %v1885
        %v1887 = vpop.f32.mrb[0].mxu0
        %1888 = vmatprep.mubr.f32.mxu0 0.0
        %1889 = vmatmul.mubr.f32.gmra.mrb[0].mxu0 %v1712
        %v1890 = vpop.f32.mrb[0].mxu0
        %v1891 = vadd.f32 %v1748, %v1890
        %v1892 = vpop.f32.mrb[0].mxu0
        %1893 = vdwg.mxu0
        %v1894 = vadd.f32 %v1816, %v1713
        %v1895 = vadd.f32 %v1821, %v1714
        %v1896 = vadd.f32 %v1826, %v1715
        %v1897 = vadd.f32 %v1831, %v1716
        %v1898 = vadd.f32 %v1836, %v1717
        %v1899 = vadd.f32 %v1841, %v1718
        %v1900 = vadd.f32 %v1846, %v1719
        %v1901 = vadd.f32 %v1851, %v1720
        %v1902 = vadd.f32 %v1856, %v1721
        %v1903 = vadd.f32 %v1861, %v1722
        %v1904 = vadd.f32 %v1866, %v1723
        %v1905 = vadd.f32 %v1871, %v1724
        %v1906 = vadd.f32 %v1876, %v1725
        %v1907 = vadd.f32 %v1881, %v1726
        %v1908 = vadd.f32 %v1886, %v1727
        %v1909 = vadd.f32 %v1891, %v1728
        %v1910 = vxor.u32 %v1894, 2147483648
        %v1911 = vxor.u32 %v1895, 2147483648
        %v1912 = vxor.u32 %v1896, 2147483648
        %v1913 = vxor.u32 %v1897, 2147483648
        %v1914 = vxor.u32 %v1898, 2147483648
        %v1915 = vxor.u32 %v1899, 2147483648
        %v1916 = vxor.u32 %v1900, 2147483648
        %v1917 = vxor.u32 %v1901, 2147483648
        %v1918 = vxor.u32 %v1902, 2147483648
        %v1919 = vxor.u32 %v1903, 2147483648
        %v1920 = vxor.u32 %v1904, 2147483648
        %v1921 = vxor.u32 %v1905, 2147483648
        %v1922 = vxor.u32 %v1906, 2147483648
        %v1923 = vxor.u32 %v1907, 2147483648
        %v1924 = vxor.u32 %v1908, 2147483648
        %v1925 = vxor.u32 %v1909, 2147483648
        %v1926 = vmul.f32 %v1910, 1.442695
        %v1927 = vpow.pop %v1926
        %v1928 = vmul.f32 %v1911, 1.442695
        %v1929 = vpow.pop %v1928
        %v1930 = vmul.f32 %v1912, 1.442695
        %v1931 = vpow.pop %v1930
        %v1932 = vmul.f32 %v1913, 1.442695
        %v1933 = vpow.pop %v1932
        %v1934 = vmul.f32 %v1914, 1.442695
        %v1935 = vpow.pop %v1934
        %v1936 = vmul.f32 %v1915, 1.442695
        %v1937 = vpow.pop %v1936
        %v1938 = vmul.f32 %v1916, 1.442695
        %v1939 = vpow.pop %v1938
        %v1940 = vmul.f32 %v1917, 1.442695
        %v1941 = vpow.pop %v1940
        %v1942 = vmul.f32 %v1918, 1.442695
        %v1943 = vpow.pop %v1942
        %v1944 = vmul.f32 %v1919, 1.442695
        %v1945 = vpow.pop %v1944
        %v1946 = vmul.f32 %v1920, 1.442695
        %v1947 = vpow.pop %v1946
        %v1948 = vmul.f32 %v1921, 1.442695
        %v1949 = vpow.pop %v1948
        %v1950 = vmul.f32 %v1922, 1.442695
        %v1951 = vpow.pop %v1950
        %v1952 = vmul.f32 %v1923, 1.442695
        %v1953 = vpow.pop %v1952
        %v1954 = vmul.f32 %v1924, 1.442695
        %v1955 = vpow.pop %v1954
        %v1956 = vmul.f32 %v1925, 1.442695
        %v1957 = vpow.pop %v1956
        %v1958 = vadd.f32 %v1927, 1.0
        %v1959 = vadd.f32 %v1929, 1.0
        %v1960 = vadd.f32 %v1931, 1.0
        %v1961 = vadd.f32 %v1933, 1.0
        %v1962 = vadd.f32 %v1935, 1.0
        %v1963 = vadd.f32 %v1937, 1.0
        %v1964 = vadd.f32 %v1939, 1.0
        %v1965 = vadd.f32 %v1941, 1.0
        %v1966 = vadd.f32 %v1943, 1.0
        %v1967 = vadd.f32 %v1945, 1.0
        %v1968 = vadd.f32 %v1947, 1.0
        %v1969 = vadd.f32 %v1949, 1.0
        %v1970 = vadd.f32 %v1951, 1.0
        %v1971 = vadd.f32 %v1953, 1.0
        %v1972 = vadd.f32 %v1955, 1.0
        %v1973 = vadd.f32 %v1957, 1.0
        %v1974 = vrcp.pop %v1958
        %v1975 = vmul.f32 1.0, %v1974
        %v1976 = vrcp.pop %v1959
        %v1977 = vmul.f32 1.0, %v1976
        %v1978 = vrcp.pop %v1960
        %v1979 = vmul.f32 1.0, %v1978
        %v1980 = vrcp.pop %v1961
        %v1981 = vmul.f32 1.0, %v1980
        %v1982 = vrcp.pop %v1962
        %v1983 = vmul.f32 1.0, %v1982
        %v1984 = vrcp.pop %v1963
        %v1985 = vmul.f32 1.0, %v1984
        %v1986 = vrcp.pop %v1964
        %v1987 = vmul.f32 1.0, %v1986
        %v1988 = vrcp.pop %v1965
        %v1989 = vmul.f32 1.0, %v1988
        %v1990 = vrcp.pop %v1966
        %v1991 = vmul.f32 1.0, %v1990
        %v1992 = vrcp.pop %v1967
        %v1993 = vmul.f32 1.0, %v1992
        %v1994 = vrcp.pop %v1968
        %v1995 = vmul.f32 1.0, %v1994
        %v1996 = vrcp.pop %v1969
        %v1997 = vmul.f32 1.0, %v1996
        %v1998 = vrcp.pop %v1970
        %v1999 = vmul.f32 1.0, %v1998
        %v2000 = vrcp.pop %v1971
        %v2001 = vmul.f32 1.0, %v2000
        %v2002 = vrcp.pop %v1972
        %v2003 = vmul.f32 1.0, %v2002
        %v2004 = vrcp.pop %v1973
        %v2005 = vmul.f32 1.0, %v2004
        %v2006 = vmul.f32 %v1894, %v1975
        %v2007 = vmul.f32 %v1895, %v1977
        %v2008 = vmul.f32 %v1896, %v1979
        %v2009 = vmul.f32 %v1897, %v1981
        %v2010 = vmul.f32 %v1898, %v1983
        %v2011 = vmul.f32 %v1899, %v1985
        %v2012 = vmul.f32 %v1900, %v1987
        %v2013 = vmul.f32 %v1901, %v1989
        %v2014 = vmul.f32 %v1902, %v1991
        %v2015 = vmul.f32 %v1903, %v1993
        %v2016 = vmul.f32 %v1904, %v1995
        %v2017 = vmul.f32 %v1905, %v1997
        %v2018 = vmul.f32 %v1906, %v1999
        %v2019 = vmul.f32 %v1907, %v2001
        %v2020 = vmul.f32 %v1908, %v2003
        %v2021 = vmul.f32 %v1909, %v2005
        %2022 = vadd.xlane.f32.xlu0 %v2006
        %v2023 = vpop.xlane.xlu0 %2022
        %2024 = vadd.xlane.f32.xlu0 %v2007
        %v2025 = vpop.xlane.xlu0 %2024
        %2026 = vadd.xlane.f32.xlu0 %v2008
        %v2027 = vpop.xlane.xlu0 %2026
        %2028 = vadd.xlane.f32.xlu0 %v2009
        %v2029 = vpop.xlane.xlu0 %2028
        %2030 = vadd.xlane.f32.xlu0 %v2010
        %v2031 = vpop.xlane.xlu0 %2030
        %2032 = vadd.xlane.f32.xlu0 %v2011
        %v2033 = vpop.xlane.xlu0 %2032
        %2034 = vadd.xlane.f32.xlu0 %v2012
        %v2035 = vpop.xlane.xlu0 %2034
        %2036 = vadd.xlane.f32.xlu0 %v2013
        %v2037 = vpop.xlane.xlu0 %2036
        %2038 = vadd.xlane.f32.xlu0 %v2014
        %v2039 = vpop.xlane.xlu0 %2038
        %2040 = vadd.xlane.f32.xlu0 %v2015
        %v2041 = vpop.xlane.xlu0 %2040
        %2042 = vadd.xlane.f32.xlu0 %v2016
        %v2043 = vpop.xlane.xlu0 %2042
        %2044 = vadd.xlane.f32.xlu0 %v2017
        %v2045 = vpop.xlane.xlu0 %2044
        %2046 = vadd.xlane.f32.xlu0 %v2018
        %v2047 = vpop.xlane.xlu0 %2046
        %2048 = vadd.xlane.f32.xlu0 %v2019
        %v2049 = vpop.xlane.xlu0 %2048
        %2050 = vadd.xlane.f32.xlu0 %v2020
        %v2051 = vpop.xlane.xlu0 %2050
        %2052 = vadd.xlane.f32.xlu0 %v2021
        %v2053 = vpop.xlane.xlu0 %2052
        %v2054 = vmul.f32 %v2023, 0.03125
        %v2055 = vmul.f32 %v2025, 0.03125
        %v2056 = vmul.f32 %v2027, 0.03125
        %v2057 = vmul.f32 %v2029, 0.03125
        %v2058 = vmul.f32 %v2031, 0.03125
        %v2059 = vmul.f32 %v2033, 0.03125
        %v2060 = vmul.f32 %v2035, 0.03125
        %v2061 = vmul.f32 %v2037, 0.03125
        %v2062 = vmul.f32 %v2039, 0.03125
        %v2063 = vmul.f32 %v2041, 0.03125
        %v2064 = vmul.f32 %v2043, 0.03125
        %v2065 = vmul.f32 %v2045, 0.03125
        %v2066 = vmul.f32 %v2047, 0.03125
        %v2067 = vmul.f32 %v2049, 0.03125
        %v2068 = vmul.f32 %v2051, 0.03125
        %v2069 = vmul.f32 %v2053, 0.03125
        %v2070 = vmul.f32 %v2006, %v2006
        %v2071 = vmul.f32 %v2007, %v2007
        %v2072 = vmul.f32 %v2008, %v2008
        %v2073 = vmul.f32 %v2009, %v2009
        %v2074 = vmul.f32 %v2010, %v2010
        %v2075 = vmul.f32 %v2011, %v2011
        %v2076 = vmul.f32 %v2012, %v2012
        %v2077 = vmul.f32 %v2013, %v2013
        %v2078 = vmul.f32 %v2014, %v2014
        %v2079 = vmul.f32 %v2015, %v2015
        %v2080 = vmul.f32 %v2016, %v2016
        %v2081 = vmul.f32 %v2017, %v2017
        %v2082 = vmul.f32 %v2018, %v2018
        %v2083 = vmul.f32 %v2019, %v2019
        %v2084 = vmul.f32 %v2020, %v2020
        %v2085 = vmul.f32 %v2021, %v2021
        %2086 = vadd.xlane.f32.xlu0 %v2070
        %v2087 = vpop.xlane.xlu0 %2086
        %2088 = vadd.xlane.f32.xlu0 %v2071
        %v2089 = vpop.xlane.xlu0 %2088
        %2090 = vadd.xlane.f32.xlu0 %v2072
        %v2091 = vpop.xlane.xlu0 %2090
        %2092 = vadd.xlane.f32.xlu0 %v2073
        %v2093 = vpop.xlane.xlu0 %2092
        %2094 = vadd.xlane.f32.xlu0 %v2074
        %v2095 = vpop.xlane.xlu0 %2094
        %2096 = vadd.xlane.f32.xlu0 %v2075
        %v2097 = vpop.xlane.xlu0 %2096
        %2098 = vadd.xlane.f32.xlu0 %v2076
        %v2099 = vpop.xlane.xlu0 %2098
        %2100 = vadd.xlane.f32.xlu0 %v2077
        %v2101 = vpop.xlane.xlu0 %2100
        %2102 = vadd.xlane.f32.xlu0 %v2078
        %v2103 = vpop.xlane.xlu0 %2102
        %2104 = vadd.xlane.f32.xlu0 %v2079
        %v2105 = vpop.xlane.xlu0 %2104
        %2106 = vadd.xlane.f32.xlu0 %v2080
        %v2107 = vpop.xlane.xlu0 %2106
        %2108 = vadd.xlane.f32.xlu0 %v2081
        %v2109 = vpop.xlane.xlu0 %2108
        %2110 = vadd.xlane.f32.xlu0 %v2082
        %v2111 = vpop.xlane.xlu0 %2110
        %2112 = vadd.xlane.f32.xlu0 %v2083
        %v2113 = vpop.xlane.xlu0 %2112
        %2114 = vadd.xlane.f32.xlu0 %v2084
        %v2115 = vpop.xlane.xlu0 %2114
        %2116 = vadd.xlane.f32.xlu0 %v2085
        %v2117 = vpop.xlane.xlu0 %2116
        %v2118 = vmul.f32 %v2087, 0.03125
        %v2119 = vmul.f32 %v2089, 0.03125
        %v2120 = vmul.f32 %v2091, 0.03125
        %v2121 = vmul.f32 %v2093, 0.03125
        %v2122 = vmul.f32 %v2095, 0.03125
        %v2123 = vmul.f32 %v2097, 0.03125
        %v2124 = vmul.f32 %v2099, 0.03125
        %v2125 = vmul.f32 %v2101, 0.03125
        %v2126 = vmul.f32 %v2103, 0.03125
        %v2127 = vmul.f32 %v2105, 0.03125
        %v2128 = vmul.f32 %v2107, 0.03125
        %v2129 = vmul.f32 %v2109, 0.03125
        %v2130 = vmul.f32 %v2111, 0.03125
        %v2131 = vmul.f32 %v2113, 0.03125
        %v2132 = vmul.f32 %v2115, 0.03125
        %v2133 = vmul.f32 %v2117, 0.03125
        %v2134 = vmul.f32 %v2054, %v2054
        %v2135 = vmul.f32 %v2055, %v2055
        %v2136 = vmul.f32 %v2056, %v2056
        %v2137 = vmul.f32 %v2057, %v2057
        %v2138 = vmul.f32 %v2058, %v2058
        %v2139 = vmul.f32 %v2059, %v2059
        %v2140 = vmul.f32 %v2060, %v2060
        %v2141 = vmul.f32 %v2061, %v2061
        %v2142 = vmul.f32 %v2062, %v2062
        %v2143 = vmul.f32 %v2063, %v2063
        %v2144 = vmul.f32 %v2064, %v2064
        %v2145 = vmul.f32 %v2065, %v2065
        %v2146 = vmul.f32 %v2066, %v2066
        %v2147 = vmul.f32 %v2067, %v2067
        %v2148 = vmul.f32 %v2068, %v2068
        %v2149 = vmul.f32 %v2069, %v2069
        %v2150 = vsub.f32 %v2118, %v2134
        %v2151 = vsub.f32 %v2119, %v2135
        %v2152 = vsub.f32 %v2120, %v2136
        %v2153 = vsub.f32 %v2121, %v2137
        %v2154 = vsub.f32 %v2122, %v2138
        %v2155 = vsub.f32 %v2123, %v2139
        %v2156 = vsub.f32 %v2124, %v2140
        %v2157 = vsub.f32 %v2125, %v2141
        %v2158 = vsub.f32 %v2126, %v2142
        %v2159 = vsub.f32 %v2127, %v2143
        %v2160 = vsub.f32 %v2128, %v2144
        %v2161 = vsub.f32 %v2129, %v2145
        %v2162 = vsub.f32 %v2130, %v2146
        %v2163 = vsub.f32 %v2131, %v2147
        %v2164 = vsub.f32 %v2132, %v2148
        %v2165 = vsub.f32 %v2133, %v2149
        %v2166 = vsub.f32 %v2006, %v2054
        %v2167 = vsub.f32 %v2007, %v2055
        %v2168 = vsub.f32 %v2008, %v2056
        %v2169 = vsub.f32 %v2009, %v2057
        %v2170 = vsub.f32 %v2010, %v2058
        %v2171 = vsub.f32 %v2011, %v2059
        %v2172 = vsub.f32 %v2012, %v2060
        %v2173 = vsub.f32 %v2013, %v2061
        %v2174 = vsub.f32 %v2014, %v2062
        %v2175 = vsub.f32 %v2015, %v2063
        %v2176 = vsub.f32 %v2016, %v2064
        %v2177 = vsub.f32 %v2017, %v2065
        %v2178 = vsub.f32 %v2018, %v2066
        %v2179 = vsub.f32 %v2019, %v2067
        %v2180 = vsub.f32 %v2020, %v2068
        %v2181 = vsub.f32 %v2021, %v2069
        %v2182 = vadd.f32 %v2150, 0.1
        %v2183 = vadd.f32 %v2151, 0.1
        %v2184 = vadd.f32 %v2152, 0.1
        %v2185 = vadd.f32 %v2153, 0.1
        %v2186 = vadd.f32 %v2154, 0.1
        %v2187 = vadd.f32 %v2155, 0.1
        %v2188 = vadd.f32 %v2156, 0.1
        %v2189 = vadd.f32 %v2157, 0.1
        %v2190 = vadd.f32 %v2158, 0.1
        %v2191 = vadd.f32 %v2159, 0.1
        %v2192 = vadd.f32 %v2160, 0.1
        %v2193 = vadd.f32 %v2161, 0.1
        %v2194 = vadd.f32 %v2162, 0.1
        %v2195 = vadd.f32 %v2163, 0.1
        %v2196 = vadd.f32 %v2164, 0.1
        %v2197 = vadd.f32 %v2165, 0.1
        %v2198 = vrsqrt.pop %v2182
        %v2199 = vrsqrt.pop %v2183
        %v2200 = vrsqrt.pop %v2184
        %v2201 = vrsqrt.pop %v2185
        %v2202 = vrsqrt.pop %v2186
        %v2203 = vrsqrt.pop %v2187
        %v2204 = vrsqrt.pop %v2188
        %v2205 = vrsqrt.pop %v2189
        %v2206 = vrsqrt.pop %v2190
        %v2207 = vrsqrt.pop %v2191
        %v2208 = vrsqrt.pop %v2192
        %v2209 = vrsqrt.pop %v2193
        %v2210 = vrsqrt.pop %v2194
        %v2211 = vrsqrt.pop %v2195
        %v2212 = vrsqrt.pop %v2196
        %v2213 = vrsqrt.pop %v2197
        %v2214 = vmul.f32 %v2166, %v2198
        %v2215 = vmul.f32 %v2167, %v2199
        %v2216 = vmul.f32 %v2168, %v2200
        %v2217 = vmul.f32 %v2169, %v2201
        %v2218 = vmul.f32 %v2170, %v2202
        %v2219 = vmul.f32 %v2171, %v2203
        %v2220 = vmul.f32 %v2172, %v2204
        %v2221 = vmul.f32 %v2173, %v2205
        %v2222 = vmul.f32 %v2174, %v2206
        %v2223 = vmul.f32 %v2175, %v2207
        %v2224 = vmul.f32 %v2176, %v2208
        %v2225 = vmul.f32 %v2177, %v2209
        %v2226 = vmul.f32 %v2178, %v2210
        %v2227 = vmul.f32 %v2179, %v2211
        %v2228 = vmul.f32 %v2180, %v2212
        %v2229 = vmul.f32 %v2181, %v2213
        %v2230 = vlaneseq
        %v2231 = vshrl.u32 %v2230, 7
        %v2232 = vsub.s32 0, %v2231
        %v2233 = vrot.slane %v463, %v2232
        %v2234 = vmul.f32 %v2214, %v2233
        %v2235 = vmul.f32 %v2215, %v2233
        %v2236 = vmul.f32 %v2216, %v2233
        %v2237 = vmul.f32 %v2217, %v2233
        %v2238 = vmul.f32 %v2218, %v2233
        %v2239 = vmul.f32 %v2219, %v2233
        %v2240 = vmul.f32 %v2220, %v2233
        %v2241 = vmul.f32 %v2221, %v2233
        %v2242 = vmul.f32 %v2222, %v2233
        %v2243 = vmul.f32 %v2223, %v2233
        %v2244 = vmul.f32 %v2224, %v2233
        %v2245 = vmul.f32 %v2225, %v2233
        %v2246 = vmul.f32 %v2226, %v2233
        %v2247 = vmul.f32 %v2227, %v2233
        %v2248 = vmul.f32 %v2228, %v2233
        %v2249 = vmul.f32 %v2229, %v2233
        %v2250 = vlaneseq
        %v2251 = vshrl.u32 %v2250, 7
        %v2252 = vsub.s32 0, %v2251
        %v2253 = vrot.slane %v468, %v2252
        %v2254 = vadd.f32 %v2234, %v2253
        %v2255 = vadd.f32 %v2235, %v2253
        %v2256 = vadd.f32 %v2236, %v2253
        %v2257 = vadd.f32 %v2237, %v2253
        %v2258 = vadd.f32 %v2238, %v2253
        %v2259 = vadd.f32 %v2239, %v2253
        %v2260 = vadd.f32 %v2240, %v2253
        %v2261 = vadd.f32 %v2241, %v2253
        %v2262 = vadd.f32 %v2242, %v2253
        %v2263 = vadd.f32 %v2243, %v2253
        %v2264 = vadd.f32 %v2244, %v2253
        %v2265 = vadd.f32 %v2245, %v2253
        %v2266 = vadd.f32 %v2246, %v2253
        %v2267 = vadd.f32 %v2247, %v2253
        %v2268 = vadd.f32 %v2248, %v2253
        %v2269 = vadd.f32 %v2249, %v2253
        %v2270 = vadd.f32 %v1713, %v2254
        %v2271 = vadd.f32 %v1714, %v2255
        %v2272 = vadd.f32 %v1715, %v2256
        %v2273 = vadd.f32 %v1716, %v2257
        %v2274 = vadd.f32 %v1717, %v2258
        %v2275 = vadd.f32 %v1718, %v2259
        %v2276 = vadd.f32 %v1719, %v2260
        %v2277 = vadd.f32 %v1720, %v2261
        %v2278 = vadd.f32 %v1721, %v2262
        %v2279 = vadd.f32 %v1722, %v2263
        %v2280 = vadd.f32 %v1723, %v2264
        %v2281 = vadd.f32 %v1724, %v2265
        %v2282 = vadd.f32 %v1725, %v2266
        %v2283 = vadd.f32 %v1726, %v2267
        %v2284 = vadd.f32 %v1727, %v2268
        %v2285 = vadd.f32 %v1728, %v2269
        %v2286 = vld [vmem:[#allocation7] sm:$0xff]
        %v2287 = vld [vmem:[#allocation7 + $0x8] sm:$0xff]
        %v2288 = vld [vmem:[#allocation7 + $0x10] sm:$0xff]
        %v2289 = vld [vmem:[#allocation7 + $0x18] sm:$0xff]
        %v2290 = vld [vmem:[#allocation7 + $0x20] sm:$0xff]
        %v2291 = vld [vmem:[#allocation7 + $0x28] sm:$0xff]
        %v2292 = vld [vmem:[#allocation7 + $0x30] sm:$0xff]
        %v2293 = vld [vmem:[#allocation7 + $0x38] sm:$0xff]
        %v2294 = vld [vmem:[#allocation7 + $0x40] sm:$0xff]
        %v2295 = vld [vmem:[#allocation7 + $0x48] sm:$0xff]
        %v2296 = vld [vmem:[#allocation7 + $0x50] sm:$0xff]
        %v2297 = vld [vmem:[#allocation7 + $0x58] sm:$0xff]
        %v2298 = vld [vmem:[#allocation7 + $0x60] sm:$0xff]
        %v2299 = vld [vmem:[#allocation7 + $0x68] sm:$0xff]
        %v2300 = vld [vmem:[#allocation7 + $0x70] sm:$0xff]
        %v2301 = vld [vmem:[#allocation7 + $0x78] sm:$0xff]
        %v2302 = vlaneseq
        %v2303 = vshrl.u32 %v2302, 7
        %v2304 = vsub.s32 0, %v2303
        %v2305 = vrot.slane %v459, %v2304
        %2306 = vmatprep.subr.mxu0 0.0
        %2307 = vmatpush1.msra.mxu0 %v2286
        %2308 = vmatprep.subr.mxu0 0.0
        %2309 = vmatpush1.msra.mxu0 %v2287
        %2310 = vmatprep.subr.mxu0 0.0
        %2311 = vmatpush1.msra.mxu0 %v2288
        %2312 = vmatprep.subr.mxu0 0.0
        %2313 = vmatpush1.msra.mxu0 %v2289
        %2314 = vmatprep.subr.mxu0 0.0
        %2315 = vmatpush1.msra.mxu0 %v2290
        %2316 = vmatprep.subr.mxu0 0.0
        %2317 = vmatpush1.msra.mxu0 %v2291
        %2318 = vmatprep.subr.mxu0 0.0
        %2319 = vmatpush1.msra.mxu0 %v2292
        %2320 = vmatprep.subr.mxu0 0.0
        %2321 = vmatpush1.msra.mxu0 %v2293
        %2322 = vmatprep.subr.mxu0 0.0
        %2323 = vmatpush1.msra.mxu0 %v2294
        %2324 = vmatprep.subr.mxu0 0.0
        %2325 = vmatpush1.msra.mxu0 %v2295
        %2326 = vmatprep.subr.mxu0 0.0
        %2327 = vmatpush1.msra.mxu0 %v2296
        %2328 = vmatprep.subr.mxu0 0.0
        %2329 = vmatpush1.msra.mxu0 %v2297
        %2330 = vmatprep.subr.mxu0 0.0
        %2331 = vmatpush1.msra.mxu0 %v2298
        %2332 = vmatprep.subr.mxu0 0.0
        %2333 = vmatpush1.msra.mxu0 %v2299
        %2334 = vmatprep.subr.mxu0 0.0
        %2335 = vmatpush1.msra.mxu0 %v2300
        %2336 = vmatprep.subr.mxu0 0.0
        %2337 = vmatpush1.msra.mxu0 %v2301
        %2338 = vmatprep.subr.mxu0 0.0
        %2339 = vmatpush1.msra.mxu0 0.0
        %2340 = vmatprep.subr.mxu0 0.0
        %2341 = vmatpush1.msra.mxu0 0.0
        %2342 = vmatprep.subr.mxu0 0.0
        %2343 = vmatpush1.msra.mxu0 0.0
        %2344 = vmatprep.subr.mxu0 0.0
        %2345 = vmatpush1.msra.mxu0 0.0
        %2346 = vmatprep.subr.mxu0 0.0
        %2347 = vmatpush1.msra.mxu0 0.0
        %2348 = vmatprep.subr.mxu0 0.0
        %2349 = vmatpush1.msra.mxu0 0.0
        %2350 = vmatprep.subr.mxu0 0.0
        %2351 = vmatpush1.msra.mxu0 0.0
        %2352 = vmatprep.subr.mxu0 0.0
        %2353 = vmatpush1.msra.mxu0 0.0
        %2354 = vmatprep.subr.mxu0 0.0
        %2355 = vmatpush1.msra.mxu0 0.0
        %2356 = vmatprep.subr.mxu0 0.0
        %2357 = vmatpush1.msra.mxu0 0.0
        %2358 = vmatprep.subr.mxu0 0.0
        %2359 = vmatpush1.msra.mxu0 0.0
        %2360 = vmatprep.subr.mxu0 0.0
        %2361 = vmatpush1.msra.mxu0 0.0
        %2362 = vmatprep.subr.mxu0 0.0
        %2363 = vmatpush1.msra.mxu0 0.0
        %2364 = vmatprep.subr.mxu0 0.0
        %2365 = vmatpush1.msra.mxu0 0.0
        %2366 = vmatprep.subr.mxu0 0.0
        %2367 = vmatpush1.msra.mxu0 0.0
        %2368 = vmatprep.subr.mxu0 0.0
        %2369 = vmatpush1.msra.mxu0 0.0
        %2370 = vmatprep.mubr.f32.mxu0 0.0
        %2371 = vmatmul.mubr.f32.gmra.mrb[0].mxu0 %v2254
        %v2372 = vpop.f32.mrb[0].mxu0
        %v2373 = vadd.f32 %v2305, %v2372
        %v2374 = vpop.f32.mrb[0].mxu0
        %2375 = vmatprep.mubr.f32.mxu0 0.0
        %2376 = vmatmul.mubr.f32.gmra.mrb[0].mxu0 %v2255
        %v2377 = vpop.f32.mrb[0].mxu0
        %v2378 = vadd.f32 %v2305, %v2377
        %v2379 = vpop.f32.mrb[0].mxu0
        %2380 = vmatprep.mubr.f32.mxu0 0.0
        %2381 = vmatmul.mubr.f32.gmra.mrb[0].mxu0 %v2256
        %v2382 = vpop.f32.mrb[0].mxu0
        %v2383 = vadd.f32 %v2305, %v2382
        %v2384 = vpop.f32.mrb[0].mxu0
        %2385 = vmatprep.mubr.f32.mxu0 0.0
        %2386 = vmatmul.mubr.f32.gmra.mrb[0].mxu0 %v2257
        %v2387 = vpop.f32.mrb[0].mxu0
        %v2388 = vadd.f32 %v2305, %v2387
        %v2389 = vpop.f32.mrb[0].mxu0
        %2390 = vmatprep.mubr.f32.mxu0 0.0
        %2391 = vmatmul.mubr.f32.gmra.mrb[0].mxu0 %v2258
        %v2392 = vpop.f32.mrb[0].mxu0
        %v2393 = vadd.f32 %v2305, %v2392
        %v2394 = vpop.f32.mrb[0].mxu0
        %2395 = vmatprep.mubr.f32.mxu0 0.0
        %2396 = vmatmul.mubr.f32.gmra.mrb[0].mxu0 %v2259
        %v2397 = vpop.f32.mrb[0].mxu0
        %v2398 = vadd.f32 %v2305, %v2397
        %v2399 = vpop.f32.mrb[0].mxu0
        %2400 = vmatprep.mubr.f32.mxu0 0.0
        %2401 = vmatmul.mubr.f32.gmra.mrb[0].mxu0 %v2260
        %v2402 = vpop.f32.mrb[0].mxu0
        %v2403 = vadd.f32 %v2305, %v2402
        %v2404 = vpop.f32.mrb[0].mxu0
        %2405 = vmatprep.mubr.f32.mxu0 0.0
        %2406 = vmatmul.mubr.f32.gmra.mrb[0].mxu0 %v2261
        %v2407 = vpop.f32.mrb[0].mxu0
        %v2408 = vadd.f32 %v2305, %v2407
        %v2409 = vpop.f32.mrb[0].mxu0
        %2410 = vmatprep.mubr.f32.mxu0 0.0
        %2411 = vmatmul.mubr.f32.gmra.mrb[0].mxu0 %v2262
        %v2412 = vpop.f32.mrb[0].mxu0
        %v2413 = vadd.f32 %v2305, %v2412
        %v2414 = vpop.f32.mrb[0].mxu0
        %2415 = vmatprep.mubr.f32.mxu0 0.0
        %2416 = vmatmul.mubr.f32.gmra.mrb[0].mxu0 %v2263
        %v2417 = vpop.f32.mrb[0].mxu0
        %v2418 = vadd.f32 %v2305, %v2417
        %v2419 = vpop.f32.mrb[0].mxu0
        %2420 = vmatprep.mubr.f32.mxu0 0.0
        %2421 = vmatmul.mubr.f32.gmra.mrb[0].mxu0 %v2264
        %v2422 = vpop.f32.mrb[0].mxu0
        %v2423 = vadd.f32 %v2305, %v2422
        %v2424 = vpop.f32.mrb[0].mxu0
        %2425 = vmatprep.mubr.f32.mxu0 0.0
        %2426 = vmatmul.mubr.f32.gmra.mrb[0].mxu0 %v2265
        %v2427 = vpop.f32.mrb[0].mxu0
        %v2428 = vadd.f32 %v2305, %v2427
        %v2429 = vpop.f32.mrb[0].mxu0
        %2430 = vmatprep.mubr.f32.mxu0 0.0
        %2431 = vmatmul.mubr.f32.gmra.mrb[0].mxu0 %v2266
        %v2432 = vpop.f32.mrb[0].mxu0
        %v2433 = vadd.f32 %v2305, %v2432
        %v2434 = vpop.f32.mrb[0].mxu0
        %2435 = vmatprep.mubr.f32.mxu0 0.0
        %2436 = vmatmul.mubr.f32.gmra.mrb[0].mxu0 %v2267
        %v2437 = vpop.f32.mrb[0].mxu0
        %v2438 = vadd.f32 %v2305, %v2437
        %v2439 = vpop.f32.mrb[0].mxu0
        %2440 = vmatprep.mubr.f32.mxu0 0.0
        %2441 = vmatmul.mubr.f32.gmra.mrb[0].mxu0 %v2268
        %v2442 = vpop.f32.mrb[0].mxu0
        %v2443 = vadd.f32 %v2305, %v2442
        %v2444 = vpop.f32.mrb[0].mxu0
        %2445 = vmatprep.mubr.f32.mxu0 0.0
        %2446 = vmatmul.mubr.f32.gmra.mrb[0].mxu0 %v2269
        %v2447 = vpop.f32.mrb[0].mxu0
        %v2448 = vadd.f32 %v2305, %v2447
        %v2449 = vpop.f32.mrb[0].mxu0
        %2450 = vdwg.mxu0
        %v2451 = vadd.f32 %v2373, %v2270
        %v2452 = vadd.f32 %v2378, %v2271
        %v2453 = vadd.f32 %v2383, %v2272
        %v2454 = vadd.f32 %v2388, %v2273
        %v2455 = vadd.f32 %v2393, %v2274
        %v2456 = vadd.f32 %v2398, %v2275
        %v2457 = vadd.f32 %v2403, %v2276
        %v2458 = vadd.f32 %v2408, %v2277
        %v2459 = vadd.f32 %v2413, %v2278
        %v2460 = vadd.f32 %v2418, %v2279
        %v2461 = vadd.f32 %v2423, %v2280
        %v2462 = vadd.f32 %v2428, %v2281
        %v2463 = vadd.f32 %v2433, %v2282
        %v2464 = vadd.f32 %v2438, %v2283
        %v2465 = vadd.f32 %v2443, %v2284
        %v2466 = vadd.f32 %v2448, %v2285
        %v2467 = vxor.u32 %v2451, 2147483648
        %v2468 = vxor.u32 %v2452, 2147483648
        %v2469 = vxor.u32 %v2453, 2147483648
        %v2470 = vxor.u32 %v2454, 2147483648
        %v2471 = vxor.u32 %v2455, 2147483648
        %v2472 = vxor.u32 %v2456, 2147483648
        %v2473 = vxor.u32 %v2457, 2147483648
        %v2474 = vxor.u32 %v2458, 2147483648
        %v2475 = vxor.u32 %v2459, 2147483648
        %v2476 = vxor.u32 %v2460, 2147483648
        %v2477 = vxor.u32 %v2461, 2147483648
        %v2478 = vxor.u32 %v2462, 2147483648
        %v2479 = vxor.u32 %v2463, 2147483648
        %v2480 = vxor.u32 %v2464, 2147483648
        %v2481 = vxor.u32 %v2465, 2147483648
        %v2482 = vxor.u32 %v2466, 2147483648
        %v2483 = vmul.f32 %v2467, 1.442695
        %v2484 = vpow.pop %v2483
        %v2485 = vmul.f32 %v2468, 1.442695
        %v2486 = vpow.pop %v2485
        %v2487 = vmul.f32 %v2469, 1.442695
        %v2488 = vpow.pop %v2487
        %v2489 = vmul.f32 %v2470, 1.442695
        %v2490 = vpow.pop %v2489
        %v2491 = vmul.f32 %v2471, 1.442695
        %v2492 = vpow.pop %v2491
        %v2493 = vmul.f32 %v2472, 1.442695
        %v2494 = vpow.pop %v2493
        %v2495 = vmul.f32 %v2473, 1.442695
        %v2496 = vpow.pop %v2495
        %v2497 = vmul.f32 %v2474, 1.442695
        %v2498 = vpow.pop %v2497
        %v2499 = vmul.f32 %v2475, 1.442695
        %v2500 = vpow.pop %v2499
        %v2501 = vmul.f32 %v2476, 1.442695
        %v2502 = vpow.pop %v2501
        %v2503 = vmul.f32 %v2477, 1.442695
        %v2504 = vpow.pop %v2503
        %v2505 = vmul.f32 %v2478, 1.442695
        %v2506 = vpow.pop %v2505
        %v2507 = vmul.f32 %v2479, 1.442695
        %v2508 = vpow.pop %v2507
        %v2509 = vmul.f32 %v2480, 1.442695
        %v2510 = vpow.pop %v2509
        %v2511 = vmul.f32 %v2481, 1.442695
        %v2512 = vpow.pop %v2511
        %v2513 = vmul.f32 %v2482, 1.442695
        %v2514 = vpow.pop %v2513
        %v2515 = vadd.f32 %v2484, 1.0
        %v2516 = vadd.f32 %v2486, 1.0
        %v2517 = vadd.f32 %v2488, 1.0
        %v2518 = vadd.f32 %v2490, 1.0
        %v2519 = vadd.f32 %v2492, 1.0
        %v2520 = vadd.f32 %v2494, 1.0
        %v2521 = vadd.f32 %v2496, 1.0
        %v2522 = vadd.f32 %v2498, 1.0
        %v2523 = vadd.f32 %v2500, 1.0
        %v2524 = vadd.f32 %v2502, 1.0
        %v2525 = vadd.f32 %v2504, 1.0
        %v2526 = vadd.f32 %v2506, 1.0
        %v2527 = vadd.f32 %v2508, 1.0
        %v2528 = vadd.f32 %v2510, 1.0
        %v2529 = vadd.f32 %v2512, 1.0
        %v2530 = vadd.f32 %v2514, 1.0
        %v2531 = vrcp.pop %v2515
        %v2532 = vmul.f32 1.0, %v2531
        %v2533 = vrcp.pop %v2516
        %v2534 = vmul.f32 1.0, %v2533
        %v2535 = vrcp.pop %v2517
        %v2536 = vmul.f32 1.0, %v2535
        %v2537 = vrcp.pop %v2518
        %v2538 = vmul.f32 1.0, %v2537
        %v2539 = vrcp.pop %v2519
        %v2540 = vmul.f32 1.0, %v2539
        %v2541 = vrcp.pop %v2520
        %v2542 = vmul.f32 1.0, %v2541
        %v2543 = vrcp.pop %v2521
        %v2544 = vmul.f32 1.0, %v2543
        %v2545 = vrcp.pop %v2522
        %v2546 = vmul.f32 1.0, %v2545
        %v2547 = vrcp.pop %v2523
        %v2548 = vmul.f32 1.0, %v2547
        %v2549 = vrcp.pop %v2524
        %v2550 = vmul.f32 1.0, %v2549
        %v2551 = vrcp.pop %v2525
        %v2552 = vmul.f32 1.0, %v2551
        %v2553 = vrcp.pop %v2526
        %v2554 = vmul.f32 1.0, %v2553
        %v2555 = vrcp.pop %v2527
        %v2556 = vmul.f32 1.0, %v2555
        %v2557 = vrcp.pop %v2528
        %v2558 = vmul.f32 1.0, %v2557
        %v2559 = vrcp.pop %v2529
        %v2560 = vmul.f32 1.0, %v2559
        %v2561 = vrcp.pop %v2530
        %v2562 = vmul.f32 1.0, %v2561
        %v2563 = vmul.f32 %v2451, %v2532
        %v2564 = vmul.f32 %v2452, %v2534
        %v2565 = vmul.f32 %v2453, %v2536
        %v2566 = vmul.f32 %v2454, %v2538
        %v2567 = vmul.f32 %v2455, %v2540
        %v2568 = vmul.f32 %v2456, %v2542
        %v2569 = vmul.f32 %v2457, %v2544
        %v2570 = vmul.f32 %v2458, %v2546
        %v2571 = vmul.f32 %v2459, %v2548
        %v2572 = vmul.f32 %v2460, %v2550
        %v2573 = vmul.f32 %v2461, %v2552
        %v2574 = vmul.f32 %v2462, %v2554
        %v2575 = vmul.f32 %v2463, %v2556
        %v2576 = vmul.f32 %v2464, %v2558
        %v2577 = vmul.f32 %v2465, %v2560
        %v2578 = vmul.f32 %v2466, %v2562
        %2579 = vadd.xlane.f32.xlu0 %v2563
        %v2580 = vpop.xlane.xlu0 %2579
        %2581 = vadd.xlane.f32.xlu0 %v2564
        %v2582 = vpop.xlane.xlu0 %2581
        %2583 = vadd.xlane.f32.xlu0 %v2565
        %v2584 = vpop.xlane.xlu0 %2583
        %2585 = vadd.xlane.f32.xlu0 %v2566
        %v2586 = vpop.xlane.xlu0 %2585
        %2587 = vadd.xlane.f32.xlu0 %v2567
        %v2588 = vpop.xlane.xlu0 %2587
        %2589 = vadd.xlane.f32.xlu0 %v2568
        %v2590 = vpop.xlane.xlu0 %2589
        %2591 = vadd.xlane.f32.xlu0 %v2569
        %v2592 = vpop.xlane.xlu0 %2591
        %2593 = vadd.xlane.f32.xlu0 %v2570
        %v2594 = vpop.xlane.xlu0 %2593
        %2595 = vadd.xlane.f32.xlu0 %v2571
        %v2596 = vpop.xlane.xlu0 %2595
        %2597 = vadd.xlane.f32.xlu0 %v2572
        %v2598 = vpop.xlane.xlu0 %2597
        %2599 = vadd.xlane.f32.xlu0 %v2573
        %v2600 = vpop.xlane.xlu0 %2599
        %2601 = vadd.xlane.f32.xlu0 %v2574
        %v2602 = vpop.xlane.xlu0 %2601
        %2603 = vadd.xlane.f32.xlu0 %v2575
        %v2604 = vpop.xlane.xlu0 %2603
        %2605 = vadd.xlane.f32.xlu0 %v2576
        %v2606 = vpop.xlane.xlu0 %2605
        %2607 = vadd.xlane.f32.xlu0 %v2577
        %v2608 = vpop.xlane.xlu0 %2607
        %2609 = vadd.xlane.f32.xlu0 %v2578
        %v2610 = vpop.xlane.xlu0 %2609
        %v2611 = vmul.f32 %v2580, 0.03125
        %v2612 = vmul.f32 %v2582, 0.03125
        %v2613 = vmul.f32 %v2584, 0.03125
        %v2614 = vmul.f32 %v2586, 0.03125
        %v2615 = vmul.f32 %v2588, 0.03125
        %v2616 = vmul.f32 %v2590, 0.03125
        %v2617 = vmul.f32 %v2592, 0.03125
        %v2618 = vmul.f32 %v2594, 0.03125
        %v2619 = vmul.f32 %v2596, 0.03125
        %v2620 = vmul.f32 %v2598, 0.03125
        %v2621 = vmul.f32 %v2600, 0.03125
        %v2622 = vmul.f32 %v2602, 0.03125
        %v2623 = vmul.f32 %v2604, 0.03125
        %v2624 = vmul.f32 %v2606, 0.03125
        %v2625 = vmul.f32 %v2608, 0.03125
        %v2626 = vmul.f32 %v2610, 0.03125
        %v2627 = vmul.f32 %v2563, %v2563
        %v2628 = vmul.f32 %v2564, %v2564
        %v2629 = vmul.f32 %v2565, %v2565
        %v2630 = vmul.f32 %v2566, %v2566
        %v2631 = vmul.f32 %v2567, %v2567
        %v2632 = vmul.f32 %v2568, %v2568
        %v2633 = vmul.f32 %v2569, %v2569
        %v2634 = vmul.f32 %v2570, %v2570
        %v2635 = vmul.f32 %v2571, %v2571
        %v2636 = vmul.f32 %v2572, %v2572
        %v2637 = vmul.f32 %v2573, %v2573
        %v2638 = vmul.f32 %v2574, %v2574
        %v2639 = vmul.f32 %v2575, %v2575
        %v2640 = vmul.f32 %v2576, %v2576
        %v2641 = vmul.f32 %v2577, %v2577
        %v2642 = vmul.f32 %v2578, %v2578
        %2643 = vadd.xlane.f32.xlu0 %v2627
        %v2644 = vpop.xlane.xlu0 %2643
        %2645 = vadd.xlane.f32.xlu0 %v2628
        %v2646 = vpop.xlane.xlu0 %2645
        %2647 = vadd.xlane.f32.xlu0 %v2629
        %v2648 = vpop.xlane.xlu0 %2647
        %2649 = vadd.xlane.f32.xlu0 %v2630
        %v2650 = vpop.xlane.xlu0 %2649
        %2651 = vadd.xlane.f32.xlu0 %v2631
        %v2652 = vpop.xlane.xlu0 %2651
        %2653 = vadd.xlane.f32.xlu0 %v2632
        %v2654 = vpop.xlane.xlu0 %2653
        %2655 = vadd.xlane.f32.xlu0 %v2633
        %v2656 = vpop.xlane.xlu0 %2655
        %2657 = vadd.xlane.f32.xlu0 %v2634
        %v2658 = vpop.xlane.xlu0 %2657
        %2659 = vadd.xlane.f32.xlu0 %v2635
        %v2660 = vpop.xlane.xlu0 %2659
        %2661 = vadd.xlane.f32.xlu0 %v2636
        %v2662 = vpop.xlane.xlu0 %2661
        %2663 = vadd.xlane.f32.xlu0 %v2637
        %v2664 = vpop.xlane.xlu0 %2663
        %2665 = vadd.xlane.f32.xlu0 %v2638
        %v2666 = vpop.xlane.xlu0 %2665
        %2667 = vadd.xlane.f32.xlu0 %v2639
        %v2668 = vpop.xlane.xlu0 %2667
        %2669 = vadd.xlane.f32.xlu0 %v2640
        %v2670 = vpop.xlane.xlu0 %2669
        %2671 = vadd.xlane.f32.xlu0 %v2641
        %v2672 = vpop.xlane.xlu0 %2671
        %2673 = vadd.xlane.f32.xlu0 %v2642
        %v2674 = vpop.xlane.xlu0 %2673
        %v2675 = vmul.f32 %v2644, 0.03125
        %v2676 = vmul.f32 %v2646, 0.03125
        %v2677 = vmul.f32 %v2648, 0.03125
        %v2678 = vmul.f32 %v2650, 0.03125
        %v2679 = vmul.f32 %v2652, 0.03125
        %v2680 = vmul.f32 %v2654, 0.03125
        %v2681 = vmul.f32 %v2656, 0.03125
        %v2682 = vmul.f32 %v2658, 0.03125
        %v2683 = vmul.f32 %v2660, 0.03125
        %v2684 = vmul.f32 %v2662, 0.03125
        %v2685 = vmul.f32 %v2664, 0.03125
        %v2686 = vmul.f32 %v2666, 0.03125
        %v2687 = vmul.f32 %v2668, 0.03125
        %v2688 = vmul.f32 %v2670, 0.03125
        %v2689 = vmul.f32 %v2672, 0.03125
        %v2690 = vmul.f32 %v2674, 0.03125
        %v2691 = vmul.f32 %v2611, %v2611
        %v2692 = vmul.f32 %v2612, %v2612
        %v2693 = vmul.f32 %v2613, %v2613
        %v2694 = vmul.f32 %v2614, %v2614
        %v2695 = vmul.f32 %v2615, %v2615
        %v2696 = vmul.f32 %v2616, %v2616
        %v2697 = vmul.f32 %v2617, %v2617
        %v2698 = vmul.f32 %v2618, %v2618
        %v2699 = vmul.f32 %v2619, %v2619
        %v2700 = vmul.f32 %v2620, %v2620
        %v2701 = vmul.f32 %v2621, %v2621
        %v2702 = vmul.f32 %v2622, %v2622
        %v2703 = vmul.f32 %v2623, %v2623
        %v2704 = vmul.f32 %v2624, %v2624
        %v2705 = vmul.f32 %v2625, %v2625
        %v2706 = vmul.f32 %v2626, %v2626
        %v2707 = vsub.f32 %v2675, %v2691
        %v2708 = vsub.f32 %v2676, %v2692
        %v2709 = vsub.f32 %v2677, %v2693
        %v2710 = vsub.f32 %v2678, %v2694
        %v2711 = vsub.f32 %v2679, %v2695
        %v2712 = vsub.f32 %v2680, %v2696
        %v2713 = vsub.f32 %v2681, %v2697
        %v2714 = vsub.f32 %v2682, %v2698
        %v2715 = vsub.f32 %v2683, %v2699
        %v2716 = vsub.f32 %v2684, %v2700
        %v2717 = vsub.f32 %v2685, %v2701
        %v2718 = vsub.f32 %v2686, %v2702
        %v2719 = vsub.f32 %v2687, %v2703
        %v2720 = vsub.f32 %v2688, %v2704
        %v2721 = vsub.f32 %v2689, %v2705
        %v2722 = vsub.f32 %v2690, %v2706
        %v2723 = vsub.f32 %v2563, %v2611
        %v2724 = vsub.f32 %v2564, %v2612
        %v2725 = vsub.f32 %v2565, %v2613
        %v2726 = vsub.f32 %v2566, %v2614
        %v2727 = vsub.f32 %v2567, %v2615
        %v2728 = vsub.f32 %v2568, %v2616
        %v2729 = vsub.f32 %v2569, %v2617
        %v2730 = vsub.f32 %v2570, %v2618
        %v2731 = vsub.f32 %v2571, %v2619
        %v2732 = vsub.f32 %v2572, %v2620
        %v2733 = vsub.f32 %v2573, %v2621
        %v2734 = vsub.f32 %v2574, %v2622
        %v2735 = vsub.f32 %v2575, %v2623
        %v2736 = vsub.f32 %v2576, %v2624
        %v2737 = vsub.f32 %v2577, %v2625
        %v2738 = vsub.f32 %v2578, %v2626
        %v2739 = vadd.f32 %v2707, 0.1
        %v2740 = vadd.f32 %v2708, 0.1
        %v2741 = vadd.f32 %v2709, 0.1
        %v2742 = vadd.f32 %v2710, 0.1
        %v2743 = vadd.f32 %v2711, 0.1
        %v2744 = vadd.f32 %v2712, 0.1
        %v2745 = vadd.f32 %v2713, 0.1
        %v2746 = vadd.f32 %v2714, 0.1
        %v2747 = vadd.f32 %v2715, 0.1
        %v2748 = vadd.f32 %v2716, 0.1
        %v2749 = vadd.f32 %v2717, 0.1
        %v2750 = vadd.f32 %v2718, 0.1
        %v2751 = vadd.f32 %v2719, 0.1
        %v2752 = vadd.f32 %v2720, 0.1
        %v2753 = vadd.f32 %v2721, 0.1
        %v2754 = vadd.f32 %v2722, 0.1
        %v2755 = vrsqrt.pop %v2739
        %v2756 = vrsqrt.pop %v2740
        %v2757 = vrsqrt.pop %v2741
        %v2758 = vrsqrt.pop %v2742
        %v2759 = vrsqrt.pop %v2743
        %v2760 = vrsqrt.pop %v2744
        %v2761 = vrsqrt.pop %v2745
        %v2762 = vrsqrt.pop %v2746
        %v2763 = vrsqrt.pop %v2747
        %v2764 = vrsqrt.pop %v2748
        %v2765 = vrsqrt.pop %v2749
        %v2766 = vrsqrt.pop %v2750
        %v2767 = vrsqrt.pop %v2751
        %v2768 = vrsqrt.pop %v2752
        %v2769 = vrsqrt.pop %v2753
        %v2770 = vrsqrt.pop %v2754
        %v2771 = vmul.f32 %v2723, %v2755
        %v2772 = vmul.f32 %v2724, %v2756
        %v2773 = vmul.f32 %v2725, %v2757
        %v2774 = vmul.f32 %v2726, %v2758
        %v2775 = vmul.f32 %v2727, %v2759
        %v2776 = vmul.f32 %v2728, %v2760
        %v2777 = vmul.f32 %v2729, %v2761
        %v2778 = vmul.f32 %v2730, %v2762
        %v2779 = vmul.f32 %v2731, %v2763
        %v2780 = vmul.f32 %v2732, %v2764
        %v2781 = vmul.f32 %v2733, %v2765
        %v2782 = vmul.f32 %v2734, %v2766
        %v2783 = vmul.f32 %v2735, %v2767
        %v2784 = vmul.f32 %v2736, %v2768
        %v2785 = vmul.f32 %v2737, %v2769
        %v2786 = vmul.f32 %v2738, %v2770
        %v2787 = vlaneseq
        %v2788 = vshrl.u32 %v2787, 7
        %v2789 = vsub.s32 0, %v2788
        %v2790 = vrot.slane %v464, %v2789
        %v2791 = vmul.f32 %v2771, %v2790
        %v2792 = vmul.f32 %v2772, %v2790
        %v2793 = vmul.f32 %v2773, %v2790
        %v2794 = vmul.f32 %v2774, %v2790
        %v2795 = vmul.f32 %v2775, %v2790
        %v2796 = vmul.f32 %v2776, %v2790
        %v2797 = vmul.f32 %v2777, %v2790
        %v2798 = vmul.f32 %v2778, %v2790
        %v2799 = vmul.f32 %v2779, %v2790
        %v2800 = vmul.f32 %v2780, %v2790
        %v2801 = vmul.f32 %v2781, %v2790
        %v2802 = vmul.f32 %v2782, %v2790
        %v2803 = vmul.f32 %v2783, %v2790
        %v2804 = vmul.f32 %v2784, %v2790
        %v2805 = vmul.f32 %v2785, %v2790
        %v2806 = vmul.f32 %v2786, %v2790
        %v2807 = vlaneseq
        %v2808 = vshrl.u32 %v2807, 7
        %v2809 = vsub.s32 0, %v2808
        %v2810 = vrot.slane %v469, %v2809
        %v2811 = vadd.f32 %v2791, %v2810
        %v2812 = vadd.f32 %v2792, %v2810
        %v2813 = vadd.f32 %v2793, %v2810
        %v2814 = vadd.f32 %v2794, %v2810
        %v2815 = vadd.f32 %v2795, %v2810
        %v2816 = vadd.f32 %v2796, %v2810
        %v2817 = vadd.f32 %v2797, %v2810
        %v2818 = vadd.f32 %v2798, %v2810
        %v2819 = vadd.f32 %v2799, %v2810
        %v2820 = vadd.f32 %v2800, %v2810
        %v2821 = vadd.f32 %v2801, %v2810
        %v2822 = vadd.f32 %v2802, %v2810
        %v2823 = vadd.f32 %v2803, %v2810
        %v2824 = vadd.f32 %v2804, %v2810
        %v2825 = vadd.f32 %v2805, %v2810
        %v2826 = vadd.f32 %v2806, %v2810
        %v2827 = vadd.f32 %v2270, %v2811
        %v2828 = vadd.f32 %v2271, %v2812
        %v2829 = vadd.f32 %v2272, %v2813
        %v2830 = vadd.f32 %v2273, %v2814
        %v2831 = vadd.f32 %v2274, %v2815
        %v2832 = vadd.f32 %v2275, %v2816
        %v2833 = vadd.f32 %v2276, %v2817
        %v2834 = vadd.f32 %v2277, %v2818
        %v2835 = vadd.f32 %v2278, %v2819
        %v2836 = vadd.f32 %v2279, %v2820
        %v2837 = vadd.f32 %v2280, %v2821
        %v2838 = vadd.f32 %v2281, %v2822
        %v2839 = vadd.f32 %v2282, %v2823
        %v2840 = vadd.f32 %v2283, %v2824
        %v2841 = vadd.f32 %v2284, %v2825
        %v2842 = vadd.f32 %v2285, %v2826
        %v2843 = vld [vmem:[#allocation8] sm:$0xff]
        %v2844 = vld [vmem:[#allocation8 + $0x8] sm:$0xff]
        %v2845 = vld [vmem:[#allocation8 + $0x10] sm:$0xff]
        %v2846 = vld [vmem:[#allocation8 + $0x18] sm:$0xff]
        %v2847 = vld [vmem:[#allocation8 + $0x20] sm:$0xff]
        %v2848 = vld [vmem:[#allocation8 + $0x28] sm:$0xff]
        %v2849 = vld [vmem:[#allocation8 + $0x30] sm:$0xff]
        %v2850 = vld [vmem:[#allocation8 + $0x38] sm:$0xff]
        %v2851 = vld [vmem:[#allocation8 + $0x40] sm:$0xff]
        %v2852 = vld [vmem:[#allocation8 + $0x48] sm:$0xff]
        %v2853 = vld [vmem:[#allocation8 + $0x50] sm:$0xff]
        %v2854 = vld [vmem:[#allocation8 + $0x58] sm:$0xff]
        %v2855 = vld [vmem:[#allocation8 + $0x60] sm:$0xff]
        %v2856 = vld [vmem:[#allocation8 + $0x68] sm:$0xff]
        %v2857 = vld [vmem:[#allocation8 + $0x70] sm:$0xff]
        %v2858 = vld [vmem:[#allocation8 + $0x78] sm:$0xff]
        %v2859 = vlaneseq
        %v2860 = vshrl.u32 %v2859, 7
        %v2861 = vsub.s32 0, %v2860
        %v2862 = vrot.slane %v460, %v2861
        %2863 = vmatprep.subr.mxu0 0.0
        %2864 = vmatpush1.msra.mxu0 %v2843
        %2865 = vmatprep.subr.mxu0 0.0
        %2866 = vmatpush1.msra.mxu0 %v2844
        %2867 = vmatprep.subr.mxu0 0.0
        %2868 = vmatpush1.msra.mxu0 %v2845
        %2869 = vmatprep.subr.mxu0 0.0
        %2870 = vmatpush1.msra.mxu0 %v2846
        %2871 = vmatprep.subr.mxu0 0.0
        %2872 = vmatpush1.msra.mxu0 %v2847
        %2873 = vmatprep.subr.mxu0 0.0
        %2874 = vmatpush1.msra.mxu0 %v2848
        %2875 = vmatprep.subr.mxu0 0.0
        %2876 = vmatpush1.msra.mxu0 %v2849
        %2877 = vmatprep.subr.mxu0 0.0
        %2878 = vmatpush1.msra.mxu0 %v2850
        %2879 = vmatprep.subr.mxu0 0.0
        %2880 = vmatpush1.msra.mxu0 %v2851
        %2881 = vmatprep.subr.mxu0 0.0
        %2882 = vmatpush1.msra.mxu0 %v2852
        %2883 = vmatprep.subr.mxu0 0.0
        %2884 = vmatpush1.msra.mxu0 %v2853
        %2885 = vmatprep.subr.mxu0 0.0
        %2886 = vmatpush1.msra.mxu0 %v2854
        %2887 = vmatprep.subr.mxu0 0.0
        %2888 = vmatpush1.msra.mxu0 %v2855
        %2889 = vmatprep.subr.mxu0 0.0
        %2890 = vmatpush1.msra.mxu0 %v2856
        %2891 = vmatprep.subr.mxu0 0.0
        %2892 = vmatpush1.msra.mxu0 %v2857
        %2893 = vmatprep.subr.mxu0 0.0
        %2894 = vmatpush1.msra.mxu0 %v2858
        %2895 = vmatprep.subr.mxu0 0.0
        %2896 = vmatpush1.msra.mxu0 0.0
        %2897 = vmatprep.subr.mxu0 0.0
        %2898 = vmatpush1.msra.mxu0 0.0
        %2899 = vmatprep.subr.mxu0 0.0
        %2900 = vmatpush1.msra.mxu0 0.0
        %2901 = vmatprep.subr.mxu0 0.0
        %2902 = vmatpush1.msra.mxu0 0.0
        %2903 = vmatprep.subr.mxu0 0.0
        %2904 = vmatpush1.msra.mxu0 0.0
        %2905 = vmatprep.subr.mxu0 0.0
        %2906 = vmatpush1.msra.mxu0 0.0
        %2907 = vmatprep.subr.mxu0 0.0
        %2908 = vmatpush1.msra.mxu0 0.0
        %2909 = vmatprep.subr.mxu0 0.0
        %2910 = vmatpush1.msra.mxu0 0.0
        %2911 = vmatprep.subr.mxu0 0.0
        %2912 = vmatpush1.msra.mxu0 0.0
        %2913 = vmatprep.subr.mxu0 0.0
        %2914 = vmatpush1.msra.mxu0 0.0
        %2915 = vmatprep.subr.mxu0 0.0
        %2916 = vmatpush1.msra.mxu0 0.0
        %2917 = vmatprep.subr.mxu0 0.0
        %2918 = vmatpush1.msra.mxu0 0.0
        %2919 = vmatprep.subr.mxu0 0.0
        %2920 = vmatpush1.msra.mxu0 0.0
        %2921 = vmatprep.subr.mxu0 0.0
        %2922 = vmatpush1.msra.mxu0 0.0
        %2923 = vmatprep.subr.mxu0 0.0
        %2924 = vmatpush1.msra.mxu0 0.0
        %2925 = vmatprep.subr.mxu0 0.0
        %2926 = vmatpush1.msra.mxu0 0.0
        %2927 = vmatprep.mubr.f32.mxu0 0.0
        %2928 = vmatmul.mubr.f32.gmra.mrb[0].mxu0 %v2811
        %v2929 = vpop.f32.mrb[0].mxu0
        %v2930 = vadd.f32 %v2862, %v2929
        %v2931 = vpop.f32.mrb[0].mxu0
        %2932 = vmatprep.mubr.f32.mxu0 0.0
        %2933 = vmatmul.mubr.f32.gmra.mrb[0].mxu0 %v2812
        %v2934 = vpop.f32.mrb[0].mxu0
        %v2935 = vadd.f32 %v2862, %v2934
        %v2936 = vpop.f32.mrb[0].mxu0
        %2937 = vmatprep.mubr.f32.mxu0 0.0
        %2938 = vmatmul.mubr.f32.gmra.mrb[0].mxu0 %v2813
        %v2939 = vpop.f32.mrb[0].mxu0
        %v2940 = vadd.f32 %v2862, %v2939
        %v2941 = vpop.f32.mrb[0].mxu0
        %2942 = vmatprep.mubr.f32.mxu0 0.0
        %2943 = vmatmul.mubr.f32.gmra.mrb[0].mxu0 %v2814
        %v2944 = vpop.f32.mrb[0].mxu0
        %v2945 = vadd.f32 %v2862, %v2944
        %v2946 = vpop.f32.mrb[0].mxu0
        %2947 = vmatprep.mubr.f32.mxu0 0.0
        %2948 = vmatmul.mubr.f32.gmra.mrb[0].mxu0 %v2815
        %v2949 = vpop.f32.mrb[0].mxu0
        %v2950 = vadd.f32 %v2862, %v2949
        %v2951 = vpop.f32.mrb[0].mxu0
        %2952 = vmatprep.mubr.f32.mxu0 0.0
        %2953 = vmatmul.mubr.f32.gmra.mrb[0].mxu0 %v2816
        %v2954 = vpop.f32.mrb[0].mxu0
        %v2955 = vadd.f32 %v2862, %v2954
        %v2956 = vpop.f32.mrb[0].mxu0
        %2957 = vmatprep.mubr.f32.mxu0 0.0
        %2958 = vmatmul.mubr.f32.gmra.mrb[0].mxu0 %v2817
        %v2959 = vpop.f32.mrb[0].mxu0
        %v2960 = vadd.f32 %v2862, %v2959
        %v2961 = vpop.f32.mrb[0].mxu0
        %2962 = vmatprep.mubr.f32.mxu0 0.0
        %2963 = vmatmul.mubr.f32.gmra.mrb[0].mxu0 %v2818
        %v2964 = vpop.f32.mrb[0].mxu0
        %v2965 = vadd.f32 %v2862, %v2964
        %v2966 = vpop.f32.mrb[0].mxu0
        %2967 = vmatprep.mubr.f32.mxu0 0.0
        %2968 = vmatmul.mubr.f32.gmra.mrb[0].mxu0 %v2819
        %v2969 = vpop.f32.mrb[0].mxu0
        %v2970 = vadd.f32 %v2862, %v2969
        %v2971 = vpop.f32.mrb[0].mxu0
        %2972 = vmatprep.mubr.f32.mxu0 0.0
        %2973 = vmatmul.mubr.f32.gmra.mrb[0].mxu0 %v2820
        %v2974 = vpop.f32.mrb[0].mxu0
        %v2975 = vadd.f32 %v2862, %v2974
        %v2976 = vpop.f32.mrb[0].mxu0
        %2977 = vmatprep.mubr.f32.mxu0 0.0
        %2978 = vmatmul.mubr.f32.gmra.mrb[0].mxu0 %v2821
        %v2979 = vpop.f32.mrb[0].mxu0
        %v2980 = vadd.f32 %v2862, %v2979
        %v2981 = vpop.f32.mrb[0].mxu0
        %2982 = vmatprep.mubr.f32.mxu0 0.0
        %2983 = vmatmul.mubr.f32.gmra.mrb[0].mxu0 %v2822
        %v2984 = vpop.f32.mrb[0].mxu0
        %v2985 = vadd.f32 %v2862, %v2984
        %v2986 = vpop.f32.mrb[0].mxu0
        %2987 = vmatprep.mubr.f32.mxu0 0.0
        %2988 = vmatmul.mubr.f32.gmra.mrb[0].mxu0 %v2823
        %v2989 = vpop.f32.mrb[0].mxu0
        %v2990 = vadd.f32 %v2862, %v2989
        %v2991 = vpop.f32.mrb[0].mxu0
        %2992 = vmatprep.mubr.f32.mxu0 0.0
        %2993 = vmatmul.mubr.f32.gmra.mrb[0].mxu0 %v2824
        %v2994 = vpop.f32.mrb[0].mxu0
        %v2995 = vadd.f32 %v2862, %v2994
        %v2996 = vpop.f32.mrb[0].mxu0
        %2997 = vmatprep.mubr.f32.mxu0 0.0
        %2998 = vmatmul.mubr.f32.gmra.mrb[0].mxu0 %v2825
        %v2999 = vpop.f32.mrb[0].mxu0
        %v3000 = vadd.f32 %v2862, %v2999
        %v3001 = vpop.f32.mrb[0].mxu0
        %3002 = vmatprep.mubr.f32.mxu0 0.0
        %3003 = vmatmul.mubr.f32.gmra.mrb[0].mxu0 %v2826
        %v3004 = vpop.f32.mrb[0].mxu0
        %v3005 = vadd.f32 %v2862, %v3004
        %v3006 = vpop.f32.mrb[0].mxu0
        %3007 = vdwg.mxu0
        %v3008 = vadd.f32 %v2930, %v2827
        %v3009 = vadd.f32 %v2935, %v2828
        %v3010 = vadd.f32 %v2940, %v2829
        %v3011 = vadd.f32 %v2945, %v2830
        %v3012 = vadd.f32 %v2950, %v2831
        %v3013 = vadd.f32 %v2955, %v2832
        %v3014 = vadd.f32 %v2960, %v2833
        %v3015 = vadd.f32 %v2965, %v2834
        %v3016 = vadd.f32 %v2970, %v2835
        %v3017 = vadd.f32 %v2975, %v2836
        %v3018 = vadd.f32 %v2980, %v2837
        %v3019 = vadd.f32 %v2985, %v2838
        %v3020 = vadd.f32 %v2990, %v2839
        %v3021 = vadd.f32 %v2995, %v2840
        %v3022 = vadd.f32 %v3000, %v2841
        %v3023 = vadd.f32 %v3005, %v2842
        %v3024 = vxor.u32 %v3008, 2147483648
        %v3025 = vxor.u32 %v3009, 2147483648
        %v3026 = vxor.u32 %v3010, 2147483648
        %v3027 = vxor.u32 %v3011, 2147483648
        %v3028 = vxor.u32 %v3012, 2147483648
        %v3029 = vxor.u32 %v3013, 2147483648
        %v3030 = vxor.u32 %v3014, 2147483648
        %v3031 = vxor.u32 %v3015, 2147483648
        %v3032 = vxor.u32 %v3016, 2147483648
        %v3033 = vxor.u32 %v3017, 2147483648
        %v3034 = vxor.u32 %v3018, 2147483648
        %v3035 = vxor.u32 %v3019, 2147483648
        %v3036 = vxor.u32 %v3020, 2147483648
        %v3037 = vxor.u32 %v3021, 2147483648
        %v3038 = vxor.u32 %v3022, 2147483648
        %v3039 = vxor.u32 %v3023, 2147483648
        %v3040 = vmul.f32 %v3024, 1.442695
        %v3041 = vpow.pop %v3040
        %v3042 = vmul.f32 %v3025, 1.442695
        %v3043 = vpow.pop %v3042
        %v3044 = vmul.f32 %v3026, 1.442695
        %v3045 = vpow.pop %v3044
        %v3046 = vmul.f32 %v3027, 1.442695
        %v3047 = vpow.pop %v3046
        %v3048 = vmul.f32 %v3028, 1.442695
        %v3049 = vpow.pop %v3048
        %v3050 = vmul.f32 %v3029, 1.442695
        %v3051 = vpow.pop %v3050
        %v3052 = vmul.f32 %v3030, 1.442695
        %v3053 = vpow.pop %v3052
        %v3054 = vmul.f32 %v3031, 1.442695
        %v3055 = vpow.pop %v3054
        %v3056 = vmul.f32 %v3032, 1.442695
        %v3057 = vpow.pop %v3056
        %v3058 = vmul.f32 %v3033, 1.442695
        %v3059 = vpow.pop %v3058
        %v3060 = vmul.f32 %v3034, 1.442695
        %v3061 = vpow.pop %v3060
        %v3062 = vmul.f32 %v3035, 1.442695
        %v3063 = vpow.pop %v3062
        %v3064 = vmul.f32 %v3036, 1.442695
        %v3065 = vpow.pop %v3064
        %v3066 = vmul.f32 %v3037, 1.442695
        %v3067 = vpow.pop %v3066
        %v3068 = vmul.f32 %v3038, 1.442695
        %v3069 = vpow.pop %v3068
        %v3070 = vmul.f32 %v3039, 1.442695
        %v3071 = vpow.pop %v3070
        %v3072 = vadd.f32 %v3041, 1.0
        %v3073 = vadd.f32 %v3043, 1.0
        %v3074 = vadd.f32 %v3045, 1.0
        %v3075 = vadd.f32 %v3047, 1.0
        %v3076 = vadd.f32 %v3049, 1.0
        %v3077 = vadd.f32 %v3051, 1.0
        %v3078 = vadd.f32 %v3053, 1.0
        %v3079 = vadd.f32 %v3055, 1.0
        %v3080 = vadd.f32 %v3057, 1.0
        %v3081 = vadd.f32 %v3059, 1.0
        %v3082 = vadd.f32 %v3061, 1.0
        %v3083 = vadd.f32 %v3063, 1.0
        %v3084 = vadd.f32 %v3065, 1.0
        %v3085 = vadd.f32 %v3067, 1.0
        %v3086 = vadd.f32 %v3069, 1.0
        %v3087 = vadd.f32 %v3071, 1.0
        %v3088 = vrcp.pop %v3072
        %v3089 = vmul.f32 1.0, %v3088
        %v3090 = vrcp.pop %v3073
        %v3091 = vmul.f32 1.0, %v3090
        %v3092 = vrcp.pop %v3074
        %v3093 = vmul.f32 1.0, %v3092
        %v3094 = vrcp.pop %v3075
        %v3095 = vmul.f32 1.0, %v3094
        %v3096 = vrcp.pop %v3076
        %v3097 = vmul.f32 1.0, %v3096
        %v3098 = vrcp.pop %v3077
        %v3099 = vmul.f32 1.0, %v3098
        %v3100 = vrcp.pop %v3078
        %v3101 = vmul.f32 1.0, %v3100
        %v3102 = vrcp.pop %v3079
        %v3103 = vmul.f32 1.0, %v3102
        %v3104 = vrcp.pop %v3080
        %v3105 = vmul.f32 1.0, %v3104
        %v3106 = vrcp.pop %v3081
        %v3107 = vmul.f32 1.0, %v3106
        %v3108 = vrcp.pop %v3082
        %v3109 = vmul.f32 1.0, %v3108
        %v3110 = vrcp.pop %v3083
        %v3111 = vmul.f32 1.0, %v3110
        %v3112 = vrcp.pop %v3084
        %v3113 = vmul.f32 1.0, %v3112
        %v3114 = vrcp.pop %v3085
        %v3115 = vmul.f32 1.0, %v3114
        %v3116 = vrcp.pop %v3086
        %v3117 = vmul.f32 1.0, %v3116
        %v3118 = vrcp.pop %v3087
        %v3119 = vmul.f32 1.0, %v3118
        %v3120 = vmul.f32 %v3008, %v3089
        %v3121 = vmul.f32 %v3009, %v3091
        %v3122 = vmul.f32 %v3010, %v3093
        %v3123 = vmul.f32 %v3011, %v3095
        %v3124 = vmul.f32 %v3012, %v3097
        %v3125 = vmul.f32 %v3013, %v3099
        %v3126 = vmul.f32 %v3014, %v3101
        %v3127 = vmul.f32 %v3015, %v3103
        %v3128 = vmul.f32 %v3016, %v3105
        %v3129 = vmul.f32 %v3017, %v3107
        %v3130 = vmul.f32 %v3018, %v3109
        %v3131 = vmul.f32 %v3019, %v3111
        %v3132 = vmul.f32 %v3020, %v3113
        %v3133 = vmul.f32 %v3021, %v3115
        %v3134 = vmul.f32 %v3022, %v3117
        %v3135 = vmul.f32 %v3023, %v3119
        %3136 = vadd.xlane.f32.xlu0 %v3120
        %v3137 = vpop.xlane.xlu0 %3136
        %3138 = vadd.xlane.f32.xlu0 %v3121
        %v3139 = vpop.xlane.xlu0 %3138
        %3140 = vadd.xlane.f32.xlu0 %v3122
        %v3141 = vpop.xlane.xlu0 %3140
        %3142 = vadd.xlane.f32.xlu0 %v3123
        %v3143 = vpop.xlane.xlu0 %3142
        %3144 = vadd.xlane.f32.xlu0 %v3124
        %v3145 = vpop.xlane.xlu0 %3144
        %3146 = vadd.xlane.f32.xlu0 %v3125
        %v3147 = vpop.xlane.xlu0 %3146
        %3148 = vadd.xlane.f32.xlu0 %v3126
        %v3149 = vpop.xlane.xlu0 %3148
        %3150 = vadd.xlane.f32.xlu0 %v3127
        %v3151 = vpop.xlane.xlu0 %3150
        %3152 = vadd.xlane.f32.xlu0 %v3128
        %v3153 = vpop.xlane.xlu0 %3152
        %3154 = vadd.xlane.f32.xlu0 %v3129
        %v3155 = vpop.xlane.xlu0 %3154
        %3156 = vadd.xlane.f32.xlu0 %v3130
        %v3157 = vpop.xlane.xlu0 %3156
        %3158 = vadd.xlane.f32.xlu0 %v3131
        %v3159 = vpop.xlane.xlu0 %3158
        %3160 = vadd.xlane.f32.xlu0 %v3132
        %v3161 = vpop.xlane.xlu0 %3160
        %3162 = vadd.xlane.f32.xlu0 %v3133
        %v3163 = vpop.xlane.xlu0 %3162
        %3164 = vadd.xlane.f32.xlu0 %v3134
        %v3165 = vpop.xlane.xlu0 %3164
        %3166 = vadd.xlane.f32.xlu0 %v3135
        %v3167 = vpop.xlane.xlu0 %3166
        %v3168 = vmul.f32 %v3137, 0.03125
        %v3169 = vmul.f32 %v3139, 0.03125
        %v3170 = vmul.f32 %v3141, 0.03125
        %v3171 = vmul.f32 %v3143, 0.03125
        %v3172 = vmul.f32 %v3145, 0.03125
        %v3173 = vmul.f32 %v3147, 0.03125
        %v3174 = vmul.f32 %v3149, 0.03125
        %v3175 = vmul.f32 %v3151, 0.03125
        %v3176 = vmul.f32 %v3153, 0.03125
        %v3177 = vmul.f32 %v3155, 0.03125
        %v3178 = vmul.f32 %v3157, 0.03125
        %v3179 = vmul.f32 %v3159, 0.03125
        %v3180 = vmul.f32 %v3161, 0.03125
        %v3181 = vmul.f32 %v3163, 0.03125
        %v3182 = vmul.f32 %v3165, 0.03125
        %v3183 = vmul.f32 %v3167, 0.03125
        %v3184 = vmul.f32 %v3120, %v3120
        %v3185 = vmul.f32 %v3121, %v3121
        %v3186 = vmul.f32 %v3122, %v3122
        %v3187 = vmul.f32 %v3123, %v3123
        %v3188 = vmul.f32 %v3124, %v3124
        %v3189 = vmul.f32 %v3125, %v3125
        %v3190 = vmul.f32 %v3126, %v3126
        %v3191 = vmul.f32 %v3127, %v3127
        %v3192 = vmul.f32 %v3128, %v3128
        %v3193 = vmul.f32 %v3129, %v3129
        %v3194 = vmul.f32 %v3130, %v3130
        %v3195 = vmul.f32 %v3131, %v3131
        %v3196 = vmul.f32 %v3132, %v3132
        %v3197 = vmul.f32 %v3133, %v3133
        %v3198 = vmul.f32 %v3134, %v3134
        %v3199 = vmul.f32 %v3135, %v3135
        %3200 = vadd.xlane.f32.xlu0 %v3184
        %v3201 = vpop.xlane.xlu0 %3200
        %3202 = vadd.xlane.f32.xlu0 %v3185
        %v3203 = vpop.xlane.xlu0 %3202
        %3204 = vadd.xlane.f32.xlu0 %v3186
        %v3205 = vpop.xlane.xlu0 %3204
        %3206 = vadd.xlane.f32.xlu0 %v3187
        %v3207 = vpop.xlane.xlu0 %3206
        %3208 = vadd.xlane.f32.xlu0 %v3188
        %v3209 = vpop.xlane.xlu0 %3208
        %3210 = vadd.xlane.f32.xlu0 %v3189
        %v3211 = vpop.xlane.xlu0 %3210
        %3212 = vadd.xlane.f32.xlu0 %v3190
        %v3213 = vpop.xlane.xlu0 %3212
        %3214 = vadd.xlane.f32.xlu0 %v3191
        %v3215 = vpop.xlane.xlu0 %3214
        %3216 = vadd.xlane.f32.xlu0 %v3192
        %v3217 = vpop.xlane.xlu0 %3216
        %3218 = vadd.xlane.f32.xlu0 %v3193
        %v3219 = vpop.xlane.xlu0 %3218
        %3220 = vadd.xlane.f32.xlu0 %v3194
        %v3221 = vpop.xlane.xlu0 %3220
        %3222 = vadd.xlane.f32.xlu0 %v3195
        %v3223 = vpop.xlane.xlu0 %3222
        %3224 = vadd.xlane.f32.xlu0 %v3196
        %v3225 = vpop.xlane.xlu0 %3224
        %3226 = vadd.xlane.f32.xlu0 %v3197
        %v3227 = vpop.xlane.xlu0 %3226
        %3228 = vadd.xlane.f32.xlu0 %v3198
        %v3229 = vpop.xlane.xlu0 %3228
        %3230 = vadd.xlane.f32.xlu0 %v3199
        %v3231 = vpop.xlane.xlu0 %3230
        %v3232 = vmul.f32 %v3201, 0.03125
        %v3233 = vmul.f32 %v3203, 0.03125
        %v3234 = vmul.f32 %v3205, 0.03125
        %v3235 = vmul.f32 %v3207, 0.03125
        %v3236 = vmul.f32 %v3209, 0.03125
        %v3237 = vmul.f32 %v3211, 0.03125
        %v3238 = vmul.f32 %v3213, 0.03125
        %v3239 = vmul.f32 %v3215, 0.03125
        %v3240 = vmul.f32 %v3217, 0.03125
        %v3241 = vmul.f32 %v3219, 0.03125
        %v3242 = vmul.f32 %v3221, 0.03125
        %v3243 = vmul.f32 %v3223, 0.03125
        %v3244 = vmul.f32 %v3225, 0.03125
        %v3245 = vmul.f32 %v3227, 0.03125
        %v3246 = vmul.f32 %v3229, 0.03125
        %v3247 = vmul.f32 %v3231, 0.03125
        %v3248 = vmul.f32 %v3168, %v3168
        %v3249 = vmul.f32 %v3169, %v3169
        %v3250 = vmul.f32 %v3170, %v3170
        %v3251 = vmul.f32 %v3171, %v3171
        %v3252 = vmul.f32 %v3172, %v3172
        %v3253 = vmul.f32 %v3173, %v3173
        %v3254 = vmul.f32 %v3174, %v3174
        %v3255 = vmul.f32 %v3175, %v3175
        %v3256 = vmul.f32 %v3176, %v3176
        %v3257 = vmul.f32 %v3177, %v3177
        %v3258 = vmul.f32 %v3178, %v3178
        %v3259 = vmul.f32 %v3179, %v3179
        %v3260 = vmul.f32 %v3180, %v3180
        %v3261 = vmul.f32 %v3181, %v3181
        %v3262 = vmul.f32 %v3182, %v3182
        %v3263 = vmul.f32 %v3183, %v3183
        %v3264 = vsub.f32 %v3232, %v3248
        %v3265 = vsub.f32 %v3233, %v3249
        %v3266 = vsub.f32 %v3234, %v3250
        %v3267 = vsub.f32 %v3235, %v3251
        %v3268 = vsub.f32 %v3236, %v3252
        %v3269 = vsub.f32 %v3237, %v3253
        %v3270 = vsub.f32 %v3238, %v3254
        %v3271 = vsub.f32 %v3239, %v3255
        %v3272 = vsub.f32 %v3240, %v3256
        %v3273 = vsub.f32 %v3241, %v3257
        %v3274 = vsub.f32 %v3242, %v3258
        %v3275 = vsub.f32 %v3243, %v3259
        %v3276 = vsub.f32 %v3244, %v3260
        %v3277 = vsub.f32 %v3245, %v3261
        %v3278 = vsub.f32 %v3246, %v3262
        %v3279 = vsub.f32 %v3247, %v3263
        %v3280 = vsub.f32 %v3120, %v3168
        %v3281 = vsub.f32 %v3121, %v3169
        %v3282 = vsub.f32 %v3122, %v3170
        %v3283 = vsub.f32 %v3123, %v3171
        %v3284 = vsub.f32 %v3124, %v3172
        %v3285 = vsub.f32 %v3125, %v3173
        %v3286 = vsub.f32 %v3126, %v3174
        %v3287 = vsub.f32 %v3127, %v3175
        %v3288 = vsub.f32 %v3128, %v3176
        %v3289 = vsub.f32 %v3129, %v3177
        %v3290 = vsub.f32 %v3130, %v3178
        %v3291 = vsub.f32 %v3131, %v3179
        %v3292 = vsub.f32 %v3132, %v3180
        %v3293 = vsub.f32 %v3133, %v3181
        %v3294 = vsub.f32 %v3134, %v3182
        %v3295 = vsub.f32 %v3135, %v3183
        %v3296 = vadd.f32 %v3264, 0.1
        %v3297 = vadd.f32 %v3265, 0.1
        %v3298 = vadd.f32 %v3266, 0.1
        %v3299 = vadd.f32 %v3267, 0.1
        %v3300 = vadd.f32 %v3268, 0.1
        %v3301 = vadd.f32 %v3269, 0.1
        %v3302 = vadd.f32 %v3270, 0.1
        %v3303 = vadd.f32 %v3271, 0.1
        %v3304 = vadd.f32 %v3272, 0.1
        %v3305 = vadd.f32 %v3273, 0.1
        %v3306 = vadd.f32 %v3274, 0.1
        %v3307 = vadd.f32 %v3275, 0.1
        %v3308 = vadd.f32 %v3276, 0.1
        %v3309 = vadd.f32 %v3277, 0.1
        %v3310 = vadd.f32 %v3278, 0.1
        %v3311 = vadd.f32 %v3279, 0.1
        %v3312 = vrsqrt.pop %v3296
        %v3313 = vrsqrt.pop %v3297
        %v3314 = vrsqrt.pop %v3298
        %v3315 = vrsqrt.pop %v3299
        %v3316 = vrsqrt.pop %v3300
        %v3317 = vrsqrt.pop %v3301
        %v3318 = vrsqrt.pop %v3302
        %v3319 = vrsqrt.pop %v3303
        %v3320 = vrsqrt.pop %v3304
        %v3321 = vrsqrt.pop %v3305
        %v3322 = vrsqrt.pop %v3306
        %v3323 = vrsqrt.pop %v3307
        %v3324 = vrsqrt.pop %v3308
        %v3325 = vrsqrt.pop %v3309
        %v3326 = vrsqrt.pop %v3310
        %v3327 = vrsqrt.pop %v3311
        %v3328 = vmul.f32 %v3280, %v3312
        %v3329 = vmul.f32 %v3281, %v3313
        %v3330 = vmul.f32 %v3282, %v3314
        %v3331 = vmul.f32 %v3283, %v3315
        %v3332 = vmul.f32 %v3284, %v3316
        %v3333 = vmul.f32 %v3285, %v3317
        %v3334 = vmul.f32 %v3286, %v3318
        %v3335 = vmul.f32 %v3287, %v3319
        %v3336 = vmul.f32 %v3288, %v3320
        %v3337 = vmul.f32 %v3289, %v3321
        %v3338 = vmul.f32 %v3290, %v3322
        %v3339 = vmul.f32 %v3291, %v3323
        %v3340 = vmul.f32 %v3292, %v3324
        %v3341 = vmul.f32 %v3293, %v3325
        %v3342 = vmul.f32 %v3294, %v3326
        %v3343 = vmul.f32 %v3295, %v3327
        %v3344 = vlaneseq
        %v3345 = vshrl.u32 %v3344, 7
        %v3346 = vsub.s32 0, %v3345
        %v3347 = vrot.slane %v465, %v3346
        %v3348 = vmul.f32 %v3328, %v3347
        %v3349 = vmul.f32 %v3329, %v3347
        %v3350 = vmul.f32 %v3330, %v3347
        %v3351 = vmul.f32 %v3331, %v3347
        %v3352 = vmul.f32 %v3332, %v3347
        %v3353 = vmul.f32 %v3333, %v3347
        %v3354 = vmul.f32 %v3334, %v3347
        %v3355 = vmul.f32 %v3335, %v3347
        %v3356 = vmul.f32 %v3336, %v3347
        %v3357 = vmul.f32 %v3337, %v3347
        %v3358 = vmul.f32 %v3338, %v3347
        %v3359 = vmul.f32 %v3339, %v3347
        %v3360 = vmul.f32 %v3340, %v3347
        %v3361 = vmul.f32 %v3341, %v3347
        %v3362 = vmul.f32 %v3342, %v3347
        %v3363 = vmul.f32 %v3343, %v3347
        %v3364 = vlaneseq
        %v3365 = vshrl.u32 %v3364, 7
        %v3366 = vsub.s32 0, %v3365
        %v3367 = vrot.slane %v470, %v3366
        %v3368 = vadd.f32 %v3348, %v3367
        %v3369 = vadd.f32 %v3349, %v3367
        %v3370 = vadd.f32 %v3350, %v3367
        %v3371 = vadd.f32 %v3351, %v3367
        %v3372 = vadd.f32 %v3352, %v3367
        %v3373 = vadd.f32 %v3353, %v3367
        %v3374 = vadd.f32 %v3354, %v3367
        %v3375 = vadd.f32 %v3355, %v3367
        %v3376 = vadd.f32 %v3356, %v3367
        %v3377 = vadd.f32 %v3357, %v3367
        %v3378 = vadd.f32 %v3358, %v3367
        %v3379 = vadd.f32 %v3359, %v3367
        %v3380 = vadd.f32 %v3360, %v3367
        %v3381 = vadd.f32 %v3361, %v3367
        %v3382 = vadd.f32 %v3362, %v3367
        %v3383 = vadd.f32 %v3363, %v3367
        %v3384 = vld [vmem:[#allocation10] sm:$0xff]
        %v3385 = vld [vmem:[#allocation10 + $0x8] sm:$0xff]
        %v3386 = vld [vmem:[#allocation10 + $0x10] sm:$0xff]
        %v3387 = vld [vmem:[#allocation10 + $0x18] sm:$0xff]
        %v3388 = vld [vmem:[#allocation10 + $0x20] sm:$0xff]
        %v3389 = vld [vmem:[#allocation10 + $0x28] sm:$0xff]
        %v3390 = vld [vmem:[#allocation10 + $0x30] sm:$0xff]
        %v3391 = vld [vmem:[#allocation10 + $0x38] sm:$0xff]
        %v3392 = vld [vmem:[#allocation10 + $0x40] sm:$0xff]
        %v3393 = vld [vmem:[#allocation10 + $0x48] sm:$0xff]
        %v3394 = vld [vmem:[#allocation10 + $0x50] sm:$0xff]
        %v3395 = vld [vmem:[#allocation10 + $0x58] sm:$0xff]
        %v3396 = vld [vmem:[#allocation10 + $0x60] sm:$0xff]
        %v3397 = vld [vmem:[#allocation10 + $0x68] sm:$0xff]
        %v3398 = vld [vmem:[#allocation10 + $0x70] sm:$0xff]
        %v3399 = vld [vmem:[#allocation10 + $0x78] sm:$0xff]
        %v3400 = vld [vmem:[#allocation10 + $0x80] sm:$0xff]
        %v3401 = vld [vmem:[#allocation10 + $0x88] sm:$0xff]
        %v3402 = vld [vmem:[#allocation10 + $0x90] sm:$0xff]
        %v3403 = vld [vmem:[#allocation10 + $0x98] sm:$0xff]
        %v3404 = vld [vmem:[#allocation10 + $0xa0] sm:$0xff]
        %v3405 = vld [vmem:[#allocation10 + $0xa8] sm:$0xff]
        %v3406 = vld [vmem:[#allocation10 + $0xb0] sm:$0xff]
        %v3407 = vld [vmem:[#allocation10 + $0xb8] sm:$0xff]
        %v3408 = vld [vmem:[#allocation10 + $0xc0] sm:$0xff]
        %v3409 = vld [vmem:[#allocation10 + $0xc8] sm:$0xff]
        %v3410 = vld [vmem:[#allocation10 + $0xd0] sm:$0xff]
        %v3411 = vld [vmem:[#allocation10 + $0xd8] sm:$0xff]
        %v3412 = vld [vmem:[#allocation10 + $0xe0] sm:$0xff]
        %v3413 = vld [vmem:[#allocation10 + $0xe8] sm:$0xff]
        %v3414 = vld [vmem:[#allocation10 + $0xf0] sm:$0xff]
        %v3415 = vld [vmem:[#allocation10 + $0xf8] sm:$0xff]
        %3416 = vmatprep.subr.mxu0 %v3385
        %3417 = vmatpush1.msra.mxu0 %v3384
        %3418 = vmatprep.subr.mxu0 %v3387
        %3419 = vmatpush1.msra.mxu0 %v3386
        %3420 = vmatprep.subr.mxu0 %v3389
        %3421 = vmatpush1.msra.mxu0 %v3388
        %3422 = vmatprep.subr.mxu0 %v3391
        %3423 = vmatpush1.msra.mxu0 %v3390
        %3424 = vmatprep.subr.mxu0 %v3393
        %3425 = vmatpush1.msra.mxu0 %v3392
        %3426 = vmatprep.subr.mxu0 %v3395
        %3427 = vmatpush1.msra.mxu0 %v3394
        %3428 = vmatprep.subr.mxu0 %v3397
        %3429 = vmatpush1.msra.mxu0 %v3396
        %3430 = vmatprep.subr.mxu0 %v3399
        %3431 = vmatpush1.msra.mxu0 %v3398
        %3432 = vmatprep.subr.mxu0 %v3401
        %3433 = vmatpush1.msra.mxu0 %v3400
        %3434 = vmatprep.subr.mxu0 %v3403
        %3435 = vmatpush1.msra.mxu0 %v3402
        %3436 = vmatprep.subr.mxu0 %v3405
        %3437 = vmatpush1.msra.mxu0 %v3404
        %3438 = vmatprep.subr.mxu0 %v3407
        %3439 = vmatpush1.msra.mxu0 %v3406
        %3440 = vmatprep.subr.mxu0 %v3409
        %3441 = vmatpush1.msra.mxu0 %v3408
        %3442 = vmatprep.subr.mxu0 %v3411
        %3443 = vmatpush1.msra.mxu0 %v3410
        %3444 = vmatprep.subr.mxu0 %v3413
        %3445 = vmatpush1.msra.mxu0 %v3412
        %3446 = vmatprep.subr.mxu0 %v3415
        %3447 = vmatpush1.msra.mxu0 %v3414
        %3448 = vmatprep.subr.mxu0 0.0
        %3449 = vmatpush1.msra.mxu0 0.0
        %3450 = vmatprep.subr.mxu0 0.0
        %3451 = vmatpush1.msra.mxu0 0.0
        %3452 = vmatprep.subr.mxu0 0.0
        %3453 = vmatpush1.msra.mxu0 0.0
        %3454 = vmatprep.subr.mxu0 0.0
        %3455 = vmatpush1.msra.mxu0 0.0
        %3456 = vmatprep.subr.mxu0 0.0
        %3457 = vmatpush1.msra.mxu0 0.0
        %3458 = vmatprep.subr.mxu0 0.0
        %3459 = vmatpush1.msra.mxu0 0.0
        %3460 = vmatprep.subr.mxu0 0.0
        %3461 = vmatpush1.msra.mxu0 0.0
        %3462 = vmatprep.subr.mxu0 0.0
        %3463 = vmatpush1.msra.mxu0 0.0
        %3464 = vmatprep.subr.mxu0 0.0
        %3465 = vmatpush1.msra.mxu0 0.0
        %3466 = vmatprep.subr.mxu0 0.0
        %3467 = vmatpush1.msra.mxu0 0.0
        %3468 = vmatprep.subr.mxu0 0.0
        %3469 = vmatpush1.msra.mxu0 0.0
        %3470 = vmatprep.subr.mxu0 0.0
        %3471 = vmatpush1.msra.mxu0 0.0
        %3472 = vmatprep.subr.mxu0 0.0
        %3473 = vmatpush1.msra.mxu0 0.0
        %3474 = vmatprep.subr.mxu0 0.0
        %3475 = vmatpush1.msra.mxu0 0.0
        %3476 = vmatprep.subr.mxu0 0.0
        %3477 = vmatpush1.msra.mxu0 0.0
        %3478 = vmatprep.subr.mxu0 0.0
        %3479 = vmatpush1.msra.mxu0 0.0
        %3480 = vmatprep.mubr.f32.mxu0 0.0
        %3481 = vmatmul.mubr.f32.gmra.mrb[0].mxu0 %v3368
        %v3482 = vpop.f32.mrb[0].mxu0
        %v3483 = vadd.f32 0.0, %v3482
        %v3484 = vpop.f32.mrb[0].mxu0
        %v3485 = vadd.f32 0.0, %v3484
        %3486 = vmatprep.mubr.f32.mxu0 0.0
        %3487 = vmatmul.mubr.f32.gmra.mrb[0].mxu0 %v3369
        %v3488 = vpop.f32.mrb[0].mxu0
        %v3489 = vadd.f32 0.0, %v3488
        %v3490 = vpop.f32.mrb[0].mxu0
        %v3491 = vadd.f32 0.0, %v3490
        %3492 = vmatprep.mubr.f32.mxu0 0.0
        %3493 = vmatmul.mubr.f32.gmra.mrb[0].mxu0 %v3370
        %v3494 = vpop.f32.mrb[0].mxu0
        %v3495 = vadd.f32 0.0, %v3494
        %v3496 = vpop.f32.mrb[0].mxu0
        %v3497 = vadd.f32 0.0, %v3496
        %3498 = vmatprep.mubr.f32.mxu0 0.0
        %3499 = vmatmul.mubr.f32.gmra.mrb[0].mxu0 %v3371
        %v3500 = vpop.f32.mrb[0].mxu0
        %v3501 = vadd.f32 0.0, %v3500
        %v3502 = vpop.f32.mrb[0].mxu0
        %v3503 = vadd.f32 0.0, %v3502
        %3504 = vmatprep.mubr.f32.mxu0 0.0
        %3505 = vmatmul.mubr.f32.gmra.mrb[0].mxu0 %v3372
        %v3506 = vpop.f32.mrb[0].mxu0
        %v3507 = vadd.f32 0.0, %v3506
        %v3508 = vpop.f32.mrb[0].mxu0
        %v3509 = vadd.f32 0.0, %v3508
        %3510 = vmatprep.mubr.f32.mxu0 0.0
        %3511 = vmatmul.mubr.f32.gmra.mrb[0].mxu0 %v3373
        %v3512 = vpop.f32.mrb[0].mxu0
        %v3513 = vadd.f32 0.0, %v3512
        %v3514 = vpop.f32.mrb[0].mxu0
        %v3515 = vadd.f32 0.0, %v3514
        %3516 = vmatprep.mubr.f32.mxu0 0.0
        %3517 = vmatmul.mubr.f32.gmra.mrb[0].mxu0 %v3374
        %v3518 = vpop.f32.mrb[0].mxu0
        %v3519 = vadd.f32 0.0, %v3518
        %v3520 = vpop.f32.mrb[0].mxu0
        %v3521 = vadd.f32 0.0, %v3520
        %3522 = vmatprep.mubr.f32.mxu0 0.0
        %3523 = vmatmul.mubr.f32.gmra.mrb[0].mxu0 %v3375
        %v3524 = vpop.f32.mrb[0].mxu0
        %v3525 = vadd.f32 0.0, %v3524
        %v3526 = vpop.f32.mrb[0].mxu0
        %v3527 = vadd.f32 0.0, %v3526
        %3528 = vmatprep.mubr.f32.mxu0 0.0
        %3529 = vmatmul.mubr.f32.gmra.mrb[0].mxu0 %v3376
        %v3530 = vpop.f32.mrb[0].mxu0
        %v3531 = vadd.f32 0.0, %v3530
        %v3532 = vpop.f32.mrb[0].mxu0
        %v3533 = vadd.f32 0.0, %v3532
        %3534 = vmatprep.mubr.f32.mxu0 0.0
        %3535 = vmatmul.mubr.f32.gmra.mrb[0].mxu0 %v3377
        %v3536 = vpop.f32.mrb[0].mxu0
        %v3537 = vadd.f32 0.0, %v3536
        %v3538 = vpop.f32.mrb[0].mxu0
        %v3539 = vadd.f32 0.0, %v3538
        %3540 = vmatprep.mubr.f32.mxu0 0.0
        %3541 = vmatmul.mubr.f32.gmra.mrb[0].mxu0 %v3378
        %v3542 = vpop.f32.mrb[0].mxu0
        %v3543 = vadd.f32 0.0, %v3542
        %v3544 = vpop.f32.mrb[0].mxu0
        %v3545 = vadd.f32 0.0, %v3544
        %3546 = vmatprep.mubr.f32.mxu0 0.0
        %3547 = vmatmul.mubr.f32.gmra.mrb[0].mxu0 %v3379
        %v3548 = vpop.f32.mrb[0].mxu0
        %v3549 = vadd.f32 0.0, %v3548
        %v3550 = vpop.f32.mrb[0].mxu0
        %v3551 = vadd.f32 0.0, %v3550
        %3552 = vmatprep.mubr.f32.mxu0 0.0
        %3553 = vmatmul.mubr.f32.gmra.mrb[0].mxu0 %v3380
        %v3554 = vpop.f32.mrb[0].mxu0
        %v3555 = vadd.f32 0.0, %v3554
        %v3556 = vpop.f32.mrb[0].mxu0
        %v3557 = vadd.f32 0.0, %v3556
        %3558 = vmatprep.mubr.f32.mxu0 0.0
        %3559 = vmatmul.mubr.f32.gmra.mrb[0].mxu0 %v3381
        %v3560 = vpop.f32.mrb[0].mxu0
        %v3561 = vadd.f32 0.0, %v3560
        %v3562 = vpop.f32.mrb[0].mxu0
        %v3563 = vadd.f32 0.0, %v3562
        %3564 = vmatprep.mubr.f32.mxu0 0.0
        %3565 = vmatmul.mubr.f32.gmra.mrb[0].mxu0 %v3382
        %v3566 = vpop.f32.mrb[0].mxu0
        %v3567 = vadd.f32 0.0, %v3566
        %v3568 = vpop.f32.mrb[0].mxu0
        %v3569 = vadd.f32 0.0, %v3568
        %3570 = vmatprep.mubr.f32.mxu0 0.0
        %3571 = vmatmul.mubr.f32.gmra.mrb[0].mxu0 %v3383
        %v3572 = vpop.f32.mrb[0].mxu0
        %v3573 = vadd.f32 0.0, %v3572
        %v3574 = vpop.f32.mrb[0].mxu0
        %v3575 = vadd.f32 0.0, %v3574
        %3576 = vdwg.mxu0
        %v3577 = vlaneseq
        %v3578 = vshrl.u32 %v3577, 7
        %v3579 = vsub.s32 0, %v3578
        %v3580 = vrot.slane %v471, %v3579
        %v3581 = vadd.f32 %v3483, %v3580
        %v3582 = vadd.f32 %v3489, %v3580
        %v3583 = vadd.f32 %v3495, %v3580
        %v3584 = vadd.f32 %v3501, %v3580
        %v3585 = vadd.f32 %v3507, %v3580
        %v3586 = vadd.f32 %v3513, %v3580
        %v3587 = vadd.f32 %v3519, %v3580
        %v3588 = vadd.f32 %v3525, %v3580
        %v3589 = vadd.f32 %v3531, %v3580
        %v3590 = vadd.f32 %v3537, %v3580
        %v3591 = vadd.f32 %v3543, %v3580
        %v3592 = vadd.f32 %v3549, %v3580
        %v3593 = vadd.f32 %v3555, %v3580
        %v3594 = vadd.f32 %v3561, %v3580
        %v3595 = vadd.f32 %v3567, %v3580
        %v3596 = vadd.f32 %v3573, %v3580
        %v3597 = vlaneseq
        %v3598 = vshrl.u32 %v3597, 7
        %v3599 = vsub.s32 0, %v3598
        %v3600 = vrot.slane %v472, %v3599
        %v3601 = vadd.f32 %v3485, %v3600
        %v3602 = vadd.f32 %v3491, %v3600
        %v3603 = vadd.f32 %v3497, %v3600
        %v3604 = vadd.f32 %v3503, %v3600
        %v3605 = vadd.f32 %v3509, %v3600
        %v3606 = vadd.f32 %v3515, %v3600
        %v3607 = vadd.f32 %v3521, %v3600
        %v3608 = vadd.f32 %v3527, %v3600
        %v3609 = vadd.f32 %v3533, %v3600
        %v3610 = vadd.f32 %v3539, %v3600
        %v3611 = vadd.f32 %v3545, %v3600
        %v3612 = vadd.f32 %v3551, %v3600
        %v3613 = vadd.f32 %v3557, %v3600
        %v3614 = vadd.f32 %v3563, %v3600
        %v3615 = vadd.f32 %v3569, %v3600
        %v3616 = vadd.f32 %v3575, %v3600
        %v3617 = vlaneseq
        %v3618 = vshrl.u32 %v3617, 7
        %v3619 = vsub.s32 0, %v3618
        %v3620 = vrot.slane %v473, %v3619
        %v3621 = vsub.f32 %v494, %v3620
        %v3622 = vsub.f32 %v495, %v3620
        %v3623 = vsub.f32 %v496, %v3620
        %v3624 = vsub.f32 %v497, %v3620
        %v3625 = vsub.f32 %v498, %v3620
        %v3626 = vsub.f32 %v499, %v3620
        %v3627 = vsub.f32 %v500, %v3620
        %v3628 = vsub.f32 %v501, %v3620
        %v3629 = vsub.f32 %v502, %v3620
        %v3630 = vsub.f32 %v503, %v3620
        %v3631 = vsub.f32 %v504, %v3620
        %v3632 = vsub.f32 %v505, %v3620
        %v3633 = vsub.f32 %v506, %v3620
        %v3634 = vsub.f32 %v507, %v3620
        %v3635 = vsub.f32 %v508, %v3620
        %v3636 = vsub.f32 %v509, %v3620
        %v3637 = vadd.f32 %v474, 1.837877
        %v3638 = vmul.f32 %v3621, %v3621
        %v3639 = vmul.f32 %v3622, %v3622
        %v3640 = vmul.f32 %v3623, %v3623
        %v3641 = vmul.f32 %v3624, %v3624
        %v3642 = vmul.f32 %v3625, %v3625
        %v3643 = vmul.f32 %v3626, %v3626
        %v3644 = vmul.f32 %v3627, %v3627
        %v3645 = vmul.f32 %v3628, %v3628
        %v3646 = vmul.f32 %v3629, %v3629
        %v3647 = vmul.f32 %v3630, %v3630
        %v3648 = vmul.f32 %v3631, %v3631
        %v3649 = vmul.f32 %v3632, %v3632
        %v3650 = vmul.f32 %v3633, %v3633
        %v3651 = vmul.f32 %v3634, %v3634
        %v3652 = vmul.f32 %v3635, %v3635
        %v3653 = vmul.f32 %v3636, %v3636
        %v3654 = vlaneseq
        %v3655 = vshrl.u32 %v3654, 7
        %v3656 = vsub.s32 0, %v3655
        %v3657 = vrot.slane %v475, %v3656
        %v3658 = vmul.f32 %v3638, %v3657
        %v3659 = vmul.f32 %v3639, %v3657
        %v3660 = vmul.f32 %v3640, %v3657
        %v3661 = vmul.f32 %v3641, %v3657
        %v3662 = vmul.f32 %v3642, %v3657
        %v3663 = vmul.f32 %v3643, %v3657
        %v3664 = vmul.f32 %v3644, %v3657
        %v3665 = vmul.f32 %v3645, %v3657
        %v3666 = vmul.f32 %v3646, %v3657
        %v3667 = vmul.f32 %v3647, %v3657
        %v3668 = vmul.f32 %v3648, %v3657
        %v3669 = vmul.f32 %v3649, %v3657
        %v3670 = vmul.f32 %v3650, %v3657
        %v3671 = vmul.f32 %v3651, %v3657
        %v3672 = vmul.f32 %v3652, %v3657
        %v3673 = vmul.f32 %v3653, %v3657
        %v3674 = vlaneseq
        %v3675 = vshrl.u32 %v3674, 7
        %v3676 = vsub.s32 0, %v3675
        %v3677 = vrot.slane %v3637, %v3676
        %v3678 = vadd.f32 %v3677, %v3658
        %v3679 = vadd.f32 %v3677, %v3659
        %v3680 = vadd.f32 %v3677, %v3660
        %v3681 = vadd.f32 %v3677, %v3661
        %v3682 = vadd.f32 %v3677, %v3662
        %v3683 = vadd.f32 %v3677, %v3663
        %v3684 = vadd.f32 %v3677, %v3664
        %v3685 = vadd.f32 %v3677, %v3665
        %v3686 = vadd.f32 %v3677, %v3666
        %v3687 = vadd.f32 %v3677, %v3667
        %v3688 = vadd.f32 %v3677, %v3668
        %v3689 = vadd.f32 %v3677, %v3669
        %v3690 = vadd.f32 %v3677, %v3670
        %v3691 = vadd.f32 %v3677, %v3671
        %v3692 = vadd.f32 %v3677, %v3672
        %v3693 = vadd.f32 %v3677, %v3673
        %v3694 = vmul.f32 %v3678, -0.5
        %v3695 = vmul.f32 %v3679, -0.5
        %v3696 = vmul.f32 %v3680, -0.5
        %v3697 = vmul.f32 %v3681, -0.5
        %v3698 = vmul.f32 %v3682, -0.5
        %v3699 = vmul.f32 %v3683, -0.5
        %v3700 = vmul.f32 %v3684, -0.5
        %v3701 = vmul.f32 %v3685, -0.5
        %v3702 = vmul.f32 %v3686, -0.5
        %v3703 = vmul.f32 %v3687, -0.5
        %v3704 = vmul.f32 %v3688, -0.5
        %v3705 = vmul.f32 %v3689, -0.5
        %v3706 = vmul.f32 %v3690, -0.5
        %v3707 = vmul.f32 %v3691, -0.5
        %v3708 = vmul.f32 %v3692, -0.5
        %v3709 = vmul.f32 %v3693, -0.5
        %v3710 = vadd.f32 %v3694, -1.89712
        %v3711 = vadd.f32 %v3695, -1.89712
        %v3712 = vadd.f32 %v3696, -1.89712
        %v3713 = vadd.f32 %v3697, -1.89712
        %v3714 = vadd.f32 %v3698, -1.89712
        %v3715 = vadd.f32 %v3699, -1.89712
        %v3716 = vadd.f32 %v3700, -1.89712
        %v3717 = vadd.f32 %v3701, -1.89712
        %v3718 = vadd.f32 %v3702, -1.89712
        %v3719 = vadd.f32 %v3703, -1.89712
        %v3720 = vadd.f32 %v3704, -1.89712
        %v3721 = vadd.f32 %v3705, -1.89712
        %v3722 = vadd.f32 %v3706, -1.89712
        %v3723 = vadd.f32 %v3707, -1.89712
        %v3724 = vadd.f32 %v3708, -1.89712
        %v3725 = vadd.f32 %v3709, -1.89712
        %v3726 = vsub.f32 0.0, %v3601
        %v3727 = vsub.f32 0.0, %v3602
        %v3728 = vsub.f32 0.0, %v3603
        %v3729 = vsub.f32 0.0, %v3604
        %v3730 = vsub.f32 0.0, %v3605
        %v3731 = vsub.f32 0.0, %v3606
        %v3732 = vsub.f32 0.0, %v3607
        %v3733 = vsub.f32 0.0, %v3608
        %v3734 = vsub.f32 0.0, %v3609
        %v3735 = vsub.f32 0.0, %v3610
        %v3736 = vsub.f32 0.0, %v3611
        %v3737 = vsub.f32 0.0, %v3612
        %v3738 = vsub.f32 0.0, %v3613
        %v3739 = vsub.f32 0.0, %v3614
        %v3740 = vsub.f32 0.0, %v3615
        %v3741 = vsub.f32 0.0, %v3616
        %v3742 = vmul.f32 %v3726, 1.442695
        %v3743 = vpow.pop %v3742
        %v3744 = vmul.f32 %v3727, 1.442695
        %v3745 = vpow.pop %v3744
        %v3746 = vmul.f32 %v3728, 1.442695
        %v3747 = vpow.pop %v3746
        %v3748 = vmul.f32 %v3729, 1.442695
        %v3749 = vpow.pop %v3748
        %v3750 = vmul.f32 %v3730, 1.442695
        %v3751 = vpow.pop %v3750
        %v3752 = vmul.f32 %v3731, 1.442695
        %v3753 = vpow.pop %v3752
        %v3754 = vmul.f32 %v3732, 1.442695
        %v3755 = vpow.pop %v3754
        %v3756 = vmul.f32 %v3733, 1.442695
        %v3757 = vpow.pop %v3756
        %v3758 = vmul.f32 %v3734, 1.442695
        %v3759 = vpow.pop %v3758
        %v3760 = vmul.f32 %v3735, 1.442695
        %v3761 = vpow.pop %v3760
        %v3762 = vmul.f32 %v3736, 1.442695
        %v3763 = vpow.pop %v3762
        %v3764 = vmul.f32 %v3737, 1.442695
        %v3765 = vpow.pop %v3764
        %v3766 = vmul.f32 %v3738, 1.442695
        %v3767 = vpow.pop %v3766
        %v3768 = vmul.f32 %v3739, 1.442695
        %v3769 = vpow.pop %v3768
        %v3770 = vmul.f32 %v3740, 1.442695
        %v3771 = vpow.pop %v3770
        %v3772 = vmul.f32 %v3741, 1.442695
        %v3773 = vpow.pop %v3772
        %v3774 = vsub.f32 %v494, %v3581
        %v3775 = vsub.f32 %v495, %v3582
        %v3776 = vsub.f32 %v496, %v3583
        %v3777 = vsub.f32 %v497, %v3584
        %v3778 = vsub.f32 %v498, %v3585
        %v3779 = vsub.f32 %v499, %v3586
        %v3780 = vsub.f32 %v500, %v3587
        %v3781 = vsub.f32 %v501, %v3588
        %v3782 = vsub.f32 %v502, %v3589
        %v3783 = vsub.f32 %v503, %v3590
        %v3784 = vsub.f32 %v504, %v3591
        %v3785 = vsub.f32 %v505, %v3592
        %v3786 = vsub.f32 %v506, %v3593
        %v3787 = vsub.f32 %v507, %v3594
        %v3788 = vsub.f32 %v508, %v3595
        %v3789 = vsub.f32 %v509, %v3596
        %v3790 = vadd.f32 %v3601, 1.837877
        %v3791 = vadd.f32 %v3602, 1.837877
        %v3792 = vadd.f32 %v3603, 1.837877
        %v3793 = vadd.f32 %v3604, 1.837877
        %v3794 = vadd.f32 %v3605, 1.837877
        %v3795 = vadd.f32 %v3606, 1.837877
        %v3796 = vadd.f32 %v3607, 1.837877
        %v3797 = vadd.f32 %v3608, 1.837877
        %v3798 = vadd.f32 %v3609, 1.837877
        %v3799 = vadd.f32 %v3610, 1.837877
        %v3800 = vadd.f32 %v3611, 1.837877
        %v3801 = vadd.f32 %v3612, 1.837877
        %v3802 = vadd.f32 %v3613, 1.837877
        %v3803 = vadd.f32 %v3614, 1.837877
        %v3804 = vadd.f32 %v3615, 1.837877
        %v3805 = vadd.f32 %v3616, 1.837877
        %v3806 = vmul.f32 %v3774, %v3774
        %v3807 = vmul.f32 %v3775, %v3775
        %v3808 = vmul.f32 %v3776, %v3776
        %v3809 = vmul.f32 %v3777, %v3777
        %v3810 = vmul.f32 %v3778, %v3778
        %v3811 = vmul.f32 %v3779, %v3779
        %v3812 = vmul.f32 %v3780, %v3780
        %v3813 = vmul.f32 %v3781, %v3781
        %v3814 = vmul.f32 %v3782, %v3782
        %v3815 = vmul.f32 %v3783, %v3783
        %v3816 = vmul.f32 %v3784, %v3784
        %v3817 = vmul.f32 %v3785, %v3785
        %v3818 = vmul.f32 %v3786, %v3786
        %v3819 = vmul.f32 %v3787, %v3787
        %v3820 = vmul.f32 %v3788, %v3788
        %v3821 = vmul.f32 %v3789, %v3789
        %v3822 = vmul.f32 %v3806, %v3743
        %v3823 = vmul.f32 %v3807, %v3745
        %v3824 = vmul.f32 %v3808, %v3747
        %v3825 = vmul.f32 %v3809, %v3749
        %v3826 = vmul.f32 %v3810, %v3751
        %v3827 = vmul.f32 %v3811, %v3753
        %v3828 = vmul.f32 %v3812, %v3755
        %v3829 = vmul.f32 %v3813, %v3757
        %v3830 = vmul.f32 %v3814, %v3759
        %v3831 = vmul.f32 %v3815, %v3761
        %v3832 = vmul.f32 %v3816, %v3763
        %v3833 = vmul.f32 %v3817, %v3765
        %v3834 = vmul.f32 %v3818, %v3767
        %v3835 = vmul.f32 %v3819, %v3769
        %v3836 = vmul.f32 %v3820, %v3771
        %v3837 = vmul.f32 %v3821, %v3773
        %v3838 = vadd.f32 %v3790, %v3822
        %v3839 = vadd.f32 %v3791, %v3823
        %v3840 = vadd.f32 %v3792, %v3824
        %v3841 = vadd.f32 %v3793, %v3825
        %v3842 = vadd.f32 %v3794, %v3826
        %v3843 = vadd.f32 %v3795, %v3827
        %v3844 = vadd.f32 %v3796, %v3828
        %v3845 = vadd.f32 %v3797, %v3829
        %v3846 = vadd.f32 %v3798, %v3830
        %v3847 = vadd.f32 %v3799, %v3831
        %v3848 = vadd.f32 %v3800, %v3832
        %v3849 = vadd.f32 %v3801, %v3833
        %v3850 = vadd.f32 %v3802, %v3834
        %v3851 = vadd.f32 %v3803, %v3835
        %v3852 = vadd.f32 %v3804, %v3836
        %v3853 = vadd.f32 %v3805, %v3837
        %v3854 = vmul.f32 %v3838, -0.5
        %v3855 = vmul.f32 %v3839, -0.5
        %v3856 = vmul.f32 %v3840, -0.5
        %v3857 = vmul.f32 %v3841, -0.5
        %v3858 = vmul.f32 %v3842, -0.5
        %v3859 = vmul.f32 %v3843, -0.5
        %v3860 = vmul.f32 %v3844, -0.5
        %v3861 = vmul.f32 %v3845, -0.5
        %v3862 = vmul.f32 %v3846, -0.5
        %v3863 = vmul.f32 %v3847, -0.5
        %v3864 = vmul.f32 %v3848, -0.5
        %v3865 = vmul.f32 %v3849, -0.5
        %v3866 = vmul.f32 %v3850, -0.5
        %v3867 = vmul.f32 %v3851, -0.5
        %v3868 = vmul.f32 %v3852, -0.5
        %v3869 = vmul.f32 %v3853, -0.5
        %v3870 = vadd.f32 %v3854, -0.2876821
        %v3871 = vadd.f32 %v3855, -0.2876821
        %v3872 = vadd.f32 %v3856, -0.2876821
        %v3873 = vadd.f32 %v3857, -0.2876821
        %v3874 = vadd.f32 %v3858, -0.2876821
        %v3875 = vadd.f32 %v3859, -0.2876821
        %v3876 = vadd.f32 %v3860, -0.2876821
        %v3877 = vadd.f32 %v3861, -0.2876821
        %v3878 = vadd.f32 %v3862, -0.2876821
        %v3879 = vadd.f32 %v3863, -0.2876821
        %v3880 = vadd.f32 %v3864, -0.2876821
        %v3881 = vadd.f32 %v3865, -0.2876821
        %v3882 = vadd.f32 %v3866, -0.2876821
        %v3883 = vadd.f32 %v3867, -0.2876821
        %v3884 = vadd.f32 %v3868, -0.2876821
        %v3885 = vadd.f32 %v3869, -0.2876821
        %v3886 = vadd.f32 %v476, 1.837877
        %v3887 = vlaneseq
        %v3888 = vshrl.u32 %v3887, 7
        %v3889 = vsub.s32 0, %v3888
        %v3890 = vrot.slane %v477, %v3889
        %v3891 = vmul.f32 %v3638, %v3890
        %v3892 = vmul.f32 %v3639, %v3890
        %v3893 = vmul.f32 %v3640, %v3890
        %v3894 = vmul.f32 %v3641, %v3890
        %v3895 = vmul.f32 %v3642, %v3890
        %v3896 = vmul.f32 %v3643, %v3890
        %v3897 = vmul.f32 %v3644, %v3890
        %v3898 = vmul.f32 %v3645, %v3890
        %v3899 = vmul.f32 %v3646, %v3890
        %v3900 = vmul.f32 %v3647, %v3890
        %v3901 = vmul.f32 %v3648, %v3890
        %v3902 = vmul.f32 %v3649, %v3890
        %v3903 = vmul.f32 %v3650, %v3890
        %v3904 = vmul.f32 %v3651, %v3890
        %v3905 = vmul.f32 %v3652, %v3890
        %v3906 = vmul.f32 %v3653, %v3890
        %v3907 = vlaneseq
        %v3908 = vshrl.u32 %v3907, 7
        %v3909 = vsub.s32 0, %v3908
        %v3910 = vrot.slane %v3886, %v3909
        %v3911 = vadd.f32 %v3910, %v3891
        %v3912 = vadd.f32 %v3910, %v3892
        %v3913 = vadd.f32 %v3910, %v3893
        %v3914 = vadd.f32 %v3910, %v3894
        %v3915 = vadd.f32 %v3910, %v3895
        %v3916 = vadd.f32 %v3910, %v3896
        %v3917 = vadd.f32 %v3910, %v3897
        %v3918 = vadd.f32 %v3910, %v3898
        %v3919 = vadd.f32 %v3910, %v3899
        %v3920 = vadd.f32 %v3910, %v3900
        %v3921 = vadd.f32 %v3910, %v3901
        %v3922 = vadd.f32 %v3910, %v3902
        %v3923 = vadd.f32 %v3910, %v3903
        %v3924 = vadd.f32 %v3910, %v3904
        %v3925 = vadd.f32 %v3910, %v3905
        %v3926 = vadd.f32 %v3910, %v3906
        %v3927 = vmul.f32 %v3911, -0.5
        %v3928 = vmul.f32 %v3912, -0.5
        %v3929 = vmul.f32 %v3913, -0.5
        %v3930 = vmul.f32 %v3914, -0.5
        %v3931 = vmul.f32 %v3915, -0.5
        %v3932 = vmul.f32 %v3916, -0.5
        %v3933 = vmul.f32 %v3917, -0.5
        %v3934 = vmul.f32 %v3918, -0.5
        %v3935 = vmul.f32 %v3919, -0.5
        %v3936 = vmul.f32 %v3920, -0.5
        %v3937 = vmul.f32 %v3921, -0.5
        %v3938 = vmul.f32 %v3922, -0.5
        %v3939 = vmul.f32 %v3923, -0.5
        %v3940 = vmul.f32 %v3924, -0.5
        %v3941 = vmul.f32 %v3925, -0.5
        %v3942 = vmul.f32 %v3926, -0.5
        %v3943 = vadd.f32 %v3927, -2.3025851
        %v3944 = vadd.f32 %v3928, -2.3025851
        %v3945 = vadd.f32 %v3929, -2.3025851
        %v3946 = vadd.f32 %v3930, -2.3025851
        %v3947 = vadd.f32 %v3931, -2.3025851
        %v3948 = vadd.f32 %v3932, -2.3025851
        %v3949 = vadd.f32 %v3933, -2.3025851
        %v3950 = vadd.f32 %v3934, -2.3025851
        %v3951 = vadd.f32 %v3935, -2.3025851
        %v3952 = vadd.f32 %v3936, -2.3025851
        %v3953 = vadd.f32 %v3937, -2.3025851
        %v3954 = vadd.f32 %v3938, -2.3025851
        %v3955 = vadd.f32 %v3939, -2.3025851
        %v3956 = vadd.f32 %v3940, -2.3025851
        %v3957 = vadd.f32 %v3941, -2.3025851
        %v3958 = vadd.f32 %v3942, -2.3025851
        %v3959 = vmax.f32 %v3710, %v3870
        %v3960 = vmax.f32 %v3711, %v3871
        %v3961 = vmax.f32 %v3712, %v3872
        %v3962 = vmax.f32 %v3713, %v3873
        %v3963 = vmax.f32 %v3714, %v3874
        %v3964 = vmax.f32 %v3715, %v3875
        %v3965 = vmax.f32 %v3716, %v3876
        %v3966 = vmax.f32 %v3717, %v3877
        %v3967 = vmax.f32 %v3718, %v3878
        %v3968 = vmax.f32 %v3719, %v3879
        %v3969 = vmax.f32 %v3720, %v3880
        %v3970 = vmax.f32 %v3721, %v3881
        %v3971 = vmax.f32 %v3722, %v3882
        %v3972 = vmax.f32 %v3723, %v3883
        %v3973 = vmax.f32 %v3724, %v3884
        %v3974 = vmax.f32 %v3725, %v3885
        %v3975 = vmax.f32 %v3959, %v3943
        %v3976 = vmax.f32 %v3960, %v3944
        %v3977 = vmax.f32 %v3961, %v3945
        %v3978 = vmax.f32 %v3962, %v3946
        %v3979 = vmax.f32 %v3963, %v3947
        %v3980 = vmax.f32 %v3964, %v3948
        %v3981 = vmax.f32 %v3965, %v3949
        %v3982 = vmax.f32 %v3966, %v3950
        %v3983 = vmax.f32 %v3967, %v3951
        %v3984 = vmax.f32 %v3968, %v3952
        %v3985 = vmax.f32 %v3969, %v3953
        %v3986 = vmax.f32 %v3970, %v3954
        %v3987 = vmax.f32 %v3971, %v3955
        %v3988 = vmax.f32 %v3972, %v3956
        %v3989 = vmax.f32 %v3973, %v3957
        %v3990 = vmax.f32 %v3974, %v3958
        %v3991 = vsub.f32 %v3710, %v3975
        %v3992 = vsub.f32 %v3711, %v3976
        %v3993 = vsub.f32 %v3712, %v3977
        %v3994 = vsub.f32 %v3713, %v3978
        %v3995 = vsub.f32 %v3714, %v3979
        %v3996 = vsub.f32 %v3715, %v3980
        %v3997 = vsub.f32 %v3716, %v3981
        %v3998 = vsub.f32 %v3717, %v3982
        %v3999 = vsub.f32 %v3718, %v3983
        %v4000 = vsub.f32 %v3719, %v3984
        %v4001 = vsub.f32 %v3720, %v3985
        %v4002 = vsub.f32 %v3721, %v3986
        %v4003 = vsub.f32 %v3722, %v3987
        %v4004 = vsub.f32 %v3723, %v3988
        %v4005 = vsub.f32 %v3724, %v3989
        %v4006 = vsub.f32 %v3725, %v3990
        %v4007 = vmul.f32 %v3991, 1.442695
        %v4008 = vpow.pop %v4007
        %v4009 = vmul.f32 %v3992, 1.442695
        %v4010 = vpow.pop %v4009
        %v4011 = vmul.f32 %v3993, 1.442695
        %v4012 = vpow.pop %v4011
        %v4013 = vmul.f32 %v3994, 1.442695
        %v4014 = vpow.pop %v4013
        %v4015 = vmul.f32 %v3995, 1.442695
        %v4016 = vpow.pop %v4015
        %v4017 = vmul.f32 %v3996, 1.442695
        %v4018 = vpow.pop %v4017
        %v4019 = vmul.f32 %v3997, 1.442695
        %v4020 = vpow.pop %v4019
        %v4021 = vmul.f32 %v3998, 1.442695
        %v4022 = vpow.pop %v4021
        %v4023 = vmul.f32 %v3999, 1.442695
        %v4024 = vpow.pop %v4023
        %v4025 = vmul.f32 %v4000, 1.442695
        %v4026 = vpow.pop %v4025
        %v4027 = vmul.f32 %v4001, 1.442695
        %v4028 = vpow.pop %v4027
        %v4029 = vmul.f32 %v4002, 1.442695
        %v4030 = vpow.pop %v4029
        %v4031 = vmul.f32 %v4003, 1.442695
        %v4032 = vpow.pop %v4031
        %v4033 = vmul.f32 %v4004, 1.442695
        %v4034 = vpow.pop %v4033
        %v4035 = vmul.f32 %v4005, 1.442695
        %v4036 = vpow.pop %v4035
        %v4037 = vmul.f32 %v4006, 1.442695
        %v4038 = vpow.pop %v4037
        %v4039 = vsub.f32 %v3870, %v3975
        %v4040 = vsub.f32 %v3871, %v3976
        %v4041 = vsub.f32 %v3872, %v3977
        %v4042 = vsub.f32 %v3873, %v3978
        %v4043 = vsub.f32 %v3874, %v3979
        %v4044 = vsub.f32 %v3875, %v3980
        %v4045 = vsub.f32 %v3876, %v3981
        %v4046 = vsub.f32 %v3877, %v3982
        %v4047 = vsub.f32 %v3878, %v3983
        %v4048 = vsub.f32 %v3879, %v3984
        %v4049 = vsub.f32 %v3880, %v3985
        %v4050 = vsub.f32 %v3881, %v3986
        %v4051 = vsub.f32 %v3882, %v3987
        %v4052 = vsub.f32 %v3883, %v3988
        %v4053 = vsub.f32 %v3884, %v3989
        %v4054 = vsub.f32 %v3885, %v3990
        %v4055 = vmul.f32 %v4039, 1.442695
        %v4056 = vpow.pop %v4055
        %v4057 = vmul.f32 %v4040, 1.442695
        %v4058 = vpow.pop %v4057
        %v4059 = vmul.f32 %v4041, 1.442695
        %v4060 = vpow.pop %v4059
        %v4061 = vmul.f32 %v4042, 1.442695
        %v4062 = vpow.pop %v4061
        %v4063 = vmul.f32 %v4043, 1.442695
        %v4064 = vpow.pop %v4063
        %v4065 = vmul.f32 %v4044, 1.442695
        %v4066 = vpow.pop %v4065
        %v4067 = vmul.f32 %v4045, 1.442695
        %v4068 = vpow.pop %v4067
        %v4069 = vmul.f32 %v4046, 1.442695
        %v4070 = vpow.pop %v4069
        %v4071 = vmul.f32 %v4047, 1.442695
        %v4072 = vpow.pop %v4071
        %v4073 = vmul.f32 %v4048, 1.442695
        %v4074 = vpow.pop %v4073
        %v4075 = vmul.f32 %v4049, 1.442695
        %v4076 = vpow.pop %v4075
        %v4077 = vmul.f32 %v4050, 1.442695
        %v4078 = vpow.pop %v4077
        %v4079 = vmul.f32 %v4051, 1.442695
        %v4080 = vpow.pop %v4079
        %v4081 = vmul.f32 %v4052, 1.442695
        %v4082 = vpow.pop %v4081
        %v4083 = vmul.f32 %v4053, 1.442695
        %v4084 = vpow.pop %v4083
        %v4085 = vmul.f32 %v4054, 1.442695
        %v4086 = vpow.pop %v4085
        %v4087 = vadd.f32 %v4008, %v4056
        %v4088 = vadd.f32 %v4010, %v4058
        %v4089 = vadd.f32 %v4012, %v4060
        %v4090 = vadd.f32 %v4014, %v4062
        %v4091 = vadd.f32 %v4016, %v4064
        %v4092 = vadd.f32 %v4018, %v4066
        %v4093 = vadd.f32 %v4020, %v4068
        %v4094 = vadd.f32 %v4022, %v4070
        %v4095 = vadd.f32 %v4024, %v4072
        %v4096 = vadd.f32 %v4026, %v4074
        %v4097 = vadd.f32 %v4028, %v4076
        %v4098 = vadd.f32 %v4030, %v4078
        %v4099 = vadd.f32 %v4032, %v4080
        %v4100 = vadd.f32 %v4034, %v4082
        %v4101 = vadd.f32 %v4036, %v4084
        %v4102 = vadd.f32 %v4038, %v4086
        %v4103 = vsub.f32 %v3943, %v3975
        %v4104 = vsub.f32 %v3944, %v3976
        %v4105 = vsub.f32 %v3945, %v3977
        %v4106 = vsub.f32 %v3946, %v3978
        %v4107 = vsub.f32 %v3947, %v3979
        %v4108 = vsub.f32 %v3948, %v3980
        %v4109 = vsub.f32 %v3949, %v3981
        %v4110 = vsub.f32 %v3950, %v3982
        %v4111 = vsub.f32 %v3951, %v3983
        %v4112 = vsub.f32 %v3952, %v3984
        %v4113 = vsub.f32 %v3953, %v3985
        %v4114 = vsub.f32 %v3954, %v3986
        %v4115 = vsub.f32 %v3955, %v3987
        %v4116 = vsub.f32 %v3956, %v3988
        %v4117 = vsub.f32 %v3957, %v3989
        %v4118 = vsub.f32 %v3958, %v3990
        %v4119 = vmul.f32 %v4103, 1.442695
        %v4120 = vpow.pop %v4119
        %v4121 = vmul.f32 %v4104, 1.442695
        %v4122 = vpow.pop %v4121
        %v4123 = vmul.f32 %v4105, 1.442695
        %v4124 = vpow.pop %v4123
        %v4125 = vmul.f32 %v4106, 1.442695
        %v4126 = vpow.pop %v4125
        %v4127 = vmul.f32 %v4107, 1.442695
        %v4128 = vpow.pop %v4127
        %v4129 = vmul.f32 %v4108, 1.442695
        %v4130 = vpow.pop %v4129
        %v4131 = vmul.f32 %v4109, 1.442695
        %v4132 = vpow.pop %v4131
        %v4133 = vmul.f32 %v4110, 1.442695
        %v4134 = vpow.pop %v4133
        %v4135 = vmul.f32 %v4111, 1.442695
        %v4136 = vpow.pop %v4135
        %v4137 = vmul.f32 %v4112, 1.442695
        %v4138 = vpow.pop %v4137
        %v4139 = vmul.f32 %v4113, 1.442695
        %v4140 = vpow.pop %v4139
        %v4141 = vmul.f32 %v4114, 1.442695
        %v4142 = vpow.pop %v4141
        %v4143 = vmul.f32 %v4115, 1.442695
        %v4144 = vpow.pop %v4143
        %v4145 = vmul.f32 %v4116, 1.442695
        %v4146 = vpow.pop %v4145
        %v4147 = vmul.f32 %v4117, 1.442695
        %v4148 = vpow.pop %v4147
        %v4149 = vmul.f32 %v4118, 1.442695
        %v4150 = vpow.pop %v4149
        %v4151 = vadd.f32 %v4087, %v4120
        %v4152 = vadd.f32 %v4088, %v4122
        %v4153 = vadd.f32 %v4089, %v4124
        %v4154 = vadd.f32 %v4090, %v4126
        %v4155 = vadd.f32 %v4091, %v4128
        %v4156 = vadd.f32 %v4092, %v4130
        %v4157 = vadd.f32 %v4093, %v4132
        %v4158 = vadd.f32 %v4094, %v4134
        %v4159 = vadd.f32 %v4095, %v4136
        %v4160 = vadd.f32 %v4096, %v4138
        %v4161 = vadd.f32 %v4097, %v4140
        %v4162 = vadd.f32 %v4098, %v4142
        %v4163 = vadd.f32 %v4099, %v4144
        %v4164 = vadd.f32 %v4100, %v4146
        %v4165 = vadd.f32 %v4101, %v4148
        %v4166 = vadd.f32 %v4102, %v4150
        %v4167 = vlog2.pop %v4151
        %v4168 = vmul.f32 %v4167, 0.6931472
        %v4169 = vlog2.pop %v4152
        %v4170 = vmul.f32 %v4169, 0.6931472
        %v4171 = vlog2.pop %v4153
        %v4172 = vmul.f32 %v4171, 0.6931472
        %v4173 = vlog2.pop %v4154
        %v4174 = vmul.f32 %v4173, 0.6931472
        %v4175 = vlog2.pop %v4155
        %v4176 = vmul.f32 %v4175, 0.6931472
        %v4177 = vlog2.pop %v4156
        %v4178 = vmul.f32 %v4177, 0.6931472
        %v4179 = vlog2.pop %v4157
        %v4180 = vmul.f32 %v4179, 0.6931472
        %v4181 = vlog2.pop %v4158
        %v4182 = vmul.f32 %v4181, 0.6931472
        %v4183 = vlog2.pop %v4159
        %v4184 = vmul.f32 %v4183, 0.6931472
        %v4185 = vlog2.pop %v4160
        %v4186 = vmul.f32 %v4185, 0.6931472
        %v4187 = vlog2.pop %v4161
        %v4188 = vmul.f32 %v4187, 0.6931472
        %v4189 = vlog2.pop %v4162
        %v4190 = vmul.f32 %v4189, 0.6931472
        %v4191 = vlog2.pop %v4163
        %v4192 = vmul.f32 %v4191, 0.6931472
        %v4193 = vlog2.pop %v4164
        %v4194 = vmul.f32 %v4193, 0.6931472
        %v4195 = vlog2.pop %v4165
        %v4196 = vmul.f32 %v4195, 0.6931472
        %v4197 = vlog2.pop %v4166
        %v4198 = vmul.f32 %v4197, 0.6931472
        %v4199 = vadd.f32 %v3975, %v4168
        %v4200 = vadd.f32 %v3976, %v4170
        %v4201 = vadd.f32 %v3977, %v4172
        %v4202 = vadd.f32 %v3978, %v4174
        %v4203 = vadd.f32 %v3979, %v4176
        %v4204 = vadd.f32 %v3980, %v4178
        %v4205 = vadd.f32 %v3981, %v4180
        %v4206 = vadd.f32 %v3982, %v4182
        %v4207 = vadd.f32 %v3983, %v4184
        %v4208 = vadd.f32 %v3984, %v4186
        %v4209 = vadd.f32 %v3985, %v4188
        %v4210 = vadd.f32 %v3986, %v4190
        %v4211 = vadd.f32 %v3987, %v4192
        %v4212 = vadd.f32 %v3988, %v4194
        %v4213 = vadd.f32 %v3989, %v4196
        %v4214 = vadd.f32 %v3990, %v4198
        %4215 = vst [vmem:[%s442] sm:$0xff] %v4199
        %4216 = vst [vmem:[%s442 + $0x8] sm:$0xff] %v4200
        %4217 = vst [vmem:[%s442 + $0x10] sm:$0xff] %v4201
        %4218 = vst [vmem:[%s442 + $0x18] sm:$0xff] %v4202
        %4219 = vst [vmem:[%s442 + $0x20] sm:$0xff] %v4203
        %4220 = vst [vmem:[%s442 + $0x28] sm:$0xff] %v4204
        %4221 = vst [vmem:[%s442 + $0x30] sm:$0xff] %v4205
        %4222 = vst [vmem:[%s442 + $0x38] sm:$0xff] %v4206
        %4223 = vst [vmem:[%s442 + $0x40] sm:$0xff] %v4207
        %4224 = vst [vmem:[%s442 + $0x48] sm:$0xff] %v4208
        %4225 = vst [vmem:[%s442 + $0x50] sm:$0xff] %v4209
        %4226 = vst [vmem:[%s442 + $0x58] sm:$0xff] %v4210
        %4227 = vst [vmem:[%s442 + $0x60] sm:$0xff] %v4211
        %4228 = vst [vmem:[%s442 + $0x68] sm:$0xff] %v4212
        %4229 = vst [vmem:[%s442 + $0x70] sm:$0xff] %v4213
        %4230 = vst [vmem:[%s442 + $0x78] sm:$0xff] %v4214
        %s4231 = sand.u32 %s255, 1
        %s4232 = scalar_lea.sflag [#allocation4], %s4231
        %s4233 = sand.u32 %s255, 1
        %s4234 = smul.addr %s4233, 128
        %s4235 = scalar_lea.vmem [#allocation11], %s4234
        // Predicated region
        $region81: #{tpu_custom_call.1} parent=59 // pred_check
          %p4236 = pneg %p265
        $region82: #{tpu_custom_call.1} parent=59 // pred_check_branch
          %4238 = sbr.rel (%p4236) target = $region84
        $region83: #{tpu_custom_call.1} parent=59 // pred_region
          %s4239 = smul.u32 16, %s27
          %s4241 = ssub.s32 2048, 2048
          %4242 = vsyncadd %s4232, %s4241
          %s4243 = smul.addr %s4239, 128
          %s4244 = scalar_lea.hbm %s10, %s4243
          %s4245 = sshll.u32 %s4235, 4
          %s4246 = int_to_ptr.vmem [resolvable:$true] %s4245
          %4251 = dma.vmem_to_hbm [thread:$0]  %s4246, 2048, %s4244, %s4232, 128, 128, 8
        $region84: #{tpu_custom_call.1} parent=59 // pred_fallthru
          _
      $region60: #{tpu_custom_call.1} parent=5 // pred_fallthru
        _
      %p4252 = scmp.le.s32.totalorder 2, %s22
      // Predicated region
      $region85: #{tpu_custom_call.1} parent=5 // pred_check
        %p4253 = pneg %p4252
      $region86: #{tpu_custom_call.1} parent=5 // pred_check_branch
        %4255 = sbr.rel (%p4253) target = $region88
      $region87: #{tpu_custom_call.1} parent=5 // pred_region
        %s4256 = ssub.s32 %s22, 2
        // Predicated region
        $region89: #{tpu_custom_call.1} parent=87 // pred_check
          %p4257 = pneg %p271
        $region90: #{tpu_custom_call.1} parent=87 // pred_check_branch
          %4259 = sbr.rel (%p4257) target = $region92
        $region91: #{tpu_custom_call.1} parent=87 // pred_region
          %s4260 = sand.u32 %s256, 1
          %s4261 = scalar_lea.sflag [#allocation4], %s4260
          %s4262 = sand.u32 %s256, 1
          %s4263 = smul.addr %s4262, 128
          %s4264 = scalar_lea.vmem [#allocation11], %s4263
          %4265 = dma.done %s4261, 2048
        $region92: #{tpu_custom_call.1} parent=87 // pred_fallthru
          _
      $region88: #{tpu_custom_call.1} parent=5 // pred_fallthru
        _
    $region6: #{tpu_custom_call.1} parent=1 // loop_footer
      %s26 = sadd.s32 1, %s22
    $region7: #{tpu_custom_call.1} parent=1 // loop_footer_branch
      %21 = sbr.rel target = $region3
    $region8: #{tpu_custom_call.1} parent=1 // loop_exit
      _
    %4266 = vsyncpa [#allocation3], 1
    %s4267 = scalar_lea.sflag [#allocation3], 1
    %4268 = vsyncpa %s4267, 1
    %4269 = vsyncpa [#allocation6], 1
    %4270 = vsyncpa [#allocation9], 1
    %4271 = vsyncpa [#allocation4], 1
    %s4272 = scalar_lea.sflag [#allocation4], 1
    %4273 = vsyncpa %s4272, 1

// kernel: tpu_custom_call.1
$region0: #{tpu_custom_call.1}
  #allocation0 [shape = 'u32[]', space=smem, size = 0x4, offset = 0x4, fixed_abs, tag = 'smem constant byte address 0x4 - core index']
  #allocation1 [shape = 'u32[144,128]{1,0:T(1,128)}', space=vmem, size = 0x12000, scoped, tag = 'internal scratch']
  %s0 = inlined_call_operand.vmem [shape: f32[256,64], index: 0, kind: input, shape index: {}]
  %s1 = inlined_call_operand.vmem [shape: f32[256,128], index: 1, kind: input, shape index: {}]
  %s2 = inlined_call_operand.hbm [shape: f32[64,128], index: 2, kind: input, shape index: {}]
  %s3 = inlined_call_operand.vmem [shape: f32[128,128], index: 3, kind: input, shape index: {}]
  %s4 = inlined_call_operand.hbm [shape: f32[128,128], index: 4, kind: input, shape index: {}]
  %s5 = inlined_call_operand.hbm [shape: f32[128,128], index: 5, kind: input, shape index: {}]
  %s6 = inlined_call_operand.hbm [shape: f32[128,128], index: 6, kind: input, shape index: {}]
  %s7 = inlined_call_operand.hbm [shape: f32[128,256], index: 7, kind: input, shape index: {}]
  %s8 = inlined_call_operand.vmem [shape: f32[15,128], index: 8, kind: input, shape index: {}]
  %s9 = inlined_call_operand.vmem [shape: f32[7,128], index: 9, kind: input, shape index: {}]
  %s10 = inlined_call_operand.hbm [shape: f32[256,128], index: 10, kind: output, shape index: {}]
  %s11 = sld [smem:[#allocation0]]
  $region93: #{tpu_custom_call.1} parent=0
    _
  %s13 = ssub.s32 1, %s11
  %s14 = scalar_select 0, %s13, %s11
  $region1: #{tpu_custom_call.1} parent=0
    #allocation2 [shape = 'u8[32768]{0}', space=vmem, size = 0x8000, scoped, tag = 'input window, operand 2, single buffered']
    #allocation3 [shape = 's32[2]{0}', space=sflag, size = 0x8, scoped, tag = 'scoped memory for tpu_custom_call.1']
    #allocation4 [shape = 's32[2]{0}', space=sflag, size = 0x8, scoped, tag = 'scoped memory for tpu_custom_call.1']
    #allocation5 [shape = 'u8[65536]{0}', space=vmem, size = 0x10000, scoped, tag = 'input window, operand 4, single buffered']
    #allocation6 [shape = 's32[1]{0}', space=sflag, size = 0x4, scoped, tag = 'scoped memory for tpu_custom_call.1']
    #allocation7 [shape = 'u8[65536]{0}', space=vmem, size = 0x10000, scoped, tag = 'input window, operand 5, single buffered']
    #allocation8 [shape = 'u8[65536]{0}', space=vmem, size = 0x10000, scoped, tag = 'input window, operand 6, single buffered']
    #allocation9 [shape = 's32[1]{0}', space=sflag, size = 0x4, scoped, tag = 'scoped memory for tpu_custom_call.1']
    #allocation10 [shape = 'u8[131072]{0}', space=vmem, size = 0x20000, scoped, tag = 'input window, operand 7, single buffered']
    #allocation11 [shape = 'u8[131072]{0}', space=vmem, size = 0x20000, scoped, tag = 'output window, operand 0']
    %15 = vsyncpa [#allocation3], 0
    %16 = vsyncpa [#allocation6], 0
    %17 = vsyncpa [#allocation9], 0
    %18 = vsyncpa [#allocation4], 0
    %s19 = scalar_lea.sflag [#allocation4], 1
    %20 = vsyncpa %s19, 0
    loop: start=0, step=1, limit=4
    $region2: #{tpu_custom_call.1} parent=1 // loop_pre_header
      _
    $region3: #{tpu_custom_call.1} parent=1 // loop_header
      %s22 = sphi 0, %s26
      %p23 = scmp.ge.s32.totalorder %s22, 4
      %s32 = sphi 0, %s34
      %s35 = sphi 0, %s32
      %s36 = sphi 0, %s35
      %s52 = sphi 0, %s36
      %s58 = sphi 0, %s60
      %s61 = sphi 0, %s58
      %s62 = sphi 0, %s61
      %s78 = sphi 0, %s62
      %s82 = sphi 0, %s82
      %s84 = sphi 0, %s82
      %s85 = sphi 0, %s84
      %s99 = sphi 0, %s85
      %s103 = sphi 0, %s103
      %s105 = sphi 0, %s103
      %s106 = sphi 0, %s105
      %s120 = sphi 0, %s106
      %s124 = sphi 0, %s124
      %s126 = sphi 0, %s124
      %s127 = sphi 0, %s126
      %s141 = sphi 0, %s127
      %s145 = sphi 0, %s145
      %s147 = sphi 0, %s145
      %s148 = sphi 0, %s147
      %s162 = sphi 0, %s148
      %s166 = sphi 0, %s166
      %s168 = sphi 0, %s166
      %s169 = sphi 0, %s168
      %s183 = sphi 0, %s169
      %s187 = sphi 0, %s187
      %s189 = sphi 0, %s187
      %s190 = sphi 0, %s189
      %s204 = sphi 0, %s190
      %s208 = sphi 0, %s208
      %s210 = sphi 0, %s208
      %s211 = sphi 0, %s210
      %s225 = sphi 0, %s211
      %s229 = sphi 0, %s229
      %s231 = sphi 0, %s229
      %s232 = sphi 0, %s231
      %s246 = sphi 0, %s232
      %s252 = sphi 0, %s254
      %s255 = sphi 0, %s252
      %s256 = sphi 0, %s255
      %s272 = sphi 0, %s256
    $region4: #{tpu_custom_call.1} parent=1 // loop_header_branch
      %25 = sbr.rel (%p23) target = $region8
    $region5: #{tpu_custom_call.1} parent=1 // loop_body
      %s27 = ssub.s32 %s22, 1
      %s28 = ssub.s32 %s22, 2
      %s29 = sadd.s32 %s22, 1
      %s30 = ssub.s32 %s22, %s29
      %p31 = scmp.eq.s32.totalorder %s30, 0
      %s33 = sadd.s32 %s32, 1
      %s34 = scalar_select %p31, %s32, %s33
      %p37 = pneg %p31
      %p38 = scmp.eq.s32.totalorder %s22, 1
      %p39 = por %p37, %p38
      %p40 = scmp.ne.s32.totalorder %s32, %s35
      %p41 = scmp.eq.s32.totalorder %s22, 0
      %p42 = por %p40, %p41
      %p43 = scmp.ne.s32.totalorder %s32, %s35
      %p44 = scmp.eq.s32.totalorder %s27, 1
      %p45 = por %p43, %p44
      %p46 = scmp.ne.s32.totalorder %s35, %s36
      %p47 = scmp.eq.s32.totalorder %s27, 0
      %p48 = por %p46, %p47
      %p49 = scmp.ne.s32.totalorder %s35, %s36
      %p50 = scmp.eq.s32.totalorder %s28, 1
      %p51 = por %p49, %p50
      %p53 = scmp.ne.s32.totalorder %s36, %s52
      %p54 = scmp.eq.s32.totalorder %s28, 0
      %p55 = por %p53, %p54
      %s56 = ssub.s32 %s22, %s29
      %p57 = scmp.eq.s32.totalorder %s56, 0
      %s59 = sadd.s32 %s58, 1
      %s60 = scalar_select %p57, %s58, %s59
      %p63 = pneg %p57
      %p64 = scmp.eq.s32.totalorder %s22, 1
      %p65 = por %p63, %p64
      %p66 = scmp.ne.s32.totalorder %s58, %s61
      %p67 = scmp.eq.s32.totalorder %s22, 0
      %p68 = por %p66, %p67
      %p69 = scmp.ne.s32.totalorder %s58, %s61
      %p70 = scmp.eq.s32.totalorder %s27, 1
      %p71 = por %p69, %p70
      %p72 = scmp.ne.s32.totalorder %s61, %s62
      %p73 = scmp.eq.s32.totalorder %s27, 0
      %p74 = por %p72, %p73
      %p75 = scmp.ne.s32.totalorder %s61, %s62
      %p76 = scmp.eq.s32.totalorder %s28, 1
      %p77 = por %p75, %p76
      %p79 = scmp.ne.s32.totalorder %s62, %s78
      %p80 = scmp.eq.s32.totalorder %s28, 0
      %p81 = por %p79, %p80
      %s83 = sadd.s32 %s82, 1
      %p86 = scmp.eq.s32.totalorder %s22, 1
      %p87 = scmp.ne.s32.totalorder %s82, %s84
      %p88 = scmp.eq.s32.totalorder %s22, 0
      %p89 = por %p87, %p88
      %p90 = scmp.ne.s32.totalorder %s82, %s84
      %p91 = scmp.eq.s32.totalorder %s27, 1
      %p92 = por %p90, %p91
      %p93 = scmp.ne.s32.totalorder %s84, %s85
      %p94 = scmp.eq.s32.totalorder %s27, 0
      %p95 = por %p93, %p94
      %p96 = scmp.ne.s32.totalorder %s84, %s85
      %p97 = scmp.eq.s32.totalorder %s28, 1
      %p98 = por %p96, %p97
      %p100 = scmp.ne.s32.totalorder %s85, %s99
      %p101 = scmp.eq.s32.totalorder %s28, 0
      %p102 = por %p100, %p101
      %s104 = sadd.s32 %s103, 1
      %p107 = scmp.eq.s32.totalorder %s22, 1
      %p108 = scmp.ne.s32.totalorder %s103, %s105
      %p109 = scmp.eq.s32.totalorder %s22, 0
      %p110 = por %p108, %p109
      %p111 = scmp.ne.s32.totalorder %s103, %s105
      %p112 = scmp.eq.s32.totalorder %s27, 1
      %p113 = por %p111, %p112
      %p114 = scmp.ne.s32.totalorder %s105, %s106
      %p115 = scmp.eq.s32.totalorder %s27, 0
      %p116 = por %p114, %p115
      %p117 = scmp.ne.s32.totalorder %s105, %s106
      %p118 = scmp.eq.s32.totalorder %s28, 1
      %p119 = por %p117, %p118
      %p121 = scmp.ne.s32.totalorder %s106, %s120
      %p122 = scmp.eq.s32.totalorder %s28, 0
      %p123 = por %p121, %p122
      %s125 = sadd.s32 %s124, 1
      %p128 = scmp.eq.s32.totalorder %s22, 1
      %p129 = scmp.ne.s32.totalorder %s124, %s126
      %p130 = scmp.eq.s32.totalorder %s22, 0
      %p131 = por %p129, %p130
      %p132 = scmp.ne.s32.totalorder %s124, %s126
      %p133 = scmp.eq.s32.totalorder %s27, 1
      %p134 = por %p132, %p133
      %p135 = scmp.ne.s32.totalorder %s126, %s127
      %p136 = scmp.eq.s32.totalorder %s27, 0
      %p137 = por %p135, %p136
      %p138 = scmp.ne.s32.totalorder %s126, %s127
      %p139 = scmp.eq.s32.totalorder %s28, 1
      %p140 = por %p138, %p139
      %p142 = scmp.ne.s32.totalorder %s127, %s141
      %p143 = scmp.eq.s32.totalorder %s28, 0
      %p144 = por %p142, %p143
      %s146 = sadd.s32 %s145, 1
      %p149 = scmp.eq.s32.totalorder %s22, 1
      %p150 = scmp.ne.s32.totalorder %s145, %s147
      %p151 = scmp.eq.s32.totalorder %s22, 0
      %p152 = por %p150, %p151
      %p153 = scmp.ne.s32.totalorder %s145, %s147
      %p154 = scmp.eq.s32.totalorder %s27, 1
      %p155 = por %p153, %p154
      %p156 = scmp.ne.s32.totalorder %s147, %s148
      %p157 = scmp.eq.s32.totalorder %s27, 0
      %p158 = por %p156, %p157
      %p159 = scmp.ne.s32.totalorder %s147, %s148
      %p160 = scmp.eq.s32.totalorder %s28, 1
      %p161 = por %p159, %p160
      %p163 = scmp.ne.s32.totalorder %s148, %s162
      %p164 = scmp.eq.s32.totalorder %s28, 0
      %p165 = por %p163, %p164
      %s167 = sadd.s32 %s166, 1
      %p170 = scmp.eq.s32.totalorder %s22, 1
      %p171 = scmp.ne.s32.totalorder %s166, %s168
      %p172 = scmp.eq.s32.totalorder %s22, 0
      %p173 = por %p171, %p172
      %p174 = scmp.ne.s32.totalorder %s166, %s168
      %p175 = scmp.eq.s32.totalorder %s27, 1
      %p176 = por %p174, %p175
      %p177 = scmp.ne.s32.totalorder %s168, %s169
      %p178 = scmp.eq.s32.totalorder %s27, 0
      %p179 = por %p177, %p178
      %p180 = scmp.ne.s32.totalorder %s168, %s169
      %p181 = scmp.eq.s32.totalorder %s28, 1
      %p182 = por %p180, %p181
      %p184 = scmp.ne.s32.totalorder %s169, %s183
      %p185 = scmp.eq.s32.totalorder %s28, 0
      %p186 = por %p184, %p185
      %s188 = sadd.s32 %s187, 1
      %p191 = scmp.eq.s32.totalorder %s22, 1
      %p192 = scmp.ne.s32.totalorder %s187, %s189
      %p193 = scmp.eq.s32.totalorder %s22, 0
      %p194 = por %p192, %p193
      %p195 = scmp.ne.s32.totalorder %s187, %s189
      %p196 = scmp.eq.s32.totalorder %s27, 1
      %p197 = por %p195, %p196
      %p198 = scmp.ne.s32.totalorder %s189, %s190
      %p199 = scmp.eq.s32.totalorder %s27, 0
      %p200 = por %p198, %p199
      %p201 = scmp.ne.s32.totalorder %s189, %s190
      %p202 = scmp.eq.s32.totalorder %s28, 1
      %p203 = por %p201, %p202
      %p205 = scmp.ne.s32.totalorder %s190, %s204
      %p206 = scmp.eq.s32.totalorder %s28, 0
      %p207 = por %p205, %p206
      %s209 = sadd.s32 %s208, 1
      %p212 = scmp.eq.s32.totalorder %s22, 1
      %p213 = scmp.ne.s32.totalorder %s208, %s210
      %p214 = scmp.eq.s32.totalorder %s22, 0
      %p215 = por %p213, %p214
      %p216 = scmp.ne.s32.totalorder %s208, %s210
      %p217 = scmp.eq.s32.totalorder %s27, 1
      %p218 = por %p216, %p217
      %p219 = scmp.ne.s32.totalorder %s210, %s211
      %p220 = scmp.eq.s32.totalorder %s27, 0
      %p221 = por %p219, %p220
      %p222 = scmp.ne.s32.totalorder %s210, %s211
      %p223 = scmp.eq.s32.totalorder %s28, 1
      %p224 = por %p222, %p223
      %p226 = scmp.ne.s32.totalorder %s211, %s225
      %p227 = scmp.eq.s32.totalorder %s28, 0
      %p228 = por %p226, %p227
      %s230 = sadd.s32 %s229, 1
      %p233 = scmp.eq.s32.totalorder %s22, 1
      %p234 = scmp.ne.s32.totalorder %s229, %s231
      %p235 = scmp.eq.s32.totalorder %s22, 0
      %p236 = por %p234, %p235
      %p237 = scmp.ne.s32.totalorder %s229, %s231
      %p238 = scmp.eq.s32.totalorder %s27, 1
      %p239 = por %p237, %p238
      %p240 = scmp.ne.s32.totalorder %s231, %s232
      %p241 = scmp.eq.s32.totalorder %s27, 0
      %p242 = por %p240, %p241
      %p243 = scmp.ne.s32.totalorder %s231, %s232
      %p244 = scmp.eq.s32.totalorder %s28, 1
      %p245 = por %p243, %p244
      %p247 = scmp.ne.s32.totalorder %s232, %s246
      %p248 = scmp.eq.s32.totalorder %s28, 0
      %p249 = por %p247, %p248
      %s250 = ssub.s32 %s22, %s29
      %p251 = scmp.eq.s32.totalorder %s250, 0
      %s253 = sadd.s32 %s252, 1
      %s254 = scalar_select %p251, %s252, %s253
      %p257 = pneg %p251
      %p258 = scmp.eq.s32.totalorder %s22, 1
      %p259 = por %p257, %p258
      %p260 = scmp.ne.s32.totalorder %s252, %s255
      %p261 = scmp.eq.s32.totalorder %s22, 0
      %p262 = por %p260, %p261
      %p263 = scmp.ne.s32.totalorder %s252, %s255
      %p264 = scmp.eq.s32.totalorder %s27, 1
      %p265 = por %p263, %p264
      %p266 = scmp.ne.s32.totalorder %s255, %s256
      %p267 = scmp.eq.s32.totalorder %s27, 0
      %p268 = por %p266, %p267
      %p269 = scmp.ne.s32.totalorder %s255, %s256
      %p270 = scmp.eq.s32.totalorder %s28, 1
      %p271 = por %p269, %p270
      %p273 = scmp.ne.s32.totalorder %s256, %s272
      %p274 = scmp.eq.s32.totalorder %s28, 0
      %p275 = por %p273, %p274
      %p276 = scmp.le.s32.totalorder 1, %s22
      %p277 = scmp.lt.s32.totalorder %s22, 3
      %p278 = pnand %p276, %p277
      %p279 = pneg %p278
      // Predicated region
      $region9: #{tpu_custom_call.1} parent=5 // pred_check
        _
      $region10: #{tpu_custom_call.1} parent=5 // pred_check_branch
        %281 = sbr.rel (%p278) target = $region12
      $region11: #{tpu_custom_call.1} parent=5 // pred_region
        %s282 = ssub.s32 %s22, 1
        // Predicated region
        $region13: #{tpu_custom_call.1} parent=11 // pred_check
          %p283 = pneg %p95
        $region14: #{tpu_custom_call.1} parent=11 // pred_check_branch
          %285 = sbr.rel (%p283) target = $region16
        $region15: #{tpu_custom_call.1} parent=11 // pred_region
          %s287 = ssub.s32 1024, 1024
          %288 = vsyncadd [#allocation3], %s287
          %s289 = sshll.u32 [#allocation2], 4
          %s290 = int_to_ptr.vmem [resolvable:$true] %s289
          %295 = dma.hbm_to_vmem [thread:$0]  %s2, 1024, %s290, [#allocation3], 128, 128, 8
        $region16: #{tpu_custom_call.1} parent=11 // pred_fallthru
          _
        // Predicated region
        $region17: #{tpu_custom_call.1} parent=11 // pred_check
          %p296 = pneg %p116
        $region18: #{tpu_custom_call.1} parent=11 // pred_check_branch
          %298 = sbr.rel (%p296) target = $region20
        $region19: #{tpu_custom_call.1} parent=11 // pred_region
          _
        $region20: #{tpu_custom_call.1} parent=11 // pred_fallthru
          _
        // Predicated region
        $region21: #{tpu_custom_call.1} parent=11 // pred_check
          %p299 = pneg %p137
        $region22: #{tpu_custom_call.1} parent=11 // pred_check_branch
          %301 = sbr.rel (%p299) target = $region24
        $region23: #{tpu_custom_call.1} parent=11 // pred_region
          %s303 = ssub.s32 2048, 2048
          %304 = vsyncadd [#allocation6], %s303
          %s305 = sshll.u32 [#allocation5], 4
          %s306 = int_to_ptr.vmem [resolvable:$true] %s305
          %311 = dma.hbm_to_vmem [thread:$0]  %s4, 2048, %s306, [#allocation6], 128, 128, 8
        $region24: #{tpu_custom_call.1} parent=11 // pred_fallthru
          _
        // Predicated region
        $region25: #{tpu_custom_call.1} parent=11 // pred_check
          %p312 = pneg %p158
        $region26: #{tpu_custom_call.1} parent=11 // pred_check_branch
          %314 = sbr.rel (%p312) target = $region28
        $region27: #{tpu_custom_call.1} parent=11 // pred_region
          %s316 = ssub.s32 2048, 2048
          %317 = vsyncadd [#allocation6], %s316
          %s318 = sshll.u32 [#allocation7], 4
          %s319 = int_to_ptr.vmem [resolvable:$true] %s318
          %324 = dma.hbm_to_vmem [thread:$0]  %s5, 2048, %s319, [#allocation6], 128, 128, 8
        $region28: #{tpu_custom_call.1} parent=11 // pred_fallthru
          _
        // Predicated region
        $region29: #{tpu_custom_call.1} parent=11 // pred_check
          %p325 = pneg %p179
        $region30: #{tpu_custom_call.1} parent=11 // pred_check_branch
          %327 = sbr.rel (%p325) target = $region32
        $region31: #{tpu_custom_call.1} parent=11 // pred_region
          %s329 = ssub.s32 2048, 2048
          %330 = vsyncadd [#allocation9], %s329
          %s331 = sshll.u32 [#allocation8], 4
          %s332 = int_to_ptr.vmem [resolvable:$true] %s331
          %337 = dma.hbm_to_vmem [thread:$0]  %s6, 2048, %s332, [#allocation9], 128, 128, 8
        $region32: #{tpu_custom_call.1} parent=11 // pred_fallthru
          _
        // Predicated region
        $region33: #{tpu_custom_call.1} parent=11 // pred_check
          %p338 = pneg %p200
        $region34: #{tpu_custom_call.1} parent=11 // pred_check_branch
          %340 = sbr.rel (%p338) target = $region36
        $region35: #{tpu_custom_call.1} parent=11 // pred_region
          %s342 = ssub.s32 4096, 4096
          %343 = vsyncadd [#allocation9], %s342
          %s344 = sshll.u32 [#allocation10], 4
          %s345 = int_to_ptr.vmem [resolvable:$true] %s344
          %350 = dma.hbm_to_vmem [thread:$0]  %s7, 4096, %s345, [#allocation9], 256, 256, 16
        $region36: #{tpu_custom_call.1} parent=11 // pred_fallthru
          _
        // Predicated region
        $region37: #{tpu_custom_call.1} parent=11 // pred_check
          %p351 = pneg %p221
        $region38: #{tpu_custom_call.1} parent=11 // pred_check_branch
          %353 = sbr.rel (%p351) target = $region40
        $region39: #{tpu_custom_call.1} parent=11 // pred_region
          _
        $region40: #{tpu_custom_call.1} parent=11 // pred_fallthru
          _
        // Predicated region
        $region41: #{tpu_custom_call.1} parent=11 // pred_check
          %p354 = pneg %p242
        $region42: #{tpu_custom_call.1} parent=11 // pred_check_branch
          %356 = sbr.rel (%p354) target = $region44
        $region43: #{tpu_custom_call.1} parent=11 // pred_region
          _
        $region44: #{tpu_custom_call.1} parent=11 // pred_fallthru
          _
      $region12: #{tpu_custom_call.1} parent=5 // pred_fallthru
        _
      %p357 = scmp.lt.s32.totalorder %s22, 2
      // Predicated region
      $region45: #{tpu_custom_call.1} parent=5 // pred_check
        %p358 = pneg %p357
      $region46: #{tpu_custom_call.1} parent=5 // pred_check_branch
        %360 = sbr.rel (%p358) target = $region48
      $region47: #{tpu_custom_call.1} parent=5 // pred_region
        // Predicated region
        $region49: #{tpu_custom_call.1} parent=47 // pred_check
          %p361 = pneg %p42
        $region50: #{tpu_custom_call.1} parent=47 // pred_check_branch
          %363 = sbr.rel (%p361) target = $region52
        $region51: #{tpu_custom_call.1} parent=47 // pred_region
          %s364 = smul.u32 16, %s22
          %p365 = scmp.lt.s32.totalorder %s364, 31
          %s366 = scalar_select %p365, %s364, 31
          %s367 = smul.addr %s366, 8
          %s368 = scalar_lea.vmem %s0, %s367
          %s369 = smul.u32 16, %s22
        $region52: #{tpu_custom_call.1} parent=47 // pred_fallthru
          _
        // Predicated region
        $region53: #{tpu_custom_call.1} parent=47 // pred_check
          %p370 = pneg %p68
        $region54: #{tpu_custom_call.1} parent=47 // pred_check_branch
          %372 = sbr.rel (%p370) target = $region56
        $region55: #{tpu_custom_call.1} parent=47 // pred_region
          %s373 = smul.u32 16, %s22
          %p374 = scmp.lt.s32.totalorder %s373, 31
          %s375 = scalar_select %p374, %s373, 31
          %s376 = smul.addr %s375, 8
          %s377 = scalar_lea.vmem %s1, %s376
          %s378 = smul.u32 16, %s22
        $region56: #{tpu_custom_call.1} parent=47 // pred_fallthru
          _
      $region48: #{tpu_custom_call.1} parent=5 // pred_fallthru
        _
      %p379 = scmp.le.s32.totalorder 1, %s22
      %p380 = scmp.lt.s32.totalorder %s22, 3
      %p381 = pnand %p379, %p380
      %p382 = pneg %p381
      // Predicated region
      $region57: #{tpu_custom_call.1} parent=5 // pred_check
        _
      $region58: #{tpu_custom_call.1} parent=5 // pred_check_branch
        %384 = sbr.rel (%p381) target = $region60
      $region59: #{tpu_custom_call.1} parent=5 // pred_region
        %s385 = ssub.s32 %s22, 1
        // Predicated region
        $region61: #{tpu_custom_call.1} parent=59 // pred_check
          %p386 = pneg %p95
        $region62: #{tpu_custom_call.1} parent=59 // pred_check_branch
          %388 = sbr.rel (%p386) target = $region64
        $region63: #{tpu_custom_call.1} parent=59 // pred_region
          %389 = dma.done [#allocation3], 1024
        $region64: #{tpu_custom_call.1} parent=59 // pred_fallthru
          _
        // Predicated region
        $region65: #{tpu_custom_call.1} parent=59 // pred_check
          %p390 = pneg %p137
        $region66: #{tpu_custom_call.1} parent=59 // pred_check_branch
          %392 = sbr.rel (%p390) target = $region68
        $region67: #{tpu_custom_call.1} parent=59 // pred_region
          %393 = dma.done [#allocation6], 2048
        $region68: #{tpu_custom_call.1} parent=59 // pred_fallthru
          _
        // Predicated region
        $region69: #{tpu_custom_call.1} parent=59 // pred_check
          %p394 = pneg %p158
        $region70: #{tpu_custom_call.1} parent=59 // pred_check_branch
          %396 = sbr.rel (%p394) target = $region72
        $region71: #{tpu_custom_call.1} parent=59 // pred_region
          %397 = dma.done [#allocation6], 2048
        $region72: #{tpu_custom_call.1} parent=59 // pred_fallthru
          _
        // Predicated region
        $region73: #{tpu_custom_call.1} parent=59 // pred_check
          %p398 = pneg %p179
        $region74: #{tpu_custom_call.1} parent=59 // pred_check_branch
          %400 = sbr.rel (%p398) target = $region76
        $region75: #{tpu_custom_call.1} parent=59 // pred_region
          %401 = dma.done [#allocation9], 2048
        $region76: #{tpu_custom_call.1} parent=59 // pred_fallthru
          _
        // Predicated region
        $region77: #{tpu_custom_call.1} parent=59 // pred_check
          %p402 = pneg %p200
        $region78: #{tpu_custom_call.1} parent=59 // pred_check_branch
          %404 = sbr.rel (%p402) target = $region80
        $region79: #{tpu_custom_call.1} parent=59 // pred_region
          %405 = dma.done [#allocation9], 4096
        $region80: #{tpu_custom_call.1} parent=59 // pred_fallthru
          _
        %s406 = smul.u32 16, %s27
        %p407 = scmp.lt.s32.totalorder %s406, 31
        %s408 = scalar_select %p407, %s406, 31
        %s409 = smul.addr %s408, 8
        %s410 = scalar_lea.vmem %s0, %s409
        %p411 = pneg %p48
        %p412 = pneg %p45
        %s413 = smul.u32 16, %s27
        %p414 = scmp.lt.s32.totalorder %s413, 31
        %s415 = scalar_select %p414, %s413, 31
        %s416 = smul.addr %s415, 8
        %s417 = scalar_lea.vmem %s1, %s416
        %p418 = pneg %p74
        %p419 = pneg %p71
        %p420 = pneg %p95
        %p421 = pneg %p92
        %p422 = pneg %p116
        %p423 = pneg %p113
        %p424 = pneg %p137
        %p425 = pneg %p134
        %p426 = pneg %p158
        %p427 = pneg %p155
        %p428 = pneg %p179
        %p429 = pneg %p176
        %p430 = pneg %p200
        %p431 = pneg %p197
        %p432 = pneg %p221
        %p433 = pneg %p218
        %p434 = pneg %p242
        %p435 = pneg %p239
        %p436 = pneg %p268
        %p437 = pneg %p265
        %s438 = sand.u32 %s255, 1
        %s439 = scalar_lea.sflag [#allocation4], %s438
        %s440 = sand.u32 %s255, 1
        %s441 = smul.addr %s440, 128
        %s442 = scalar_lea.vmem [#allocation11], %s441
        %s443 = smul.u32 16, %s27
        %p444 = scmp.lt.s32.totalorder %s443, 31
        %s445 = scalar_select %p444, %s443, 31
        %s446 = smul.addr %s445, 8
        %s447 = scalar_lea.vmem %s0, %s446
        %s448 = smul.u32 16, %s27
        %s449 = smul.u32 16, %s27
        %p450 = scmp.lt.s32.totalorder %s449, 31
        %s451 = scalar_select %p450, %s449, 31
        %s452 = smul.addr %s451, 8
        %s453 = scalar_lea.vmem %s1, %s452
        %s454 = smul.u32 16, %s27
        %s455 = smul.u32 16, %s27
        %v456 = vld [vmem:[%s8] sm:$0x1]
        %v457 = vld [vmem:[%s8 + $0x1] sm:$0x1]
        %v458 = vld [vmem:[%s8 + $0x2] sm:$0x1]
        %v459 = vld [vmem:[%s8 + $0x3] sm:$0x1]
        %v460 = vld [vmem:[%s8 + $0x4] sm:$0x1]
        %v461 = vld [vmem:[%s8 + $0x5] sm:$0x1]
        %v462 = vld [vmem:[%s8 + $0x6] sm:$0x1]
        %v463 = vld [vmem:[%s8 + $0x7] sm:$0x1]
        %v464 = vld [vmem:[%s8 + $0x8] sm:$0x1]
        %v465 = vld [vmem:[%s8 + $0x9] sm:$0x1]
        %v466 = vld [vmem:[%s8 + $0xa] sm:$0x1]
        %v467 = vld [vmem:[%s8 + $0xb] sm:$0x1]
        %v468 = vld [vmem:[%s8 + $0xc] sm:$0x1]
        %v469 = vld [vmem:[%s8 + $0xd] sm:$0x1]
        %v470 = vld [vmem:[%s8 + $0xe] sm:$0x1]
        %v471 = vld [vmem:[%s9] sm:$0x1]
        %v472 = vld [vmem:[%s9 + $0x1] sm:$0x1]
        %v473 = vld [vmem:[%s9 + $0x2] sm:$0x1]
        %v474 = vld [vmem:[%s9 + $0x3] sm:$0x1]
        %v475 = vld [vmem:[%s9 + $0x4] sm:$0x1]
        %v476 = vld [vmem:[%s9 + $0x5] sm:$0x1]
        %v477 = vld [vmem:[%s9 + $0x6] sm:$0x1]
        %v478 = vld [vmem:[%s447] sm:$0xff]
        %v479 = vld [vmem:[%s447 + $0x8] sm:$0xff]
        %v480 = vld [vmem:[%s447 + $0x10] sm:$0xff]
        %v481 = vld [vmem:[%s447 + $0x18] sm:$0xff]
        %v482 = vld [vmem:[%s447 + $0x20] sm:$0xff]
        %v483 = vld [vmem:[%s447 + $0x28] sm:$0xff]
        %v484 = vld [vmem:[%s447 + $0x30] sm:$0xff]
        %v485 = vld [vmem:[%s447 + $0x38] sm:$0xff]
        %v486 = vld [vmem:[%s447 + $0x40] sm:$0xff]
        %v487 = vld [vmem:[%s447 + $0x48] sm:$0xff]
        %v488 = vld [vmem:[%s447 + $0x50] sm:$0xff]
        %v489 = vld [vmem:[%s447 + $0x58] sm:$0xff]
        %v490 = vld [vmem:[%s447 + $0x60] sm:$0xff]
        %v491 = vld [vmem:[%s447 + $0x68] sm:$0xff]
        %v492 = vld [vmem:[%s447 + $0x70] sm:$0xff]
        %v493 = vld [vmem:[%s447 + $0x78] sm:$0xff]
        %v494 = vld [vmem:[%s453] sm:$0xff]
        %v495 = vld [vmem:[%s453 + $0x8] sm:$0xff]
        %v496 = vld [vmem:[%s453 + $0x10] sm:$0xff]
        %v497 = vld [vmem:[%s453 + $0x18] sm:$0xff]
        %v498 = vld [vmem:[%s453 + $0x20] sm:$0xff]
        %v499 = vld [vmem:[%s453 + $0x28] sm:$0xff]
        %v500 = vld [vmem:[%s453 + $0x30] sm:$0xff]
        %v501 = vld [vmem:[%s453 + $0x38] sm:$0xff]
        %v502 = vld [vmem:[%s453 + $0x40] sm:$0xff]
        %v503 = vld [vmem:[%s453 + $0x48] sm:$0xff]
        %v504 = vld [vmem:[%s453 + $0x50] sm:$0xff]
        %v505 = vld [vmem:[%s453 + $0x58] sm:$0xff]
        %v506 = vld [vmem:[%s453 + $0x60] sm:$0xff]
        %v507 = vld [vmem:[%s453 + $0x68] sm:$0xff]
        %v508 = vld [vmem:[%s453 + $0x70] sm:$0xff]
        %v509 = vld [vmem:[%s453 + $0x78] sm:$0xff]
        %v510 = vmul.f32 %v478, %v478
        %v511 = vmul.f32 %v479, %v479
        %v512 = vmul.f32 %v480, %v480
        %v513 = vmul.f32 %v481, %v481
        %v514 = vmul.f32 %v482, %v482
        %v515 = vmul.f32 %v483, %v483
        %v516 = vmul.f32 %v484, %v484
        %v517 = vmul.f32 %v485, %v485
        %v518 = vmul.f32 %v486, %v486
        %v519 = vmul.f32 %v487, %v487
        %v520 = vmul.f32 %v488, %v488
        %v521 = vmul.f32 %v489, %v489
        %v522 = vmul.f32 %v490, %v490
        %v523 = vmul.f32 %v491, %v491
        %v524 = vmul.f32 %v492, %v492
        %v525 = vmul.f32 %v493, %v493
        %vm526 = vcmask 523264
        %v527 = vsel %vm526, %v510, 0.0
        %528 = vadd.xlane.f32.xlu0 %v527
        %v529 = vpop.xlane.xlu0 %528
        %v530 = vsel %vm526, %v511, 0.0
        %531 = vadd.xlane.f32.xlu0 %v530
        %v532 = vpop.xlane.xlu0 %531
        %v533 = vsel %vm526, %v512, 0.0
        %534 = vadd.xlane.f32.xlu0 %v533
        %v535 = vpop.xlane.xlu0 %534
        %v536 = vsel %vm526, %v513, 0.0
        %537 = vadd.xlane.f32.xlu0 %v536
        %v538 = vpop.xlane.xlu0 %537
        %v539 = vsel %vm526, %v514, 0.0
        %540 = vadd.xlane.f32.xlu0 %v539
        %v541 = vpop.xlane.xlu0 %540
        %v542 = vsel %vm526, %v515, 0.0
        %543 = vadd.xlane.f32.xlu0 %v542
        %v544 = vpop.xlane.xlu0 %543
        %v545 = vsel %vm526, %v516, 0.0
        %546 = vadd.xlane.f32.xlu0 %v545
        %v547 = vpop.xlane.xlu0 %546
        %v548 = vsel %vm526, %v517, 0.0
        %549 = vadd.xlane.f32.xlu0 %v548
        %v550 = vpop.xlane.xlu0 %549
        %v551 = vsel %vm526, %v518, 0.0
        %552 = vadd.xlane.f32.xlu0 %v551
        %v553 = vpop.xlane.xlu0 %552
        %v554 = vsel %vm526, %v519, 0.0
        %555 = vadd.xlane.f32.xlu0 %v554
        %v556 = vpop.xlane.xlu0 %555
        %v557 = vsel %vm526, %v520, 0.0
        %558 = vadd.xlane.f32.xlu0 %v557
        %v559 = vpop.xlane.xlu0 %558
        %v560 = vsel %vm526, %v521, 0.0
        %561 = vadd.xlane.f32.xlu0 %v560
        %v562 = vpop.xlane.xlu0 %561
        %v563 = vsel %vm526, %v522, 0.0
        %564 = vadd.xlane.f32.xlu0 %v563
        %v565 = vpop.xlane.xlu0 %564
        %v566 = vsel %vm526, %v523, 0.0
        %567 = vadd.xlane.f32.xlu0 %v566
        %v568 = vpop.xlane.xlu0 %567
        %v569 = vsel %vm526, %v524, 0.0
        %570 = vadd.xlane.f32.xlu0 %v569
        %v571 = vpop.xlane.xlu0 %570
        %v572 = vsel %vm526, %v525, 0.0
        %573 = vadd.xlane.f32.xlu0 %v572
        %v574 = vpop.xlane.xlu0 %573
        %v575 = vrsqrt.pop %v529
        %v576 = vrsqrt.pop %v532
        %v577 = vrsqrt.pop %v535
        %v578 = vrsqrt.pop %v538
        %v579 = vrsqrt.pop %v541
        %v580 = vrsqrt.pop %v544
        %v581 = vrsqrt.pop %v547
        %v582 = vrsqrt.pop %v550
        %v583 = vrsqrt.pop %v553
        %v584 = vrsqrt.pop %v556
        %v585 = vrsqrt.pop %v559
        %v586 = vrsqrt.pop %v562
        %v587 = vrsqrt.pop %v565
        %v588 = vrsqrt.pop %v568
        %v589 = vrsqrt.pop %v571
        %v590 = vrsqrt.pop %v574
        %v591 = vmul.f32 %v478, %v575
        %v592 = vmul.f32 %v479, %v576
        %v593 = vmul.f32 %v480, %v577
        %v594 = vmul.f32 %v481, %v578
        %v595 = vmul.f32 %v482, %v579
        %v596 = vmul.f32 %v483, %v580
        %v597 = vmul.f32 %v484, %v581
        %v598 = vmul.f32 %v485, %v582
        %v599 = vmul.f32 %v486, %v583
        %v600 = vmul.f32 %v487, %v584
        %v601 = vmul.f32 %v488, %v585
        %v602 = vmul.f32 %v489, %v586
        %v603 = vmul.f32 %v490, %v587
        %v604 = vmul.f32 %v491, %v588
        %v605 = vmul.f32 %v492, %v589
        %v606 = vmul.f32 %v493, %v590
        %v607 = vld [vmem:[#allocation2] sm:$0xff]
        %v608 = vld [vmem:[#allocation2 + $0x8] sm:$0xff]
        %v609 = vld [vmem:[#allocation2 + $0x10] sm:$0xff]
        %v610 = vld [vmem:[#allocation2 + $0x18] sm:$0xff]
        %v611 = vld [vmem:[#allocation2 + $0x20] sm:$0xff]
        %v612 = vld [vmem:[#allocation2 + $0x28] sm:$0xff]
        %v613 = vld [vmem:[#allocation2 + $0x30] sm:$0xff]
        %v614 = vld [vmem:[#allocation2 + $0x38] sm:$0xff]
        %v615 = vlaneseq
        %v616 = vshrl.u32 %v615, 7
        %v617 = vsub.s32 0, %v616
        %v618 = vrot.slane %v456, %v617
        %v620 = vsel %vm526, %v591, 0
        %v623 = vsel %vm526, %v592, 0
        %v626 = vsel %vm526, %v593, 0
        %v629 = vsel %vm526, %v594, 0
        %v632 = vsel %vm526, %v595, 0
        %v635 = vsel %vm526, %v596, 0
        %v638 = vsel %vm526, %v597, 0
        %v641 = vsel %vm526, %v598, 0
        %v644 = vsel %vm526, %v599, 0
        %v647 = vsel %vm526, %v600, 0
        %v650 = vsel %vm526, %v601, 0
        %v653 = vsel %vm526, %v602, 0
        %v656 = vsel %vm526, %v603, 0
        %v659 = vsel %vm526, %v604, 0
        %v662 = vsel %vm526, %v605, 0
        %v665 = vsel %vm526, %v606, 0
        %667 = vmatprep.subr.mxu0 0.0
        %668 = vmatpush1.msra.mxu0 %v607
        %669 = vmatprep.subr.mxu0 0.0
        %670 = vmatpush1.msra.mxu0 %v608
        %671 = vmatprep.subr.mxu0 0.0
        %672 = vmatpush1.msra.mxu0 %v609
        %673 = vmatprep.subr.mxu0 0.0
        %674 = vmatpush1.msra.mxu0 %v610
        %675 = vmatprep.subr.mxu0 0.0
        %676 = vmatpush1.msra.mxu0 %v611
        %677 = vmatprep.subr.mxu0 0.0
        %678 = vmatpush1.msra.mxu0 %v612
        %679 = vmatprep.subr.mxu0 0.0
        %680 = vmatpush1.msra.mxu0 %v613
        %681 = vmatprep.subr.mxu0 0.0
        %682 = vmatpush1.msra.mxu0 %v614
        %683 = vmatprep.subr.mxu0 0.0
        %684 = vmatpush1.msra.mxu0 0.0
        %685 = vmatprep.subr.mxu0 0.0
        %686 = vmatpush1.msra.mxu0 0.0
        %687 = vmatprep.subr.mxu0 0.0
        %688 = vmatpush1.msra.mxu0 0.0
        %689 = vmatprep.subr.mxu0 0.0
        %690 = vmatpush1.msra.mxu0 0.0
        %691 = vmatprep.subr.mxu0 0.0
        %692 = vmatpush1.msra.mxu0 0.0
        %693 = vmatprep.subr.mxu0 0.0
        %694 = vmatpush1.msra.mxu0 0.0
        %695 = vmatprep.subr.mxu0 0.0
        %696 = vmatpush1.msra.mxu0 0.0
        %697 = vmatprep.subr.mxu0 0.0
        %698 = vmatpush1.msra.mxu0 0.0
        %699 = vmatprep.subr.mxu0 0.0
        %700 = vmatpush1.msra.mxu0 0.0
        %701 = vmatprep.subr.mxu0 0.0
        %702 = vmatpush1.msra.mxu0 0.0
        %703 = vmatprep.subr.mxu0 0.0
        %704 = vmatpush1.msra.mxu0 0.0
        %705 = vmatprep.subr.mxu0 0.0
        %706 = vmatpush1.msra.mxu0 0.0
        %707 = vmatprep.subr.mxu0 0.0
        %708 = vmatpush1.msra.mxu0 0.0
        %709 = vmatprep.subr.mxu0 0.0
        %710 = vmatpush1.msra.mxu0 0.0
        %711 = vmatprep.subr.mxu0 0.0
        %712 = vmatpush1.msra.mxu0 0.0
        %713 = vmatprep.subr.mxu0 0.0
        %714 = vmatpush1.msra.mxu0 0.0
        %715 = vmatprep.subr.mxu0 0.0
        %716 = vmatpush1.msra.mxu0 0.0
        %717 = vmatprep.subr.mxu0 0.0
        %718 = vmatpush1.msra.mxu0 0.0
        %719 = vmatprep.subr.mxu0 0.0
        %720 = vmatpush1.msra.mxu0 0.0
        %721 = vmatprep.subr.mxu0 0.0
        %722 = vmatpush1.msra.mxu0 0.0
        %723 = vmatprep.subr.mxu0 0.0
        %724 = vmatpush1.msra.mxu0 0.0
        %725 = vmatprep.subr.mxu0 0.0
        %726 = vmatpush1.msra.mxu0 0.0
        %727 = vmatprep.subr.mxu0 0.0
        %728 = vmatpush1.msra.mxu0 0.0
        %729 = vmatprep.subr.mxu0 0.0
        %730 = vmatpush1.msra.mxu0 0.0
        %731 = vmatprep.mubr.f32.mxu0 0.0
        %732 = vmatmul.mubr.f32.gmra.mrb[0].mxu0 %v620
        %v733 = vpop.f32.mrb[0].mxu0
        %v734 = vadd.f32 %v618, %v733
        %v735 = vpop.f32.mrb[0].mxu0
        %736 = vmatprep.mubr.f32.mxu0 0.0
        %737 = vmatmul.mubr.f32.gmra.mrb[0].mxu0 %v623
        %v738 = vpop.f32.mrb[0].mxu0
        %v739 = vadd.f32 %v618, %v738
        %v740 = vpop.f32.mrb[0].mxu0
        %741 = vmatprep.mubr.f32.mxu0 0.0
        %742 = vmatmul.mubr.f32.gmra.mrb[0].mxu0 %v626
        %v743 = vpop.f32.mrb[0].mxu0
        %v744 = vadd.f32 %v618, %v743
        %v745 = vpop.f32.mrb[0].mxu0
        %746 = vmatprep.mubr.f32.mxu0 0.0
        %747 = vmatmul.mubr.f32.gmra.mrb[0].mxu0 %v629
        %v748 = vpop.f32.mrb[0].mxu0
        %v749 = vadd.f32 %v618, %v748
        %v750 = vpop.f32.mrb[0].mxu0
        %751 = vmatprep.mubr.f32.mxu0 0.0
        %752 = vmatmul.mubr.f32.gmra.mrb[0].mxu0 %v632
        %v753 = vpop.f32.mrb[0].mxu0
        %v754 = vadd.f32 %v618, %v753
        %v755 = vpop.f32.mrb[0].mxu0
        %756 = vmatprep.mubr.f32.mxu0 0.0
        %757 = vmatmul.mubr.f32.gmra.mrb[0].mxu0 %v635
        %v758 = vpop.f32.mrb[0].mxu0
        %v759 = vadd.f32 %v618, %v758
        %v760 = vpop.f32.mrb[0].mxu0
        %761 = vmatprep.mubr.f32.mxu0 0.0
        %762 = vmatmul.mubr.f32.gmra.mrb[0].mxu0 %v638
        %v763 = vpop.f32.mrb[0].mxu0
        %v764 = vadd.f32 %v618, %v763
        %v765 = vpop.f32.mrb[0].mxu0
        %766 = vmatprep.mubr.f32.mxu0 0.0
        %767 = vmatmul.mubr.f32.gmra.mrb[0].mxu0 %v641
        %v768 = vpop.f32.mrb[0].mxu0
        %v769 = vadd.f32 %v618, %v768
        %v770 = vpop.f32.mrb[0].mxu0
        %771 = vmatprep.mubr.f32.mxu0 0.0
        %772 = vmatmul.mubr.f32.gmra.mrb[0].mxu0 %v644
        %v773 = vpop.f32.mrb[0].mxu0
        %v774 = vadd.f32 %v618, %v773
        %v775 = vpop.f32.mrb[0].mxu0
        %776 = vmatprep.mubr.f32.mxu0 0.0
        %777 = vmatmul.mubr.f32.gmra.mrb[0].mxu0 %v647
        %v778 = vpop.f32.mrb[0].mxu0
        %v779 = vadd.f32 %v618, %v778
        %v780 = vpop.f32.mrb[0].mxu0
        %781 = vmatprep.mubr.f32.mxu0 0.0
        %782 = vmatmul.mubr.f32.gmra.mrb[0].mxu0 %v650
        %v783 = vpop.f32.mrb[0].mxu0
        %v784 = vadd.f32 %v618, %v783
        %v785 = vpop.f32.mrb[0].mxu0
        %786 = vmatprep.mubr.f32.mxu0 0.0
        %787 = vmatmul.mubr.f32.gmra.mrb[0].mxu0 %v653
        %v788 = vpop.f32.mrb[0].mxu0
        %v789 = vadd.f32 %v618, %v788
        %v790 = vpop.f32.mrb[0].mxu0
        %791 = vmatprep.mubr.f32.mxu0 0.0
        %792 = vmatmul.mubr.f32.gmra.mrb[0].mxu0 %v656
        %v793 = vpop.f32.mrb[0].mxu0
        %v794 = vadd.f32 %v618, %v793
        %v795 = vpop.f32.mrb[0].mxu0
        %796 = vmatprep.mubr.f32.mxu0 0.0
        %797 = vmatmul.mubr.f32.gmra.mrb[0].mxu0 %v659
        %v798 = vpop.f32.mrb[0].mxu0
        %v799 = vadd.f32 %v618, %v798
        %v800 = vpop.f32.mrb[0].mxu0
        %801 = vmatprep.mubr.f32.mxu0 0.0
        %802 = vmatmul.mubr.f32.gmra.mrb[0].mxu0 %v662
        %v803 = vpop.f32.mrb[0].mxu0
        %v804 = vadd.f32 %v618, %v803
        %v805 = vpop.f32.mrb[0].mxu0
        %806 = vmatprep.mubr.f32.mxu0 0.0
        %807 = vmatmul.mubr.f32.gmra.mrb[0].mxu0 %v665
        %v808 = vpop.f32.mrb[0].mxu0
        %v809 = vadd.f32 %v618, %v808
        %v810 = vpop.f32.mrb[0].mxu0
        %811 = vdwg.mxu0
        %v812 = vxor.u32 %v734, 2147483648
        %v813 = vxor.u32 %v739, 2147483648
        %v814 = vxor.u32 %v744, 2147483648
        %v815 = vxor.u32 %v749, 2147483648
        %v816 = vxor.u32 %v754, 2147483648
        %v817 = vxor.u32 %v759, 2147483648
        %v818 = vxor.u32 %v764, 2147483648
        %v819 = vxor.u32 %v769, 2147483648
        %v820 = vxor.u32 %v774, 2147483648
        %v821 = vxor.u32 %v779, 2147483648
        %v822 = vxor.u32 %v784, 2147483648
        %v823 = vxor.u32 %v789, 2147483648
        %v824 = vxor.u32 %v794, 2147483648
        %v825 = vxor.u32 %v799, 2147483648
        %v826 = vxor.u32 %v804, 2147483648
        %v827 = vxor.u32 %v809, 2147483648
        %v828 = vmul.f32 %v812, 1.442695
        %v829 = vpow.pop %v828
        %v830 = vmul.f32 %v813, 1.442695
        %v831 = vpow.pop %v830
        %v832 = vmul.f32 %v814, 1.442695
        %v833 = vpow.pop %v832
        %v834 = vmul.f32 %v815, 1.442695
        %v835 = vpow.pop %v834
        %v836 = vmul.f32 %v816, 1.442695
        %v837 = vpow.pop %v836
        %v838 = vmul.f32 %v817, 1.442695
        %v839 = vpow.pop %v838
        %v840 = vmul.f32 %v818, 1.442695
        %v841 = vpow.pop %v840
        %v842 = vmul.f32 %v819, 1.442695
        %v843 = vpow.pop %v842
        %v844 = vmul.f32 %v820, 1.442695
        %v845 = vpow.pop %v844
        %v846 = vmul.f32 %v821, 1.442695
        %v847 = vpow.pop %v846
        %v848 = vmul.f32 %v822, 1.442695
        %v849 = vpow.pop %v848
        %v850 = vmul.f32 %v823, 1.442695
        %v851 = vpow.pop %v850
        %v852 = vmul.f32 %v824, 1.442695
        %v853 = vpow.pop %v852
        %v854 = vmul.f32 %v825, 1.442695
        %v855 = vpow.pop %v854
        %v856 = vmul.f32 %v826, 1.442695
        %v857 = vpow.pop %v856
        %v858 = vmul.f32 %v827, 1.442695
        %v859 = vpow.pop %v858
        %v860 = vadd.f32 %v829, 1.0
        %v861 = vadd.f32 %v831, 1.0
        %v862 = vadd.f32 %v833, 1.0
        %v863 = vadd.f32 %v835, 1.0
        %v864 = vadd.f32 %v837, 1.0
        %v865 = vadd.f32 %v839, 1.0
        %v866 = vadd.f32 %v841, 1.0
        %v867 = vadd.f32 %v843, 1.0
        %v868 = vadd.f32 %v845, 1.0
        %v869 = vadd.f32 %v847, 1.0
        %v870 = vadd.f32 %v849, 1.0
        %v871 = vadd.f32 %v851, 1.0
        %v872 = vadd.f32 %v853, 1.0
        %v873 = vadd.f32 %v855, 1.0
        %v874 = vadd.f32 %v857, 1.0
        %v875 = vadd.f32 %v859, 1.0
        %v876 = vrcp.pop %v860
        %v877 = vmul.f32 1.0, %v876
        %v878 = vrcp.pop %v861
        %v879 = vmul.f32 1.0, %v878
        %v880 = vrcp.pop %v862
        %v881 = vmul.f32 1.0, %v880
        %v882 = vrcp.pop %v863
        %v883 = vmul.f32 1.0, %v882
        %v884 = vrcp.pop %v864
        %v885 = vmul.f32 1.0, %v884
        %v886 = vrcp.pop %v865
        %v887 = vmul.f32 1.0, %v886
        %v888 = vrcp.pop %v866
        %v889 = vmul.f32 1.0, %v888
        %v890 = vrcp.pop %v867
        %v891 = vmul.f32 1.0, %v890
        %v892 = vrcp.pop %v868
        %v893 = vmul.f32 1.0, %v892
        %v894 = vrcp.pop %v869
        %v895 = vmul.f32 1.0, %v894
        %v896 = vrcp.pop %v870
        %v897 = vmul.f32 1.0, %v896
        %v898 = vrcp.pop %v871
        %v899 = vmul.f32 1.0, %v898
        %v900 = vrcp.pop %v872
        %v901 = vmul.f32 1.0, %v900
        %v902 = vrcp.pop %v873
        %v903 = vmul.f32 1.0, %v902
        %v904 = vrcp.pop %v874
        %v905 = vmul.f32 1.0, %v904
        %v906 = vrcp.pop %v875
        %v907 = vmul.f32 1.0, %v906
        %v908 = vmul.f32 %v734, %v877
        %v909 = vmul.f32 %v739, %v879
        %v910 = vmul.f32 %v744, %v881
        %v911 = vmul.f32 %v749, %v883
        %v912 = vmul.f32 %v754, %v885
        %v913 = vmul.f32 %v759, %v887
        %v914 = vmul.f32 %v764, %v889
        %v915 = vmul.f32 %v769, %v891
        %v916 = vmul.f32 %v774, %v893
        %v917 = vmul.f32 %v779, %v895
        %v918 = vmul.f32 %v784, %v897
        %v919 = vmul.f32 %v789, %v899
        %v920 = vmul.f32 %v794, %v901
        %v921 = vmul.f32 %v799, %v903
        %v922 = vmul.f32 %v804, %v905
        %v923 = vmul.f32 %v809, %v907
        %924 = vadd.xlane.f32.xlu0 %v908
        %v925 = vpop.xlane.xlu0 %924
        %926 = vadd.xlane.f32.xlu0 %v909
        %v927 = vpop.xlane.xlu0 %926
        %928 = vadd.xlane.f32.xlu0 %v910
        %v929 = vpop.xlane.xlu0 %928
        %930 = vadd.xlane.f32.xlu0 %v911
        %v931 = vpop.xlane.xlu0 %930
        %932 = vadd.xlane.f32.xlu0 %v912
        %v933 = vpop.xlane.xlu0 %932
        %934 = vadd.xlane.f32.xlu0 %v913
        %v935 = vpop.xlane.xlu0 %934
        %936 = vadd.xlane.f32.xlu0 %v914
        %v937 = vpop.xlane.xlu0 %936
        %938 = vadd.xlane.f32.xlu0 %v915
        %v939 = vpop.xlane.xlu0 %938
        %940 = vadd.xlane.f32.xlu0 %v916
        %v941 = vpop.xlane.xlu0 %940
        %942 = vadd.xlane.f32.xlu0 %v917
        %v943 = vpop.xlane.xlu0 %942
        %944 = vadd.xlane.f32.xlu0 %v918
        %v945 = vpop.xlane.xlu0 %944
        %946 = vadd.xlane.f32.xlu0 %v919
        %v947 = vpop.xlane.xlu0 %946
        %948 = vadd.xlane.f32.xlu0 %v920
        %v949 = vpop.xlane.xlu0 %948
        %950 = vadd.xlane.f32.xlu0 %v921
        %v951 = vpop.xlane.xlu0 %950
        %952 = vadd.xlane.f32.xlu0 %v922
        %v953 = vpop.xlane.xlu0 %952
        %954 = vadd.xlane.f32.xlu0 %v923
        %v955 = vpop.xlane.xlu0 %954
        %v956 = vmul.f32 %v925, 0.03125
        %v957 = vmul.f32 %v927, 0.03125
        %v958 = vmul.f32 %v929, 0.03125
        %v959 = vmul.f32 %v931, 0.03125
        %v960 = vmul.f32 %v933, 0.03125
        %v961 = vmul.f32 %v935, 0.03125
        %v962 = vmul.f32 %v937, 0.03125
        %v963 = vmul.f32 %v939, 0.03125
        %v964 = vmul.f32 %v941, 0.03125
        %v965 = vmul.f32 %v943, 0.03125
        %v966 = vmul.f32 %v945, 0.03125
        %v967 = vmul.f32 %v947, 0.03125
        %v968 = vmul.f32 %v949, 0.03125
        %v969 = vmul.f32 %v951, 0.03125
        %v970 = vmul.f32 %v953, 0.03125
        %v971 = vmul.f32 %v955, 0.03125
        %v972 = vmul.f32 %v908, %v908
        %v973 = vmul.f32 %v909, %v909
        %v974 = vmul.f32 %v910, %v910
        %v975 = vmul.f32 %v911, %v911
        %v976 = vmul.f32 %v912, %v912
        %v977 = vmul.f32 %v913, %v913
        %v978 = vmul.f32 %v914, %v914
        %v979 = vmul.f32 %v915, %v915
        %v980 = vmul.f32 %v916, %v916
        %v981 = vmul.f32 %v917, %v917
        %v982 = vmul.f32 %v918, %v918
        %v983 = vmul.f32 %v919, %v919
        %v984 = vmul.f32 %v920, %v920
        %v985 = vmul.f32 %v921, %v921
        %v986 = vmul.f32 %v922, %v922
        %v987 = vmul.f32 %v923, %v923
        %988 = vadd.xlane.f32.xlu0 %v972
        %v989 = vpop.xlane.xlu0 %988
        %990 = vadd.xlane.f32.xlu0 %v973
        %v991 = vpop.xlane.xlu0 %990
        %992 = vadd.xlane.f32.xlu0 %v974
        %v993 = vpop.xlane.xlu0 %992
        %994 = vadd.xlane.f32.xlu0 %v975
        %v995 = vpop.xlane.xlu0 %994
        %996 = vadd.xlane.f32.xlu0 %v976
        %v997 = vpop.xlane.xlu0 %996
        %998 = vadd.xlane.f32.xlu0 %v977
        %v999 = vpop.xlane.xlu0 %998
        %1000 = vadd.xlane.f32.xlu0 %v978
        %v1001 = vpop.xlane.xlu0 %1000
        %1002 = vadd.xlane.f32.xlu0 %v979
        %v1003 = vpop.xlane.xlu0 %1002
        %1004 = vadd.xlane.f32.xlu0 %v980
        %v1005 = vpop.xlane.xlu0 %1004
        %1006 = vadd.xlane.f32.xlu0 %v981
        %v1007 = vpop.xlane.xlu0 %1006
        %1008 = vadd.xlane.f32.xlu0 %v982
        %v1009 = vpop.xlane.xlu0 %1008
        %1010 = vadd.xlane.f32.xlu0 %v983
        %v1011 = vpop.xlane.xlu0 %1010
        %1012 = vadd.xlane.f32.xlu0 %v984
        %v1013 = vpop.xlane.xlu0 %1012
        %1014 = vadd.xlane.f32.xlu0 %v985
        %v1015 = vpop.xlane.xlu0 %1014
        %1016 = vadd.xlane.f32.xlu0 %v986
        %v1017 = vpop.xlane.xlu0 %1016
        %1018 = vadd.xlane.f32.xlu0 %v987
        %v1019 = vpop.xlane.xlu0 %1018
        %v1020 = vmul.f32 %v989, 0.03125
        %v1021 = vmul.f32 %v991, 0.03125
        %v1022 = vmul.f32 %v993, 0.03125
        %v1023 = vmul.f32 %v995, 0.03125
        %v1024 = vmul.f32 %v997, 0.03125
        %v1025 = vmul.f32 %v999, 0.03125
        %v1026 = vmul.f32 %v1001, 0.03125
        %v1027 = vmul.f32 %v1003, 0.03125
        %v1028 = vmul.f32 %v1005, 0.03125
        %v1029 = vmul.f32 %v1007, 0.03125
        %v1030 = vmul.f32 %v1009, 0.03125
        %v1031 = vmul.f32 %v1011, 0.03125
        %v1032 = vmul.f32 %v1013, 0.03125
        %v1033 = vmul.f32 %v1015, 0.03125
        %v1034 = vmul.f32 %v1017, 0.03125
        %v1035 = vmul.f32 %v1019, 0.03125
        %v1036 = vmul.f32 %v956, %v956
        %v1037 = vmul.f32 %v957, %v957
        %v1038 = vmul.f32 %v958, %v958
        %v1039 = vmul.f32 %v959, %v959
        %v1040 = vmul.f32 %v960, %v960
        %v1041 = vmul.f32 %v961, %v961
        %v1042 = vmul.f32 %v962, %v962
        %v1043 = vmul.f32 %v963, %v963
        %v1044 = vmul.f32 %v964, %v964
        %v1045 = vmul.f32 %v965, %v965
        %v1046 = vmul.f32 %v966, %v966
        %v1047 = vmul.f32 %v967, %v967
        %v1048 = vmul.f32 %v968, %v968
        %v1049 = vmul.f32 %v969, %v969
        %v1050 = vmul.f32 %v970, %v970
        %v1051 = vmul.f32 %v971, %v971
        %v1052 = vsub.f32 %v1020, %v1036
        %v1053 = vsub.f32 %v1021, %v1037
        %v1054 = vsub.f32 %v1022, %v1038
        %v1055 = vsub.f32 %v1023, %v1039
        %v1056 = vsub.f32 %v1024, %v1040
        %v1057 = vsub.f32 %v1025, %v1041
        %v1058 = vsub.f32 %v1026, %v1042
        %v1059 = vsub.f32 %v1027, %v1043
        %v1060 = vsub.f32 %v1028, %v1044
        %v1061 = vsub.f32 %v1029, %v1045
        %v1062 = vsub.f32 %v1030, %v1046
        %v1063 = vsub.f32 %v1031, %v1047
        %v1064 = vsub.f32 %v1032, %v1048
        %v1065 = vsub.f32 %v1033, %v1049
        %v1066 = vsub.f32 %v1034, %v1050
        %v1067 = vsub.f32 %v1035, %v1051
        %v1068 = vsub.f32 %v908, %v956
        %v1069 = vsub.f32 %v909, %v957
        %v1070 = vsub.f32 %v910, %v958
        %v1071 = vsub.f32 %v911, %v959
        %v1072 = vsub.f32 %v912, %v960
        %v1073 = vsub.f32 %v913, %v961
        %v1074 = vsub.f32 %v914, %v962
        %v1075 = vsub.f32 %v915, %v963
        %v1076 = vsub.f32 %v916, %v964
        %v1077 = vsub.f32 %v917, %v965
        %v1078 = vsub.f32 %v918, %v966
        %v1079 = vsub.f32 %v919, %v967
        %v1080 = vsub.f32 %v920, %v968
        %v1081 = vsub.f32 %v921, %v969
        %v1082 = vsub.f32 %v922, %v970
        %v1083 = vsub.f32 %v923, %v971
        %v1084 = vadd.f32 %v1052, 0.1
        %v1085 = vadd.f32 %v1053, 0.1
        %v1086 = vadd.f32 %v1054, 0.1
        %v1087 = vadd.f32 %v1055, 0.1
        %v1088 = vadd.f32 %v1056, 0.1
        %v1089 = vadd.f32 %v1057, 0.1
        %v1090 = vadd.f32 %v1058, 0.1
        %v1091 = vadd.f32 %v1059, 0.1
        %v1092 = vadd.f32 %v1060, 0.1
        %v1093 = vadd.f32 %v1061, 0.1
        %v1094 = vadd.f32 %v1062, 0.1
        %v1095 = vadd.f32 %v1063, 0.1
        %v1096 = vadd.f32 %v1064, 0.1
        %v1097 = vadd.f32 %v1065, 0.1
        %v1098 = vadd.f32 %v1066, 0.1
        %v1099 = vadd.f32 %v1067, 0.1
        %v1100 = vrsqrt.pop %v1084
        %v1101 = vrsqrt.pop %v1085
        %v1102 = vrsqrt.pop %v1086
        %v1103 = vrsqrt.pop %v1087
        %v1104 = vrsqrt.pop %v1088
        %v1105 = vrsqrt.pop %v1089
        %v1106 = vrsqrt.pop %v1090
        %v1107 = vrsqrt.pop %v1091
        %v1108 = vrsqrt.pop %v1092
        %v1109 = vrsqrt.pop %v1093
        %v1110 = vrsqrt.pop %v1094
        %v1111 = vrsqrt.pop %v1095
        %v1112 = vrsqrt.pop %v1096
        %v1113 = vrsqrt.pop %v1097
        %v1114 = vrsqrt.pop %v1098
        %v1115 = vrsqrt.pop %v1099
        %v1116 = vmul.f32 %v1068, %v1100
        %v1117 = vmul.f32 %v1069, %v1101
        %v1118 = vmul.f32 %v1070, %v1102
        %v1119 = vmul.f32 %v1071, %v1103
        %v1120 = vmul.f32 %v1072, %v1104
        %v1121 = vmul.f32 %v1073, %v1105
        %v1122 = vmul.f32 %v1074, %v1106
        %v1123 = vmul.f32 %v1075, %v1107
        %v1124 = vmul.f32 %v1076, %v1108
        %v1125 = vmul.f32 %v1077, %v1109
        %v1126 = vmul.f32 %v1078, %v1110
        %v1127 = vmul.f32 %v1079, %v1111
        %v1128 = vmul.f32 %v1080, %v1112
        %v1129 = vmul.f32 %v1081, %v1113
        %v1130 = vmul.f32 %v1082, %v1114
        %v1131 = vmul.f32 %v1083, %v1115
        %v1132 = vlaneseq
        %v1133 = vshrl.u32 %v1132, 7
        %v1134 = vsub.s32 0, %v1133
        %v1135 = vrot.slane %v461, %v1134
        %v1136 = vmul.f32 %v1116, %v1135
        %v1137 = vmul.f32 %v1117, %v1135
        %v1138 = vmul.f32 %v1118, %v1135
        %v1139 = vmul.f32 %v1119, %v1135
        %v1140 = vmul.f32 %v1120, %v1135
        %v1141 = vmul.f32 %v1121, %v1135
        %v1142 = vmul.f32 %v1122, %v1135
        %v1143 = vmul.f32 %v1123, %v1135
        %v1144 = vmul.f32 %v1124, %v1135
        %v1145 = vmul.f32 %v1125, %v1135
        %v1146 = vmul.f32 %v1126, %v1135
        %v1147 = vmul.f32 %v1127, %v1135
        %v1148 = vmul.f32 %v1128, %v1135
        %v1149 = vmul.f32 %v1129, %v1135
        %v1150 = vmul.f32 %v1130, %v1135
        %v1151 = vmul.f32 %v1131, %v1135
        %v1152 = vlaneseq
        %v1153 = vshrl.u32 %v1152, 7
        %v1154 = vsub.s32 0, %v1153
        %v1155 = vrot.slane %v466, %v1154
        %v1156 = vadd.f32 %v1136, %v1155
        %v1157 = vadd.f32 %v1137, %v1155
        %v1158 = vadd.f32 %v1138, %v1155
        %v1159 = vadd.f32 %v1139, %v1155
        %v1160 = vadd.f32 %v1140, %v1155
        %v1161 = vadd.f32 %v1141, %v1155
        %v1162 = vadd.f32 %v1142, %v1155
        %v1163 = vadd.f32 %v1143, %v1155
        %v1164 = vadd.f32 %v1144, %v1155
        %v1165 = vadd.f32 %v1145, %v1155
        %v1166 = vadd.f32 %v1146, %v1155
        %v1167 = vadd.f32 %v1147, %v1155
        %v1168 = vadd.f32 %v1148, %v1155
        %v1169 = vadd.f32 %v1149, %v1155
        %v1170 = vadd.f32 %v1150, %v1155
        %v1171 = vadd.f32 %v1151, %v1155
        %v1172 = vld [vmem:[%s3] sm:$0xff]
        %v1173 = vld [vmem:[%s3 + $0x8] sm:$0xff]
        %v1174 = vld [vmem:[%s3 + $0x10] sm:$0xff]
        %v1175 = vld [vmem:[%s3 + $0x18] sm:$0xff]
        %v1176 = vld [vmem:[%s3 + $0x20] sm:$0xff]
        %v1177 = vld [vmem:[%s3 + $0x28] sm:$0xff]
        %v1178 = vld [vmem:[%s3 + $0x30] sm:$0xff]
        %v1179 = vld [vmem:[%s3 + $0x38] sm:$0xff]
        %v1180 = vld [vmem:[%s3 + $0x40] sm:$0xff]
        %v1181 = vld [vmem:[%s3 + $0x48] sm:$0xff]
        %v1182 = vld [vmem:[%s3 + $0x50] sm:$0xff]
        %v1183 = vld [vmem:[%s3 + $0x58] sm:$0xff]
        %v1184 = vld [vmem:[%s3 + $0x60] sm:$0xff]
        %v1185 = vld [vmem:[%s3 + $0x68] sm:$0xff]
        %v1186 = vld [vmem:[%s3 + $0x70] sm:$0xff]
        %v1187 = vld [vmem:[%s3 + $0x78] sm:$0xff]
        %v1188 = vlaneseq
        %v1189 = vshrl.u32 %v1188, 7
        %v1190 = vsub.s32 0, %v1189
        %v1191 = vrot.slane %v457, %v1190
        %1192 = vmatprep.subr.mxu0 0.0
        %1193 = vmatpush1.msra.mxu0 %v1172
        %1194 = vmatprep.subr.mxu0 0.0
        %1195 = vmatpush1.msra.mxu0 %v1173
        %1196 = vmatprep.subr.mxu0 0.0
        %1197 = vmatpush1.msra.mxu0 %v1174
        %1198 = vmatprep.subr.mxu0 0.0
        %1199 = vmatpush1.msra.mxu0 %v1175
        %1200 = vmatprep.subr.mxu0 0.0
        %1201 = vmatpush1.msra.mxu0 %v1176
        %1202 = vmatprep.subr.mxu0 0.0
        %1203 = vmatpush1.msra.mxu0 %v1177
        %1204 = vmatprep.subr.mxu0 0.0
        %1205 = vmatpush1.msra.mxu0 %v1178
        %1206 = vmatprep.subr.mxu0 0.0
        %1207 = vmatpush1.msra.mxu0 %v1179
        %1208 = vmatprep.subr.mxu0 0.0
        %1209 = vmatpush1.msra.mxu0 %v1180
        %1210 = vmatprep.subr.mxu0 0.0
        %1211 = vmatpush1.msra.mxu0 %v1181
        %1212 = vmatprep.subr.mxu0 0.0
        %1213 = vmatpush1.msra.mxu0 %v1182
        %1214 = vmatprep.subr.mxu0 0.0
        %1215 = vmatpush1.msra.mxu0 %v1183
        %1216 = vmatprep.subr.mxu0 0.0
        %1217 = vmatpush1.msra.mxu0 %v1184
        %1218 = vmatprep.subr.mxu0 0.0
        %1219 = vmatpush1.msra.mxu0 %v1185
        %1220 = vmatprep.subr.mxu0 0.0
        %1221 = vmatpush1.msra.mxu0 %v1186
        %1222 = vmatprep.subr.mxu0 0.0
        %1223 = vmatpush1.msra.mxu0 %v1187
        %1224 = vmatprep.subr.mxu0 0.0
        %1225 = vmatpush1.msra.mxu0 0.0
        %1226 = vmatprep.subr.mxu0 0.0
        %1227 = vmatpush1.msra.mxu0 0.0
        %1228 = vmatprep.subr.mxu0 0.0
        %1229 = vmatpush1.msra.mxu0 0.0
        %1230 = vmatprep.subr.mxu0 0.0
        %1231 = vmatpush1.msra.mxu0 0.0
        %1232 = vmatprep.subr.mxu0 0.0
        %1233 = vmatpush1.msra.mxu0 0.0
        %1234 = vmatprep.subr.mxu0 0.0
        %1235 = vmatpush1.msra.mxu0 0.0
        %1236 = vmatprep.subr.mxu0 0.0
        %1237 = vmatpush1.msra.mxu0 0.0
        %1238 = vmatprep.subr.mxu0 0.0
        %1239 = vmatpush1.msra.mxu0 0.0
        %1240 = vmatprep.subr.mxu0 0.0
        %1241 = vmatpush1.msra.mxu0 0.0
        %1242 = vmatprep.subr.mxu0 0.0
        %1243 = vmatpush1.msra.mxu0 0.0
        %1244 = vmatprep.subr.mxu0 0.0
        %1245 = vmatpush1.msra.mxu0 0.0
        %1246 = vmatprep.subr.mxu0 0.0
        %1247 = vmatpush1.msra.mxu0 0.0
        %1248 = vmatprep.subr.mxu0 0.0
        %1249 = vmatpush1.msra.mxu0 0.0
        %1250 = vmatprep.subr.mxu0 0.0
        %1251 = vmatpush1.msra.mxu0 0.0
        %1252 = vmatprep.subr.mxu0 0.0
        %1253 = vmatpush1.msra.mxu0 0.0
        %1254 = vmatprep.subr.mxu0 0.0
        %1255 = vmatpush1.msra.mxu0 0.0
        %1256 = vmatprep.mubr.f32.mxu0 0.0
        %1257 = vmatmul.mubr.f32.gmra.mrb[0].mxu0 %v1156
        %v1258 = vpop.f32.mrb[0].mxu0
        %v1259 = vadd.f32 %v1191, %v1258
        %v1260 = vpop.f32.mrb[0].mxu0
        %1261 = vmatprep.mubr.f32.mxu0 0.0
        %1262 = vmatmul.mubr.f32.gmra.mrb[0].mxu0 %v1157
        %v1263 = vpop.f32.mrb[0].mxu0
        %v1264 = vadd.f32 %v1191, %v1263
        %v1265 = vpop.f32.mrb[0].mxu0
        %1266 = vmatprep.mubr.f32.mxu0 0.0
        %1267 = vmatmul.mubr.f32.gmra.mrb[0].mxu0 %v1158
        %v1268 = vpop.f32.mrb[0].mxu0
        %v1269 = vadd.f32 %v1191, %v1268
        %v1270 = vpop.f32.mrb[0].mxu0
        %1271 = vmatprep.mubr.f32.mxu0 0.0
        %1272 = vmatmul.mubr.f32.gmra.mrb[0].mxu0 %v1159
        %v1273 = vpop.f32.mrb[0].mxu0
        %v1274 = vadd.f32 %v1191, %v1273
        %v1275 = vpop.f32.mrb[0].mxu0
        %1276 = vmatprep.mubr.f32.mxu0 0.0
        %1277 = vmatmul.mubr.f32.gmra.mrb[0].mxu0 %v1160
        %v1278 = vpop.f32.mrb[0].mxu0
        %v1279 = vadd.f32 %v1191, %v1278
        %v1280 = vpop.f32.mrb[0].mxu0
        %1281 = vmatprep.mubr.f32.mxu0 0.0
        %1282 = vmatmul.mubr.f32.gmra.mrb[0].mxu0 %v1161
        %v1283 = vpop.f32.mrb[0].mxu0
        %v1284 = vadd.f32 %v1191, %v1283
        %v1285 = vpop.f32.mrb[0].mxu0
        %1286 = vmatprep.mubr.f32.mxu0 0.0
        %1287 = vmatmul.mubr.f32.gmra.mrb[0].mxu0 %v1162
        %v1288 = vpop.f32.mrb[0].mxu0
        %v1289 = vadd.f32 %v1191, %v1288
        %v1290 = vpop.f32.mrb[0].mxu0
        %1291 = vmatprep.mubr.f32.mxu0 0.0
        %1292 = vmatmul.mubr.f32.gmra.mrb[0].mxu0 %v1163
        %v1293 = vpop.f32.mrb[0].mxu0
        %v1294 = vadd.f32 %v1191, %v1293
        %v1295 = vpop.f32.mrb[0].mxu0
        %1296 = vmatprep.mubr.f32.mxu0 0.0
        %1297 = vmatmul.mubr.f32.gmra.mrb[0].mxu0 %v1164
        %v1298 = vpop.f32.mrb[0].mxu0
        %v1299 = vadd.f32 %v1191, %v1298
        %v1300 = vpop.f32.mrb[0].mxu0
        %1301 = vmatprep.mubr.f32.mxu0 0.0
        %1302 = vmatmul.mubr.f32.gmra.mrb[0].mxu0 %v1165
        %v1303 = vpop.f32.mrb[0].mxu0
        %v1304 = vadd.f32 %v1191, %v1303
        %v1305 = vpop.f32.mrb[0].mxu0
        %1306 = vmatprep.mubr.f32.mxu0 0.0
        %1307 = vmatmul.mubr.f32.gmra.mrb[0].mxu0 %v1166
        %v1308 = vpop.f32.mrb[0].mxu0
        %v1309 = vadd.f32 %v1191, %v1308
        %v1310 = vpop.f32.mrb[0].mxu0
        %1311 = vmatprep.mubr.f32.mxu0 0.0
        %1312 = vmatmul.mubr.f32.gmra.mrb[0].mxu0 %v1167
        %v1313 = vpop.f32.mrb[0].mxu0
        %v1314 = vadd.f32 %v1191, %v1313
        %v1315 = vpop.f32.mrb[0].mxu0
        %1316 = vmatprep.mubr.f32.mxu0 0.0
        %1317 = vmatmul.mubr.f32.gmra.mrb[0].mxu0 %v1168
        %v1318 = vpop.f32.mrb[0].mxu0
        %v1319 = vadd.f32 %v1191, %v1318
        %v1320 = vpop.f32.mrb[0].mxu0
        %1321 = vmatprep.mubr.f32.mxu0 0.0
        %1322 = vmatmul.mubr.f32.gmra.mrb[0].mxu0 %v1169
        %v1323 = vpop.f32.mrb[0].mxu0
        %v1324 = vadd.f32 %v1191, %v1323
        %v1325 = vpop.f32.mrb[0].mxu0
        %1326 = vmatprep.mubr.f32.mxu0 0.0
        %1327 = vmatmul.mubr.f32.gmra.mrb[0].mxu0 %v1170
        %v1328 = vpop.f32.mrb[0].mxu0
        %v1329 = vadd.f32 %v1191, %v1328
        %v1330 = vpop.f32.mrb[0].mxu0
        %1331 = vmatprep.mubr.f32.mxu0 0.0
        %1332 = vmatmul.mubr.f32.gmra.mrb[0].mxu0 %v1171
        %v1333 = vpop.f32.mrb[0].mxu0
        %v1334 = vadd.f32 %v1191, %v1333
        %v1335 = vpop.f32.mrb[0].mxu0
        %1336 = vdwg.mxu0
        %v1337 = vadd.f32 %v1259, %v1156
        %v1338 = vadd.f32 %v1264, %v1157
        %v1339 = vadd.f32 %v1269, %v1158
        %v1340 = vadd.f32 %v1274, %v1159
        %v1341 = vadd.f32 %v1279, %v1160
        %v1342 = vadd.f32 %v1284, %v1161
        %v1343 = vadd.f32 %v1289, %v1162
        %v1344 = vadd.f32 %v1294, %v1163
        %v1345 = vadd.f32 %v1299, %v1164
        %v1346 = vadd.f32 %v1304, %v1165
        %v1347 = vadd.f32 %v1309, %v1166
        %v1348 = vadd.f32 %v1314, %v1167
        %v1349 = vadd.f32 %v1319, %v1168
        %v1350 = vadd.f32 %v1324, %v1169
        %v1351 = vadd.f32 %v1329, %v1170
        %v1352 = vadd.f32 %v1334, %v1171
        %v1353 = vxor.u32 %v1337, 2147483648
        %v1354 = vxor.u32 %v1338, 2147483648
        %v1355 = vxor.u32 %v1339, 2147483648
        %v1356 = vxor.u32 %v1340, 2147483648
        %v1357 = vxor.u32 %v1341, 2147483648
        %v1358 = vxor.u32 %v1342, 2147483648
        %v1359 = vxor.u32 %v1343, 2147483648
        %v1360 = vxor.u32 %v1344, 2147483648
        %v1361 = vxor.u32 %v1345, 2147483648
        %v1362 = vxor.u32 %v1346, 2147483648
        %v1363 = vxor.u32 %v1347, 2147483648
        %v1364 = vxor.u32 %v1348, 2147483648
        %v1365 = vxor.u32 %v1349, 2147483648
        %v1366 = vxor.u32 %v1350, 2147483648
        %v1367 = vxor.u32 %v1351, 2147483648
        %v1368 = vxor.u32 %v1352, 2147483648
        %v1369 = vmul.f32 %v1353, 1.442695
        %v1370 = vpow.pop %v1369
        %v1371 = vmul.f32 %v1354, 1.442695
        %v1372 = vpow.pop %v1371
        %v1373 = vmul.f32 %v1355, 1.442695
        %v1374 = vpow.pop %v1373
        %v1375 = vmul.f32 %v1356, 1.442695
        %v1376 = vpow.pop %v1375
        %v1377 = vmul.f32 %v1357, 1.442695
        %v1378 = vpow.pop %v1377
        %v1379 = vmul.f32 %v1358, 1.442695
        %v1380 = vpow.pop %v1379
        %v1381 = vmul.f32 %v1359, 1.442695
        %v1382 = vpow.pop %v1381
        %v1383 = vmul.f32 %v1360, 1.442695
        %v1384 = vpow.pop %v1383
        %v1385 = vmul.f32 %v1361, 1.442695
        %v1386 = vpow.pop %v1385
        %v1387 = vmul.f32 %v1362, 1.442695
        %v1388 = vpow.pop %v1387
        %v1389 = vmul.f32 %v1363, 1.442695
        %v1390 = vpow.pop %v1389
        %v1391 = vmul.f32 %v1364, 1.442695
        %v1392 = vpow.pop %v1391
        %v1393 = vmul.f32 %v1365, 1.442695
        %v1394 = vpow.pop %v1393
        %v1395 = vmul.f32 %v1366, 1.442695
        %v1396 = vpow.pop %v1395
        %v1397 = vmul.f32 %v1367, 1.442695
        %v1398 = vpow.pop %v1397
        %v1399 = vmul.f32 %v1368, 1.442695
        %v1400 = vpow.pop %v1399
        %v1401 = vadd.f32 %v1370, 1.0
        %v1402 = vadd.f32 %v1372, 1.0
        %v1403 = vadd.f32 %v1374, 1.0
        %v1404 = vadd.f32 %v1376, 1.0
        %v1405 = vadd.f32 %v1378, 1.0
        %v1406 = vadd.f32 %v1380, 1.0
        %v1407 = vadd.f32 %v1382, 1.0
        %v1408 = vadd.f32 %v1384, 1.0
        %v1409 = vadd.f32 %v1386, 1.0
        %v1410 = vadd.f32 %v1388, 1.0
        %v1411 = vadd.f32 %v1390, 1.0
        %v1412 = vadd.f32 %v1392, 1.0
        %v1413 = vadd.f32 %v1394, 1.0
        %v1414 = vadd.f32 %v1396, 1.0
        %v1415 = vadd.f32 %v1398, 1.0
        %v1416 = vadd.f32 %v1400, 1.0
        %v1417 = vrcp.pop %v1401
        %v1418 = vmul.f32 1.0, %v1417
        %v1419 = vrcp.pop %v1402
        %v1420 = vmul.f32 1.0, %v1419
        %v1421 = vrcp.pop %v1403
        %v1422 = vmul.f32 1.0, %v1421
        %v1423 = vrcp.pop %v1404
        %v1424 = vmul.f32 1.0, %v1423
        %v1425 = vrcp.pop %v1405
        %v1426 = vmul.f32 1.0, %v1425
        %v1427 = vrcp.pop %v1406
        %v1428 = vmul.f32 1.0, %v1427
        %v1429 = vrcp.pop %v1407
        %v1430 = vmul.f32 1.0, %v1429
        %v1431 = vrcp.pop %v1408
        %v1432 = vmul.f32 1.0, %v1431
        %v1433 = vrcp.pop %v1409
        %v1434 = vmul.f32 1.0, %v1433
        %v1435 = vrcp.pop %v1410
        %v1436 = vmul.f32 1.0, %v1435
        %v1437 = vrcp.pop %v1411
        %v1438 = vmul.f32 1.0, %v1437
        %v1439 = vrcp.pop %v1412
        %v1440 = vmul.f32 1.0, %v1439
        %v1441 = vrcp.pop %v1413
        %v1442 = vmul.f32 1.0, %v1441
        %v1443 = vrcp.pop %v1414
        %v1444 = vmul.f32 1.0, %v1443
        %v1445 = vrcp.pop %v1415
        %v1446 = vmul.f32 1.0, %v1445
        %v1447 = vrcp.pop %v1416
        %v1448 = vmul.f32 1.0, %v1447
        %v1449 = vmul.f32 %v1337, %v1418
        %v1450 = vmul.f32 %v1338, %v1420
        %v1451 = vmul.f32 %v1339, %v1422
        %v1452 = vmul.f32 %v1340, %v1424
        %v1453 = vmul.f32 %v1341, %v1426
        %v1454 = vmul.f32 %v1342, %v1428
        %v1455 = vmul.f32 %v1343, %v1430
        %v1456 = vmul.f32 %v1344, %v1432
        %v1457 = vmul.f32 %v1345, %v1434
        %v1458 = vmul.f32 %v1346, %v1436
        %v1459 = vmul.f32 %v1347, %v1438
        %v1460 = vmul.f32 %v1348, %v1440
        %v1461 = vmul.f32 %v1349, %v1442
        %v1462 = vmul.f32 %v1350, %v1444
        %v1463 = vmul.f32 %v1351, %v1446
        %v1464 = vmul.f32 %v1352, %v1448
        %1465 = vadd.xlane.f32.xlu0 %v1449
        %v1466 = vpop.xlane.xlu0 %1465
        %1467 = vadd.xlane.f32.xlu0 %v1450
        %v1468 = vpop.xlane.xlu0 %1467
        %1469 = vadd.xlane.f32.xlu0 %v1451
        %v1470 = vpop.xlane.xlu0 %1469
        %1471 = vadd.xlane.f32.xlu0 %v1452
        %v1472 = vpop.xlane.xlu0 %1471
        %1473 = vadd.xlane.f32.xlu0 %v1453
        %v1474 = vpop.xlane.xlu0 %1473
        %1475 = vadd.xlane.f32.xlu0 %v1454
        %v1476 = vpop.xlane.xlu0 %1475
        %1477 = vadd.xlane.f32.xlu0 %v1455
        %v1478 = vpop.xlane.xlu0 %1477
        %1479 = vadd.xlane.f32.xlu0 %v1456
        %v1480 = vpop.xlane.xlu0 %1479
        %1481 = vadd.xlane.f32.xlu0 %v1457
        %v1482 = vpop.xlane.xlu0 %1481
        %1483 = vadd.xlane.f32.xlu0 %v1458
        %v1484 = vpop.xlane.xlu0 %1483
        %1485 = vadd.xlane.f32.xlu0 %v1459
        %v1486 = vpop.xlane.xlu0 %1485
        %1487 = vadd.xlane.f32.xlu0 %v1460
        %v1488 = vpop.xlane.xlu0 %1487
        %1489 = vadd.xlane.f32.xlu0 %v1461
        %v1490 = vpop.xlane.xlu0 %1489
        %1491 = vadd.xlane.f32.xlu0 %v1462
        %v1492 = vpop.xlane.xlu0 %1491
        %1493 = vadd.xlane.f32.xlu0 %v1463
        %v1494 = vpop.xlane.xlu0 %1493
        %1495 = vadd.xlane.f32.xlu0 %v1464
        %v1496 = vpop.xlane.xlu0 %1495
        %v1497 = vmul.f32 %v1466, 0.03125
        %v1498 = vmul.f32 %v1468, 0.03125
        %v1499 = vmul.f32 %v1470, 0.03125
        %v1500 = vmul.f32 %v1472, 0.03125
        %v1501 = vmul.f32 %v1474, 0.03125
        %v1502 = vmul.f32 %v1476, 0.03125
        %v1503 = vmul.f32 %v1478, 0.03125
        %v1504 = vmul.f32 %v1480, 0.03125
        %v1505 = vmul.f32 %v1482, 0.03125
        %v1506 = vmul.f32 %v1484, 0.03125
        %v1507 = vmul.f32 %v1486, 0.03125
        %v1508 = vmul.f32 %v1488, 0.03125
        %v1509 = vmul.f32 %v1490, 0.03125
        %v1510 = vmul.f32 %v1492, 0.03125
        %v1511 = vmul.f32 %v1494, 0.03125
        %v1512 = vmul.f32 %v1496, 0.03125
        %v1513 = vmul.f32 %v1449, %v1449
        %v1514 = vmul.f32 %v1450, %v1450
        %v1515 = vmul.f32 %v1451, %v1451
        %v1516 = vmul.f32 %v1452, %v1452
        %v1517 = vmul.f32 %v1453, %v1453
        %v1518 = vmul.f32 %v1454, %v1454
        %v1519 = vmul.f32 %v1455, %v1455
        %v1520 = vmul.f32 %v1456, %v1456
        %v1521 = vmul.f32 %v1457, %v1457
        %v1522 = vmul.f32 %v1458, %v1458
        %v1523 = vmul.f32 %v1459, %v1459
        %v1524 = vmul.f32 %v1460, %v1460
        %v1525 = vmul.f32 %v1461, %v1461
        %v1526 = vmul.f32 %v1462, %v1462
        %v1527 = vmul.f32 %v1463, %v1463
        %v1528 = vmul.f32 %v1464, %v1464
        %1529 = vadd.xlane.f32.xlu0 %v1513
        %v1530 = vpop.xlane.xlu0 %1529
        %1531 = vadd.xlane.f32.xlu0 %v1514
        %v1532 = vpop.xlane.xlu0 %1531
        %1533 = vadd.xlane.f32.xlu0 %v1515
        %v1534 = vpop.xlane.xlu0 %1533
        %1535 = vadd.xlane.f32.xlu0 %v1516
        %v1536 = vpop.xlane.xlu0 %1535
        %1537 = vadd.xlane.f32.xlu0 %v1517
        %v1538 = vpop.xlane.xlu0 %1537
        %1539 = vadd.xlane.f32.xlu0 %v1518
        %v1540 = vpop.xlane.xlu0 %1539
        %1541 = vadd.xlane.f32.xlu0 %v1519
        %v1542 = vpop.xlane.xlu0 %1541
        %1543 = vadd.xlane.f32.xlu0 %v1520
        %v1544 = vpop.xlane.xlu0 %1543
        %1545 = vadd.xlane.f32.xlu0 %v1521
        %v1546 = vpop.xlane.xlu0 %1545
        %1547 = vadd.xlane.f32.xlu0 %v1522
        %v1548 = vpop.xlane.xlu0 %1547
        %1549 = vadd.xlane.f32.xlu0 %v1523
        %v1550 = vpop.xlane.xlu0 %1549
        %1551 = vadd.xlane.f32.xlu0 %v1524
        %v1552 = vpop.xlane.xlu0 %1551
        %1553 = vadd.xlane.f32.xlu0 %v1525
        %v1554 = vpop.xlane.xlu0 %1553
        %1555 = vadd.xlane.f32.xlu0 %v1526
        %v1556 = vpop.xlane.xlu0 %1555
        %1557 = vadd.xlane.f32.xlu0 %v1527
        %v1558 = vpop.xlane.xlu0 %1557
        %1559 = vadd.xlane.f32.xlu0 %v1528
        %v1560 = vpop.xlane.xlu0 %1559
        %v1561 = vmul.f32 %v1530, 0.03125
        %v1562 = vmul.f32 %v1532, 0.03125
        %v1563 = vmul.f32 %v1534, 0.03125
        %v1564 = vmul.f32 %v1536, 0.03125
        %v1565 = vmul.f32 %v1538, 0.03125
        %v1566 = vmul.f32 %v1540, 0.03125
        %v1567 = vmul.f32 %v1542, 0.03125
        %v1568 = vmul.f32 %v1544, 0.03125
        %v1569 = vmul.f32 %v1546, 0.03125
        %v1570 = vmul.f32 %v1548, 0.03125
        %v1571 = vmul.f32 %v1550, 0.03125
        %v1572 = vmul.f32 %v1552, 0.03125
        %v1573 = vmul.f32 %v1554, 0.03125
        %v1574 = vmul.f32 %v1556, 0.03125
        %v1575 = vmul.f32 %v1558, 0.03125
        %v1576 = vmul.f32 %v1560, 0.03125
        %v1577 = vmul.f32 %v1497, %v1497
        %v1578 = vmul.f32 %v1498, %v1498
        %v1579 = vmul.f32 %v1499, %v1499
        %v1580 = vmul.f32 %v1500, %v1500
        %v1581 = vmul.f32 %v1501, %v1501
        %v1582 = vmul.f32 %v1502, %v1502
        %v1583 = vmul.f32 %v1503, %v1503
        %v1584 = vmul.f32 %v1504, %v1504
        %v1585 = vmul.f32 %v1505, %v1505
        %v1586 = vmul.f32 %v1506, %v1506
        %v1587 = vmul.f32 %v1507, %v1507
        %v1588 = vmul.f32 %v1508, %v1508
        %v1589 = vmul.f32 %v1509, %v1509
        %v1590 = vmul.f32 %v1510, %v1510
        %v1591 = vmul.f32 %v1511, %v1511
        %v1592 = vmul.f32 %v1512, %v1512
        %v1593 = vsub.f32 %v1561, %v1577
        %v1594 = vsub.f32 %v1562, %v1578
        %v1595 = vsub.f32 %v1563, %v1579
        %v1596 = vsub.f32 %v1564, %v1580
        %v1597 = vsub.f32 %v1565, %v1581
        %v1598 = vsub.f32 %v1566, %v1582
        %v1599 = vsub.f32 %v1567, %v1583
        %v1600 = vsub.f32 %v1568, %v1584
        %v1601 = vsub.f32 %v1569, %v1585
        %v1602 = vsub.f32 %v1570, %v1586
        %v1603 = vsub.f32 %v1571, %v1587
        %v1604 = vsub.f32 %v1572, %v1588
        %v1605 = vsub.f32 %v1573, %v1589
        %v1606 = vsub.f32 %v1574, %v1590
        %v1607 = vsub.f32 %v1575, %v1591
        %v1608 = vsub.f32 %v1576, %v1592
        %v1609 = vsub.f32 %v1449, %v1497
        %v1610 = vsub.f32 %v1450, %v1498
        %v1611 = vsub.f32 %v1451, %v1499
        %v1612 = vsub.f32 %v1452, %v1500
        %v1613 = vsub.f32 %v1453, %v1501
        %v1614 = vsub.f32 %v1454, %v1502
        %v1615 = vsub.f32 %v1455, %v1503
        %v1616 = vsub.f32 %v1456, %v1504
        %v1617 = vsub.f32 %v1457, %v1505
        %v1618 = vsub.f32 %v1458, %v1506
        %v1619 = vsub.f32 %v1459, %v1507
        %v1620 = vsub.f32 %v1460, %v1508
        %v1621 = vsub.f32 %v1461, %v1509
        %v1622 = vsub.f32 %v1462, %v1510
        %v1623 = vsub.f32 %v1463, %v1511
        %v1624 = vsub.f32 %v1464, %v1512
        %v1625 = vadd.f32 %v1593, 0.1
        %v1626 = vadd.f32 %v1594, 0.1
        %v1627 = vadd.f32 %v1595, 0.1
        %v1628 = vadd.f32 %v1596, 0.1
        %v1629 = vadd.f32 %v1597, 0.1
        %v1630 = vadd.f32 %v1598, 0.1
        %v1631 = vadd.f32 %v1599, 0.1
        %v1632 = vadd.f32 %v1600, 0.1
        %v1633 = vadd.f32 %v1601, 0.1
        %v1634 = vadd.f32 %v1602, 0.1
        %v1635 = vadd.f32 %v1603, 0.1
        %v1636 = vadd.f32 %v1604, 0.1
        %v1637 = vadd.f32 %v1605, 0.1
        %v1638 = vadd.f32 %v1606, 0.1
        %v1639 = vadd.f32 %v1607, 0.1
        %v1640 = vadd.f32 %v1608, 0.1
        %v1641 = vrsqrt.pop %v1625
        %v1642 = vrsqrt.pop %v1626
        %v1643 = vrsqrt.pop %v1627
        %v1644 = vrsqrt.pop %v1628
        %v1645 = vrsqrt.pop %v1629
        %v1646 = vrsqrt.pop %v1630
        %v1647 = vrsqrt.pop %v1631
        %v1648 = vrsqrt.pop %v1632
        %v1649 = vrsqrt.pop %v1633
        %v1650 = vrsqrt.pop %v1634
        %v1651 = vrsqrt.pop %v1635
        %v1652 = vrsqrt.pop %v1636
        %v1653 = vrsqrt.pop %v1637
        %v1654 = vrsqrt.pop %v1638
        %v1655 = vrsqrt.pop %v1639
        %v1656 = vrsqrt.pop %v1640
        %v1657 = vmul.f32 %v1609, %v1641
        %v1658 = vmul.f32 %v1610, %v1642
        %v1659 = vmul.f32 %v1611, %v1643
        %v1660 = vmul.f32 %v1612, %v1644
        %v1661 = vmul.f32 %v1613, %v1645
        %v1662 = vmul.f32 %v1614, %v1646
        %v1663 = vmul.f32 %v1615, %v1647
        %v1664 = vmul.f32 %v1616, %v1648
        %v1665 = vmul.f32 %v1617, %v1649
        %v1666 = vmul.f32 %v1618, %v1650
        %v1667 = vmul.f32 %v1619, %v1651
        %v1668 = vmul.f32 %v1620, %v1652
        %v1669 = vmul.f32 %v1621, %v1653
        %v1670 = vmul.f32 %v1622, %v1654
        %v1671 = vmul.f32 %v1623, %v1655
        %v1672 = vmul.f32 %v1624, %v1656
        %v1673 = vlaneseq
        %v1674 = vshrl.u32 %v1673, 7
        %v1675 = vsub.s32 0, %v1674
        %v1676 = vrot.slane %v462, %v1675
        %v1677 = vmul.f32 %v1657, %v1676
        %v1678 = vmul.f32 %v1658, %v1676
        %v1679 = vmul.f32 %v1659, %v1676
        %v1680 = vmul.f32 %v1660, %v1676
        %v1681 = vmul.f32 %v1661, %v1676
        %v1682 = vmul.f32 %v1662, %v1676
        %v1683 = vmul.f32 %v1663, %v1676
        %v1684 = vmul.f32 %v1664, %v1676
        %v1685 = vmul.f32 %v1665, %v1676
        %v1686 = vmul.f32 %v1666, %v1676
        %v1687 = vmul.f32 %v1667, %v1676
        %v1688 = vmul.f32 %v1668, %v1676
        %v1689 = vmul.f32 %v1669, %v1676
        %v1690 = vmul.f32 %v1670, %v1676
        %v1691 = vmul.f32 %v1671, %v1676
        %v1692 = vmul.f32 %v1672, %v1676
        %v1693 = vlaneseq
        %v1694 = vshrl.u32 %v1693, 7
        %v1695 = vsub.s32 0, %v1694
        %v1696 = vrot.slane %v467, %v1695
        %v1697 = vadd.f32 %v1677, %v1696
        %v1698 = vadd.f32 %v1678, %v1696
        %v1699 = vadd.f32 %v1679, %v1696
        %v1700 = vadd.f32 %v1680, %v1696
        %v1701 = vadd.f32 %v1681, %v1696
        %v1702 = vadd.f32 %v1682, %v1696
        %v1703 = vadd.f32 %v1683, %v1696
        %v1704 = vadd.f32 %v1684, %v1696
        %v1705 = vadd.f32 %v1685, %v1696
        %v1706 = vadd.f32 %v1686, %v1696
        %v1707 = vadd.f32 %v1687, %v1696
        %v1708 = vadd.f32 %v1688, %v1696
        %v1709 = vadd.f32 %v1689, %v1696
        %v1710 = vadd.f32 %v1690, %v1696
        %v1711 = vadd.f32 %v1691, %v1696
        %v1712 = vadd.f32 %v1692, %v1696
        %v1713 = vadd.f32 %v1156, %v1697
        %v1714 = vadd.f32 %v1157, %v1698
        %v1715 = vadd.f32 %v1158, %v1699
        %v1716 = vadd.f32 %v1159, %v1700
        %v1717 = vadd.f32 %v1160, %v1701
        %v1718 = vadd.f32 %v1161, %v1702
        %v1719 = vadd.f32 %v1162, %v1703
        %v1720 = vadd.f32 %v1163, %v1704
        %v1721 = vadd.f32 %v1164, %v1705
        %v1722 = vadd.f32 %v1165, %v1706
        %v1723 = vadd.f32 %v1166, %v1707
        %v1724 = vadd.f32 %v1167, %v1708
        %v1725 = vadd.f32 %v1168, %v1709
        %v1726 = vadd.f32 %v1169, %v1710
        %v1727 = vadd.f32 %v1170, %v1711
        %v1728 = vadd.f32 %v1171, %v1712
        %v1729 = vld [vmem:[#allocation5] sm:$0xff]
        %v1730 = vld [vmem:[#allocation5 + $0x8] sm:$0xff]
        %v1731 = vld [vmem:[#allocation5 + $0x10] sm:$0xff]
        %v1732 = vld [vmem:[#allocation5 + $0x18] sm:$0xff]
        %v1733 = vld [vmem:[#allocation5 + $0x20] sm:$0xff]
        %v1734 = vld [vmem:[#allocation5 + $0x28] sm:$0xff]
        %v1735 = vld [vmem:[#allocation5 + $0x30] sm:$0xff]
        %v1736 = vld [vmem:[#allocation5 + $0x38] sm:$0xff]
        %v1737 = vld [vmem:[#allocation5 + $0x40] sm:$0xff]
        %v1738 = vld [vmem:[#allocation5 + $0x48] sm:$0xff]
        %v1739 = vld [vmem:[#allocation5 + $0x50] sm:$0xff]
        %v1740 = vld [vmem:[#allocation5 + $0x58] sm:$0xff]
        %v1741 = vld [vmem:[#allocation5 + $0x60] sm:$0xff]
        %v1742 = vld [vmem:[#allocation5 + $0x68] sm:$0xff]
        %v1743 = vld [vmem:[#allocation5 + $0x70] sm:$0xff]
        %v1744 = vld [vmem:[#allocation5 + $0x78] sm:$0xff]
        %v1745 = vlaneseq
        %v1746 = vshrl.u32 %v1745, 7
        %v1747 = vsub.s32 0, %v1746
        %v1748 = vrot.slane %v458, %v1747
        %1749 = vmatprep.subr.mxu0 0.0
        %1750 = vmatpush1.msra.mxu0 %v1729
        %1751 = vmatprep.subr.mxu0 0.0
        %1752 = vmatpush1.msra.mxu0 %v1730
        %1753 = vmatprep.subr.mxu0 0.0
        %1754 = vmatpush1.msra.mxu0 %v1731
        %1755 = vmatprep.subr.mxu0 0.0
        %1756 = vmatpush1.msra.mxu0 %v1732
        %1757 = vmatprep.subr.mxu0 0.0
        %1758 = vmatpush1.msra.mxu0 %v1733
        %1759 = vmatprep.subr.mxu0 0.0
        %1760 = vmatpush1.msra.mxu0 %v1734
        %1761 = vmatprep.subr.mxu0 0.0
        %1762 = vmatpush1.msra.mxu0 %v1735
        %1763 = vmatprep.subr.mxu0 0.0
        %1764 = vmatpush1.msra.mxu0 %v1736
        %1765 = vmatprep.subr.mxu0 0.0
        %1766 = vmatpush1.msra.mxu0 %v1737
        %1767 = vmatprep.subr.mxu0 0.0
        %1768 = vmatpush1.msra.mxu0 %v1738
        %1769 = vmatprep.subr.mxu0 0.0
        %1770 = vmatpush1.msra.mxu0 %v1739
        %1771 = vmatprep.subr.mxu0 0.0
        %1772 = vmatpush1.msra.mxu0 %v1740
        %1773 = vmatprep.subr.mxu0 0.0
        %1774 = vmatpush1.msra.mxu0 %v1741
        %1775 = vmatprep.subr.mxu0 0.0
        %1776 = vmatpush1.msra.mxu0 %v1742
        %1777 = vmatprep.subr.mxu0 0.0
        %1778 = vmatpush1.msra.mxu0 %v1743
        %1779 = vmatprep.subr.mxu0 0.0
        %1780 = vmatpush1.msra.mxu0 %v1744
        %1781 = vmatprep.subr.mxu0 0.0
        %1782 = vmatpush1.msra.mxu0 0.0
        %1783 = vmatprep.subr.mxu0 0.0
        %1784 = vmatpush1.msra.mxu0 0.0
        %1785 = vmatprep.subr.mxu0 0.0
        %1786 = vmatpush1.msra.mxu0 0.0
        %1787 = vmatprep.subr.mxu0 0.0
        %1788 = vmatpush1.msra.mxu0 0.0
        %1789 = vmatprep.subr.mxu0 0.0
        %1790 = vmatpush1.msra.mxu0 0.0
        %1791 = vmatprep.subr.mxu0 0.0
        %1792 = vmatpush1.msra.mxu0 0.0
        %1793 = vmatprep.subr.mxu0 0.0
        %1794 = vmatpush1.msra.mxu0 0.0
        %1795 = vmatprep.subr.mxu0 0.0
        %1796 = vmatpush1.msra.mxu0 0.0
        %1797 = vmatprep.subr.mxu0 0.0
        %1798 = vmatpush1.msra.mxu0 0.0
        %1799 = vmatprep.subr.mxu0 0.0
        %1800 = vmatpush1.msra.mxu0 0.0
        %1801 = vmatprep.subr.mxu0 0.0
        %1802 = vmatpush1.msra.mxu0 0.0
        %1803 = vmatprep.subr.mxu0 0.0
        %1804 = vmatpush1.msra.mxu0 0.0
        %1805 = vmatprep.subr.mxu0 0.0
        %1806 = vmatpush1.msra.mxu0 0.0
        %1807 = vmatprep.subr.mxu0 0.0
        %1808 = vmatpush1.msra.mxu0 0.0
        %1809 = vmatprep.subr.mxu0 0.0
        %1810 = vmatpush1.msra.mxu0 0.0
        %1811 = vmatprep.subr.mxu0 0.0
        %1812 = vmatpush1.msra.mxu0 0.0
        %1813 = vmatprep.mubr.f32.mxu0 0.0
        %1814 = vmatmul.mubr.f32.gmra.mrb[0].mxu0 %v1697
        %v1815 = vpop.f32.mrb[0].mxu0
        %v1816 = vadd.f32 %v1748, %v1815
        %v1817 = vpop.f32.mrb[0].mxu0
        %1818 = vmatprep.mubr.f32.mxu0 0.0
        %1819 = vmatmul.mubr.f32.gmra.mrb[0].mxu0 %v1698
        %v1820 = vpop.f32.mrb[0].mxu0
        %v1821 = vadd.f32 %v1748, %v1820
        %v1822 = vpop.f32.mrb[0].mxu0
        %1823 = vmatprep.mubr.f32.mxu0 0.0
        %1824 = vmatmul.mubr.f32.gmra.mrb[0].mxu0 %v1699
        %v1825 = vpop.f32.mrb[0].mxu0
        %v1826 = vadd.f32 %v1748, %v1825
        %v1827 = vpop.f32.mrb[0].mxu0
        %1828 = vmatprep.mubr.f32.mxu0 0.0
        %1829 = vmatmul.mubr.f32.gmra.mrb[0].mxu0 %v1700
        %v1830 = vpop.f32.mrb[0].mxu0
        %v1831 = vadd.f32 %v1748, %v1830
        %v1832 = vpop.f32.mrb[0].mxu0
        %1833 = vmatprep.mubr.f32.mxu0 0.0
        %1834 = vmatmul.mubr.f32.gmra.mrb[0].mxu0 %v1701
        %v1835 = vpop.f32.mrb[0].mxu0
        %v1836 = vadd.f32 %v1748, %v1835
        %v1837 = vpop.f32.mrb[0].mxu0
        %1838 = vmatprep.mubr.f32.mxu0 0.0
        %1839 = vmatmul.mubr.f32.gmra.mrb[0].mxu0 %v1702
        %v1840 = vpop.f32.mrb[0].mxu0
        %v1841 = vadd.f32 %v1748, %v1840
        %v1842 = vpop.f32.mrb[0].mxu0
        %1843 = vmatprep.mubr.f32.mxu0 0.0
        %1844 = vmatmul.mubr.f32.gmra.mrb[0].mxu0 %v1703
        %v1845 = vpop.f32.mrb[0].mxu0
        %v1846 = vadd.f32 %v1748, %v1845
        %v1847 = vpop.f32.mrb[0].mxu0
        %1848 = vmatprep.mubr.f32.mxu0 0.0
        %1849 = vmatmul.mubr.f32.gmra.mrb[0].mxu0 %v1704
        %v1850 = vpop.f32.mrb[0].mxu0
        %v1851 = vadd.f32 %v1748, %v1850
        %v1852 = vpop.f32.mrb[0].mxu0
        %1853 = vmatprep.mubr.f32.mxu0 0.0
        %1854 = vmatmul.mubr.f32.gmra.mrb[0].mxu0 %v1705
        %v1855 = vpop.f32.mrb[0].mxu0
        %v1856 = vadd.f32 %v1748, %v1855
        %v1857 = vpop.f32.mrb[0].mxu0
        %1858 = vmatprep.mubr.f32.mxu0 0.0
        %1859 = vmatmul.mubr.f32.gmra.mrb[0].mxu0 %v1706
        %v1860 = vpop.f32.mrb[0].mxu0
        %v1861 = vadd.f32 %v1748, %v1860
        %v1862 = vpop.f32.mrb[0].mxu0
        %1863 = vmatprep.mubr.f32.mxu0 0.0
        %1864 = vmatmul.mubr.f32.gmra.mrb[0].mxu0 %v1707
        %v1865 = vpop.f32.mrb[0].mxu0
        %v1866 = vadd.f32 %v1748, %v1865
        %v1867 = vpop.f32.mrb[0].mxu0
        %1868 = vmatprep.mubr.f32.mxu0 0.0
        %1869 = vmatmul.mubr.f32.gmra.mrb[0].mxu0 %v1708
        %v1870 = vpop.f32.mrb[0].mxu0
        %v1871 = vadd.f32 %v1748, %v1870
        %v1872 = vpop.f32.mrb[0].mxu0
        %1873 = vmatprep.mubr.f32.mxu0 0.0
        %1874 = vmatmul.mubr.f32.gmra.mrb[0].mxu0 %v1709
        %v1875 = vpop.f32.mrb[0].mxu0
        %v1876 = vadd.f32 %v1748, %v1875
        %v1877 = vpop.f32.mrb[0].mxu0
        %1878 = vmatprep.mubr.f32.mxu0 0.0
        %1879 = vmatmul.mubr.f32.gmra.mrb[0].mxu0 %v1710
        %v1880 = vpop.f32.mrb[0].mxu0
        %v1881 = vadd.f32 %v1748, %v1880
        %v1882 = vpop.f32.mrb[0].mxu0
        %1883 = vmatprep.mubr.f32.mxu0 0.0
        %1884 = vmatmul.mubr.f32.gmra.mrb[0].mxu0 %v1711
        %v1885 = vpop.f32.mrb[0].mxu0
        %v1886 = vadd.f32 %v1748, %v1885
        %v1887 = vpop.f32.mrb[0].mxu0
        %1888 = vmatprep.mubr.f32.mxu0 0.0
        %1889 = vmatmul.mubr.f32.gmra.mrb[0].mxu0 %v1712
        %v1890 = vpop.f32.mrb[0].mxu0
        %v1891 = vadd.f32 %v1748, %v1890
        %v1892 = vpop.f32.mrb[0].mxu0
        %1893 = vdwg.mxu0
        %v1894 = vadd.f32 %v1816, %v1713
        %v1895 = vadd.f32 %v1821, %v1714
        %v1896 = vadd.f32 %v1826, %v1715
        %v1897 = vadd.f32 %v1831, %v1716
        %v1898 = vadd.f32 %v1836, %v1717
        %v1899 = vadd.f32 %v1841, %v1718
        %v1900 = vadd.f32 %v1846, %v1719
        %v1901 = vadd.f32 %v1851, %v1720
        %v1902 = vadd.f32 %v1856, %v1721
        %v1903 = vadd.f32 %v1861, %v1722
        %v1904 = vadd.f32 %v1866, %v1723
        %v1905 = vadd.f32 %v1871, %v1724
        %v1906 = vadd.f32 %v1876, %v1725
        %v1907 = vadd.f32 %v1881, %v1726
        %v1908 = vadd.f32 %v1886, %v1727
        %v1909 = vadd.f32 %v1891, %v1728
        %v1910 = vxor.u32 %v1894, 2147483648
        %v1911 = vxor.u32 %v1895, 2147483648
        %v1912 = vxor.u32 %v1896, 2147483648
        %v1913 = vxor.u32 %v1897, 2147483648
        %v1914 = vxor.u32 %v1898, 2147483648
        %v1915 = vxor.u32 %v1899, 2147483648
        %v1916 = vxor.u32 %v1900, 2147483648
        %v1917 = vxor.u32 %v1901, 2147483648
        %v1918 = vxor.u32 %v1902, 2147483648
        %v1919 = vxor.u32 %v1903, 2147483648
        %v1920 = vxor.u32 %v1904, 2147483648
        %v1921 = vxor.u32 %v1905, 2147483648
        %v1922 = vxor.u32 %v1906, 2147483648
        %v1923 = vxor.u32 %v1907, 2147483648
        %v1924 = vxor.u32 %v1908, 2147483648
        %v1925 = vxor.u32 %v1909, 2147483648
        %v1926 = vmul.f32 %v1910, 1.442695
        %v1927 = vpow.pop %v1926
        %v1928 = vmul.f32 %v1911, 1.442695
        %v1929 = vpow.pop %v1928
        %v1930 = vmul.f32 %v1912, 1.442695
        %v1931 = vpow.pop %v1930
        %v1932 = vmul.f32 %v1913, 1.442695
        %v1933 = vpow.pop %v1932
        %v1934 = vmul.f32 %v1914, 1.442695
        %v1935 = vpow.pop %v1934
        %v1936 = vmul.f32 %v1915, 1.442695
        %v1937 = vpow.pop %v1936
        %v1938 = vmul.f32 %v1916, 1.442695
        %v1939 = vpow.pop %v1938
        %v1940 = vmul.f32 %v1917, 1.442695
        %v1941 = vpow.pop %v1940
        %v1942 = vmul.f32 %v1918, 1.442695
        %v1943 = vpow.pop %v1942
        %v1944 = vmul.f32 %v1919, 1.442695
        %v1945 = vpow.pop %v1944
        %v1946 = vmul.f32 %v1920, 1.442695
        %v1947 = vpow.pop %v1946
        %v1948 = vmul.f32 %v1921, 1.442695
        %v1949 = vpow.pop %v1948
        %v1950 = vmul.f32 %v1922, 1.442695
        %v1951 = vpow.pop %v1950
        %v1952 = vmul.f32 %v1923, 1.442695
        %v1953 = vpow.pop %v1952
        %v1954 = vmul.f32 %v1924, 1.442695
        %v1955 = vpow.pop %v1954
        %v1956 = vmul.f32 %v1925, 1.442695
        %v1957 = vpow.pop %v1956
        %v1958 = vadd.f32 %v1927, 1.0
        %v1959 = vadd.f32 %v1929, 1.0
        %v1960 = vadd.f32 %v1931, 1.0
        %v1961 = vadd.f32 %v1933, 1.0
        %v1962 = vadd.f32 %v1935, 1.0
        %v1963 = vadd.f32 %v1937, 1.0
        %v1964 = vadd.f32 %v1939, 1.0
        %v1965 = vadd.f32 %v1941, 1.0
        %v1966 = vadd.f32 %v1943, 1.0
        %v1967 = vadd.f32 %v1945, 1.0
        %v1968 = vadd.f32 %v1947, 1.0
        %v1969 = vadd.f32 %v1949, 1.0
        %v1970 = vadd.f32 %v1951, 1.0
        %v1971 = vadd.f32 %v1953, 1.0
        %v1972 = vadd.f32 %v1955, 1.0
        %v1973 = vadd.f32 %v1957, 1.0
        %v1974 = vrcp.pop %v1958
        %v1975 = vmul.f32 1.0, %v1974
        %v1976 = vrcp.pop %v1959
        %v1977 = vmul.f32 1.0, %v1976
        %v1978 = vrcp.pop %v1960
        %v1979 = vmul.f32 1.0, %v1978
        %v1980 = vrcp.pop %v1961
        %v1981 = vmul.f32 1.0, %v1980
        %v1982 = vrcp.pop %v1962
        %v1983 = vmul.f32 1.0, %v1982
        %v1984 = vrcp.pop %v1963
        %v1985 = vmul.f32 1.0, %v1984
        %v1986 = vrcp.pop %v1964
        %v1987 = vmul.f32 1.0, %v1986
        %v1988 = vrcp.pop %v1965
        %v1989 = vmul.f32 1.0, %v1988
        %v1990 = vrcp.pop %v1966
        %v1991 = vmul.f32 1.0, %v1990
        %v1992 = vrcp.pop %v1967
        %v1993 = vmul.f32 1.0, %v1992
        %v1994 = vrcp.pop %v1968
        %v1995 = vmul.f32 1.0, %v1994
        %v1996 = vrcp.pop %v1969
        %v1997 = vmul.f32 1.0, %v1996
        %v1998 = vrcp.pop %v1970
        %v1999 = vmul.f32 1.0, %v1998
        %v2000 = vrcp.pop %v1971
        %v2001 = vmul.f32 1.0, %v2000
        %v2002 = vrcp.pop %v1972
        %v2003 = vmul.f32 1.0, %v2002
        %v2004 = vrcp.pop %v1973
        %v2005 = vmul.f32 1.0, %v2004
        %v2006 = vmul.f32 %v1894, %v1975
        %v2007 = vmul.f32 %v1895, %v1977
        %v2008 = vmul.f32 %v1896, %v1979
        %v2009 = vmul.f32 %v1897, %v1981
        %v2010 = vmul.f32 %v1898, %v1983
        %v2011 = vmul.f32 %v1899, %v1985
        %v2012 = vmul.f32 %v1900, %v1987
        %v2013 = vmul.f32 %v1901, %v1989
        %v2014 = vmul.f32 %v1902, %v1991
        %v2015 = vmul.f32 %v1903, %v1993
        %v2016 = vmul.f32 %v1904, %v1995
        %v2017 = vmul.f32 %v1905, %v1997
        %v2018 = vmul.f32 %v1906, %v1999
        %v2019 = vmul.f32 %v1907, %v2001
        %v2020 = vmul.f32 %v1908, %v2003
        %v2021 = vmul.f32 %v1909, %v2005
        %2022 = vadd.xlane.f32.xlu0 %v2006
        %v2023 = vpop.xlane.xlu0 %2022
        %2024 = vadd.xlane.f32.xlu0 %v2007
        %v2025 = vpop.xlane.xlu0 %2024
        %2026 = vadd.xlane.f32.xlu0 %v2008
        %v2027 = vpop.xlane.xlu0 %2026
        %2028 = vadd.xlane.f32.xlu0 %v2009
        %v2029 = vpop.xlane.xlu0 %2028
        %2030 = vadd.xlane.f32.xlu0 %v2010
        %v2031 = vpop.xlane.xlu0 %2030
        %2032 = vadd.xlane.f32.xlu0 %v2011
        %v2033 = vpop.xlane.xlu0 %2032
        %2034 = vadd.xlane.f32.xlu0 %v2012
        %v2035 = vpop.xlane.xlu0 %2034
        %2036 = vadd.xlane.f32.xlu0 %v2013
        %v2037 = vpop.xlane.xlu0 %2036
        %2038 = vadd.xlane.f32.xlu0 %v2014
        %v2039 = vpop.xlane.xlu0 %2038
        %2040 = vadd.xlane.f32.xlu0 %v2015
        %v2041 = vpop.xlane.xlu0 %2040
        %2042 = vadd.xlane.f32.xlu0 %v2016
        %v2043 = vpop.xlane.xlu0 %2042
        %2044 = vadd.xlane.f32.xlu0 %v2017
        %v2045 = vpop.xlane.xlu0 %2044
        %2046 = vadd.xlane.f32.xlu0 %v2018
        %v2047 = vpop.xlane.xlu0 %2046
        %2048 = vadd.xlane.f32.xlu0 %v2019
        %v2049 = vpop.xlane.xlu0 %2048
        %2050 = vadd.xlane.f32.xlu0 %v2020
        %v2051 = vpop.xlane.xlu0 %2050
        %2052 = vadd.xlane.f32.xlu0 %v2021
        %v2053 = vpop.xlane.xlu0 %2052
        %v2054 = vmul.f32 %v2023, 0.03125
        %v2055 = vmul.f32 %v2025, 0.03125
        %v2056 = vmul.f32 %v2027, 0.03125
        %v2057 = vmul.f32 %v2029, 0.03125
        %v2058 = vmul.f32 %v2031, 0.03125
        %v2059 = vmul.f32 %v2033, 0.03125
        %v2060 = vmul.f32 %v2035, 0.03125
        %v2061 = vmul.f32 %v2037, 0.03125
        %v2062 = vmul.f32 %v2039, 0.03125
        %v2063 = vmul.f32 %v2041, 0.03125
        %v2064 = vmul.f32 %v2043, 0.03125
        %v2065 = vmul.f32 %v2045, 0.03125
        %v2066 = vmul.f32 %v2047, 0.03125
        %v2067 = vmul.f32 %v2049, 0.03125
        %v2068 = vmul.f32 %v2051, 0.03125
        %v2069 = vmul.f32 %v2053, 0.03125
        %v2070 = vmul.f32 %v2006, %v2006
        %v2071 = vmul.f32 %v2007, %v2007
        %v2072 = vmul.f32 %v2008, %v2008
        %v2073 = vmul.f32 %v2009, %v2009
        %v2074 = vmul.f32 %v2010, %v2010
        %v2075 = vmul.f32 %v2011, %v2011
        %v2076 = vmul.f32 %v2012, %v2012
        %v2077 = vmul.f32 %v2013, %v2013
        %v2078 = vmul.f32 %v2014, %v2014
        %v2079 = vmul.f32 %v2015, %v2015
        %v2080 = vmul.f32 %v2016, %v2016
        %v2081 = vmul.f32 %v2017, %v2017
        %v2082 = vmul.f32 %v2018, %v2018
        %v2083 = vmul.f32 %v2019, %v2019
        %v2084 = vmul.f32 %v2020, %v2020
        %v2085 = vmul.f32 %v2021, %v2021
        %2086 = vadd.xlane.f32.xlu0 %v2070
        %v2087 = vpop.xlane.xlu0 %2086
        %2088 = vadd.xlane.f32.xlu0 %v2071
        %v2089 = vpop.xlane.xlu0 %2088
        %2090 = vadd.xlane.f32.xlu0 %v2072
        %v2091 = vpop.xlane.xlu0 %2090
        %2092 = vadd.xlane.f32.xlu0 %v2073
        %v2093 = vpop.xlane.xlu0 %2092
        %2094 = vadd.xlane.f32.xlu0 %v2074
        %v2095 = vpop.xlane.xlu0 %2094
        %2096 = vadd.xlane.f32.xlu0 %v2075
        %v2097 = vpop.xlane.xlu0 %2096
        %2098 = vadd.xlane.f32.xlu0 %v2076
        %v2099 = vpop.xlane.xlu0 %2098
        %2100 = vadd.xlane.f32.xlu0 %v2077
        %v2101 = vpop.xlane.xlu0 %2100
        %2102 = vadd.xlane.f32.xlu0 %v2078
        %v2103 = vpop.xlane.xlu0 %2102
        %2104 = vadd.xlane.f32.xlu0 %v2079
        %v2105 = vpop.xlane.xlu0 %2104
        %2106 = vadd.xlane.f32.xlu0 %v2080
        %v2107 = vpop.xlane.xlu0 %2106
        %2108 = vadd.xlane.f32.xlu0 %v2081
        %v2109 = vpop.xlane.xlu0 %2108
        %2110 = vadd.xlane.f32.xlu0 %v2082
        %v2111 = vpop.xlane.xlu0 %2110
        %2112 = vadd.xlane.f32.xlu0 %v2083
        %v2113 = vpop.xlane.xlu0 %2112
        %2114 = vadd.xlane.f32.xlu0 %v2084
        %v2115 = vpop.xlane.xlu0 %2114
        %2116 = vadd.xlane.f32.xlu0 %v2085
        %v2117 = vpop.xlane.xlu0 %2116
        %v2118 = vmul.f32 %v2087, 0.03125
        %v2119 = vmul.f32 %v2089, 0.03125
        %v2120 = vmul.f32 %v2091, 0.03125
        %v2121 = vmul.f32 %v2093, 0.03125
        %v2122 = vmul.f32 %v2095, 0.03125
        %v2123 = vmul.f32 %v2097, 0.03125
        %v2124 = vmul.f32 %v2099, 0.03125
        %v2125 = vmul.f32 %v2101, 0.03125
        %v2126 = vmul.f32 %v2103, 0.03125
        %v2127 = vmul.f32 %v2105, 0.03125
        %v2128 = vmul.f32 %v2107, 0.03125
        %v2129 = vmul.f32 %v2109, 0.03125
        %v2130 = vmul.f32 %v2111, 0.03125
        %v2131 = vmul.f32 %v2113, 0.03125
        %v2132 = vmul.f32 %v2115, 0.03125
        %v2133 = vmul.f32 %v2117, 0.03125
        %v2134 = vmul.f32 %v2054, %v2054
        %v2135 = vmul.f32 %v2055, %v2055
        %v2136 = vmul.f32 %v2056, %v2056
        %v2137 = vmul.f32 %v2057, %v2057
        %v2138 = vmul.f32 %v2058, %v2058
        %v2139 = vmul.f32 %v2059, %v2059
        %v2140 = vmul.f32 %v2060, %v2060
        %v2141 = vmul.f32 %v2061, %v2061
        %v2142 = vmul.f32 %v2062, %v2062
        %v2143 = vmul.f32 %v2063, %v2063
        %v2144 = vmul.f32 %v2064, %v2064
        %v2145 = vmul.f32 %v2065, %v2065
        %v2146 = vmul.f32 %v2066, %v2066
        %v2147 = vmul.f32 %v2067, %v2067
        %v2148 = vmul.f32 %v2068, %v2068
        %v2149 = vmul.f32 %v2069, %v2069
        %v2150 = vsub.f32 %v2118, %v2134
        %v2151 = vsub.f32 %v2119, %v2135
        %v2152 = vsub.f32 %v2120, %v2136
        %v2153 = vsub.f32 %v2121, %v2137
        %v2154 = vsub.f32 %v2122, %v2138
        %v2155 = vsub.f32 %v2123, %v2139
        %v2156 = vsub.f32 %v2124, %v2140
        %v2157 = vsub.f32 %v2125, %v2141
        %v2158 = vsub.f32 %v2126, %v2142
        %v2159 = vsub.f32 %v2127, %v2143
        %v2160 = vsub.f32 %v2128, %v2144
        %v2161 = vsub.f32 %v2129, %v2145
        %v2162 = vsub.f32 %v2130, %v2146
        %v2163 = vsub.f32 %v2131, %v2147
        %v2164 = vsub.f32 %v2132, %v2148
        %v2165 = vsub.f32 %v2133, %v2149
        %v2166 = vsub.f32 %v2006, %v2054
        %v2167 = vsub.f32 %v2007, %v2055
        %v2168 = vsub.f32 %v2008, %v2056
        %v2169 = vsub.f32 %v2009, %v2057
        %v2170 = vsub.f32 %v2010, %v2058
        %v2171 = vsub.f32 %v2011, %v2059
        %v2172 = vsub.f32 %v2012, %v2060
        %v2173 = vsub.f32 %v2013, %v2061
        %v2174 = vsub.f32 %v2014, %v2062
        %v2175 = vsub.f32 %v2015, %v2063
        %v2176 = vsub.f32 %v2016, %v2064
        %v2177 = vsub.f32 %v2017, %v2065
        %v2178 = vsub.f32 %v2018, %v2066
        %v2179 = vsub.f32 %v2019, %v2067
        %v2180 = vsub.f32 %v2020, %v2068
        %v2181 = vsub.f32 %v2021, %v2069
        %v2182 = vadd.f32 %v2150, 0.1
        %v2183 = vadd.f32 %v2151, 0.1
        %v2184 = vadd.f32 %v2152, 0.1
        %v2185 = vadd.f32 %v2153, 0.1
        %v2186 = vadd.f32 %v2154, 0.1
        %v2187 = vadd.f32 %v2155, 0.1
        %v2188 = vadd.f32 %v2156, 0.1
        %v2189 = vadd.f32 %v2157, 0.1
        %v2190 = vadd.f32 %v2158, 0.1
        %v2191 = vadd.f32 %v2159, 0.1
        %v2192 = vadd.f32 %v2160, 0.1
        %v2193 = vadd.f32 %v2161, 0.1
        %v2194 = vadd.f32 %v2162, 0.1
        %v2195 = vadd.f32 %v2163, 0.1
        %v2196 = vadd.f32 %v2164, 0.1
        %v2197 = vadd.f32 %v2165, 0.1
        %v2198 = vrsqrt.pop %v2182
        %v2199 = vrsqrt.pop %v2183
        %v2200 = vrsqrt.pop %v2184
        %v2201 = vrsqrt.pop %v2185
        %v2202 = vrsqrt.pop %v2186
        %v2203 = vrsqrt.pop %v2187
        %v2204 = vrsqrt.pop %v2188
        %v2205 = vrsqrt.pop %v2189
        %v2206 = vrsqrt.pop %v2190
        %v2207 = vrsqrt.pop %v2191
        %v2208 = vrsqrt.pop %v2192
        %v2209 = vrsqrt.pop %v2193
        %v2210 = vrsqrt.pop %v2194
        %v2211 = vrsqrt.pop %v2195
        %v2212 = vrsqrt.pop %v2196
        %v2213 = vrsqrt.pop %v2197
        %v2214 = vmul.f32 %v2166, %v2198
        %v2215 = vmul.f32 %v2167, %v2199
        %v2216 = vmul.f32 %v2168, %v2200
        %v2217 = vmul.f32 %v2169, %v2201
        %v2218 = vmul.f32 %v2170, %v2202
        %v2219 = vmul.f32 %v2171, %v2203
        %v2220 = vmul.f32 %v2172, %v2204
        %v2221 = vmul.f32 %v2173, %v2205
        %v2222 = vmul.f32 %v2174, %v2206
        %v2223 = vmul.f32 %v2175, %v2207
        %v2224 = vmul.f32 %v2176, %v2208
        %v2225 = vmul.f32 %v2177, %v2209
        %v2226 = vmul.f32 %v2178, %v2210
        %v2227 = vmul.f32 %v2179, %v2211
        %v2228 = vmul.f32 %v2180, %v2212
        %v2229 = vmul.f32 %v2181, %v2213
        %v2230 = vlaneseq
        %v2231 = vshrl.u32 %v2230, 7
        %v2232 = vsub.s32 0, %v2231
        %v2233 = vrot.slane %v463, %v2232
        %v2234 = vmul.f32 %v2214, %v2233
        %v2235 = vmul.f32 %v2215, %v2233
        %v2236 = vmul.f32 %v2216, %v2233
        %v2237 = vmul.f32 %v2217, %v2233
        %v2238 = vmul.f32 %v2218, %v2233
        %v2239 = vmul.f32 %v2219, %v2233
        %v2240 = vmul.f32 %v2220, %v2233
        %v2241 = vmul.f32 %v2221, %v2233
        %v2242 = vmul.f32 %v2222, %v2233
        %v2243 = vmul.f32 %v2223, %v2233
        %v2244 = vmul.f32 %v2224, %v2233
        %v2245 = vmul.f32 %v2225, %v2233
        %v2246 = vmul.f32 %v2226, %v2233
        %v2247 = vmul.f32 %v2227, %v2233
        %v2248 = vmul.f32 %v2228, %v2233
        %v2249 = vmul.f32 %v2229, %v2233
        %v2250 = vlaneseq
        %v2251 = vshrl.u32 %v2250, 7
        %v2252 = vsub.s32 0, %v2251
        %v2253 = vrot.slane %v468, %v2252
        %v2254 = vadd.f32 %v2234, %v2253
        %v2255 = vadd.f32 %v2235, %v2253
        %v2256 = vadd.f32 %v2236, %v2253
        %v2257 = vadd.f32 %v2237, %v2253
        %v2258 = vadd.f32 %v2238, %v2253
        %v2259 = vadd.f32 %v2239, %v2253
        %v2260 = vadd.f32 %v2240, %v2253
        %v2261 = vadd.f32 %v2241, %v2253
        %v2262 = vadd.f32 %v2242, %v2253
        %v2263 = vadd.f32 %v2243, %v2253
        %v2264 = vadd.f32 %v2244, %v2253
        %v2265 = vadd.f32 %v2245, %v2253
        %v2266 = vadd.f32 %v2246, %v2253
        %v2267 = vadd.f32 %v2247, %v2253
        %v2268 = vadd.f32 %v2248, %v2253
        %v2269 = vadd.f32 %v2249, %v2253
        %v2270 = vadd.f32 %v1713, %v2254
        %v2271 = vadd.f32 %v1714, %v2255
        %v2272 = vadd.f32 %v1715, %v2256
        %v2273 = vadd.f32 %v1716, %v2257
        %v2274 = vadd.f32 %v1717, %v2258
        %v2275 = vadd.f32 %v1718, %v2259
        %v2276 = vadd.f32 %v1719, %v2260
        %v2277 = vadd.f32 %v1720, %v2261
        %v2278 = vadd.f32 %v1721, %v2262
        %v2279 = vadd.f32 %v1722, %v2263
        %v2280 = vadd.f32 %v1723, %v2264
        %v2281 = vadd.f32 %v1724, %v2265
        %v2282 = vadd.f32 %v1725, %v2266
        %v2283 = vadd.f32 %v1726, %v2267
        %v2284 = vadd.f32 %v1727, %v2268
        %v2285 = vadd.f32 %v1728, %v2269
        %v2286 = vld [vmem:[#allocation7] sm:$0xff]
        %v2287 = vld [vmem:[#allocation7 + $0x8] sm:$0xff]
        %v2288 = vld [vmem:[#allocation7 + $0x10] sm:$0xff]
        %v2289 = vld [vmem:[#allocation7 + $0x18] sm:$0xff]
        %v2290 = vld [vmem:[#allocation7 + $0x20] sm:$0xff]
        %v2291 = vld [vmem:[#allocation7 + $0x28] sm:$0xff]
        %v2292 = vld [vmem:[#allocation7 + $0x30] sm:$0xff]
        %v2293 = vld [vmem:[#allocation7 + $0x38] sm:$0xff]
        %v2294 = vld [vmem:[#allocation7 + $0x40] sm:$0xff]
        %v2295 = vld [vmem:[#allocation7 + $0x48] sm:$0xff]
        %v2296 = vld [vmem:[#allocation7 + $0x50] sm:$0xff]
        %v2297 = vld [vmem:[#allocation7 + $0x58] sm:$0xff]
        %v2298 = vld [vmem:[#allocation7 + $0x60] sm:$0xff]
        %v2299 = vld [vmem:[#allocation7 + $0x68] sm:$0xff]
        %v2300 = vld [vmem:[#allocation7 + $0x70] sm:$0xff]
        %v2301 = vld [vmem:[#allocation7 + $0x78] sm:$0xff]
        %v2302 = vlaneseq
        %v2303 = vshrl.u32 %v2302, 7
        %v2304 = vsub.s32 0, %v2303
        %v2305 = vrot.slane %v459, %v2304
        %2306 = vmatprep.subr.mxu0 0.0
        %2307 = vmatpush1.msra.mxu0 %v2286
        %2308 = vmatprep.subr.mxu0 0.0
        %2309 = vmatpush1.msra.mxu0 %v2287
        %2310 = vmatprep.subr.mxu0 0.0
        %2311 = vmatpush1.msra.mxu0 %v2288
        %2312 = vmatprep.subr.mxu0 0.0
        %2313 = vmatpush1.msra.mxu0 %v2289
        %2314 = vmatprep.subr.mxu0 0.0
        %2315 = vmatpush1.msra.mxu0 %v2290
        %2316 = vmatprep.subr.mxu0 0.0
        %2317 = vmatpush1.msra.mxu0 %v2291
        %2318 = vmatprep.subr.mxu0 0.0
        %2319 = vmatpush1.msra.mxu0 %v2292
        %2320 = vmatprep.subr.mxu0 0.0
        %2321 = vmatpush1.msra.mxu0 %v2293
        %2322 = vmatprep.subr.mxu0 0.0
        %2323 = vmatpush1.msra.mxu0 %v2294
        %2324 = vmatprep.subr.mxu0 0.0
        %2325 = vmatpush1.msra.mxu0 %v2295
        %2326 = vmatprep.subr.mxu0 0.0
        %2327 = vmatpush1.msra.mxu0 %v2296
        %2328 = vmatprep.subr.mxu0 0.0
        %2329 = vmatpush1.msra.mxu0 %v2297
        %2330 = vmatprep.subr.mxu0 0.0
        %2331 = vmatpush1.msra.mxu0 %v2298
        %2332 = vmatprep.subr.mxu0 0.0
        %2333 = vmatpush1.msra.mxu0 %v2299
        %2334 = vmatprep.subr.mxu0 0.0
        %2335 = vmatpush1.msra.mxu0 %v2300
        %2336 = vmatprep.subr.mxu0 0.0
        %2337 = vmatpush1.msra.mxu0 %v2301
        %2338 = vmatprep.subr.mxu0 0.0
        %2339 = vmatpush1.msra.mxu0 0.0
        %2340 = vmatprep.subr.mxu0 0.0
        %2341 = vmatpush1.msra.mxu0 0.0
        %2342 = vmatprep.subr.mxu0 0.0
        %2343 = vmatpush1.msra.mxu0 0.0
        %2344 = vmatprep.subr.mxu0 0.0
        %2345 = vmatpush1.msra.mxu0 0.0
        %2346 = vmatprep.subr.mxu0 0.0
        %2347 = vmatpush1.msra.mxu0 0.0
        %2348 = vmatprep.subr.mxu0 0.0
        %2349 = vmatpush1.msra.mxu0 0.0
        %2350 = vmatprep.subr.mxu0 0.0
        %2351 = vmatpush1.msra.mxu0 0.0
        %2352 = vmatprep.subr.mxu0 0.0
        %2353 = vmatpush1.msra.mxu0 0.0
        %2354 = vmatprep.subr.mxu0 0.0
        %2355 = vmatpush1.msra.mxu0 0.0
        %2356 = vmatprep.subr.mxu0 0.0
        %2357 = vmatpush1.msra.mxu0 0.0
        %2358 = vmatprep.subr.mxu0 0.0
        %2359 = vmatpush1.msra.mxu0 0.0
        %2360 = vmatprep.subr.mxu0 0.0
        %2361 = vmatpush1.msra.mxu0 0.0
        %2362 = vmatprep.subr.mxu0 0.0
        %2363 = vmatpush1.msra.mxu0 0.0
        %2364 = vmatprep.subr.mxu0 0.0
        %2365 = vmatpush1.msra.mxu0 0.0
        %2366 = vmatprep.subr.mxu0 0.0
        %2367 = vmatpush1.msra.mxu0 0.0
        %2368 = vmatprep.subr.mxu0 0.0
        %2369 = vmatpush1.msra.mxu0 0.0
        %2370 = vmatprep.mubr.f32.mxu0 0.0
        %2371 = vmatmul.mubr.f32.gmra.mrb[0].mxu0 %v2254
        %v2372 = vpop.f32.mrb[0].mxu0
        %v2373 = vadd.f32 %v2305, %v2372
        %v2374 = vpop.f32.mrb[0].mxu0
        %2375 = vmatprep.mubr.f32.mxu0 0.0
        %2376 = vmatmul.mubr.f32.gmra.mrb[0].mxu0 %v2255
        %v2377 = vpop.f32.mrb[0].mxu0
        %v2378 = vadd.f32 %v2305, %v2377
        %v2379 = vpop.f32.mrb[0].mxu0
        %2380 = vmatprep.mubr.f32.mxu0 0.0
        %2381 = vmatmul.mubr.f32.gmra.mrb[0].mxu0 %v2256
        %v2382 = vpop.f32.mrb[0].mxu0
        %v2383 = vadd.f32 %v2305, %v2382
        %v2384 = vpop.f32.mrb[0].mxu0
        %2385 = vmatprep.mubr.f32.mxu0 0.0
        %2386 = vmatmul.mubr.f32.gmra.mrb[0].mxu0 %v2257
        %v2387 = vpop.f32.mrb[0].mxu0
        %v2388 = vadd.f32 %v2305, %v2387
        %v2389 = vpop.f32.mrb[0].mxu0
        %2390 = vmatprep.mubr.f32.mxu0 0.0
        %2391 = vmatmul.mubr.f32.gmra.mrb[0].mxu0 %v2258
        %v2392 = vpop.f32.mrb[0].mxu0
        %v2393 = vadd.f32 %v2305, %v2392
        %v2394 = vpop.f32.mrb[0].mxu0
        %2395 = vmatprep.mubr.f32.mxu0 0.0
        %2396 = vmatmul.mubr.f32.gmra.mrb[0].mxu0 %v2259
        %v2397 = vpop.f32.mrb[0].mxu0
        %v2398 = vadd.f32 %v2305, %v2397
        %v2399 = vpop.f32.mrb[0].mxu0
        %2400 = vmatprep.mubr.f32.mxu0 0.0
        %2401 = vmatmul.mubr.f32.gmra.mrb[0].mxu0 %v2260
        %v2402 = vpop.f32.mrb[0].mxu0
        %v2403 = vadd.f32 %v2305, %v2402
        %v2404 = vpop.f32.mrb[0].mxu0
        %2405 = vmatprep.mubr.f32.mxu0 0.0
        %2406 = vmatmul.mubr.f32.gmra.mrb[0].mxu0 %v2261
        %v2407 = vpop.f32.mrb[0].mxu0
        %v2408 = vadd.f32 %v2305, %v2407
        %v2409 = vpop.f32.mrb[0].mxu0
        %2410 = vmatprep.mubr.f32.mxu0 0.0
        %2411 = vmatmul.mubr.f32.gmra.mrb[0].mxu0 %v2262
        %v2412 = vpop.f32.mrb[0].mxu0
        %v2413 = vadd.f32 %v2305, %v2412
        %v2414 = vpop.f32.mrb[0].mxu0
        %2415 = vmatprep.mubr.f32.mxu0 0.0
        %2416 = vmatmul.mubr.f32.gmra.mrb[0].mxu0 %v2263
        %v2417 = vpop.f32.mrb[0].mxu0
        %v2418 = vadd.f32 %v2305, %v2417
        %v2419 = vpop.f32.mrb[0].mxu0
        %2420 = vmatprep.mubr.f32.mxu0 0.0
        %2421 = vmatmul.mubr.f32.gmra.mrb[0].mxu0 %v2264
        %v2422 = vpop.f32.mrb[0].mxu0
        %v2423 = vadd.f32 %v2305, %v2422
        %v2424 = vpop.f32.mrb[0].mxu0
        %2425 = vmatprep.mubr.f32.mxu0 0.0
        %2426 = vmatmul.mubr.f32.gmra.mrb[0].mxu0 %v2265
        %v2427 = vpop.f32.mrb[0].mxu0
        %v2428 = vadd.f32 %v2305, %v2427
        %v2429 = vpop.f32.mrb[0].mxu0
        %2430 = vmatprep.mubr.f32.mxu0 0.0
        %2431 = vmatmul.mubr.f32.gmra.mrb[0].mxu0 %v2266
        %v2432 = vpop.f32.mrb[0].mxu0
        %v2433 = vadd.f32 %v2305, %v2432
        %v2434 = vpop.f32.mrb[0].mxu0
        %2435 = vmatprep.mubr.f32.mxu0 0.0
        %2436 = vmatmul.mubr.f32.gmra.mrb[0].mxu0 %v2267
        %v2437 = vpop.f32.mrb[0].mxu0
        %v2438 = vadd.f32 %v2305, %v2437
        %v2439 = vpop.f32.mrb[0].mxu0
        %2440 = vmatprep.mubr.f32.mxu0 0.0
        %2441 = vmatmul.mubr.f32.gmra.mrb[0].mxu0 %v2268
        %v2442 = vpop.f32.mrb[0].mxu0
        %v2443 = vadd.f32 %v2305, %v2442
        %v2444 = vpop.f32.mrb[0].mxu0
        %2445 = vmatprep.mubr.f32.mxu0 0.0
        %2446 = vmatmul.mubr.f32.gmra.mrb[0].mxu0 %v2269
        %v2447 = vpop.f32.mrb[0].mxu0
        %v2448 = vadd.f32 %v2305, %v2447
        %v2449 = vpop.f32.mrb[0].mxu0
        %2450 = vdwg.mxu0
        %v2451 = vadd.f32 %v2373, %v2270
        %v2452 = vadd.f32 %v2378, %v2271
        %v2453 = vadd.f32 %v2383, %v2272
        %v2454 = vadd.f32 %v2388, %v2273
        %v2455 = vadd.f32 %v2393, %v2274
        %v2456 = vadd.f32 %v2398, %v2275
        %v2457 = vadd.f32 %v2403, %v2276
        %v2458 = vadd.f32 %v2408, %v2277
        %v2459 = vadd.f32 %v2413, %v2278
        %v2460 = vadd.f32 %v2418, %v2279
        %v2461 = vadd.f32 %v2423, %v2280
        %v2462 = vadd.f32 %v2428, %v2281
        %v2463 = vadd.f32 %v2433, %v2282
        %v2464 = vadd.f32 %v2438, %v2283
        %v2465 = vadd.f32 %v2443, %v2284
        %v2466 = vadd.f32 %v2448, %v2285
        %v2467 = vxor.u32 %v2451, 2147483648
        %v2468 = vxor.u32 %v2452, 2147483648
        %v2469 = vxor.u32 %v2453, 2147483648
        %v2470 = vxor.u32 %v2454, 2147483648
        %v2471 = vxor.u32 %v2455, 2147483648
        %v2472 = vxor.u32 %v2456, 2147483648
        %v2473 = vxor.u32 %v2457, 2147483648
        %v2474 = vxor.u32 %v2458, 2147483648
        %v2475 = vxor.u32 %v2459, 2147483648
        %v2476 = vxor.u32 %v2460, 2147483648
        %v2477 = vxor.u32 %v2461, 2147483648
        %v2478 = vxor.u32 %v2462, 2147483648
        %v2479 = vxor.u32 %v2463, 2147483648
        %v2480 = vxor.u32 %v2464, 2147483648
        %v2481 = vxor.u32 %v2465, 2147483648
        %v2482 = vxor.u32 %v2466, 2147483648
        %v2483 = vmul.f32 %v2467, 1.442695
        %v2484 = vpow.pop %v2483
        %v2485 = vmul.f32 %v2468, 1.442695
        %v2486 = vpow.pop %v2485
        %v2487 = vmul.f32 %v2469, 1.442695
        %v2488 = vpow.pop %v2487
        %v2489 = vmul.f32 %v2470, 1.442695
        %v2490 = vpow.pop %v2489
        %v2491 = vmul.f32 %v2471, 1.442695
        %v2492 = vpow.pop %v2491
        %v2493 = vmul.f32 %v2472, 1.442695
        %v2494 = vpow.pop %v2493
        %v2495 = vmul.f32 %v2473, 1.442695
        %v2496 = vpow.pop %v2495
        %v2497 = vmul.f32 %v2474, 1.442695
        %v2498 = vpow.pop %v2497
        %v2499 = vmul.f32 %v2475, 1.442695
        %v2500 = vpow.pop %v2499
        %v2501 = vmul.f32 %v2476, 1.442695
        %v2502 = vpow.pop %v2501
        %v2503 = vmul.f32 %v2477, 1.442695
        %v2504 = vpow.pop %v2503
        %v2505 = vmul.f32 %v2478, 1.442695
        %v2506 = vpow.pop %v2505
        %v2507 = vmul.f32 %v2479, 1.442695
        %v2508 = vpow.pop %v2507
        %v2509 = vmul.f32 %v2480, 1.442695
        %v2510 = vpow.pop %v2509
        %v2511 = vmul.f32 %v2481, 1.442695
        %v2512 = vpow.pop %v2511
        %v2513 = vmul.f32 %v2482, 1.442695
        %v2514 = vpow.pop %v2513
        %v2515 = vadd.f32 %v2484, 1.0
        %v2516 = vadd.f32 %v2486, 1.0
        %v2517 = vadd.f32 %v2488, 1.0
        %v2518 = vadd.f32 %v2490, 1.0
        %v2519 = vadd.f32 %v2492, 1.0
        %v2520 = vadd.f32 %v2494, 1.0
        %v2521 = vadd.f32 %v2496, 1.0
        %v2522 = vadd.f32 %v2498, 1.0
        %v2523 = vadd.f32 %v2500, 1.0
        %v2524 = vadd.f32 %v2502, 1.0
        %v2525 = vadd.f32 %v2504, 1.0
        %v2526 = vadd.f32 %v2506, 1.0
        %v2527 = vadd.f32 %v2508, 1.0
        %v2528 = vadd.f32 %v2510, 1.0
        %v2529 = vadd.f32 %v2512, 1.0
        %v2530 = vadd.f32 %v2514, 1.0
        %v2531 = vrcp.pop %v2515
        %v2532 = vmul.f32 1.0, %v2531
        %v2533 = vrcp.pop %v2516
        %v2534 = vmul.f32 1.0, %v2533
        %v2535 = vrcp.pop %v2517
        %v2536 = vmul.f32 1.0, %v2535
        %v2537 = vrcp.pop %v2518
        %v2538 = vmul.f32 1.0, %v2537
        %v2539 = vrcp.pop %v2519
        %v2540 = vmul.f32 1.0, %v2539
        %v2541 = vrcp.pop %v2520
        %v2542 = vmul.f32 1.0, %v2541
        %v2543 = vrcp.pop %v2521
        %v2544 = vmul.f32 1.0, %v2543
        %v2545 = vrcp.pop %v2522
        %v2546 = vmul.f32 1.0, %v2545
        %v2547 = vrcp.pop %v2523
        %v2548 = vmul.f32 1.0, %v2547
        %v2549 = vrcp.pop %v2524
        %v2550 = vmul.f32 1.0, %v2549
        %v2551 = vrcp.pop %v2525
        %v2552 = vmul.f32 1.0, %v2551
        %v2553 = vrcp.pop %v2526
        %v2554 = vmul.f32 1.0, %v2553
        %v2555 = vrcp.pop %v2527
        %v2556 = vmul.f32 1.0, %v2555
        %v2557 = vrcp.pop %v2528
        %v2558 = vmul.f32 1.0, %v2557
        %v2559 = vrcp.pop %v2529
        %v2560 = vmul.f32 1.0, %v2559
        %v2561 = vrcp.pop %v2530
        %v2562 = vmul.f32 1.0, %v2561
        %v2563 = vmul.f32 %v2451, %v2532
        %v2564 = vmul.f32 %v2452, %v2534
        %v2565 = vmul.f32 %v2453, %v2536
        %v2566 = vmul.f32 %v2454, %v2538
        %v2567 = vmul.f32 %v2455, %v2540
        %v2568 = vmul.f32 %v2456, %v2542
        %v2569 = vmul.f32 %v2457, %v2544
        %v2570 = vmul.f32 %v2458, %v2546
        %v2571 = vmul.f32 %v2459, %v2548
        %v2572 = vmul.f32 %v2460, %v2550
        %v2573 = vmul.f32 %v2461, %v2552
        %v2574 = vmul.f32 %v2462, %v2554
        %v2575 = vmul.f32 %v2463, %v2556
        %v2576 = vmul.f32 %v2464, %v2558
        %v2577 = vmul.f32 %v2465, %v2560
        %v2578 = vmul.f32 %v2466, %v2562
        %2579 = vadd.xlane.f32.xlu0 %v2563
        %v2580 = vpop.xlane.xlu0 %2579
        %2581 = vadd.xlane.f32.xlu0 %v2564
        %v2582 = vpop.xlane.xlu0 %2581
        %2583 = vadd.xlane.f32.xlu0 %v2565
        %v2584 = vpop.xlane.xlu0 %2583
        %2585 = vadd.xlane.f32.xlu0 %v2566
        %v2586 = vpop.xlane.xlu0 %2585
        %2587 = vadd.xlane.f32.xlu0 %v2567
        %v2588 = vpop.xlane.xlu0 %2587
        %2589 = vadd.xlane.f32.xlu0 %v2568
        %v2590 = vpop.xlane.xlu0 %2589
        %2591 = vadd.xlane.f32.xlu0 %v2569
        %v2592 = vpop.xlane.xlu0 %2591
        %2593 = vadd.xlane.f32.xlu0 %v2570
        %v2594 = vpop.xlane.xlu0 %2593
        %2595 = vadd.xlane.f32.xlu0 %v2571
        %v2596 = vpop.xlane.xlu0 %2595
        %2597 = vadd.xlane.f32.xlu0 %v2572
        %v2598 = vpop.xlane.xlu0 %2597
        %2599 = vadd.xlane.f32.xlu0 %v2573
        %v2600 = vpop.xlane.xlu0 %2599
        %2601 = vadd.xlane.f32.xlu0 %v2574
        %v2602 = vpop.xlane.xlu0 %2601
        %2603 = vadd.xlane.f32.xlu0 %v2575
        %v2604 = vpop.xlane.xlu0 %2603
        %2605 = vadd.xlane.f32.xlu0 %v2576
        %v2606 = vpop.xlane.xlu0 %2605
        %2607 = vadd.xlane.f32.xlu0 %v2577
        %v2608 = vpop.xlane.xlu0 %2607
        %2609 = vadd.xlane.f32.xlu0 %v2578
        %v2610 = vpop.xlane.xlu0 %2609
        %v2611 = vmul.f32 %v2580, 0.03125
        %v2612 = vmul.f32 %v2582, 0.03125
        %v2613 = vmul.f32 %v2584, 0.03125
        %v2614 = vmul.f32 %v2586, 0.03125
        %v2615 = vmul.f32 %v2588, 0.03125
        %v2616 = vmul.f32 %v2590, 0.03125
        %v2617 = vmul.f32 %v2592, 0.03125
        %v2618 = vmul.f32 %v2594, 0.03125
        %v2619 = vmul.f32 %v2596, 0.03125
        %v2620 = vmul.f32 %v2598, 0.03125
        %v2621 = vmul.f32 %v2600, 0.03125
        %v2622 = vmul.f32 %v2602, 0.03125
        %v2623 = vmul.f32 %v2604, 0.03125
        %v2624 = vmul.f32 %v2606, 0.03125
        %v2625 = vmul.f32 %v2608, 0.03125
        %v2626 = vmul.f32 %v2610, 0.03125
        %v2627 = vmul.f32 %v2563, %v2563
        %v2628 = vmul.f32 %v2564, %v2564
        %v2629 = vmul.f32 %v2565, %v2565
        %v2630 = vmul.f32 %v2566, %v2566
        %v2631 = vmul.f32 %v2567, %v2567
        %v2632 = vmul.f32 %v2568, %v2568
        %v2633 = vmul.f32 %v2569, %v2569
        %v2634 = vmul.f32 %v2570, %v2570
        %v2635 = vmul.f32 %v2571, %v2571
        %v2636 = vmul.f32 %v2572, %v2572
        %v2637 = vmul.f32 %v2573, %v2573
        %v2638 = vmul.f32 %v2574, %v2574
        %v2639 = vmul.f32 %v2575, %v2575
        %v2640 = vmul.f32 %v2576, %v2576
        %v2641 = vmul.f32 %v2577, %v2577
        %v2642 = vmul.f32 %v2578, %v2578
        %2643 = vadd.xlane.f32.xlu0 %v2627
        %v2644 = vpop.xlane.xlu0 %2643
        %2645 = vadd.xlane.f32.xlu0 %v2628
        %v2646 = vpop.xlane.xlu0 %2645
        %2647 = vadd.xlane.f32.xlu0 %v2629
        %v2648 = vpop.xlane.xlu0 %2647
        %2649 = vadd.xlane.f32.xlu0 %v2630
        %v2650 = vpop.xlane.xlu0 %2649
        %2651 = vadd.xlane.f32.xlu0 %v2631
        %v2652 = vpop.xlane.xlu0 %2651
        %2653 = vadd.xlane.f32.xlu0 %v2632
        %v2654 = vpop.xlane.xlu0 %2653
        %2655 = vadd.xlane.f32.xlu0 %v2633
        %v2656 = vpop.xlane.xlu0 %2655
        %2657 = vadd.xlane.f32.xlu0 %v2634
        %v2658 = vpop.xlane.xlu0 %2657
        %2659 = vadd.xlane.f32.xlu0 %v2635
        %v2660 = vpop.xlane.xlu0 %2659
        %2661 = vadd.xlane.f32.xlu0 %v2636
        %v2662 = vpop.xlane.xlu0 %2661
        %2663 = vadd.xlane.f32.xlu0 %v2637
        %v2664 = vpop.xlane.xlu0 %2663
        %2665 = vadd.xlane.f32.xlu0 %v2638
        %v2666 = vpop.xlane.xlu0 %2665
        %2667 = vadd.xlane.f32.xlu0 %v2639
        %v2668 = vpop.xlane.xlu0 %2667
        %2669 = vadd.xlane.f32.xlu0 %v2640
        %v2670 = vpop.xlane.xlu0 %2669
        %2671 = vadd.xlane.f32.xlu0 %v2641
        %v2672 = vpop.xlane.xlu0 %2671
        %2673 = vadd.xlane.f32.xlu0 %v2642
        %v2674 = vpop.xlane.xlu0 %2673
        %v2675 = vmul.f32 %v2644, 0.03125
        %v2676 = vmul.f32 %v2646, 0.03125
        %v2677 = vmul.f32 %v2648, 0.03125
        %v2678 = vmul.f32 %v2650, 0.03125
        %v2679 = vmul.f32 %v2652, 0.03125
        %v2680 = vmul.f32 %v2654, 0.03125
        %v2681 = vmul.f32 %v2656, 0.03125
        %v2682 = vmul.f32 %v2658, 0.03125
        %v2683 = vmul.f32 %v2660, 0.03125
        %v2684 = vmul.f32 %v2662, 0.03125
        %v2685 = vmul.f32 %v2664, 0.03125
        %v2686 = vmul.f32 %v2666, 0.03125
        %v2687 = vmul.f32 %v2668, 0.03125
        %v2688 = vmul.f32 %v2670, 0.03125
        %v2689 = vmul.f32 %v2672, 0.03125
        %v2690 = vmul.f32 %v2674, 0.03125
        %v2691 = vmul.f32 %v2611, %v2611
        %v2692 = vmul.f32 %v2612, %v2612
        %v2693 = vmul.f32 %v2613, %v2613
        %v2694 = vmul.f32 %v2614, %v2614
        %v2695 = vmul.f32 %v2615, %v2615
        %v2696 = vmul.f32 %v2616, %v2616
        %v2697 = vmul.f32 %v2617, %v2617
        %v2698 = vmul.f32 %v2618, %v2618
        %v2699 = vmul.f32 %v2619, %v2619
        %v2700 = vmul.f32 %v2620, %v2620
        %v2701 = vmul.f32 %v2621, %v2621
        %v2702 = vmul.f32 %v2622, %v2622
        %v2703 = vmul.f32 %v2623, %v2623
        %v2704 = vmul.f32 %v2624, %v2624
        %v2705 = vmul.f32 %v2625, %v2625
        %v2706 = vmul.f32 %v2626, %v2626
        %v2707 = vsub.f32 %v2675, %v2691
        %v2708 = vsub.f32 %v2676, %v2692
        %v2709 = vsub.f32 %v2677, %v2693
        %v2710 = vsub.f32 %v2678, %v2694
        %v2711 = vsub.f32 %v2679, %v2695
        %v2712 = vsub.f32 %v2680, %v2696
        %v2713 = vsub.f32 %v2681, %v2697
        %v2714 = vsub.f32 %v2682, %v2698
        %v2715 = vsub.f32 %v2683, %v2699
        %v2716 = vsub.f32 %v2684, %v2700
        %v2717 = vsub.f32 %v2685, %v2701
        %v2718 = vsub.f32 %v2686, %v2702
        %v2719 = vsub.f32 %v2687, %v2703
        %v2720 = vsub.f32 %v2688, %v2704
        %v2721 = vsub.f32 %v2689, %v2705
        %v2722 = vsub.f32 %v2690, %v2706
        %v2723 = vsub.f32 %v2563, %v2611
        %v2724 = vsub.f32 %v2564, %v2612
        %v2725 = vsub.f32 %v2565, %v2613
        %v2726 = vsub.f32 %v2566, %v2614
        %v2727 = vsub.f32 %v2567, %v2615
        %v2728 = vsub.f32 %v2568, %v2616
        %v2729 = vsub.f32 %v2569, %v2617
        %v2730 = vsub.f32 %v2570, %v2618
        %v2731 = vsub.f32 %v2571, %v2619
        %v2732 = vsub.f32 %v2572, %v2620
        %v2733 = vsub.f32 %v2573, %v2621
        %v2734 = vsub.f32 %v2574, %v2622
        %v2735 = vsub.f32 %v2575, %v2623
        %v2736 = vsub.f32 %v2576, %v2624
        %v2737 = vsub.f32 %v2577, %v2625
        %v2738 = vsub.f32 %v2578, %v2626
        %v2739 = vadd.f32 %v2707, 0.1
        %v2740 = vadd.f32 %v2708, 0.1
        %v2741 = vadd.f32 %v2709, 0.1
        %v2742 = vadd.f32 %v2710, 0.1
        %v2743 = vadd.f32 %v2711, 0.1
        %v2744 = vadd.f32 %v2712, 0.1
        %v2745 = vadd.f32 %v2713, 0.1
        %v2746 = vadd.f32 %v2714, 0.1
        %v2747 = vadd.f32 %v2715, 0.1
        %v2748 = vadd.f32 %v2716, 0.1
        %v2749 = vadd.f32 %v2717, 0.1
        %v2750 = vadd.f32 %v2718, 0.1
        %v2751 = vadd.f32 %v2719, 0.1
        %v2752 = vadd.f32 %v2720, 0.1
        %v2753 = vadd.f32 %v2721, 0.1
        %v2754 = vadd.f32 %v2722, 0.1
        %v2755 = vrsqrt.pop %v2739
        %v2756 = vrsqrt.pop %v2740
        %v2757 = vrsqrt.pop %v2741
        %v2758 = vrsqrt.pop %v2742
        %v2759 = vrsqrt.pop %v2743
        %v2760 = vrsqrt.pop %v2744
        %v2761 = vrsqrt.pop %v2745
        %v2762 = vrsqrt.pop %v2746
        %v2763 = vrsqrt.pop %v2747
        %v2764 = vrsqrt.pop %v2748
        %v2765 = vrsqrt.pop %v2749
        %v2766 = vrsqrt.pop %v2750
        %v2767 = vrsqrt.pop %v2751
        %v2768 = vrsqrt.pop %v2752
        %v2769 = vrsqrt.pop %v2753
        %v2770 = vrsqrt.pop %v2754
        %v2771 = vmul.f32 %v2723, %v2755
        %v2772 = vmul.f32 %v2724, %v2756
        %v2773 = vmul.f32 %v2725, %v2757
        %v2774 = vmul.f32 %v2726, %v2758
        %v2775 = vmul.f32 %v2727, %v2759
        %v2776 = vmul.f32 %v2728, %v2760
        %v2777 = vmul.f32 %v2729, %v2761
        %v2778 = vmul.f32 %v2730, %v2762
        %v2779 = vmul.f32 %v2731, %v2763
        %v2780 = vmul.f32 %v2732, %v2764
        %v2781 = vmul.f32 %v2733, %v2765
        %v2782 = vmul.f32 %v2734, %v2766
        %v2783 = vmul.f32 %v2735, %v2767
        %v2784 = vmul.f32 %v2736, %v2768
        %v2785 = vmul.f32 %v2737, %v2769
        %v2786 = vmul.f32 %v2738, %v2770
        %v2787 = vlaneseq
        %v2788 = vshrl.u32 %v2787, 7
        %v2789 = vsub.s32 0, %v2788
        %v2790 = vrot.slane %v464, %v2789
        %v2791 = vmul.f32 %v2771, %v2790
        %v2792 = vmul.f32 %v2772, %v2790
        %v2793 = vmul.f32 %v2773, %v2790
        %v2794 = vmul.f32 %v2774, %v2790
        %v2795 = vmul.f32 %v2775, %v2790
        %v2796 = vmul.f32 %v2776, %v2790
        %v2797 = vmul.f32 %v2777, %v2790
        %v2798 = vmul.f32 %v2778, %v2790
        %v2799 = vmul.f32 %v2779, %v2790
        %v2800 = vmul.f32 %v2780, %v2790
        %v2801 = vmul.f32 %v2781, %v2790
        %v2802 = vmul.f32 %v2782, %v2790
        %v2803 = vmul.f32 %v2783, %v2790
        %v2804 = vmul.f32 %v2784, %v2790
        %v2805 = vmul.f32 %v2785, %v2790
        %v2806 = vmul.f32 %v2786, %v2790
        %v2807 = vlaneseq
        %v2808 = vshrl.u32 %v2807, 7
        %v2809 = vsub.s32 0, %v2808
        %v2810 = vrot.slane %v469, %v2809
        %v2811 = vadd.f32 %v2791, %v2810
        %v2812 = vadd.f32 %v2792, %v2810
        %v2813 = vadd.f32 %v2793, %v2810
        %v2814 = vadd.f32 %v2794, %v2810
        %v2815 = vadd.f32 %v2795, %v2810
        %v2816 = vadd.f32 %v2796, %v2810
        %v2817 = vadd.f32 %v2797, %v2810
        %v2818 = vadd.f32 %v2798, %v2810
        %v2819 = vadd.f32 %v2799, %v2810
        %v2820 = vadd.f32 %v2800, %v2810
        %v2821 = vadd.f32 %v2801, %v2810
        %v2822 = vadd.f32 %v2802, %v2810
        %v2823 = vadd.f32 %v2803, %v2810
        %v2824 = vadd.f32 %v2804, %v2810
        %v2825 = vadd.f32 %v2805, %v2810
        %v2826 = vadd.f32 %v2806, %v2810
        %v2827 = vadd.f32 %v2270, %v2811
        %v2828 = vadd.f32 %v2271, %v2812
        %v2829 = vadd.f32 %v2272, %v2813
        %v2830 = vadd.f32 %v2273, %v2814
        %v2831 = vadd.f32 %v2274, %v2815
        %v2832 = vadd.f32 %v2275, %v2816
        %v2833 = vadd.f32 %v2276, %v2817
        %v2834 = vadd.f32 %v2277, %v2818
        %v2835 = vadd.f32 %v2278, %v2819
        %v2836 = vadd.f32 %v2279, %v2820
        %v2837 = vadd.f32 %v2280, %v2821
        %v2838 = vadd.f32 %v2281, %v2822
        %v2839 = vadd.f32 %v2282, %v2823
        %v2840 = vadd.f32 %v2283, %v2824
        %v2841 = vadd.f32 %v2284, %v2825
        %v2842 = vadd.f32 %v2285, %v2826
        %v2843 = vld [vmem:[#allocation8] sm:$0xff]
        %v2844 = vld [vmem:[#allocation8 + $0x8] sm:$0xff]
        %v2845 = vld [vmem:[#allocation8 + $0x10] sm:$0xff]
        %v2846 = vld [vmem:[#allocation8 + $0x18] sm:$0xff]
        %v2847 = vld [vmem:[#allocation8 + $0x20] sm:$0xff]
        %v2848 = vld [vmem:[#allocation8 + $0x28] sm:$0xff]
        %v2849 = vld [vmem:[#allocation8 + $0x30] sm:$0xff]
        %v2850 = vld [vmem:[#allocation8 + $0x38] sm:$0xff]
        %v2851 = vld [vmem:[#allocation8 + $0x40] sm:$0xff]
        %v2852 = vld [vmem:[#allocation8 + $0x48] sm:$0xff]
        %v2853 = vld [vmem:[#allocation8 + $0x50] sm:$0xff]
        %v2854 = vld [vmem:[#allocation8 + $0x58] sm:$0xff]
        %v2855 = vld [vmem:[#allocation8 + $0x60] sm:$0xff]
        %v2856 = vld [vmem:[#allocation8 + $0x68] sm:$0xff]
        %v2857 = vld [vmem:[#allocation8 + $0x70] sm:$0xff]
        %v2858 = vld [vmem:[#allocation8 + $0x78] sm:$0xff]
        %v2859 = vlaneseq
        %v2860 = vshrl.u32 %v2859, 7
        %v2861 = vsub.s32 0, %v2860
        %v2862 = vrot.slane %v460, %v2861
        %2863 = vmatprep.subr.mxu0 0.0
        %2864 = vmatpush1.msra.mxu0 %v2843
        %2865 = vmatprep.subr.mxu0 0.0
        %2866 = vmatpush1.msra.mxu0 %v2844
        %2867 = vmatprep.subr.mxu0 0.0
        %2868 = vmatpush1.msra.mxu0 %v2845
        %2869 = vmatprep.subr.mxu0 0.0
        %2870 = vmatpush1.msra.mxu0 %v2846
        %2871 = vmatprep.subr.mxu0 0.0
        %2872 = vmatpush1.msra.mxu0 %v2847
        %2873 = vmatprep.subr.mxu0 0.0
        %2874 = vmatpush1.msra.mxu0 %v2848
        %2875 = vmatprep.subr.mxu0 0.0
        %2876 = vmatpush1.msra.mxu0 %v2849
        %2877 = vmatprep.subr.mxu0 0.0
        %2878 = vmatpush1.msra.mxu0 %v2850
        %2879 = vmatprep.subr.mxu0 0.0
        %2880 = vmatpush1.msra.mxu0 %v2851
        %2881 = vmatprep.subr.mxu0 0.0
        %2882 = vmatpush1.msra.mxu0 %v2852
        %2883 = vmatprep.subr.mxu0 0.0
        %2884 = vmatpush1.msra.mxu0 %v2853
        %2885 = vmatprep.subr.mxu0 0.0
        %2886 = vmatpush1.msra.mxu0 %v2854
        %2887 = vmatprep.subr.mxu0 0.0
        %2888 = vmatpush1.msra.mxu0 %v2855
        %2889 = vmatprep.subr.mxu0 0.0
        %2890 = vmatpush1.msra.mxu0 %v2856
        %2891 = vmatprep.subr.mxu0 0.0
        %2892 = vmatpush1.msra.mxu0 %v2857
        %2893 = vmatprep.subr.mxu0 0.0
        %2894 = vmatpush1.msra.mxu0 %v2858
        %2895 = vmatprep.subr.mxu0 0.0
        %2896 = vmatpush1.msra.mxu0 0.0
        %2897 = vmatprep.subr.mxu0 0.0
        %2898 = vmatpush1.msra.mxu0 0.0
        %2899 = vmatprep.subr.mxu0 0.0
        %2900 = vmatpush1.msra.mxu0 0.0
        %2901 = vmatprep.subr.mxu0 0.0
        %2902 = vmatpush1.msra.mxu0 0.0
        %2903 = vmatprep.subr.mxu0 0.0
        %2904 = vmatpush1.msra.mxu0 0.0
        %2905 = vmatprep.subr.mxu0 0.0
        %2906 = vmatpush1.msra.mxu0 0.0
        %2907 = vmatprep.subr.mxu0 0.0
        %2908 = vmatpush1.msra.mxu0 0.0
        %2909 = vmatprep.subr.mxu0 0.0
        %2910 = vmatpush1.msra.mxu0 0.0
        %2911 = vmatprep.subr.mxu0 0.0
        %2912 = vmatpush1.msra.mxu0 0.0
        %2913 = vmatprep.subr.mxu0 0.0
        %2914 = vmatpush1.msra.mxu0 0.0
        %2915 = vmatprep.subr.mxu0 0.0
        %2916 = vmatpush1.msra.mxu0 0.0
        %2917 = vmatprep.subr.mxu0 0.0
        %2918 = vmatpush1.msra.mxu0 0.0
        %2919 = vmatprep.subr.mxu0 0.0
        %2920 = vmatpush1.msra.mxu0 0.0
        %2921 = vmatprep.subr.mxu0 0.0
        %2922 = vmatpush1.msra.mxu0 0.0
        %2923 = vmatprep.subr.mxu0 0.0
        %2924 = vmatpush1.msra.mxu0 0.0
        %2925 = vmatprep.subr.mxu0 0.0
        %2926 = vmatpush1.msra.mxu0 0.0
        %2927 = vmatprep.mubr.f32.mxu0 0.0
        %2928 = vmatmul.mubr.f32.gmra.mrb[0].mxu0 %v2811
        %v2929 = vpop.f32.mrb[0].mxu0
        %v2930 = vadd.f32 %v2862, %v2929
        %v2931 = vpop.f32.mrb[0].mxu0
        %2932 = vmatprep.mubr.f32.mxu0 0.0
        %2933 = vmatmul.mubr.f32.gmra.mrb[0].mxu0 %v2812
        %v2934 = vpop.f32.mrb[0].mxu0
        %v2935 = vadd.f32 %v2862, %v2934
        %v2936 = vpop.f32.mrb[0].mxu0
        %2937 = vmatprep.mubr.f32.mxu0 0.0
        %2938 = vmatmul.mubr.f32.gmra.mrb[0].mxu0 %v2813
        %v2939 = vpop.f32.mrb[0].mxu0
        %v2940 = vadd.f32 %v2862, %v2939
        %v2941 = vpop.f32.mrb[0].mxu0
        %2942 = vmatprep.mubr.f32.mxu0 0.0
        %2943 = vmatmul.mubr.f32.gmra.mrb[0].mxu0 %v2814
        %v2944 = vpop.f32.mrb[0].mxu0
        %v2945 = vadd.f32 %v2862, %v2944
        %v2946 = vpop.f32.mrb[0].mxu0
        %2947 = vmatprep.mubr.f32.mxu0 0.0
        %2948 = vmatmul.mubr.f32.gmra.mrb[0].mxu0 %v2815
        %v2949 = vpop.f32.mrb[0].mxu0
        %v2950 = vadd.f32 %v2862, %v2949
        %v2951 = vpop.f32.mrb[0].mxu0
        %2952 = vmatprep.mubr.f32.mxu0 0.0
        %2953 = vmatmul.mubr.f32.gmra.mrb[0].mxu0 %v2816
        %v2954 = vpop.f32.mrb[0].mxu0
        %v2955 = vadd.f32 %v2862, %v2954
        %v2956 = vpop.f32.mrb[0].mxu0
        %2957 = vmatprep.mubr.f32.mxu0 0.0
        %2958 = vmatmul.mubr.f32.gmra.mrb[0].mxu0 %v2817
        %v2959 = vpop.f32.mrb[0].mxu0
        %v2960 = vadd.f32 %v2862, %v2959
        %v2961 = vpop.f32.mrb[0].mxu0
        %2962 = vmatprep.mubr.f32.mxu0 0.0
        %2963 = vmatmul.mubr.f32.gmra.mrb[0].mxu0 %v2818
        %v2964 = vpop.f32.mrb[0].mxu0
        %v2965 = vadd.f32 %v2862, %v2964
        %v2966 = vpop.f32.mrb[0].mxu0
        %2967 = vmatprep.mubr.f32.mxu0 0.0
        %2968 = vmatmul.mubr.f32.gmra.mrb[0].mxu0 %v2819
        %v2969 = vpop.f32.mrb[0].mxu0
        %v2970 = vadd.f32 %v2862, %v2969
        %v2971 = vpop.f32.mrb[0].mxu0
        %2972 = vmatprep.mubr.f32.mxu0 0.0
        %2973 = vmatmul.mubr.f32.gmra.mrb[0].mxu0 %v2820
        %v2974 = vpop.f32.mrb[0].mxu0
        %v2975 = vadd.f32 %v2862, %v2974
        %v2976 = vpop.f32.mrb[0].mxu0
        %2977 = vmatprep.mubr.f32.mxu0 0.0
        %2978 = vmatmul.mubr.f32.gmra.mrb[0].mxu0 %v2821
        %v2979 = vpop.f32.mrb[0].mxu0
        %v2980 = vadd.f32 %v2862, %v2979
        %v2981 = vpop.f32.mrb[0].mxu0
        %2982 = vmatprep.mubr.f32.mxu0 0.0
        %2983 = vmatmul.mubr.f32.gmra.mrb[0].mxu0 %v2822
        %v2984 = vpop.f32.mrb[0].mxu0
        %v2985 = vadd.f32 %v2862, %v2984
        %v2986 = vpop.f32.mrb[0].mxu0
        %2987 = vmatprep.mubr.f32.mxu0 0.0
        %2988 = vmatmul.mubr.f32.gmra.mrb[0].mxu0 %v2823
        %v2989 = vpop.f32.mrb[0].mxu0
        %v2990 = vadd.f32 %v2862, %v2989
        %v2991 = vpop.f32.mrb[0].mxu0
        %2992 = vmatprep.mubr.f32.mxu0 0.0
        %2993 = vmatmul.mubr.f32.gmra.mrb[0].mxu0 %v2824
        %v2994 = vpop.f32.mrb[0].mxu0
        %v2995 = vadd.f32 %v2862, %v2994
        %v2996 = vpop.f32.mrb[0].mxu0
        %2997 = vmatprep.mubr.f32.mxu0 0.0
        %2998 = vmatmul.mubr.f32.gmra.mrb[0].mxu0 %v2825
        %v2999 = vpop.f32.mrb[0].mxu0
        %v3000 = vadd.f32 %v2862, %v2999
        %v3001 = vpop.f32.mrb[0].mxu0
        %3002 = vmatprep.mubr.f32.mxu0 0.0
        %3003 = vmatmul.mubr.f32.gmra.mrb[0].mxu0 %v2826
        %v3004 = vpop.f32.mrb[0].mxu0
        %v3005 = vadd.f32 %v2862, %v3004
        %v3006 = vpop.f32.mrb[0].mxu0
        %3007 = vdwg.mxu0
        %v3008 = vadd.f32 %v2930, %v2827
        %v3009 = vadd.f32 %v2935, %v2828
        %v3010 = vadd.f32 %v2940, %v2829
        %v3011 = vadd.f32 %v2945, %v2830
        %v3012 = vadd.f32 %v2950, %v2831
        %v3013 = vadd.f32 %v2955, %v2832
        %v3014 = vadd.f32 %v2960, %v2833
        %v3015 = vadd.f32 %v2965, %v2834
        %v3016 = vadd.f32 %v2970, %v2835
        %v3017 = vadd.f32 %v2975, %v2836
        %v3018 = vadd.f32 %v2980, %v2837
        %v3019 = vadd.f32 %v2985, %v2838
        %v3020 = vadd.f32 %v2990, %v2839
        %v3021 = vadd.f32 %v2995, %v2840
        %v3022 = vadd.f32 %v3000, %v2841
        %v3023 = vadd.f32 %v3005, %v2842
        %v3024 = vxor.u32 %v3008, 2147483648
        %v3025 = vxor.u32 %v3009, 2147483648
        %v3026 = vxor.u32 %v3010, 2147483648
        %v3027 = vxor.u32 %v3011, 2147483648
        %v3028 = vxor.u32 %v3012, 2147483648
        %v3029 = vxor.u32 %v3013, 2147483648
        %v3030 = vxor.u32 %v3014, 2147483648
        %v3031 = vxor.u32 %v3015, 2147483648
        %v3032 = vxor.u32 %v3016, 2147483648
        %v3033 = vxor.u32 %v3017, 2147483648
        %v3034 = vxor.u32 %v3018, 2147483648
        %v3035 = vxor.u32 %v3019, 2147483648
        %v3036 = vxor.u32 %v3020, 2147483648
        %v3037 = vxor.u32 %v3021, 2147483648
        %v3038 = vxor.u32 %v3022, 2147483648
        %v3039 = vxor.u32 %v3023, 2147483648
        %v3040 = vmul.f32 %v3024, 1.442695
        %v3041 = vpow.pop %v3040
        %v3042 = vmul.f32 %v3025, 1.442695
        %v3043 = vpow.pop %v3042
        %v3044 = vmul.f32 %v3026, 1.442695
        %v3045 = vpow.pop %v3044
        %v3046 = vmul.f32 %v3027, 1.442695
        %v3047 = vpow.pop %v3046
        %v3048 = vmul.f32 %v3028, 1.442695
        %v3049 = vpow.pop %v3048
        %v3050 = vmul.f32 %v3029, 1.442695
        %v3051 = vpow.pop %v3050
        %v3052 = vmul.f32 %v3030, 1.442695
        %v3053 = vpow.pop %v3052
        %v3054 = vmul.f32 %v3031, 1.442695
        %v3055 = vpow.pop %v3054
        %v3056 = vmul.f32 %v3032, 1.442695
        %v3057 = vpow.pop %v3056
        %v3058 = vmul.f32 %v3033, 1.442695
        %v3059 = vpow.pop %v3058
        %v3060 = vmul.f32 %v3034, 1.442695
        %v3061 = vpow.pop %v3060
        %v3062 = vmul.f32 %v3035, 1.442695
        %v3063 = vpow.pop %v3062
        %v3064 = vmul.f32 %v3036, 1.442695
        %v3065 = vpow.pop %v3064
        %v3066 = vmul.f32 %v3037, 1.442695
        %v3067 = vpow.pop %v3066
        %v3068 = vmul.f32 %v3038, 1.442695
        %v3069 = vpow.pop %v3068
        %v3070 = vmul.f32 %v3039, 1.442695
        %v3071 = vpow.pop %v3070
        %v3072 = vadd.f32 %v3041, 1.0
        %v3073 = vadd.f32 %v3043, 1.0
        %v3074 = vadd.f32 %v3045, 1.0
        %v3075 = vadd.f32 %v3047, 1.0
        %v3076 = vadd.f32 %v3049, 1.0
        %v3077 = vadd.f32 %v3051, 1.0
        %v3078 = vadd.f32 %v3053, 1.0
        %v3079 = vadd.f32 %v3055, 1.0
        %v3080 = vadd.f32 %v3057, 1.0
        %v3081 = vadd.f32 %v3059, 1.0
        %v3082 = vadd.f32 %v3061, 1.0
        %v3083 = vadd.f32 %v3063, 1.0
        %v3084 = vadd.f32 %v3065, 1.0
        %v3085 = vadd.f32 %v3067, 1.0
        %v3086 = vadd.f32 %v3069, 1.0
        %v3087 = vadd.f32 %v3071, 1.0
        %v3088 = vrcp.pop %v3072
        %v3089 = vmul.f32 1.0, %v3088
        %v3090 = vrcp.pop %v3073
        %v3091 = vmul.f32 1.0, %v3090
        %v3092 = vrcp.pop %v3074
        %v3093 = vmul.f32 1.0, %v3092
        %v3094 = vrcp.pop %v3075
        %v3095 = vmul.f32 1.0, %v3094
        %v3096 = vrcp.pop %v3076
        %v3097 = vmul.f32 1.0, %v3096
        %v3098 = vrcp.pop %v3077
        %v3099 = vmul.f32 1.0, %v3098
        %v3100 = vrcp.pop %v3078
        %v3101 = vmul.f32 1.0, %v3100
        %v3102 = vrcp.pop %v3079
        %v3103 = vmul.f32 1.0, %v3102
        %v3104 = vrcp.pop %v3080
        %v3105 = vmul.f32 1.0, %v3104
        %v3106 = vrcp.pop %v3081
        %v3107 = vmul.f32 1.0, %v3106
        %v3108 = vrcp.pop %v3082
        %v3109 = vmul.f32 1.0, %v3108
        %v3110 = vrcp.pop %v3083
        %v3111 = vmul.f32 1.0, %v3110
        %v3112 = vrcp.pop %v3084
        %v3113 = vmul.f32 1.0, %v3112
        %v3114 = vrcp.pop %v3085
        %v3115 = vmul.f32 1.0, %v3114
        %v3116 = vrcp.pop %v3086
        %v3117 = vmul.f32 1.0, %v3116
        %v3118 = vrcp.pop %v3087
        %v3119 = vmul.f32 1.0, %v3118
        %v3120 = vmul.f32 %v3008, %v3089
        %v3121 = vmul.f32 %v3009, %v3091
        %v3122 = vmul.f32 %v3010, %v3093
        %v3123 = vmul.f32 %v3011, %v3095
        %v3124 = vmul.f32 %v3012, %v3097
        %v3125 = vmul.f32 %v3013, %v3099
        %v3126 = vmul.f32 %v3014, %v3101
        %v3127 = vmul.f32 %v3015, %v3103
        %v3128 = vmul.f32 %v3016, %v3105
        %v3129 = vmul.f32 %v3017, %v3107
        %v3130 = vmul.f32 %v3018, %v3109
        %v3131 = vmul.f32 %v3019, %v3111
        %v3132 = vmul.f32 %v3020, %v3113
        %v3133 = vmul.f32 %v3021, %v3115
        %v3134 = vmul.f32 %v3022, %v3117
        %v3135 = vmul.f32 %v3023, %v3119
        %3136 = vadd.xlane.f32.xlu0 %v3120
        %v3137 = vpop.xlane.xlu0 %3136
        %3138 = vadd.xlane.f32.xlu0 %v3121
        %v3139 = vpop.xlane.xlu0 %3138
        %3140 = vadd.xlane.f32.xlu0 %v3122
        %v3141 = vpop.xlane.xlu0 %3140
        %3142 = vadd.xlane.f32.xlu0 %v3123
        %v3143 = vpop.xlane.xlu0 %3142
        %3144 = vadd.xlane.f32.xlu0 %v3124
        %v3145 = vpop.xlane.xlu0 %3144
        %3146 = vadd.xlane.f32.xlu0 %v3125
        %v3147 = vpop.xlane.xlu0 %3146
        %3148 = vadd.xlane.f32.xlu0 %v3126
        %v3149 = vpop.xlane.xlu0 %3148
        %3150 = vadd.xlane.f32.xlu0 %v3127
        %v3151 = vpop.xlane.xlu0 %3150
        %3152 = vadd.xlane.f32.xlu0 %v3128
        %v3153 = vpop.xlane.xlu0 %3152
        %3154 = vadd.xlane.f32.xlu0 %v3129
        %v3155 = vpop.xlane.xlu0 %3154
        %3156 = vadd.xlane.f32.xlu0 %v3130
        %v3157 = vpop.xlane.xlu0 %3156
        %3158 = vadd.xlane.f32.xlu0 %v3131
        %v3159 = vpop.xlane.xlu0 %3158
        %3160 = vadd.xlane.f32.xlu0 %v3132
        %v3161 = vpop.xlane.xlu0 %3160
        %3162 = vadd.xlane.f32.xlu0 %v3133
        %v3163 = vpop.xlane.xlu0 %3162
        %3164 = vadd.xlane.f32.xlu0 %v3134
        %v3165 = vpop.xlane.xlu0 %3164
        %3166 = vadd.xlane.f32.xlu0 %v3135
        %v3167 = vpop.xlane.xlu0 %3166
        %v3168 = vmul.f32 %v3137, 0.03125
        %v3169 = vmul.f32 %v3139, 0.03125
        %v3170 = vmul.f32 %v3141, 0.03125
        %v3171 = vmul.f32 %v3143, 0.03125
        %v3172 = vmul.f32 %v3145, 0.03125
        %v3173 = vmul.f32 %v3147, 0.03125
        %v3174 = vmul.f32 %v3149, 0.03125
        %v3175 = vmul.f32 %v3151, 0.03125
        %v3176 = vmul.f32 %v3153, 0.03125
        %v3177 = vmul.f32 %v3155, 0.03125
        %v3178 = vmul.f32 %v3157, 0.03125
        %v3179 = vmul.f32 %v3159, 0.03125
        %v3180 = vmul.f32 %v3161, 0.03125
        %v3181 = vmul.f32 %v3163, 0.03125
        %v3182 = vmul.f32 %v3165, 0.03125
        %v3183 = vmul.f32 %v3167, 0.03125
        %v3184 = vmul.f32 %v3120, %v3120
        %v3185 = vmul.f32 %v3121, %v3121
        %v3186 = vmul.f32 %v3122, %v3122
        %v3187 = vmul.f32 %v3123, %v3123
        %v3188 = vmul.f32 %v3124, %v3124
        %v3189 = vmul.f32 %v3125, %v3125
        %v3190 = vmul.f32 %v3126, %v3126
        %v3191 = vmul.f32 %v3127, %v3127
        %v3192 = vmul.f32 %v3128, %v3128
        %v3193 = vmul.f32 %v3129, %v3129
        %v3194 = vmul.f32 %v3130, %v3130
        %v3195 = vmul.f32 %v3131, %v3131
        %v3196 = vmul.f32 %v3132, %v3132
        %v3197 = vmul.f32 %v3133, %v3133
        %v3198 = vmul.f32 %v3134, %v3134
        %v3199 = vmul.f32 %v3135, %v3135
        %3200 = vadd.xlane.f32.xlu0 %v3184
        %v3201 = vpop.xlane.xlu0 %3200
        %3202 = vadd.xlane.f32.xlu0 %v3185
        %v3203 = vpop.xlane.xlu0 %3202
        %3204 = vadd.xlane.f32.xlu0 %v3186
        %v3205 = vpop.xlane.xlu0 %3204
        %3206 = vadd.xlane.f32.xlu0 %v3187
        %v3207 = vpop.xlane.xlu0 %3206
        %3208 = vadd.xlane.f32.xlu0 %v3188
        %v3209 = vpop.xlane.xlu0 %3208
        %3210 = vadd.xlane.f32.xlu0 %v3189
        %v3211 = vpop.xlane.xlu0 %3210
        %3212 = vadd.xlane.f32.xlu0 %v3190
        %v3213 = vpop.xlane.xlu0 %3212
        %3214 = vadd.xlane.f32.xlu0 %v3191
        %v3215 = vpop.xlane.xlu0 %3214
        %3216 = vadd.xlane.f32.xlu0 %v3192
        %v3217 = vpop.xlane.xlu0 %3216
        %3218 = vadd.xlane.f32.xlu0 %v3193
        %v3219 = vpop.xlane.xlu0 %3218
        %3220 = vadd.xlane.f32.xlu0 %v3194
        %v3221 = vpop.xlane.xlu0 %3220
        %3222 = vadd.xlane.f32.xlu0 %v3195
        %v3223 = vpop.xlane.xlu0 %3222
        %3224 = vadd.xlane.f32.xlu0 %v3196
        %v3225 = vpop.xlane.xlu0 %3224
        %3226 = vadd.xlane.f32.xlu0 %v3197
        %v3227 = vpop.xlane.xlu0 %3226
        %3228 = vadd.xlane.f32.xlu0 %v3198
        %v3229 = vpop.xlane.xlu0 %3228
        %3230 = vadd.xlane.f32.xlu0 %v3199
        %v3231 = vpop.xlane.xlu0 %3230
        %v3232 = vmul.f32 %v3201, 0.03125
        %v3233 = vmul.f32 %v3203, 0.03125
        %v3234 = vmul.f32 %v3205, 0.03125
        %v3235 = vmul.f32 %v3207, 0.03125
        %v3236 = vmul.f32 %v3209, 0.03125
        %v3237 = vmul.f32 %v3211, 0.03125
        %v3238 = vmul.f32 %v3213, 0.03125
        %v3239 = vmul.f32 %v3215, 0.03125
        %v3240 = vmul.f32 %v3217, 0.03125
        %v3241 = vmul.f32 %v3219, 0.03125
        %v3242 = vmul.f32 %v3221, 0.03125
        %v3243 = vmul.f32 %v3223, 0.03125
        %v3244 = vmul.f32 %v3225, 0.03125
        %v3245 = vmul.f32 %v3227, 0.03125
        %v3246 = vmul.f32 %v3229, 0.03125
        %v3247 = vmul.f32 %v3231, 0.03125
        %v3248 = vmul.f32 %v3168, %v3168
        %v3249 = vmul.f32 %v3169, %v3169
        %v3250 = vmul.f32 %v3170, %v3170
        %v3251 = vmul.f32 %v3171, %v3171
        %v3252 = vmul.f32 %v3172, %v3172
        %v3253 = vmul.f32 %v3173, %v3173
        %v3254 = vmul.f32 %v3174, %v3174
        %v3255 = vmul.f32 %v3175, %v3175
        %v3256 = vmul.f32 %v3176, %v3176
        %v3257 = vmul.f32 %v3177, %v3177
        %v3258 = vmul.f32 %v3178, %v3178
        %v3259 = vmul.f32 %v3179, %v3179
        %v3260 = vmul.f32 %v3180, %v3180
        %v3261 = vmul.f32 %v3181, %v3181
        %v3262 = vmul.f32 %v3182, %v3182
        %v3263 = vmul.f32 %v3183, %v3183
        %v3264 = vsub.f32 %v3232, %v3248
        %v3265 = vsub.f32 %v3233, %v3249
        %v3266 = vsub.f32 %v3234, %v3250
        %v3267 = vsub.f32 %v3235, %v3251
        %v3268 = vsub.f32 %v3236, %v3252
        %v3269 = vsub.f32 %v3237, %v3253
        %v3270 = vsub.f32 %v3238, %v3254
        %v3271 = vsub.f32 %v3239, %v3255
        %v3272 = vsub.f32 %v3240, %v3256
        %v3273 = vsub.f32 %v3241, %v3257
        %v3274 = vsub.f32 %v3242, %v3258
        %v3275 = vsub.f32 %v3243, %v3259
        %v3276 = vsub.f32 %v3244, %v3260
        %v3277 = vsub.f32 %v3245, %v3261
        %v3278 = vsub.f32 %v3246, %v3262
        %v3279 = vsub.f32 %v3247, %v3263
        %v3280 = vsub.f32 %v3120, %v3168
        %v3281 = vsub.f32 %v3121, %v3169
        %v3282 = vsub.f32 %v3122, %v3170
        %v3283 = vsub.f32 %v3123, %v3171
        %v3284 = vsub.f32 %v3124, %v3172
        %v3285 = vsub.f32 %v3125, %v3173
        %v3286 = vsub.f32 %v3126, %v3174
        %v3287 = vsub.f32 %v3127, %v3175
        %v3288 = vsub.f32 %v3128, %v3176
        %v3289 = vsub.f32 %v3129, %v3177
        %v3290 = vsub.f32 %v3130, %v3178
        %v3291 = vsub.f32 %v3131, %v3179
        %v3292 = vsub.f32 %v3132, %v3180
        %v3293 = vsub.f32 %v3133, %v3181
        %v3294 = vsub.f32 %v3134, %v3182
        %v3295 = vsub.f32 %v3135, %v3183
        %v3296 = vadd.f32 %v3264, 0.1
        %v3297 = vadd.f32 %v3265, 0.1
        %v3298 = vadd.f32 %v3266, 0.1
        %v3299 = vadd.f32 %v3267, 0.1
        %v3300 = vadd.f32 %v3268, 0.1
        %v3301 = vadd.f32 %v3269, 0.1
        %v3302 = vadd.f32 %v3270, 0.1
        %v3303 = vadd.f32 %v3271, 0.1
        %v3304 = vadd.f32 %v3272, 0.1
        %v3305 = vadd.f32 %v3273, 0.1
        %v3306 = vadd.f32 %v3274, 0.1
        %v3307 = vadd.f32 %v3275, 0.1
        %v3308 = vadd.f32 %v3276, 0.1
        %v3309 = vadd.f32 %v3277, 0.1
        %v3310 = vadd.f32 %v3278, 0.1
        %v3311 = vadd.f32 %v3279, 0.1
        %v3312 = vrsqrt.pop %v3296
        %v3313 = vrsqrt.pop %v3297
        %v3314 = vrsqrt.pop %v3298
        %v3315 = vrsqrt.pop %v3299
        %v3316 = vrsqrt.pop %v3300
        %v3317 = vrsqrt.pop %v3301
        %v3318 = vrsqrt.pop %v3302
        %v3319 = vrsqrt.pop %v3303
        %v3320 = vrsqrt.pop %v3304
        %v3321 = vrsqrt.pop %v3305
        %v3322 = vrsqrt.pop %v3306
        %v3323 = vrsqrt.pop %v3307
        %v3324 = vrsqrt.pop %v3308
        %v3325 = vrsqrt.pop %v3309
        %v3326 = vrsqrt.pop %v3310
        %v3327 = vrsqrt.pop %v3311
        %v3328 = vmul.f32 %v3280, %v3312
        %v3329 = vmul.f32 %v3281, %v3313
        %v3330 = vmul.f32 %v3282, %v3314
        %v3331 = vmul.f32 %v3283, %v3315
        %v3332 = vmul.f32 %v3284, %v3316
        %v3333 = vmul.f32 %v3285, %v3317
        %v3334 = vmul.f32 %v3286, %v3318
        %v3335 = vmul.f32 %v3287, %v3319
        %v3336 = vmul.f32 %v3288, %v3320
        %v3337 = vmul.f32 %v3289, %v3321
        %v3338 = vmul.f32 %v3290, %v3322
        %v3339 = vmul.f32 %v3291, %v3323
        %v3340 = vmul.f32 %v3292, %v3324
        %v3341 = vmul.f32 %v3293, %v3325
        %v3342 = vmul.f32 %v3294, %v3326
        %v3343 = vmul.f32 %v3295, %v3327
        %v3344 = vlaneseq
        %v3345 = vshrl.u32 %v3344, 7
        %v3346 = vsub.s32 0, %v3345
        %v3347 = vrot.slane %v465, %v3346
        %v3348 = vmul.f32 %v3328, %v3347
        %v3349 = vmul.f32 %v3329, %v3347
        %v3350 = vmul.f32 %v3330, %v3347
        %v3351 = vmul.f32 %v3331, %v3347
        %v3352 = vmul.f32 %v3332, %v3347
        %v3353 = vmul.f32 %v3333, %v3347
        %v3354 = vmul.f32 %v3334, %v3347
        %v3355 = vmul.f32 %v3335, %v3347
        %v3356 = vmul.f32 %v3336, %v3347
        %v3357 = vmul.f32 %v3337, %v3347
        %v3358 = vmul.f32 %v3338, %v3347
        %v3359 = vmul.f32 %v3339, %v3347
        %v3360 = vmul.f32 %v3340, %v3347
        %v3361 = vmul.f32 %v3341, %v3347
        %v3362 = vmul.f32 %v3342, %v3347
        %v3363 = vmul.f32 %v3343, %v3347
        %v3364 = vlaneseq
        %v3365 = vshrl.u32 %v3364, 7
        %v3366 = vsub.s32 0, %v3365
        %v3367 = vrot.slane %v470, %v3366
        %v3368 = vadd.f32 %v3348, %v3367
        %v3369 = vadd.f32 %v3349, %v3367
        %v3370 = vadd.f32 %v3350, %v3367
        %v3371 = vadd.f32 %v3351, %v3367
        %v3372 = vadd.f32 %v3352, %v3367
        %v3373 = vadd.f32 %v3353, %v3367
        %v3374 = vadd.f32 %v3354, %v3367
        %v3375 = vadd.f32 %v3355, %v3367
        %v3376 = vadd.f32 %v3356, %v3367
        %v3377 = vadd.f32 %v3357, %v3367
        %v3378 = vadd.f32 %v3358, %v3367
        %v3379 = vadd.f32 %v3359, %v3367
        %v3380 = vadd.f32 %v3360, %v3367
        %v3381 = vadd.f32 %v3361, %v3367
        %v3382 = vadd.f32 %v3362, %v3367
        %v3383 = vadd.f32 %v3363, %v3367
        %v3384 = vld [vmem:[#allocation10] sm:$0xff]
        %v3385 = vld [vmem:[#allocation10 + $0x8] sm:$0xff]
        %v3386 = vld [vmem:[#allocation10 + $0x10] sm:$0xff]
        %v3387 = vld [vmem:[#allocation10 + $0x18] sm:$0xff]
        %v3388 = vld [vmem:[#allocation10 + $0x20] sm:$0xff]
        %v3389 = vld [vmem:[#allocation10 + $0x28] sm:$0xff]
        %v3390 = vld [vmem:[#allocation10 + $0x30] sm:$0xff]
        %v3391 = vld [vmem:[#allocation10 + $0x38] sm:$0xff]
        %v3392 = vld [vmem:[#allocation10 + $0x40] sm:$0xff]
        %v3393 = vld [vmem:[#allocation10 + $0x48] sm:$0xff]
        %v3394 = vld [vmem:[#allocation10 + $0x50] sm:$0xff]
        %v3395 = vld [vmem:[#allocation10 + $0x58] sm:$0xff]
        %v3396 = vld [vmem:[#allocation10 + $0x60] sm:$0xff]
        %v3397 = vld [vmem:[#allocation10 + $0x68] sm:$0xff]
        %v3398 = vld [vmem:[#allocation10 + $0x70] sm:$0xff]
        %v3399 = vld [vmem:[#allocation10 + $0x78] sm:$0xff]
        %v3400 = vld [vmem:[#allocation10 + $0x80] sm:$0xff]
        %v3401 = vld [vmem:[#allocation10 + $0x88] sm:$0xff]
        %v3402 = vld [vmem:[#allocation10 + $0x90] sm:$0xff]
        %v3403 = vld [vmem:[#allocation10 + $0x98] sm:$0xff]
        %v3404 = vld [vmem:[#allocation10 + $0xa0] sm:$0xff]
        %v3405 = vld [vmem:[#allocation10 + $0xa8] sm:$0xff]
        %v3406 = vld [vmem:[#allocation10 + $0xb0] sm:$0xff]
        %v3407 = vld [vmem:[#allocation10 + $0xb8] sm:$0xff]
        %v3408 = vld [vmem:[#allocation10 + $0xc0] sm:$0xff]
        %v3409 = vld [vmem:[#allocation10 + $0xc8] sm:$0xff]
        %v3410 = vld [vmem:[#allocation10 + $0xd0] sm:$0xff]
        %v3411 = vld [vmem:[#allocation10 + $0xd8] sm:$0xff]
        %v3412 = vld [vmem:[#allocation10 + $0xe0] sm:$0xff]
        %v3413 = vld [vmem:[#allocation10 + $0xe8] sm:$0xff]
        %v3414 = vld [vmem:[#allocation10 + $0xf0] sm:$0xff]
        %v3415 = vld [vmem:[#allocation10 + $0xf8] sm:$0xff]
        %3416 = vmatprep.subr.mxu0 %v3385
        %3417 = vmatpush1.msra.mxu0 %v3384
        %3418 = vmatprep.subr.mxu0 %v3387
        %3419 = vmatpush1.msra.mxu0 %v3386
        %3420 = vmatprep.subr.mxu0 %v3389
        %3421 = vmatpush1.msra.mxu0 %v3388
        %3422 = vmatprep.subr.mxu0 %v3391
        %3423 = vmatpush1.msra.mxu0 %v3390
        %3424 = vmatprep.subr.mxu0 %v3393
        %3425 = vmatpush1.msra.mxu0 %v3392
        %3426 = vmatprep.subr.mxu0 %v3395
        %3427 = vmatpush1.msra.mxu0 %v3394
        %3428 = vmatprep.subr.mxu0 %v3397
        %3429 = vmatpush1.msra.mxu0 %v3396
        %3430 = vmatprep.subr.mxu0 %v3399
        %3431 = vmatpush1.msra.mxu0 %v3398
        %3432 = vmatprep.subr.mxu0 %v3401
        %3433 = vmatpush1.msra.mxu0 %v3400
        %3434 = vmatprep.subr.mxu0 %v3403
        %3435 = vmatpush1.msra.mxu0 %v3402
        %3436 = vmatprep.subr.mxu0 %v3405
        %3437 = vmatpush1.msra.mxu0 %v3404
        %3438 = vmatprep.subr.mxu0 %v3407
        %3439 = vmatpush1.msra.mxu0 %v3406
        %3440 = vmatprep.subr.mxu0 %v3409
        %3441 = vmatpush1.msra.mxu0 %v3408
        %3442 = vmatprep.subr.mxu0 %v3411
        %3443 = vmatpush1.msra.mxu0 %v3410
        %3444 = vmatprep.subr.mxu0 %v3413
        %3445 = vmatpush1.msra.mxu0 %v3412
        %3446 = vmatprep.subr.mxu0 %v3415
        %3447 = vmatpush1.msra.mxu0 %v3414
        %3448 = vmatprep.subr.mxu0 0.0
        %3449 = vmatpush1.msra.mxu0 0.0
        %3450 = vmatprep.subr.mxu0 0.0
        %3451 = vmatpush1.msra.mxu0 0.0
        %3452 = vmatprep.subr.mxu0 0.0
        %3453 = vmatpush1.msra.mxu0 0.0
        %3454 = vmatprep.subr.mxu0 0.0
        %3455 = vmatpush1.msra.mxu0 0.0
        %3456 = vmatprep.subr.mxu0 0.0
        %3457 = vmatpush1.msra.mxu0 0.0
        %3458 = vmatprep.subr.mxu0 0.0
        %3459 = vmatpush1.msra.mxu0 0.0
        %3460 = vmatprep.subr.mxu0 0.0
        %3461 = vmatpush1.msra.mxu0 0.0
        %3462 = vmatprep.subr.mxu0 0.0
        %3463 = vmatpush1.msra.mxu0 0.0
        %3464 = vmatprep.subr.mxu0 0.0
        %3465 = vmatpush1.msra.mxu0 0.0
        %3466 = vmatprep.subr.mxu0 0.0
        %3467 = vmatpush1.msra.mxu0 0.0
        %3468 = vmatprep.subr.mxu0 0.0
        %3469 = vmatpush1.msra.mxu0 0.0
        %3470 = vmatprep.subr.mxu0 0.0
        %3471 = vmatpush1.msra.mxu0 0.0
        %3472 = vmatprep.subr.mxu0 0.0
        %3473 = vmatpush1.msra.mxu0 0.0
        %3474 = vmatprep.subr.mxu0 0.0
        %3475 = vmatpush1.msra.mxu0 0.0
        %3476 = vmatprep.subr.mxu0 0.0
        %3477 = vmatpush1.msra.mxu0 0.0
        %3478 = vmatprep.subr.mxu0 0.0
        %3479 = vmatpush1.msra.mxu0 0.0
        %3480 = vmatprep.mubr.f32.mxu0 0.0
        %3481 = vmatmul.mubr.f32.gmra.mrb[0].mxu0 %v3368
        %v3482 = vpop.f32.mrb[0].mxu0
        %v3483 = vadd.f32 0.0, %v3482
        %v3484 = vpop.f32.mrb[0].mxu0
        %v3485 = vadd.f32 0.0, %v3484
        %3486 = vmatprep.mubr.f32.mxu0 0.0
        %3487 = vmatmul.mubr.f32.gmra.mrb[0].mxu0 %v3369
        %v3488 = vpop.f32.mrb[0].mxu0
        %v3489 = vadd.f32 0.0, %v3488
        %v3490 = vpop.f32.mrb[0].mxu0
        %v3491 = vadd.f32 0.0, %v3490
        %3492 = vmatprep.mubr.f32.mxu0 0.0
        %3493 = vmatmul.mubr.f32.gmra.mrb[0].mxu0 %v3370
        %v3494 = vpop.f32.mrb[0].mxu0
        %v3495 = vadd.f32 0.0, %v3494
        %v3496 = vpop.f32.mrb[0].mxu0
        %v3497 = vadd.f32 0.0, %v3496
        %3498 = vmatprep.mubr.f32.mxu0 0.0
        %3499 = vmatmul.mubr.f32.gmra.mrb[0].mxu0 %v3371
        %v3500 = vpop.f32.mrb[0].mxu0
        %v3501 = vadd.f32 0.0, %v3500
        %v3502 = vpop.f32.mrb[0].mxu0
        %v3503 = vadd.f32 0.0, %v3502
        %3504 = vmatprep.mubr.f32.mxu0 0.0
        %3505 = vmatmul.mubr.f32.gmra.mrb[0].mxu0 %v3372
        %v3506 = vpop.f32.mrb[0].mxu0
        %v3507 = vadd.f32 0.0, %v3506
        %v3508 = vpop.f32.mrb[0].mxu0
        %v3509 = vadd.f32 0.0, %v3508
        %3510 = vmatprep.mubr.f32.mxu0 0.0
        %3511 = vmatmul.mubr.f32.gmra.mrb[0].mxu0 %v3373
        %v3512 = vpop.f32.mrb[0].mxu0
        %v3513 = vadd.f32 0.0, %v3512
        %v3514 = vpop.f32.mrb[0].mxu0
        %v3515 = vadd.f32 0.0, %v3514
        %3516 = vmatprep.mubr.f32.mxu0 0.0
        %3517 = vmatmul.mubr.f32.gmra.mrb[0].mxu0 %v3374
        %v3518 = vpop.f32.mrb[0].mxu0
        %v3519 = vadd.f32 0.0, %v3518
        %v3520 = vpop.f32.mrb[0].mxu0
        %v3521 = vadd.f32 0.0, %v3520
        %3522 = vmatprep.mubr.f32.mxu0 0.0
        %3523 = vmatmul.mubr.f32.gmra.mrb[0].mxu0 %v3375
        %v3524 = vpop.f32.mrb[0].mxu0
        %v3525 = vadd.f32 0.0, %v3524
        %v3526 = vpop.f32.mrb[0].mxu0
        %v3527 = vadd.f32 0.0, %v3526
        %3528 = vmatprep.mubr.f32.mxu0 0.0
        %3529 = vmatmul.mubr.f32.gmra.mrb[0].mxu0 %v3376
        %v3530 = vpop.f32.mrb[0].mxu0
        %v3531 = vadd.f32 0.0, %v3530
        %v3532 = vpop.f32.mrb[0].mxu0
        %v3533 = vadd.f32 0.0, %v3532
        %3534 = vmatprep.mubr.f32.mxu0 0.0
        %3535 = vmatmul.mubr.f32.gmra.mrb[0].mxu0 %v3377
        %v3536 = vpop.f32.mrb[0].mxu0
        %v3537 = vadd.f32 0.0, %v3536
        %v3538 = vpop.f32.mrb[0].mxu0
        %v3539 = vadd.f32 0.0, %v3538
        %3540 = vmatprep.mubr.f32.mxu0 0.0
        %3541 = vmatmul.mubr.f32.gmra.mrb[0].mxu0 %v3378
        %v3542 = vpop.f32.mrb[0].mxu0
        %v3543 = vadd.f32 0.0, %v3542
        %v3544 = vpop.f32.mrb[0].mxu0
        %v3545 = vadd.f32 0.0, %v3544
        %3546 = vmatprep.mubr.f32.mxu0 0.0
        %3547 = vmatmul.mubr.f32.gmra.mrb[0].mxu0 %v3379
        %v3548 = vpop.f32.mrb[0].mxu0
        %v3549 = vadd.f32 0.0, %v3548
        %v3550 = vpop.f32.mrb[0].mxu0
        %v3551 = vadd.f32 0.0, %v3550
        %3552 = vmatprep.mubr.f32.mxu0 0.0
        %3553 = vmatmul.mubr.f32.gmra.mrb[0].mxu0 %v3380
        %v3554 = vpop.f32.mrb[0].mxu0
        %v3555 = vadd.f32 0.0, %v3554
        %v3556 = vpop.f32.mrb[0].mxu0
        %v3557 = vadd.f32 0.0, %v3556
        %3558 = vmatprep.mubr.f32.mxu0 0.0
        %3559 = vmatmul.mubr.f32.gmra.mrb[0].mxu0 %v3381
        %v3560 = vpop.f32.mrb[0].mxu0
        %v3561 = vadd.f32 0.0, %v3560
        %v3562 = vpop.f32.mrb[0].mxu0
        %v3563 = vadd.f32 0.0, %v3562
        %3564 = vmatprep.mubr.f32.mxu0 0.0
        %3565 = vmatmul.mubr.f32.gmra.mrb[0].mxu0 %v3382
        %v3566 = vpop.f32.mrb[0].mxu0
        %v3567 = vadd.f32 0.0, %v3566
        %v3568 = vpop.f32.mrb[0].mxu0
        %v3569 = vadd.f32 0.0, %v3568
        %3570 = vmatprep.mubr.f32.mxu0 0.0
        %3571 = vmatmul.mubr.f32.gmra.mrb[0].mxu0 %v3383
        %v3572 = vpop.f32.mrb[0].mxu0
        %v3573 = vadd.f32 0.0, %v3572
        %v3574 = vpop.f32.mrb[0].mxu0
        %v3575 = vadd.f32 0.0, %v3574
        %3576 = vdwg.mxu0
        %v3577 = vlaneseq
        %v3578 = vshrl.u32 %v3577, 7
        %v3579 = vsub.s32 0, %v3578
        %v3580 = vrot.slane %v471, %v3579
        %v3581 = vadd.f32 %v3483, %v3580
        %v3582 = vadd.f32 %v3489, %v3580
        %v3583 = vadd.f32 %v3495, %v3580
        %v3584 = vadd.f32 %v3501, %v3580
        %v3585 = vadd.f32 %v3507, %v3580
        %v3586 = vadd.f32 %v3513, %v3580
        %v3587 = vadd.f32 %v3519, %v3580
        %v3588 = vadd.f32 %v3525, %v3580
        %v3589 = vadd.f32 %v3531, %v3580
        %v3590 = vadd.f32 %v3537, %v3580
        %v3591 = vadd.f32 %v3543, %v3580
        %v3592 = vadd.f32 %v3549, %v3580
        %v3593 = vadd.f32 %v3555, %v3580
        %v3594 = vadd.f32 %v3561, %v3580
        %v3595 = vadd.f32 %v3567, %v3580
        %v3596 = vadd.f32 %v3573, %v3580
        %v3597 = vlaneseq
        %v3598 = vshrl.u32 %v3597, 7
        %v3599 = vsub.s32 0, %v3598
        %v3600 = vrot.slane %v472, %v3599
        %v3601 = vadd.f32 %v3485, %v3600
        %v3602 = vadd.f32 %v3491, %v3600
        %v3603 = vadd.f32 %v3497, %v3600
        %v3604 = vadd.f32 %v3503, %v3600
        %v3605 = vadd.f32 %v3509, %v3600
        %v3606 = vadd.f32 %v3515, %v3600
        %v3607 = vadd.f32 %v3521, %v3600
        %v3608 = vadd.f32 %v3527, %v3600
        %v3609 = vadd.f32 %v3533, %v3600
        %v3610 = vadd.f32 %v3539, %v3600
        %v3611 = vadd.f32 %v3545, %v3600
        %v3612 = vadd.f32 %v3551, %v3600
        %v3613 = vadd.f32 %v3557, %v3600
        %v3614 = vadd.f32 %v3563, %v3600
        %v3615 = vadd.f32 %v3569, %v3600
        %v3616 = vadd.f32 %v3575, %v3600
        %v3617 = vlaneseq
        %v3618 = vshrl.u32 %v3617, 7
        %v3619 = vsub.s32 0, %v3618
        %v3620 = vrot.slane %v473, %v3619
        %v3621 = vsub.f32 %v494, %v3620
        %v3622 = vsub.f32 %v495, %v3620
        %v3623 = vsub.f32 %v496, %v3620
        %v3624 = vsub.f32 %v497, %v3620
        %v3625 = vsub.f32 %v498, %v3620
        %v3626 = vsub.f32 %v499, %v3620
        %v3627 = vsub.f32 %v500, %v3620
        %v3628 = vsub.f32 %v501, %v3620
        %v3629 = vsub.f32 %v502, %v3620
        %v3630 = vsub.f32 %v503, %v3620
        %v3631 = vsub.f32 %v504, %v3620
        %v3632 = vsub.f32 %v505, %v3620
        %v3633 = vsub.f32 %v506, %v3620
        %v3634 = vsub.f32 %v507, %v3620
        %v3635 = vsub.f32 %v508, %v3620
        %v3636 = vsub.f32 %v509, %v3620
        %v3637 = vadd.f32 %v474, 1.837877
        %v3638 = vmul.f32 %v3621, %v3621
        %v3639 = vmul.f32 %v3622, %v3622
        %v3640 = vmul.f32 %v3623, %v3623
        %v3641 = vmul.f32 %v3624, %v3624
        %v3642 = vmul.f32 %v3625, %v3625
        %v3643 = vmul.f32 %v3626, %v3626
        %v3644 = vmul.f32 %v3627, %v3627
        %v3645 = vmul.f32 %v3628, %v3628
        %v3646 = vmul.f32 %v3629, %v3629
        %v3647 = vmul.f32 %v3630, %v3630
        %v3648 = vmul.f32 %v3631, %v3631
        %v3649 = vmul.f32 %v3632, %v3632
        %v3650 = vmul.f32 %v3633, %v3633
        %v3651 = vmul.f32 %v3634, %v3634
        %v3652 = vmul.f32 %v3635, %v3635
        %v3653 = vmul.f32 %v3636, %v3636
        %v3654 = vlaneseq
        %v3655 = vshrl.u32 %v3654, 7
        %v3656 = vsub.s32 0, %v3655
        %v3657 = vrot.slane %v475, %v3656
        %v3658 = vmul.f32 %v3638, %v3657
        %v3659 = vmul.f32 %v3639, %v3657
        %v3660 = vmul.f32 %v3640, %v3657
        %v3661 = vmul.f32 %v3641, %v3657
        %v3662 = vmul.f32 %v3642, %v3657
        %v3663 = vmul.f32 %v3643, %v3657
        %v3664 = vmul.f32 %v3644, %v3657
        %v3665 = vmul.f32 %v3645, %v3657
        %v3666 = vmul.f32 %v3646, %v3657
        %v3667 = vmul.f32 %v3647, %v3657
        %v3668 = vmul.f32 %v3648, %v3657
        %v3669 = vmul.f32 %v3649, %v3657
        %v3670 = vmul.f32 %v3650, %v3657
        %v3671 = vmul.f32 %v3651, %v3657
        %v3672 = vmul.f32 %v3652, %v3657
        %v3673 = vmul.f32 %v3653, %v3657
        %v3674 = vlaneseq
        %v3675 = vshrl.u32 %v3674, 7
        %v3676 = vsub.s32 0, %v3675
        %v3677 = vrot.slane %v3637, %v3676
        %v3678 = vadd.f32 %v3677, %v3658
        %v3679 = vadd.f32 %v3677, %v3659
        %v3680 = vadd.f32 %v3677, %v3660
        %v3681 = vadd.f32 %v3677, %v3661
        %v3682 = vadd.f32 %v3677, %v3662
        %v3683 = vadd.f32 %v3677, %v3663
        %v3684 = vadd.f32 %v3677, %v3664
        %v3685 = vadd.f32 %v3677, %v3665
        %v3686 = vadd.f32 %v3677, %v3666
        %v3687 = vadd.f32 %v3677, %v3667
        %v3688 = vadd.f32 %v3677, %v3668
        %v3689 = vadd.f32 %v3677, %v3669
        %v3690 = vadd.f32 %v3677, %v3670
        %v3691 = vadd.f32 %v3677, %v3671
        %v3692 = vadd.f32 %v3677, %v3672
        %v3693 = vadd.f32 %v3677, %v3673
        %v3694 = vmul.f32 %v3678, -0.5
        %v3695 = vmul.f32 %v3679, -0.5
        %v3696 = vmul.f32 %v3680, -0.5
        %v3697 = vmul.f32 %v3681, -0.5
        %v3698 = vmul.f32 %v3682, -0.5
        %v3699 = vmul.f32 %v3683, -0.5
        %v3700 = vmul.f32 %v3684, -0.5
        %v3701 = vmul.f32 %v3685, -0.5
        %v3702 = vmul.f32 %v3686, -0.5
        %v3703 = vmul.f32 %v3687, -0.5
        %v3704 = vmul.f32 %v3688, -0.5
        %v3705 = vmul.f32 %v3689, -0.5
        %v3706 = vmul.f32 %v3690, -0.5
        %v3707 = vmul.f32 %v3691, -0.5
        %v3708 = vmul.f32 %v3692, -0.5
        %v3709 = vmul.f32 %v3693, -0.5
        %v3710 = vadd.f32 %v3694, -1.89712
        %v3711 = vadd.f32 %v3695, -1.89712
        %v3712 = vadd.f32 %v3696, -1.89712
        %v3713 = vadd.f32 %v3697, -1.89712
        %v3714 = vadd.f32 %v3698, -1.89712
        %v3715 = vadd.f32 %v3699, -1.89712
        %v3716 = vadd.f32 %v3700, -1.89712
        %v3717 = vadd.f32 %v3701, -1.89712
        %v3718 = vadd.f32 %v3702, -1.89712
        %v3719 = vadd.f32 %v3703, -1.89712
        %v3720 = vadd.f32 %v3704, -1.89712
        %v3721 = vadd.f32 %v3705, -1.89712
        %v3722 = vadd.f32 %v3706, -1.89712
        %v3723 = vadd.f32 %v3707, -1.89712
        %v3724 = vadd.f32 %v3708, -1.89712
        %v3725 = vadd.f32 %v3709, -1.89712
        %v3726 = vsub.f32 0.0, %v3601
        %v3727 = vsub.f32 0.0, %v3602
        %v3728 = vsub.f32 0.0, %v3603
        %v3729 = vsub.f32 0.0, %v3604
        %v3730 = vsub.f32 0.0, %v3605
        %v3731 = vsub.f32 0.0, %v3606
        %v3732 = vsub.f32 0.0, %v3607
        %v3733 = vsub.f32 0.0, %v3608
        %v3734 = vsub.f32 0.0, %v3609
        %v3735 = vsub.f32 0.0, %v3610
        %v3736 = vsub.f32 0.0, %v3611
        %v3737 = vsub.f32 0.0, %v3612
        %v3738 = vsub.f32 0.0, %v3613
        %v3739 = vsub.f32 0.0, %v3614
        %v3740 = vsub.f32 0.0, %v3615
        %v3741 = vsub.f32 0.0, %v3616
        %v3742 = vmul.f32 %v3726, 1.442695
        %v3743 = vpow.pop %v3742
        %v3744 = vmul.f32 %v3727, 1.442695
        %v3745 = vpow.pop %v3744
        %v3746 = vmul.f32 %v3728, 1.442695
        %v3747 = vpow.pop %v3746
        %v3748 = vmul.f32 %v3729, 1.442695
        %v3749 = vpow.pop %v3748
        %v3750 = vmul.f32 %v3730, 1.442695
        %v3751 = vpow.pop %v3750
        %v3752 = vmul.f32 %v3731, 1.442695
        %v3753 = vpow.pop %v3752
        %v3754 = vmul.f32 %v3732, 1.442695
        %v3755 = vpow.pop %v3754
        %v3756 = vmul.f32 %v3733, 1.442695
        %v3757 = vpow.pop %v3756
        %v3758 = vmul.f32 %v3734, 1.442695
        %v3759 = vpow.pop %v3758
        %v3760 = vmul.f32 %v3735, 1.442695
        %v3761 = vpow.pop %v3760
        %v3762 = vmul.f32 %v3736, 1.442695
        %v3763 = vpow.pop %v3762
        %v3764 = vmul.f32 %v3737, 1.442695
        %v3765 = vpow.pop %v3764
        %v3766 = vmul.f32 %v3738, 1.442695
        %v3767 = vpow.pop %v3766
        %v3768 = vmul.f32 %v3739, 1.442695
        %v3769 = vpow.pop %v3768
        %v3770 = vmul.f32 %v3740, 1.442695
        %v3771 = vpow.pop %v3770
        %v3772 = vmul.f32 %v3741, 1.442695
        %v3773 = vpow.pop %v3772
        %v3774 = vsub.f32 %v494, %v3581
        %v3775 = vsub.f32 %v495, %v3582
        %v3776 = vsub.f32 %v496, %v3583
        %v3777 = vsub.f32 %v497, %v3584
        %v3778 = vsub.f32 %v498, %v3585
        %v3779 = vsub.f32 %v499, %v3586
        %v3780 = vsub.f32 %v500, %v3587
        %v3781 = vsub.f32 %v501, %v3588
        %v3782 = vsub.f32 %v502, %v3589
        %v3783 = vsub.f32 %v503, %v3590
        %v3784 = vsub.f32 %v504, %v3591
        %v3785 = vsub.f32 %v505, %v3592
        %v3786 = vsub.f32 %v506, %v3593
        %v3787 = vsub.f32 %v507, %v3594
        %v3788 = vsub.f32 %v508, %v3595
        %v3789 = vsub.f32 %v509, %v3596
        %v3790 = vadd.f32 %v3601, 1.837877
        %v3791 = vadd.f32 %v3602, 1.837877
        %v3792 = vadd.f32 %v3603, 1.837877
        %v3793 = vadd.f32 %v3604, 1.837877
        %v3794 = vadd.f32 %v3605, 1.837877
        %v3795 = vadd.f32 %v3606, 1.837877
        %v3796 = vadd.f32 %v3607, 1.837877
        %v3797 = vadd.f32 %v3608, 1.837877
        %v3798 = vadd.f32 %v3609, 1.837877
        %v3799 = vadd.f32 %v3610, 1.837877
        %v3800 = vadd.f32 %v3611, 1.837877
        %v3801 = vadd.f32 %v3612, 1.837877
        %v3802 = vadd.f32 %v3613, 1.837877
        %v3803 = vadd.f32 %v3614, 1.837877
        %v3804 = vadd.f32 %v3615, 1.837877
        %v3805 = vadd.f32 %v3616, 1.837877
        %v3806 = vmul.f32 %v3774, %v3774
        %v3807 = vmul.f32 %v3775, %v3775
        %v3808 = vmul.f32 %v3776, %v3776
        %v3809 = vmul.f32 %v3777, %v3777
        %v3810 = vmul.f32 %v3778, %v3778
        %v3811 = vmul.f32 %v3779, %v3779
        %v3812 = vmul.f32 %v3780, %v3780
        %v3813 = vmul.f32 %v3781, %v3781
        %v3814 = vmul.f32 %v3782, %v3782
        %v3815 = vmul.f32 %v3783, %v3783
        %v3816 = vmul.f32 %v3784, %v3784
        %v3817 = vmul.f32 %v3785, %v3785
        %v3818 = vmul.f32 %v3786, %v3786
        %v3819 = vmul.f32 %v3787, %v3787
        %v3820 = vmul.f32 %v3788, %v3788
        %v3821 = vmul.f32 %v3789, %v3789
        %v3822 = vmul.f32 %v3806, %v3743
        %v3823 = vmul.f32 %v3807, %v3745
        %v3824 = vmul.f32 %v3808, %v3747
        %v3825 = vmul.f32 %v3809, %v3749
        %v3826 = vmul.f32 %v3810, %v3751
        %v3827 = vmul.f32 %v3811, %v3753
        %v3828 = vmul.f32 %v3812, %v3755
        %v3829 = vmul.f32 %v3813, %v3757
        %v3830 = vmul.f32 %v3814, %v3759
        %v3831 = vmul.f32 %v3815, %v3761
        %v3832 = vmul.f32 %v3816, %v3763
        %v3833 = vmul.f32 %v3817, %v3765
        %v3834 = vmul.f32 %v3818, %v3767
        %v3835 = vmul.f32 %v3819, %v3769
        %v3836 = vmul.f32 %v3820, %v3771
        %v3837 = vmul.f32 %v3821, %v3773
        %v3838 = vadd.f32 %v3790, %v3822
        %v3839 = vadd.f32 %v3791, %v3823
        %v3840 = vadd.f32 %v3792, %v3824
        %v3841 = vadd.f32 %v3793, %v3825
        %v3842 = vadd.f32 %v3794, %v3826
        %v3843 = vadd.f32 %v3795, %v3827
        %v3844 = vadd.f32 %v3796, %v3828
        %v3845 = vadd.f32 %v3797, %v3829
        %v3846 = vadd.f32 %v3798, %v3830
        %v3847 = vadd.f32 %v3799, %v3831
        %v3848 = vadd.f32 %v3800, %v3832
        %v3849 = vadd.f32 %v3801, %v3833
        %v3850 = vadd.f32 %v3802, %v3834
        %v3851 = vadd.f32 %v3803, %v3835
        %v3852 = vadd.f32 %v3804, %v3836
        %v3853 = vadd.f32 %v3805, %v3837
        %v3854 = vmul.f32 %v3838, -0.5
        %v3855 = vmul.f32 %v3839, -0.5
        %v3856 = vmul.f32 %v3840, -0.5
        %v3857 = vmul.f32 %v3841, -0.5
        %v3858 = vmul.f32 %v3842, -0.5
        %v3859 = vmul.f32 %v3843, -0.5
        %v3860 = vmul.f32 %v3844, -0.5
        %v3861 = vmul.f32 %v3845, -0.5
        %v3862 = vmul.f32 %v3846, -0.5
        %v3863 = vmul.f32 %v3847, -0.5
        %v3864 = vmul.f32 %v3848, -0.5
        %v3865 = vmul.f32 %v3849, -0.5
        %v3866 = vmul.f32 %v3850, -0.5
        %v3867 = vmul.f32 %v3851, -0.5
        %v3868 = vmul.f32 %v3852, -0.5
        %v3869 = vmul.f32 %v3853, -0.5
        %v3870 = vadd.f32 %v3854, -0.2876821
        %v3871 = vadd.f32 %v3855, -0.2876821
        %v3872 = vadd.f32 %v3856, -0.2876821
        %v3873 = vadd.f32 %v3857, -0.2876821
        %v3874 = vadd.f32 %v3858, -0.2876821
        %v3875 = vadd.f32 %v3859, -0.2876821
        %v3876 = vadd.f32 %v3860, -0.2876821
        %v3877 = vadd.f32 %v3861, -0.2876821
        %v3878 = vadd.f32 %v3862, -0.2876821
        %v3879 = vadd.f32 %v3863, -0.2876821
        %v3880 = vadd.f32 %v3864, -0.2876821
        %v3881 = vadd.f32 %v3865, -0.2876821
        %v3882 = vadd.f32 %v3866, -0.2876821
        %v3883 = vadd.f32 %v3867, -0.2876821
        %v3884 = vadd.f32 %v3868, -0.2876821
        %v3885 = vadd.f32 %v3869, -0.2876821
        %v3886 = vadd.f32 %v476, 1.837877
        %v3887 = vlaneseq
        %v3888 = vshrl.u32 %v3887, 7
        %v3889 = vsub.s32 0, %v3888
        %v3890 = vrot.slane %v477, %v3889
        %v3891 = vmul.f32 %v3638, %v3890
        %v3892 = vmul.f32 %v3639, %v3890
        %v3893 = vmul.f32 %v3640, %v3890
        %v3894 = vmul.f32 %v3641, %v3890
        %v3895 = vmul.f32 %v3642, %v3890
        %v3896 = vmul.f32 %v3643, %v3890
        %v3897 = vmul.f32 %v3644, %v3890
        %v3898 = vmul.f32 %v3645, %v3890
        %v3899 = vmul.f32 %v3646, %v3890
        %v3900 = vmul.f32 %v3647, %v3890
        %v3901 = vmul.f32 %v3648, %v3890
        %v3902 = vmul.f32 %v3649, %v3890
        %v3903 = vmul.f32 %v3650, %v3890
        %v3904 = vmul.f32 %v3651, %v3890
        %v3905 = vmul.f32 %v3652, %v3890
        %v3906 = vmul.f32 %v3653, %v3890
        %v3907 = vlaneseq
        %v3908 = vshrl.u32 %v3907, 7
        %v3909 = vsub.s32 0, %v3908
        %v3910 = vrot.slane %v3886, %v3909
        %v3911 = vadd.f32 %v3910, %v3891
        %v3912 = vadd.f32 %v3910, %v3892
        %v3913 = vadd.f32 %v3910, %v3893
        %v3914 = vadd.f32 %v3910, %v3894
        %v3915 = vadd.f32 %v3910, %v3895
        %v3916 = vadd.f32 %v3910, %v3896
        %v3917 = vadd.f32 %v3910, %v3897
        %v3918 = vadd.f32 %v3910, %v3898
        %v3919 = vadd.f32 %v3910, %v3899
        %v3920 = vadd.f32 %v3910, %v3900
        %v3921 = vadd.f32 %v3910, %v3901
        %v3922 = vadd.f32 %v3910, %v3902
        %v3923 = vadd.f32 %v3910, %v3903
        %v3924 = vadd.f32 %v3910, %v3904
        %v3925 = vadd.f32 %v3910, %v3905
        %v3926 = vadd.f32 %v3910, %v3906
        %v3927 = vmul.f32 %v3911, -0.5
        %v3928 = vmul.f32 %v3912, -0.5
        %v3929 = vmul.f32 %v3913, -0.5
        %v3930 = vmul.f32 %v3914, -0.5
        %v3931 = vmul.f32 %v3915, -0.5
        %v3932 = vmul.f32 %v3916, -0.5
        %v3933 = vmul.f32 %v3917, -0.5
        %v3934 = vmul.f32 %v3918, -0.5
        %v3935 = vmul.f32 %v3919, -0.5
        %v3936 = vmul.f32 %v3920, -0.5
        %v3937 = vmul.f32 %v3921, -0.5
        %v3938 = vmul.f32 %v3922, -0.5
        %v3939 = vmul.f32 %v3923, -0.5
        %v3940 = vmul.f32 %v3924, -0.5
        %v3941 = vmul.f32 %v3925, -0.5
        %v3942 = vmul.f32 %v3926, -0.5
        %v3943 = vadd.f32 %v3927, -2.3025851
        %v3944 = vadd.f32 %v3928, -2.3025851
        %v3945 = vadd.f32 %v3929, -2.3025851
        %v3946 = vadd.f32 %v3930, -2.3025851
        %v3947 = vadd.f32 %v3931, -2.3025851
        %v3948 = vadd.f32 %v3932, -2.3025851
        %v3949 = vadd.f32 %v3933, -2.3025851
        %v3950 = vadd.f32 %v3934, -2.3025851
        %v3951 = vadd.f32 %v3935, -2.3025851
        %v3952 = vadd.f32 %v3936, -2.3025851
        %v3953 = vadd.f32 %v3937, -2.3025851
        %v3954 = vadd.f32 %v3938, -2.3025851
        %v3955 = vadd.f32 %v3939, -2.3025851
        %v3956 = vadd.f32 %v3940, -2.3025851
        %v3957 = vadd.f32 %v3941, -2.3025851
        %v3958 = vadd.f32 %v3942, -2.3025851
        %v3959 = vmax.f32 %v3710, %v3870
        %v3960 = vmax.f32 %v3711, %v3871
        %v3961 = vmax.f32 %v3712, %v3872
        %v3962 = vmax.f32 %v3713, %v3873
        %v3963 = vmax.f32 %v3714, %v3874
        %v3964 = vmax.f32 %v3715, %v3875
        %v3965 = vmax.f32 %v3716, %v3876
        %v3966 = vmax.f32 %v3717, %v3877
        %v3967 = vmax.f32 %v3718, %v3878
        %v3968 = vmax.f32 %v3719, %v3879
        %v3969 = vmax.f32 %v3720, %v3880
        %v3970 = vmax.f32 %v3721, %v3881
        %v3971 = vmax.f32 %v3722, %v3882
        %v3972 = vmax.f32 %v3723, %v3883
        %v3973 = vmax.f32 %v3724, %v3884
        %v3974 = vmax.f32 %v3725, %v3885
        %v3975 = vmax.f32 %v3959, %v3943
        %v3976 = vmax.f32 %v3960, %v3944
        %v3977 = vmax.f32 %v3961, %v3945
        %v3978 = vmax.f32 %v3962, %v3946
        %v3979 = vmax.f32 %v3963, %v3947
        %v3980 = vmax.f32 %v3964, %v3948
        %v3981 = vmax.f32 %v3965, %v3949
        %v3982 = vmax.f32 %v3966, %v3950
        %v3983 = vmax.f32 %v3967, %v3951
        %v3984 = vmax.f32 %v3968, %v3952
        %v3985 = vmax.f32 %v3969, %v3953
        %v3986 = vmax.f32 %v3970, %v3954
        %v3987 = vmax.f32 %v3971, %v3955
        %v3988 = vmax.f32 %v3972, %v3956
        %v3989 = vmax.f32 %v3973, %v3957
        %v3990 = vmax.f32 %v3974, %v3958
        %v3991 = vsub.f32 %v3710, %v3975
        %v3992 = vsub.f32 %v3711, %v3976
        %v3993 = vsub.f32 %v3712, %v3977
        %v3994 = vsub.f32 %v3713, %v3978
        %v3995 = vsub.f32 %v3714, %v3979
        %v3996 = vsub.f32 %v3715, %v3980
        %v3997 = vsub.f32 %v3716, %v3981
        %v3998 = vsub.f32 %v3717, %v3982
        %v3999 = vsub.f32 %v3718, %v3983
        %v4000 = vsub.f32 %v3719, %v3984
        %v4001 = vsub.f32 %v3720, %v3985
        %v4002 = vsub.f32 %v3721, %v3986
        %v4003 = vsub.f32 %v3722, %v3987
        %v4004 = vsub.f32 %v3723, %v3988
        %v4005 = vsub.f32 %v3724, %v3989
        %v4006 = vsub.f32 %v3725, %v3990
        %v4007 = vmul.f32 %v3991, 1.442695
        %v4008 = vpow.pop %v4007
        %v4009 = vmul.f32 %v3992, 1.442695
        %v4010 = vpow.pop %v4009
        %v4011 = vmul.f32 %v3993, 1.442695
        %v4012 = vpow.pop %v4011
        %v4013 = vmul.f32 %v3994, 1.442695
        %v4014 = vpow.pop %v4013
        %v4015 = vmul.f32 %v3995, 1.442695
        %v4016 = vpow.pop %v4015
        %v4017 = vmul.f32 %v3996, 1.442695
        %v4018 = vpow.pop %v4017
        %v4019 = vmul.f32 %v3997, 1.442695
        %v4020 = vpow.pop %v4019
        %v4021 = vmul.f32 %v3998, 1.442695
        %v4022 = vpow.pop %v4021
        %v4023 = vmul.f32 %v3999, 1.442695
        %v4024 = vpow.pop %v4023
        %v4025 = vmul.f32 %v4000, 1.442695
        %v4026 = vpow.pop %v4025
        %v4027 = vmul.f32 %v4001, 1.442695
        %v4028 = vpow.pop %v4027
        %v4029 = vmul.f32 %v4002, 1.442695
        %v4030 = vpow.pop %v4029
        %v4031 = vmul.f32 %v4003, 1.442695
        %v4032 = vpow.pop %v4031
        %v4033 = vmul.f32 %v4004, 1.442695
        %v4034 = vpow.pop %v4033
        %v4035 = vmul.f32 %v4005, 1.442695
        %v4036 = vpow.pop %v4035
        %v4037 = vmul.f32 %v4006, 1.442695
        %v4038 = vpow.pop %v4037
        %v4039 = vsub.f32 %v3870, %v3975
        %v4040 = vsub.f32 %v3871, %v3976
        %v4041 = vsub.f32 %v3872, %v3977
        %v4042 = vsub.f32 %v3873, %v3978
        %v4043 = vsub.f32 %v3874, %v3979
        %v4044 = vsub.f32 %v3875, %v3980
        %v4045 = vsub.f32 %v3876, %v3981
        %v4046 = vsub.f32 %v3877, %v3982
        %v4047 = vsub.f32 %v3878, %v3983
        %v4048 = vsub.f32 %v3879, %v3984
        %v4049 = vsub.f32 %v3880, %v3985
        %v4050 = vsub.f32 %v3881, %v3986
        %v4051 = vsub.f32 %v3882, %v3987
        %v4052 = vsub.f32 %v3883, %v3988
        %v4053 = vsub.f32 %v3884, %v3989
        %v4054 = vsub.f32 %v3885, %v3990
        %v4055 = vmul.f32 %v4039, 1.442695
        %v4056 = vpow.pop %v4055
        %v4057 = vmul.f32 %v4040, 1.442695
        %v4058 = vpow.pop %v4057
        %v4059 = vmul.f32 %v4041, 1.442695
        %v4060 = vpow.pop %v4059
        %v4061 = vmul.f32 %v4042, 1.442695
        %v4062 = vpow.pop %v4061
        %v4063 = vmul.f32 %v4043, 1.442695
        %v4064 = vpow.pop %v4063
        %v4065 = vmul.f32 %v4044, 1.442695
        %v4066 = vpow.pop %v4065
        %v4067 = vmul.f32 %v4045, 1.442695
        %v4068 = vpow.pop %v4067
        %v4069 = vmul.f32 %v4046, 1.442695
        %v4070 = vpow.pop %v4069
        %v4071 = vmul.f32 %v4047, 1.442695
        %v4072 = vpow.pop %v4071
        %v4073 = vmul.f32 %v4048, 1.442695
        %v4074 = vpow.pop %v4073
        %v4075 = vmul.f32 %v4049, 1.442695
        %v4076 = vpow.pop %v4075
        %v4077 = vmul.f32 %v4050, 1.442695
        %v4078 = vpow.pop %v4077
        %v4079 = vmul.f32 %v4051, 1.442695
        %v4080 = vpow.pop %v4079
        %v4081 = vmul.f32 %v4052, 1.442695
        %v4082 = vpow.pop %v4081
        %v4083 = vmul.f32 %v4053, 1.442695
        %v4084 = vpow.pop %v4083
        %v4085 = vmul.f32 %v4054, 1.442695
        %v4086 = vpow.pop %v4085
        %v4087 = vadd.f32 %v4008, %v4056
        %v4088 = vadd.f32 %v4010, %v4058
        %v4089 = vadd.f32 %v4012, %v4060
        %v4090 = vadd.f32 %v4014, %v4062
        %v4091 = vadd.f32 %v4016, %v4064
        %v4092 = vadd.f32 %v4018, %v4066
        %v4093 = vadd.f32 %v4020, %v4068
        %v4094 = vadd.f32 %v4022, %v4070
        %v4095 = vadd.f32 %v4024, %v4072
        %v4096 = vadd.f32 %v4026, %v4074
        %v4097 = vadd.f32 %v4028, %v4076
        %v4098 = vadd.f32 %v4030, %v4078
        %v4099 = vadd.f32 %v4032, %v4080
        %v4100 = vadd.f32 %v4034, %v4082
        %v4101 = vadd.f32 %v4036, %v4084
        %v4102 = vadd.f32 %v4038, %v4086
        %v4103 = vsub.f32 %v3943, %v3975
        %v4104 = vsub.f32 %v3944, %v3976
        %v4105 = vsub.f32 %v3945, %v3977
        %v4106 = vsub.f32 %v3946, %v3978
        %v4107 = vsub.f32 %v3947, %v3979
        %v4108 = vsub.f32 %v3948, %v3980
        %v4109 = vsub.f32 %v3949, %v3981
        %v4110 = vsub.f32 %v3950, %v3982
        %v4111 = vsub.f32 %v3951, %v3983
        %v4112 = vsub.f32 %v3952, %v3984
        %v4113 = vsub.f32 %v3953, %v3985
        %v4114 = vsub.f32 %v3954, %v3986
        %v4115 = vsub.f32 %v3955, %v3987
        %v4116 = vsub.f32 %v3956, %v3988
        %v4117 = vsub.f32 %v3957, %v3989
        %v4118 = vsub.f32 %v3958, %v3990
        %v4119 = vmul.f32 %v4103, 1.442695
        %v4120 = vpow.pop %v4119
        %v4121 = vmul.f32 %v4104, 1.442695
        %v4122 = vpow.pop %v4121
        %v4123 = vmul.f32 %v4105, 1.442695
        %v4124 = vpow.pop %v4123
        %v4125 = vmul.f32 %v4106, 1.442695
        %v4126 = vpow.pop %v4125
        %v4127 = vmul.f32 %v4107, 1.442695
        %v4128 = vpow.pop %v4127
        %v4129 = vmul.f32 %v4108, 1.442695
        %v4130 = vpow.pop %v4129
        %v4131 = vmul.f32 %v4109, 1.442695
        %v4132 = vpow.pop %v4131
        %v4133 = vmul.f32 %v4110, 1.442695
        %v4134 = vpow.pop %v4133
        %v4135 = vmul.f32 %v4111, 1.442695
        %v4136 = vpow.pop %v4135
        %v4137 = vmul.f32 %v4112, 1.442695
        %v4138 = vpow.pop %v4137
        %v4139 = vmul.f32 %v4113, 1.442695
        %v4140 = vpow.pop %v4139
        %v4141 = vmul.f32 %v4114, 1.442695
        %v4142 = vpow.pop %v4141
        %v4143 = vmul.f32 %v4115, 1.442695
        %v4144 = vpow.pop %v4143
        %v4145 = vmul.f32 %v4116, 1.442695
        %v4146 = vpow.pop %v4145
        %v4147 = vmul.f32 %v4117, 1.442695
        %v4148 = vpow.pop %v4147
        %v4149 = vmul.f32 %v4118, 1.442695
        %v4150 = vpow.pop %v4149
        %v4151 = vadd.f32 %v4087, %v4120
        %v4152 = vadd.f32 %v4088, %v4122
        %v4153 = vadd.f32 %v4089, %v4124
        %v4154 = vadd.f32 %v4090, %v4126
        %v4155 = vadd.f32 %v4091, %v4128
        %v4156 = vadd.f32 %v4092, %v4130
        %v4157 = vadd.f32 %v4093, %v4132
        %v4158 = vadd.f32 %v4094, %v4134
        %v4159 = vadd.f32 %v4095, %v4136
        %v4160 = vadd.f32 %v4096, %v4138
        %v4161 = vadd.f32 %v4097, %v4140
        %v4162 = vadd.f32 %v4098, %v4142
        %v4163 = vadd.f32 %v4099, %v4144
        %v4164 = vadd.f32 %v4100, %v4146
        %v4165 = vadd.f32 %v4101, %v4148
        %v4166 = vadd.f32 %v4102, %v4150
        %v4167 = vlog2.pop %v4151
        %v4168 = vmul.f32 %v4167, 0.6931472
        %v4169 = vlog2.pop %v4152
        %v4170 = vmul.f32 %v4169, 0.6931472
        %v4171 = vlog2.pop %v4153
        %v4172 = vmul.f32 %v4171, 0.6931472
        %v4173 = vlog2.pop %v4154
        %v4174 = vmul.f32 %v4173, 0.6931472
        %v4175 = vlog2.pop %v4155
        %v4176 = vmul.f32 %v4175, 0.6931472
        %v4177 = vlog2.pop %v4156
        %v4178 = vmul.f32 %v4177, 0.6931472
        %v4179 = vlog2.pop %v4157
        %v4180 = vmul.f32 %v4179, 0.6931472
        %v4181 = vlog2.pop %v4158
        %v4182 = vmul.f32 %v4181, 0.6931472
        %v4183 = vlog2.pop %v4159
        %v4184 = vmul.f32 %v4183, 0.6931472
        %v4185 = vlog2.pop %v4160
        %v4186 = vmul.f32 %v4185, 0.6931472
        %v4187 = vlog2.pop %v4161
        %v4188 = vmul.f32 %v4187, 0.6931472
        %v4189 = vlog2.pop %v4162
        %v4190 = vmul.f32 %v4189, 0.6931472
        %v4191 = vlog2.pop %v4163
        %v4192 = vmul.f32 %v4191, 0.6931472
        %v4193 = vlog2.pop %v4164
        %v4194 = vmul.f32 %v4193, 0.6931472
        %v4195 = vlog2.pop %v4165
        %v4196 = vmul.f32 %v4195, 0.6931472
        %v4197 = vlog2.pop %v4166
        %v4198 = vmul.f32 %v4197, 0.6931472
        %v4199 = vadd.f32 %v3975, %v4168
        %v4200 = vadd.f32 %v3976, %v4170
        %v4201 = vadd.f32 %v3977, %v4172
        %v4202 = vadd.f32 %v3978, %v4174
        %v4203 = vadd.f32 %v3979, %v4176
        %v4204 = vadd.f32 %v3980, %v4178
        %v4205 = vadd.f32 %v3981, %v4180
        %v4206 = vadd.f32 %v3982, %v4182
        %v4207 = vadd.f32 %v3983, %v4184
        %v4208 = vadd.f32 %v3984, %v4186
        %v4209 = vadd.f32 %v3985, %v4188
        %v4210 = vadd.f32 %v3986, %v4190
        %v4211 = vadd.f32 %v3987, %v4192
        %v4212 = vadd.f32 %v3988, %v4194
        %v4213 = vadd.f32 %v3989, %v4196
        %v4214 = vadd.f32 %v3990, %v4198
        %4215 = vst [vmem:[%s442] sm:$0xff] %v4199
        %4216 = vst [vmem:[%s442 + $0x8] sm:$0xff] %v4200
        %4217 = vst [vmem:[%s442 + $0x10] sm:$0xff] %v4201
        %4218 = vst [vmem:[%s442 + $0x18] sm:$0xff] %v4202
        %4219 = vst [vmem:[%s442 + $0x20] sm:$0xff] %v4203
        %4220 = vst [vmem:[%s442 + $0x28] sm:$0xff] %v4204
        %4221 = vst [vmem:[%s442 + $0x30] sm:$0xff] %v4205
        %4222 = vst [vmem:[%s442 + $0x38] sm:$0xff] %v4206
        %4223 = vst [vmem:[%s442 + $0x40] sm:$0xff] %v4207
        %4224 = vst [vmem:[%s442 + $0x48] sm:$0xff] %v4208
        %4225 = vst [vmem:[%s442 + $0x50] sm:$0xff] %v4209
        %4226 = vst [vmem:[%s442 + $0x58] sm:$0xff] %v4210
        %4227 = vst [vmem:[%s442 + $0x60] sm:$0xff] %v4211
        %4228 = vst [vmem:[%s442 + $0x68] sm:$0xff] %v4212
        %4229 = vst [vmem:[%s442 + $0x70] sm:$0xff] %v4213
        %4230 = vst [vmem:[%s442 + $0x78] sm:$0xff] %v4214
        %s4231 = sand.u32 %s255, 1
        %s4232 = scalar_lea.sflag [#allocation4], %s4231
        %s4233 = sand.u32 %s255, 1
        %s4234 = smul.addr %s4233, 128
        %s4235 = scalar_lea.vmem [#allocation11], %s4234
        // Predicated region
        $region81: #{tpu_custom_call.1} parent=59 // pred_check
          %p4236 = pneg %p265
        $region82: #{tpu_custom_call.1} parent=59 // pred_check_branch
          %4238 = sbr.rel (%p4236) target = $region84
        $region83: #{tpu_custom_call.1} parent=59 // pred_region
          %s4239 = smul.u32 16, %s27
          %s4241 = ssub.s32 2048, 2048
          %4242 = vsyncadd %s4232, %s4241
          %s4243 = smul.addr %s4239, 128
          %s4244 = scalar_lea.hbm %s10, %s4243
          %s4245 = sshll.u32 %s4235, 4
          %s4246 = int_to_ptr.vmem [resolvable:$true] %s4245
          %4251 = dma.vmem_to_hbm [thread:$0]  %s4246, 2048, %s4244, %s4232, 128, 128, 8
        $region84: #{tpu_custom_call.1} parent=59 // pred_fallthru
          _
      $region60: #{tpu_custom_call.1} parent=5 // pred_fallthru
        _
      %p4252 = scmp.le.s32.totalorder 2, %s22
      // Predicated region
      $region85: #{tpu_custom_call.1} parent=5 // pred_check
        %p4253 = pneg %p4252
      $region86: #{tpu_custom_call.1} parent=5 // pred_check_branch
        %4255 = sbr.rel (%p4253) target = $region88
      $region87: #{tpu_custom_call.1} parent=5 // pred_region
        %s4256 = ssub.s32 %s22, 2
        // Predicated region
        $region89: #{tpu_custom_call.1} parent=87 // pred_check
          %p4257 = pneg %p271
        $region90: #{tpu_custom_call.1} parent=87 // pred_check_branch
          %4259 = sbr.rel (%p4257) target = $region92
        $region91: #{tpu_custom_call.1} parent=87 // pred_region
          %s4260 = sand.u32 %s256, 1
          %s4261 = scalar_lea.sflag [#allocation4], %s4260
          %s4262 = sand.u32 %s256, 1
          %s4263 = smul.addr %s4262, 128
          %s4264 = scalar_lea.vmem [#allocation11], %s4263
          %4265 = dma.done %s4261, 2048
        $region92: #{tpu_custom_call.1} parent=87 // pred_fallthru
          _
      $region88: #{tpu_custom_call.1} parent=5 // pred_fallthru
        _
    $region6: #{tpu_custom_call.1} parent=1 // loop_footer
      %s26 = sadd.s32 1, %s22
    $region7: #{tpu_custom_call.1} parent=1 // loop_footer_branch
      %21 = sbr.rel target = $region3
    $region8: #{tpu_custom_call.1} parent=1 // loop_exit
      _
    %4266 = vsyncpa [#allocation3], 1
    %s4267 = scalar_lea.sflag [#allocation3], 1
    %4268 = vsyncpa %s4267, 1
    %4269 = vsyncpa [#allocation6], 1
    %4270 = vsyncpa [#allocation9], 1
    %4271 = vsyncpa [#allocation4], 1
    %s4272 = scalar_lea.sflag [#allocation4], 1
    %4273 = vsyncpa %s4272, 1

</llo_original>
